<compile_context>
chip_gen: v6e
topology: v6e:2x2x1
jax: 0.10.0
libtpu: 0.0.40
codegen_flags: <defaults>
</compile_context>

<pallas_src>
import functools
import math

import jax
import jax.numpy as jnp
from jax.experimental import pallas as pl
from jax.experimental.pallas import tpu as pltpu


_NEG_INF = -1e30   # finite stand-in for -inf (style attention fill; NaN-safe)


def _bf16(v):
    return v.astype(jnp.bfloat16)


def _mish(y):
    sp = jnp.maximum(y, 0.0) + jnp.log1p(jnp.exp(-jnp.abs(y)))   # softplus
    return y * jnp.tanh(sp)


def _ln(z, g, b, eps):
    mu = jnp.mean(z, axis=-1, keepdims=True)
    var = jnp.mean(jnp.square(z - mu), axis=-1, keepdims=True)
    return (z - mu) * jax.lax.rsqrt(var + eps) * g + b


# ----------------------------- generic dense -------------------------------

def _dense_kernel(*refs, activation, has_mask):
    if has_mask:
        x_ref, w_ref, b_ref, m_ref, o_ref = refs
    else:
        x_ref, w_ref, b_ref, o_ref = refs
        m_ref = None
    y = jnp.dot(_bf16(x_ref[...]), _bf16(w_ref[...]),
                preferred_element_type=jnp.float32) + b_ref[...]
    if activation == "relu":
        y = jnp.maximum(y, 0.0)
    elif activation == "mish":
        y = _mish(y)
    if has_mask:
        y = y * m_ref[...]           # m in {0,1}: m*(xW+b) == (m*((x*m)W+b))
    o_ref[...] = y


def dense(x, w, b, *, activation=None, row_mask=None, block_rows=512):
    """y = x @ w + b (optional activation / {0,1} row mask), row-tiled."""
    M, K = x.shape
    N = w.shape[1]
    tm = min(block_rows, M)
    n_blk = pl.cdiv(M, tm)
    Mp = n_blk * tm

    def pad_rows(a):
        return a if Mp == M else jnp.pad(a, ((0, Mp - M), (0, 0)))

    args = [pad_rows(x), w, b.reshape(1, N)]
    in_specs = [pl.BlockSpec((tm, K), lambda i: (i, 0)),
                pl.BlockSpec((K, N), lambda i: (0, 0)),
                pl.BlockSpec((1, N), lambda i: (0, 0))]
    if row_mask is not None:
        args.append(pad_rows(row_mask.reshape(M, 1)))
        in_specs.append(pl.BlockSpec((tm, 1), lambda i: (i, 0)))

    out = pl.pallas_call(
        functools.partial(_dense_kernel, activation=activation,
                          has_mask=row_mask is not None),
        grid=(n_blk,),
        out_shape=jax.ShapeDtypeStruct((Mp, N), jnp.float32),
        in_specs=in_specs,
        out_specs=pl.BlockSpec((tm, N), lambda i: (i, 0)),
        compiler_params=pltpu.CompilerParams(dimension_semantics=("parallel",)),
    )(*args)
    return out[:M] if Mp != M else out


# ------------------------- fused 2-layer Mish MLP ---------------------------

def _mlp2_kernel(x_ref, w1_ref, b1_ref, w2_ref, b2_ref, o_ref):
    h = jnp.dot(_bf16(x_ref[...]), _bf16(w1_ref[...]),
                preferred_element_type=jnp.float32) + b1_ref[...]
    h = _mish(h)
    h = jnp.dot(_bf16(h), _bf16(w2_ref[...]),
                preferred_element_type=jnp.float32) + b2_ref[...]
    o_ref[...] = _mish(h)


def mlp2(x, w1, b1, w2, b2, *, block_rows=512):
    M, K = x.shape
    H1, H2 = w1.shape[1], w2.shape[1]
    tm = min(block_rows, M)
    n_blk = pl.cdiv(M, tm)
    Mp = n_blk * tm
    xp = x if Mp == M else jnp.pad(x, ((0, Mp - M), (0, 0)))
    out = pl.pallas_call(
        _mlp2_kernel,
        grid=(n_blk,),
        out_shape=jax.ShapeDtypeStruct((Mp, H2), jnp.float32),
        in_specs=[pl.BlockSpec((tm, K), lambda i: (i, 0)),
                  pl.BlockSpec((K, H1), lambda i: (0, 0)),
                  pl.BlockSpec((1, H1), lambda i: (0, 0)),
                  pl.BlockSpec((H1, H2), lambda i: (0, 0)),
                  pl.BlockSpec((1, H2), lambda i: (0, 0))],
        out_specs=pl.BlockSpec((tm, H2), lambda i: (i, 0)),
        compiler_params=pltpu.CompilerParams(dimension_semantics=("parallel",)),
    )(xp, w1, b1.reshape(1, H1), w2, b2.reshape(1, H2))
    return out[:M] if Mp != M else out


# ------------------------------ Conv1dGLU -----------------------------------

def _conv_glu_kernel(x_ref, w_ref, b_ref, o_ref, xpad_ref, *, ksize, pad):
    x = x_ref[0]                                # [T, C]
    T, C = x.shape
    xpad_ref[...] = jnp.zeros_like(xpad_ref)
    xpad_ref[pl.ds(pad, T), :] = x
    acc = jnp.zeros((T, 2 * C), jnp.float32)
    for i in range(ksize):                      # shifted in-VMEM matmuls
        acc = acc + jnp.dot(_bf16(xpad_ref[pl.ds(i, T), :]), _bf16(w_ref[i]),
                            preferred_element_type=jnp.float32)
    acc = acc + b_ref[...]
    a = acc[:, :C]
    gate = acc[:, C:]
    sig = 1.0 / (1.0 + jnp.exp(-gate))
    o_ref[0] = x + a * sig


def conv1d_glu(x, w, b):
    """Residual gated conv (Conv1dGLU).  x:[B,T,C]  w:[k,C,2C]."""
    B, T, C = x.shape
    k = w.shape[0]
    pad = (k - 1) // 2
    return pl.pallas_call(
        functools.partial(_conv_glu_kernel, ksize=k, pad=pad),
        grid=(B,),
        out_shape=jax.ShapeDtypeStruct((B, T, C), jnp.float32),
        in_specs=[pl.BlockSpec((1, T, C), lambda bb: (bb, 0, 0)),
                  pl.BlockSpec((k, C, 2 * C), lambda bb: (0, 0, 0)),
                  pl.BlockSpec((1, 2 * C), lambda bb: (0, 0))],
        out_specs=pl.BlockSpec((1, T, C), lambda bb: (bb, 0, 0)),
        scratch_shapes=[pltpu.VMEM((T + 2 * pad, C), jnp.float32)],
        compiler_params=pltpu.CompilerParams(dimension_semantics=("parallel",)),
    )(x, w, b.reshape(1, 2 * C))


# ------------- style encoder: masked MHA + out-proj + fc + pool --------------

def _style_attn_kernel(x_ref, mk_ref, mr_ref, wqkv_ref, bqkv_ref,
                       wo_ref, bo_ref, wfc_ref, bfc_ref, o_ref,
                       *, n_heads, scale):
    mr = mr_ref[0]                               # [T, 1] valid mask
    x = x_ref[0] * mr                            # masked_fill before attention
    C = x.shape[1]
    dk = C // n_heads
    qkv = jnp.dot(_bf16(x), _bf16(wqkv_ref[...]),
                  preferred_element_type=jnp.float32) + bqkv_ref[...]
    valid_k = mk_ref[0] > 0.0                    # [1, T] key mask
    wo = wo_ref[...]
    acc = x + bo_ref[...]                        # residual + out-proj bias
    for h in range(n_heads):
        q = qkv[:, h * dk:(h + 1) * dk] * scale
        k = qkv[:, C + h * dk:C + (h + 1) * dk]
        v = qkv[:, 2 * C + h * dk:2 * C + (h + 1) * dk]
        s = jax.lax.dot_general(_bf16(q), _bf16(k), (((1,), (1,)), ((), ())),
                                preferred_element_type=jnp.float32)   # [T, T]
        s = jnp.where(valid_k, s, _NEG_INF)
        m = jnp.max(s, axis=-1, keepdims=True)
        e = jnp.exp(s - m)
        p = e * pl.reciprocal(jnp.sum(e, axis=-1, keepdims=True), approx=True)
        ctx = jnp.dot(_bf16(p), _bf16(v), preferred_element_type=jnp.float32)
        acc = acc + jnp.dot(_bf16(ctx), _bf16(wo[h * dk:(h + 1) * dk, :]),
                            preferred_element_type=jnp.float32)
    y = jnp.dot(_bf16(acc), _bf16(wfc_ref[...]),
                preferred_element_type=jnp.float32) + bfc_ref[...]    # fc
    lens = jnp.sum(mr, axis=0, keepdims=True)                         # [1, 1]
    o_ref[0] = jnp.sum(y * mr, axis=0, keepdims=True) / lens          # masked mean


def mel_style_encoder(x, mask_bt, p, cfg):
    """modules.MelStyleEncoder; x:[B,T,ssl], mask_bt:[B,T] (1=valid) -> [B,H]."""
    B, T, ssl = x.shape
    sh = p["spec1_w"].shape[1]
    # spectral: (Linear + Mish) x2 fused
    h = mlp2(x.reshape(B * T, ssl), p["spec1_w"], p["spec1_b"],
             p["spec2_w"], p["spec2_b"]).reshape(B, T, sh)
    # temporal: Conv1dGLU x2
    h = conv1d_glu(h, p["t1_w"], p["t1_b"])
    h = conv1d_glu(h, p["t2_w"], p["t2_b"])
    # fused masked MHA + out-proj(+residual) + fc + masked temporal avg pool
    nh = cfg["style_heads"]
    Hd = p["fc_w"].shape[1]
    wqkv = jnp.concatenate([p["attn_wq"], p["attn_wk"], p["attn_wv"]], axis=1)
    bqkv = jnp.concatenate([p["attn_bq"], p["attn_bk"], p["attn_bv"]], axis=0)
    mk = mask_bt.reshape(B, 1, T)
    mr = mask_bt.reshape(B, T, 1)
    g = pl.pallas_call(
        functools.partial(_style_attn_kernel, n_heads=nh,
                          scale=1.0 / math.sqrt(sh)),
        grid=(B,),
        out_shape=jax.ShapeDtypeStruct((B, 1, Hd), jnp.float32),
        in_specs=[pl.BlockSpec((1, T, sh), lambda bb: (bb, 0, 0)),
                  pl.BlockSpec((1, 1, T), lambda bb: (bb, 0, 0)),
                  pl.BlockSpec((1, T, 1), lambda bb: (bb, 0, 0)),
                  pl.BlockSpec((sh, 3 * sh), lambda bb: (0, 0)),
                  pl.BlockSpec((1, 3 * sh), lambda bb: (0, 0)),
                  pl.BlockSpec((sh, sh), lambda bb: (0, 0)),
                  pl.BlockSpec((1, sh), lambda bb: (0, 0)),
                  pl.BlockSpec((sh, Hd), lambda bb: (0, 0)),
                  pl.BlockSpec((1, Hd), lambda bb: (0, 0))],
        out_specs=pl.BlockSpec((1, 1, Hd), lambda bb: (bb, 0, 0)),
        compiler_params=pltpu.CompilerParams(dimension_semantics=("parallel",)),
    )(h, mk, mr, wqkv, bqkv.reshape(1, 3 * sh), p["attn_wo"],
      p["attn_bo"].reshape(1, sh), p["fc_w"], p["fc_b"].reshape(1, Hd))
    return g.reshape(B, Hd)


# ------------------ encoder: rel-pos MHA block (fused) ------------------------

def _get_relative_embeddings(rel_emb, length, window_size):
    pad_length = max(length - (window_size + 1), 0)
    slice_start = max((window_size + 1) - length, 0)
    if pad_length > 0:
        rel_emb = jnp.pad(rel_emb, ((0, 0), (pad_length, pad_length), (0, 0)))
    return rel_emb[:, slice_start:slice_start + 2 * length - 1]


def _expand_rel_tables(rel_k, rel_v, T, window_size):
    """Expand [1,2w+1,kc] rel embeddings to batch/head-independent tables:
       Ek[i,j,:] = rel_k[j-i+T-1], Evt[i,:,j] = rel_v[j-i+T-1] (for in-kernel use)."""
    rk = _get_relative_embeddings(rel_k, T, window_size)[0]     # [2T-1, kc]
    rv = _get_relative_embeddings(rel_v, T, window_size)[0]
    idx = jnp.arange(T)[None, :] - jnp.arange(T)[:, None] + (T - 1)   # [T,T]
    ek = jnp.take(rk, idx, axis=0)                               # [T, T, kc]
    evt = jnp.transpose(jnp.take(rv, idx, axis=0), (0, 2, 1))    # [T, kc, T]
    return ek, evt
    # TODO(synk): for long T, replace the O(T^2 kc) expanded tables with an
    # in-kernel pltpu.roll-based skew on the [2T-1, kc] tables + KV-tiled
    # (flash) online softmax.


def _enc_attn_kernel(x_ref, mk_ref, mq_ref, wqkv_ref, bqkv_ref, ek_ref, evt_ref,
                     wo_ref, bo_ref, g_ref, be_ref, o_ref,
                     *, n_heads, scale, eps):
    x = x_ref[0]                                 # [T, H]
    H = x.shape[1]
    kc = H // n_heads
    qkv = jnp.dot(_bf16(x), _bf16(wqkv_ref[...]),
                  preferred_element_type=jnp.float32) + bqkv_ref[...]
    valid = jnp.logical_and(mk_ref[0] > 0.0, mq_ref[0] > 0.0)    # [T, T]
    ek = ek_ref[...]                             # [T, T, kc]
    evt = evt_ref[...]                           # [T, kc, T]
    wo = wo_ref[...]
    acc = x + bo_ref[...]                        # residual + out-proj bias
    for h in range(n_heads):
        q = qkv[:, h * kc:(h + 1) * kc] * scale
        k = qkv[:, H + h * kc:H + (h + 1) * kc]
        v = qkv[:, 2 * H + h * kc:2 * H + (h + 1) * kc]
        s = jax.lax.dot_general(_bf16(q), _bf16(k), (((1,), (1,)), ((), ())),
                                preferred_element_type=jnp.float32)   # q @ k^T
        s = s + jnp.sum(q[:, None, :] * ek, axis=-1)             # rel-pos key bias
        s = jnp.where(valid, s, -1e4)
        m = jnp.max(s, axis=-1, keepdims=True)
        e = jnp.exp(s - m)
        p = e * pl.reciprocal(jnp.sum(e, axis=-1, keepdims=True), approx=True)
        ctx = jnp.dot(_bf16(p), _bf16(v), preferred_element_type=jnp.float32)
        ctx = ctx + jnp.sum(p[:, None, :] * evt, axis=-1)        # rel-pos values
        acc = acc + jnp.dot(_bf16(ctx), _bf16(wo[h * kc:(h + 1) * kc, :]),
                            preferred_element_type=jnp.float32)
    o_ref[0] = _ln(acc, g_ref[...], be_ref[...], eps)


def _ffn_kernel(x_ref, mr_ref, w1_ref, b1_ref, w2_ref, b2_ref, g_ref, be_ref,
                o_ref, pin_ref, pmid_ref, *, ksize, pad, eps):
    x = x_ref[0]                                 # [T, H] (LN1 output)
    T, H = x.shape
    F = pmid_ref.shape[1]
    mr = mr_ref[0]                               # [T, 1]
    pin_ref[...] = jnp.zeros_like(pin_ref)
    pin_ref[pl.ds(pad, T), :] = x * mr
    h = jnp.zeros((T, F), jnp.float32)
    for i in range(ksize):
        h = h + jnp.dot(_bf16(pin_ref[pl.ds(i, T), :]), _bf16(w1_ref[i]),
                        preferred_element_type=jnp.float32)
    h = jnp.maximum(h + b1_ref[...], 0.0) * mr
    pmid_ref[...] = jnp.zeros_like(pmid_ref)
    pmid_ref[pl.ds(pad, T), :] = h
    y = jnp.zeros((T, H), jnp.float32)
    for i in range(ksize):
        y = y + jnp.dot(_bf16(pmid_ref[pl.ds(i, T), :]), _bf16(w2_ref[i]),
                        preferred_element_type=jnp.float32)
    y = (y + b2_ref[...]) * mr
    o_ref[0] = _ln(x + y, g_ref[...], be_ref[...], eps)


def encoder_layer(x, mask_bt, lp, cfg):
    """One attentions.Encoder layer: rel-pos MHA + LN1, conv FFN + LN2."""
    B, T, H = x.shape
    nh = cfg["n_heads"]
    kc = H // nh
    wqkv = jnp.concatenate([lp["wq"], lp["wk"], lp["wv"]], axis=1)
    bqkv = jnp.concatenate([lp["bq"], lp["bk"], lp["bv"]], axis=0)
    ek, evt = _expand_rel_tables(lp["emb_rel_k"], lp["emb_rel_v"], T,
                                 cfg["window_size"])
    mk = mask_bt.reshape(B, 1, T)
    mr = mask_bt.reshape(B, T, 1)

    y = pl.pallas_call(
        functools.partial(_enc_attn_kernel, n_heads=nh,
                          scale=1.0 / math.sqrt(kc), eps=1e-5),
        grid=(B,),
        out_shape=jax.ShapeDtypeStruct((B, T, H), jnp.float32),
        in_specs=[pl.BlockSpec((1, T, H), lambda bb: (bb, 0, 0)),
                  pl.BlockSpec((1, 1, T), lambda bb: (bb, 0, 0)),
                  pl.BlockSpec((1, T, 1), lambda bb: (bb, 0, 0)),
                  pl.BlockSpec((H, 3 * H), lambda bb: (0, 0)),
                  pl.BlockSpec((1, 3 * H), lambda bb: (0, 0)),
                  pl.BlockSpec((T, T, kc), lambda bb: (0, 0, 0)),
                  pl.BlockSpec((T, kc, T), lambda bb: (0, 0, 0)),
                  pl.BlockSpec((H, H), lambda bb: (0, 0)),
                  pl.BlockSpec((1, H), lambda bb: (0, 0)),
                  pl.BlockSpec((1, H), lambda bb: (0, 0)),
                  pl.BlockSpec((1, H), lambda bb: (0, 0))],
        out_specs=pl.BlockSpec((1, T, H), lambda bb: (bb, 0, 0)),
        compiler_params=pltpu.CompilerParams(dimension_semantics=("parallel",)),
    )(x, mk, mr, wqkv, bqkv.reshape(1, 3 * H), ek, evt, lp["wo"],
      lp["bo"].reshape(1, H), lp["ln1_g"].reshape(1, H), lp["ln1_b"].reshape(1, H))

    k = lp["ffn_w1"].shape[0]
    pad = (k - 1) // 2
    F = lp["ffn_w1"].shape[2]
    out = pl.pallas_call(
        functools.partial(_ffn_kernel, ksize=k, pad=pad, eps=1e-5),
        grid=(B,),
        out_shape=jax.ShapeDtypeStruct((B, T, H), jnp.float32),
        in_specs=[pl.BlockSpec((1, T, H), lambda bb: (bb, 0, 0)),
                  pl.BlockSpec((1, T, 1), lambda bb: (bb, 0, 0)),
                  pl.BlockSpec((k, H, F), lambda bb: (0, 0, 0)),
                  pl.BlockSpec((1, F), lambda bb: (0, 0)),
                  pl.BlockSpec((k, F, H), lambda bb: (0, 0, 0)),
                  pl.BlockSpec((1, H), lambda bb: (0, 0)),
                  pl.BlockSpec((1, H), lambda bb: (0, 0)),
                  pl.BlockSpec((1, H), lambda bb: (0, 0))],
        out_specs=pl.BlockSpec((1, T, H), lambda bb: (bb, 0, 0)),
        scratch_shapes=[pltpu.VMEM((T + 2 * pad, H), jnp.float32),
                        pltpu.VMEM((T + 2 * pad, F), jnp.float32)],
        compiler_params=pltpu.CompilerParams(dimension_semantics=("parallel",)),
    )(y, mr, lp["ffn_w1"], lp["ffn_b1"].reshape(1, F), lp["ffn_w2"],
      lp["ffn_b2"].reshape(1, H), lp["ln2_g"].reshape(1, H),
      lp["ln2_b"].reshape(1, H))
    return out


# ------------------------- cross-entropy (tiled) -----------------------------

def _ce_kernel(logits_ref, tgt_ref, wgt_ref, o_ref, *, n_valid):
    @pl.when(pl.program_id(0) == 0)
    def _():
        o_ref[...] = jnp.zeros_like(o_ref)
    logits = logits_ref[...]                               # [TN, D] f32
    m = jnp.max(logits, axis=-1, keepdims=True)
    lse = jnp.log(jnp.sum(jnp.exp(logits - m), axis=-1, keepdims=True)) + m
    col = jax.lax.broadcasted_iota(jnp.int32, logits.shape, 1)
    tl = jnp.sum(jnp.where(col == tgt_ref[...], logits, 0.0),
                 axis=-1, keepdims=True)
    o_ref[...] += jnp.sum((lse - tl) * wgt_ref[...], axis=0, keepdims=True)

    @pl.when(pl.program_id(0) == pl.num_programs(0) - 1)
    def _():
        o_ref[...] = o_ref[...] * (1.0 / n_valid)


def cross_entropy_mean(logits, target, *, block_rows=1024):
    N, D = logits.shape
    tn = min(block_rows, N)
    n_blk = pl.cdiv(N, tn)
    Np = n_blk * tn
    tgt = target.reshape(N, 1).astype(jnp.int32)
    wgt = jnp.ones((N, 1), jnp.float32)
    if Np != N:
        logits = jnp.pad(logits, ((0, Np - N), (0, 0)))
        tgt = jnp.pad(tgt, ((0, Np - N), (0, 0)))
        wgt = jnp.pad(wgt, ((0, Np - N), (0, 0)))
    loss = pl.pallas_call(
        functools.partial(_ce_kernel, n_valid=float(N)),
        grid=(n_blk,),
        out_shape=jax.ShapeDtypeStruct((1, 1), jnp.float32),
        in_specs=[pl.BlockSpec((tn, D), lambda i: (i, 0)),
                  pl.BlockSpec((tn, 1), lambda i: (i, 0)),
                  pl.BlockSpec((tn, 1), lambda i: (i, 0))],
        out_specs=pl.BlockSpec((1, 1), lambda i: (0, 0)),
        compiler_params=pltpu.CompilerParams(dimension_semantics=("arbitrary",)),
    )(logits, tgt, wgt)
    return loss[0, 0]


# ------------------------------ full forward ---------------------------------

def code_predictor_forward(params, x, x_mask, refer, codes, cfg):
    """CodePredictor.forward with infer=False -> scalar cross-entropy loss."""
    B, _, T = x.shape
    H = cfg["hidden_channels"]
    xt = jnp.transpose(x, (0, 2, 1))                        # [B, T, ssl]
    rt = jnp.transpose(refer, (0, 2, 1))                    # [B, T, ssl]
    mask_bt = jnp.transpose(x_mask, (0, 2, 1))[..., 0]      # [B, T]
    mask_rows = mask_bt.reshape(B * T)

    # vq_proj (1x1 conv) with input/output mask fused as a row mask
    h = dense(xt.reshape(B * T, -1), params["vq_w"], params["vq_b"],
              row_mask=mask_rows).reshape(B, T, H)

    # reference (style) encoder -> style vector, broadcast over time
    g = mel_style_encoder(rt, mask_bt, params["ref"], cfg)  # [B, H]
    y = (h + g[:, None, :]) * mask_bt[..., None]            # encoder entry mask

    # transformer encoder (rel-pos MHA + conv FFN), fully fused per layer
    for lp in params["enc"]:
        y = encoder_layer(y, mask_bt, lp, cfg)

    # out_proj (1x1 conv) with mask fused as a row mask
    nq, dims = cfg["n_q"], cfg["dims"]
    o = dense(y.reshape(B * T, H), params["out_w"], params["out_b"],
              row_mask=mask_rows).reshape(B, T, (nq - 1) * dims)

    logits = o.reshape(B, T, nq - 1, dims).transpose(0, 2, 1, 3)   # [B,nq-1,T,dims]
    target = jnp.transpose(codes[1:], (1, 0, 2))                   # [B,nq-1,T]
    return cross_entropy_mean(logits.reshape(-1, dims), target.reshape(-1))
    # TODO(synk): infer=True branch (top-10/top-1 accuracy, argmax code output)
    # not implemented.


# ------------------------------ parameter init -------------------------------

def _linear_params(key, din, dout, scale=0.02):
    kw, kb = jax.random.split(key)
    return (jax.random.normal(kw, (din, dout), jnp.float32) * scale,
            jax.random.normal(kb, (dout,), jnp.float32) * scale)


def _conv_params(key, k, cin, cout, scale=0.02):
    kw, kb = jax.random.split(key)
    return (jax.random.normal(kw, (k, cin, cout), jnp.float32) * scale,
            jax.random.normal(kb, (cout,), jnp.float32) * scale)


def init_params(key, cfg):
    keys = iter(jax.random.split(key, 64))
    H, ssl, sh = cfg["hidden_channels"], cfg["ssl_dim"], cfg["style_hidden"]
    p = {}
    p["vq_w"], p["vq_b"] = _linear_params(next(keys), ssl, H)
    ref = {}
    ref["spec1_w"], ref["spec1_b"] = _linear_params(next(keys), ssl, sh)
    ref["spec2_w"], ref["spec2_b"] = _linear_params(next(keys), sh, sh)
    ref["t1_w"], ref["t1_b"] = _conv_params(next(keys), cfg["style_kernel"], sh, 2 * sh)
    ref["t2_w"], ref["t2_b"] = _conv_params(next(keys), cfg["style_kernel"], sh, 2 * sh)
    for nm in ("q", "k", "v", "o"):
        ref["attn_w" + nm], ref["attn_b" + nm] = _linear_params(next(keys), sh, sh)
    ref["fc_w"], ref["fc_b"] = _linear_params(next(keys), sh, H)
    p["ref"] = ref
    enc = []
    kc = H // cfg["n_heads"]
    for _ in range(cfg["n_layers"]):
        lp = {}
        for nm in ("q", "k", "v", "o"):
            lp["w" + nm], lp["b" + nm] = _linear_params(next(keys), H, H)
        lp["emb_rel_k"] = jax.random.normal(next(keys), (1, 2 * cfg["window_size"] + 1, kc),
                                            jnp.float32) * (kc ** -0.5)
        lp["emb_rel_v"] = jax.random.normal(next(keys), (1, 2 * cfg["window_size"] + 1, kc),
                                            jnp.float32) * (kc ** -0.5)
        lp["ln1_g"], lp["ln1_b"] = jnp.ones((H,), jnp.float32), jnp.zeros((H,), jnp.float32)
        lp["ffn_w1"], lp["ffn_b1"] = _conv_params(next(keys), cfg["kernel_size"], H,
                                                  cfg["filter_channels"])
        lp["ffn_w2"], lp["ffn_b2"] = _conv_params(next(keys), cfg["kernel_size"],
                                                  cfg["filter_channels"], H)
        lp["ln2_g"], lp["ln2_b"] = jnp.ones((H,), jnp.float32), jnp.zeros((H,), jnp.float32)
        enc.append(lp)
    p["enc"] = enc
    p["out_w"], p["out_b"] = _linear_params(next(keys), H, (cfg["n_q"] - 1) * cfg["dims"])
    return p


# ----------------------------------- main ------------------------------------

if __name__ == "__main__":
    cfg = dict(
        hidden_channels=32, filter_channels=64, n_heads=2, n_layers=2,
        kernel_size=3, p_dropout=0.1,           # dropout unused (eval semantics)
        n_q=4, dims=64, ssl_dim=64,
        window_size=4, style_hidden=64, style_kernel=5, style_heads=2,
    )
    B, T = 2, 16
    key = jax.random.PRNGKey(0)
    k1, k2, k3 = jax.random.split(key, 3)
    x = jax.random.normal(k1, (B, cfg["ssl_dim"], T), jnp.float32)
    refer = jax.random.normal(k2, (B, cfg["ssl_dim"], T), jnp.float32)
    lengths = jnp.array([T, T - 4])
    x_mask = (jnp.arange(T)[None, :] < lengths[:, None]).astype(jnp.float32)[:, None, :]
    codes = jax.random.randint(k3, (cfg["n_q"], B, T), 0, cfg["dims"], jnp.int32)

    params = init_params(jax.random.PRNGKey(42), cfg)

    fwd = jax.jit(functools.partial(code_predictor_forward, cfg=cfg))
    loss = fwd(params, x, x_mask, refer, codes)
    jax.block_until_ready(loss)
    assert loss.shape == () and bool(jnp.isfinite(loss))
    print("KERNEL_OK")
</pallas_src>

<mosaic_0001>
module attributes {stable_mosaic.version = 11 : i64} {
  func.func @_dense_kernel(%arg0: i32, %arg1: memref<32x64xf32, #tpu.memory_space<vmem>>, %arg2: memref<64x32xf32, #tpu.memory_space<vmem>>, %arg3: memref<1x32xf32, #tpu.memory_space<vmem>>, %arg4: memref<32x1xf32, #tpu.memory_space<vmem>>, %arg5: memref<32x32xf32, #tpu.memory_space<vmem>>) attributes {dimension_semantics = [#tpu.dimension_semantics<parallel>], iteration_bounds = array<i64: 1>, scalar_prefetch = 0 : i64, scratch_operands = 0 : i64, tpu.core_type = #tpu.core_type<tc>, window_params = [{transform_indices = @transform_0, window_bounds = array<i64: 32, 64>}, {pipeline_mode = #tpu.pipeline_mode<synchronous>, transform_indices = @transform_1, window_bounds = array<i64: 64, 32>}, {pipeline_mode = #tpu.pipeline_mode<synchronous>, transform_indices = @transform_2, window_bounds = array<i64: 1, 32>}, {transform_indices = @transform_3, window_bounds = array<i64: 32, 1>}, {transform_indices = @transform_4, window_bounds = array<i64: 32, 32>}]} {
    %c0 = arith.constant 0 : index
    %c0_0 = arith.constant 0 : index
    %0 = vector.load %arg1[%c0, %c0_0] : memref<32x64xf32, #tpu.memory_space<vmem>>, vector<32x64xf32>
    %1 = arith.truncf %0 : vector<32x64xf32> to vector<32x64xbf16>
    %c0_1 = arith.constant 0 : index
    %c0_2 = arith.constant 0 : index
    %2 = vector.load %arg2[%c0_1, %c0_2] : memref<64x32xf32, #tpu.memory_space<vmem>>, vector<64x32xf32>
    %3 = arith.truncf %2 : vector<64x32xf32> to vector<64x32xbf16>
    %cst = arith.constant dense<0.000000e+00> : vector<32x32xf32>
    %4 = tpu.matmul %1, %3, %cst {dimension_numbers = #tpu.dot_dimension_numbers<[1], [0], [0], [1], [0, 0, 1, 1], [], []>} : vector<32x64xbf16>, vector<64x32xbf16>, vector<32x32xf32> -> vector<32x32xf32>
    %c0_3 = arith.constant 0 : index
    %c0_4 = arith.constant 0 : index
    %5 = vector.load %arg3[%c0_3, %c0_4] : memref<1x32xf32, #tpu.memory_space<vmem>>, vector<1x32xf32>
    %6 = vector.broadcast %5 : vector<1x32xf32> to vector<32x32xf32>
    %7 = arith.addf %4, %6 : vector<32x32xf32>
    %c0_5 = arith.constant 0 : index
    %c0_6 = arith.constant 0 : index
    %8 = vector.load %arg4[%c0_5, %c0_6] : memref<32x1xf32, #tpu.memory_space<vmem>>, vector<32x1xf32>
    %9 = vector.broadcast %8 : vector<32x1xf32> to vector<32x32xf32>
    %10 = arith.mulf %7, %9 : vector<32x32xf32>
    %c0_7 = arith.constant 0 : index
    %c0_8 = arith.constant 0 : index
    %11 = vector.load %arg5[%c0_7, %c0_8] : memref<32x32xf32, #tpu.memory_space<vmem>>, vector<32x32xf32>
    tpu.vector_store %arg5[%c0_7, %c0_8], %10 {strides = array<i32>} : memref<32x32xf32, #tpu.memory_space<vmem>>, vector<32x32xf32>,
    return
  }
  func.func @transform_0(%arg0: i32) -> (i32, i32) {
    %c0_i32 = arith.constant 0 : i32
    %c0_i32_0 = arith.constant 0 : i32
    return %arg0, %c0_i32 : i32, i32
  }
  func.func @transform_1(%arg0: i32) -> (i32, i32) {
    %c0_i32 = arith.constant 0 : i32
    %c0_i32_0 = arith.constant 0 : i32
    %c0_i32_1 = arith.constant 0 : i32
    return %c0_i32, %c0_i32_0 : i32, i32
  }
  func.func @transform_2(%arg0: i32) -> (i32, i32) {
    %c0_i32 = arith.constant 0 : i32
    %c0_i32_0 = arith.constant 0 : i32
    %c0_i32_1 = arith.constant 0 : i32
    return %c0_i32, %c0_i32_0 : i32, i32
  }
  func.func @transform_3(%arg0: i32) -> (i32, i32) {
    %c0_i32 = arith.constant 0 : i32
    %c0_i32_0 = arith.constant 0 : i32
    return %arg0, %c0_i32 : i32, i32
  }
  func.func @transform_4(%arg0: i32) -> (i32, i32) {
    %c0_i32 = arith.constant 0 : i32
    %c0_i32_0 = arith.constant 0 : i32
    return %arg0, %c0_i32 : i32, i32
  }
}

module attributes {stable_mosaic.version = 11 : i64} {
  func.func @_mlp2_kernel(%arg0: i32, %arg1: memref<32x64xf32, #tpu.memory_space<vmem>>, %arg2: memref<64x64xf32, #tpu.memory_space<vmem>>, %arg3: memref<1x64xf32, #tpu.memory_space<vmem>>, %arg4: memref<64x64xf32, #tpu.memory_space<vmem>>, %arg5: memref<1x64xf32, #tpu.memory_space<vmem>>, %arg6: memref<32x64xf32, #tpu.memory_space<vmem>>) attributes {dimension_semantics = [#tpu.dimension_semantics<parallel>], iteration_bounds = array<i64: 1>, scalar_prefetch = 0 : i64, scratch_operands = 0 : i64, tpu.core_type = #tpu.core_type<tc>, window_params = [{transform_indices = @transform_0, window_bounds = array<i64: 32, 64>}, {pipeline_mode = #tpu.pipeline_mode<synchronous>, transform_indices = @transform_1, window_bounds = array<i64: 64, 64>}, {pipeline_mode = #tpu.pipeline_mode<synchronous>, transform_indices = @transform_2, window_bounds = array<i64: 1, 64>}, {pipeline_mode = #tpu.pipeline_mode<synchronous>, transform_indices = @transform_3, window_bounds = array<i64: 64, 64>}, {pipeline_mode = #tpu.pipeline_mode<synchronous>, transform_indices = @transform_4, window_bounds = array<i64: 1, 64>}, {transform_indices = @transform_5, window_bounds = array<i64: 32, 64>}]} {
    %c0 = arith.constant 0 : index
    %c0_0 = arith.constant 0 : index
    %0 = vector.load %arg1[%c0, %c0_0] : memref<32x64xf32, #tpu.memory_space<vmem>>, vector<32x64xf32>
    %1 = arith.truncf %0 : vector<32x64xf32> to vector<32x64xbf16>
    %c0_1 = arith.constant 0 : index
    %c0_2 = arith.constant 0 : index
    %2 = vector.load %arg2[%c0_1, %c0_2] : memref<64x64xf32, #tpu.memory_space<vmem>>, vector<64x64xf32>
    %3 = arith.truncf %2 : vector<64x64xf32> to vector<64x64xbf16>
    %cst = arith.constant dense<0.000000e+00> : vector<32x64xf32>
    %4 = tpu.matmul %1, %3, %cst {dimension_numbers = #tpu.dot_dimension_numbers<[1], [0], [0], [1], [0, 0, 1, 1], [], []>} : vector<32x64xbf16>, vector<64x64xbf16>, vector<32x64xf32> -> vector<32x64xf32>
    %c0_3 = arith.constant 0 : index
    %c0_4 = arith.constant 0 : index
    %5 = vector.load %arg3[%c0_3, %c0_4] : memref<1x64xf32, #tpu.memory_space<vmem>>, vector<1x64xf32>
    %6 = vector.broadcast %5 : vector<1x64xf32> to vector<32x64xf32>
    %7 = arith.addf %4, %6 : vector<32x64xf32>
    %cst_5 = arith.constant 0.000000e+00 : f32
    %8 = vector.broadcast %cst_5 : f32 to vector<32x64xf32>
    %9 = arith.maximumf %7, %8 : vector<32x64xf32>
    %10 = math.absf %7 : vector<32x64xf32>
    %cst_6 = arith.constant 0.000000e+00 : f32
    %11 = vector.broadcast %cst_6 : f32 to vector<32x64xf32>
    %12 = arith.subf %11, %10 : vector<32x64xf32>
    %13 = math.exp %12 : vector<32x64xf32>
    %14 = math.log1p %13 : vector<32x64xf32>
    %15 = arith.addf %9, %14 : vector<32x64xf32>
    %16 = math.tanh %15 : vector<32x64xf32>
    %17 = arith.mulf %7, %16 : vector<32x64xf32>
    %18 = arith.truncf %17 : vector<32x64xf32> to vector<32x64xbf16>
    %c0_7 = arith.constant 0 : index
    %c0_8 = arith.constant 0 : index
    %19 = vector.load %arg4[%c0_7, %c0_8] : memref<64x64xf32, #tpu.memory_space<vmem>>, vector<64x64xf32>
    %20 = arith.truncf %19 : vector<64x64xf32> to vector<64x64xbf16>
    %cst_9 = arith.constant dense<0.000000e+00> : vector<32x64xf32>
    %21 = tpu.matmul %18, %20, %cst_9 {dimension_numbers = #tpu.dot_dimension_numbers<[1], [0], [0], [1], [0, 0, 1, 1], [], []>} : vector<32x64xbf16>, vector<64x64xbf16>, vector<32x64xf32> -> vector<32x64xf32>
    %c0_10 = arith.constant 0 : index
    %c0_11 = arith.constant 0 : index
    %22 = vector.load %arg5[%c0_10, %c0_11] : memref<1x64xf32, #tpu.memory_space<vmem>>, vector<1x64xf32>
    %23 = vector.broadcast %22 : vector<1x64xf32> to vector<32x64xf32>
    %24 = arith.addf %21, %23 : vector<32x64xf32>
    %cst_12 = arith.constant 0.000000e+00 : f32
    %25 = vector.broadcast %cst_12 : f32 to vector<32x64xf32>
    %26 = arith.maximumf %24, %25 : vector<32x64xf32>
    %27 = math.absf %24 : vector<32x64xf32>
    %cst_13 = arith.constant 0.000000e+00 : f32
    %28 = vector.broadcast %cst_13 : f32 to vector<32x64xf32>
    %29 = arith.subf %28, %27 : vector<32x64xf32>
    %30 = math.exp %29 : vector<32x64xf32>
    %31 = math.log1p %30 : vector<32x64xf32>
    %32 = arith.addf %26, %31 : vector<32x64xf32>
    %33 = math.tanh %32 : vector<32x64xf32>
    %34 = arith.mulf %24, %33 : vector<32x64xf32>
    %c0_14 = arith.constant 0 : index
    %c0_15 = arith.constant 0 : index
    %35 = vector.load %arg6[%c0_14, %c0_15] : memref<32x64xf32, #tpu.memory_space<vmem>>, vector<32x64xf32>
    tpu.vector_store %arg6[%c0_14, %c0_15], %34 {strides = array<i32>} : memref<32x64xf32, #tpu.memory_space<vmem>>, vector<32x64xf32>,
    return
  }
  func.func @transform_0(%arg0: i32) -> (i32, i32) {
    %c0_i32 = arith.constant 0 : i32
    %c0_i32_0 = arith.constant 0 : i32
    return %arg0, %c0_i32 : i32, i32
  }
  func.func @transform_1(%arg0: i32) -> (i32, i32) {
    %c0_i32 = arith.constant 0 : i32
    %c0_i32_0 = arith.constant 0 : i32
    %c0_i32_1 = arith.constant 0 : i32
    return %c0_i32, %c0_i32_0 : i32, i32
  }
  func.func @transform_2(%arg0: i32) -> (i32, i32) {
    %c0_i32 = arith.constant 0 : i32
    %c0_i32_0 = arith.constant 0 : i32
    %c0_i32_1 = arith.constant 0 : i32
    return %c0_i32, %c0_i32_0 : i32, i32
  }
  func.func @transform_3(%arg0: i32) -> (i32, i32) {
    %c0_i32 = arith.constant 0 : i32
    %c0_i32_0 = arith.constant 0 : i32
    %c0_i32_1 = arith.constant 0 : i32
    return %c0_i32, %c0_i32_0 : i32, i32
  }
  func.func @transform_4(%arg0: i32) -> (i32, i32) {
    %c0_i32 = arith.constant 0 : i32
    %c0_i32_0 = arith.constant 0 : i32
    %c0_i32_1 = arith.constant 0 : i32
    return %c0_i32, %c0_i32_0 : i32, i32
  }
  func.func @transform_5(%arg0: i32) -> (i32, i32) {
    %c0_i32 = arith.constant 0 : i32
    %c0_i32_0 = arith.constant 0 : i32
    return %arg0, %c0_i32 : i32, i32
  }
}

module attributes {stable_mosaic.version = 11 : i64} {
  func.func @_conv_glu_kernel(%arg0: i32, %arg1: memref<1x16x64xf32, #tpu.memory_space<vmem>>, %arg2: memref<5x64x128xf32, #tpu.memory_space<vmem>>, %arg3: memref<1x128xf32, #tpu.memory_space<vmem>>, %arg4: memref<1x16x64xf32, #tpu.memory_space<vmem>>, %arg5: memref<20x64xf32, #tpu.memory_space<vmem>>) attributes {dimension_semantics = [#tpu.dimension_semantics<parallel>], iteration_bounds = array<i64: 2>, scalar_prefetch = 0 : i64, scratch_operands = 1 : i64, tpu.core_type = #tpu.core_type<tc>, window_params = [{transform_indices = @transform_0, window_bounds = array<i64: 1, 16, 64>}, {pipeline_mode = #tpu.pipeline_mode<synchronous>, transform_indices = @transform_1, window_bounds = array<i64: 5, 64, 128>}, {pipeline_mode = #tpu.pipeline_mode<synchronous>, transform_indices = @transform_2, window_bounds = array<i64: 1, 128>}, {transform_indices = @transform_3, window_bounds = array<i64: 1, 16, 64>}]} {
    %c0 = arith.constant 0 : index
    %c0_0 = arith.constant 0 : index
    %c0_1 = arith.constant 0 : index
    %0 = vector.load %arg1[%c0, %c0_0, %c0_1] : memref<1x16x64xf32, #tpu.memory_space<vmem>>, vector<1x16x64xf32>
    %1 = vector.shape_cast %0 : vector<1x16x64xf32> to vector<16x64xf32>
    %cst = arith.constant 0.000000e+00 : f32
    %2 = vector.broadcast %cst : f32 to vector<20x64xf32>
    %c0_2 = arith.constant 0 : index
    %c0_3 = arith.constant 0 : index
    %3 = vector.load %arg5[%c0_2, %c0_3] : memref<20x64xf32, #tpu.memory_space<vmem>>, vector<20x64xf32>
    tpu.vector_store %arg5[%c0_2, %c0_3], %2 {strides = array<i32>} : memref<20x64xf32, #tpu.memory_space<vmem>>, vector<20x64xf32>,
    %c2 = arith.constant 2 : index
    %c0_4 = arith.constant 0 : index
    %4 = vector.load %arg5[%c2, %c0_4] : memref<20x64xf32, #tpu.memory_space<vmem>>, vector<16x64xf32>
    tpu.vector_store %arg5[%c2, %c0_4], %1 {strides = array<i32>} : memref<20x64xf32, #tpu.memory_space<vmem>>, vector<16x64xf32>,
    %cst_5 = arith.constant 0.000000e+00 : f32
    %5 = vector.broadcast %cst_5 : f32 to vector<16x128xf32>
    %c0_6 = arith.constant 0 : index
    %c0_7 = arith.constant 0 : index
    %6 = vector.load %arg5[%c0_6, %c0_7] : memref<20x64xf32, #tpu.memory_space<vmem>>, vector<16x64xf32>
    %7 = arith.truncf %6 : vector<16x64xf32> to vector<16x64xbf16>
    %c0_8 = arith.constant 0 : index
    %c0_9 = arith.constant 0 : index
    %c0_10 = arith.constant 0 : index
    %8 = vector.load %arg2[%c0_8, %c0_9, %c0_10] : memref<5x64x128xf32, #tpu.memory_space<vmem>>, vector<1x64x128xf32>
    %9 = vector.shape_cast %8 : vector<1x64x128xf32> to vector<64x128xf32>
    %10 = arith.truncf %9 : vector<64x128xf32> to vector<64x128xbf16>
    %cst_11 = arith.constant dense<0.000000e+00> : vector<16x128xf32>
    %11 = tpu.matmul %7, %10, %cst_11 {dimension_numbers = #tpu.dot_dimension_numbers<[1], [0], [0], [1], [0, 0, 1, 1], [], []>} : vector<16x64xbf16>, vector<64x128xbf16>, vector<16x128xf32> -> vector<16x128xf32>
    %12 = arith.addf %5, %11 : vector<16x128xf32>
    %c1 = arith.constant 1 : index
    %c0_12 = arith.constant 0 : index
    %13 = vector.load %arg5[%c1, %c0_12] : memref<20x64xf32, #tpu.memory_space<vmem>>, vector<16x64xf32>
    %14 = arith.truncf %13 : vector<16x64xf32> to vector<16x64xbf16>
    %c1_13 = arith.constant 1 : index
    %c0_14 = arith.constant 0 : index
    %c0_15 = arith.constant 0 : index
    %15 = vector.load %arg2[%c1_13, %c0_14, %c0_15] : memref<5x64x128xf32, #tpu.memory_space<vmem>>, vector<1x64x128xf32>
    %16 = vector.shape_cast %15 : vector<1x64x128xf32> to vector<64x128xf32>
    %17 = arith.truncf %16 : vector<64x128xf32> to vector<64x128xbf16>
    %cst_16 = arith.constant dense<0.000000e+00> : vector<16x128xf32>
    %18 = tpu.matmul %14, %17, %cst_16 {dimension_numbers = #tpu.dot_dimension_numbers<[1], [0], [0], [1], [0, 0, 1, 1], [], []>} : vector<16x64xbf16>, vector<64x128xbf16>, vector<16x128xf32> -> vector<16x128xf32>
    %19 = arith.addf %12, %18 : vector<16x128xf32>
    %c2_17 = arith.constant 2 : index
    %c0_18 = arith.constant 0 : index
    %20 = vector.load %arg5[%c2_17, %c0_18] : memref<20x64xf32, #tpu.memory_space<vmem>>, vector<16x64xf32>
    %21 = arith.truncf %20 : vector<16x64xf32> to vector<16x64xbf16>
    %c2_19 = arith.constant 2 : index
    %c0_20 = arith.constant 0 : index
    %c0_21 = arith.constant 0 : index
    %22 = vector.load %arg2[%c2_19, %c0_20, %c0_21] : memref<5x64x128xf32, #tpu.memory_space<vmem>>, vector<1x64x128xf32>
    %23 = vector.shape_cast %22 : vector<1x64x128xf32> to vector<64x128xf32>
    %24 = arith.truncf %23 : vector<64x128xf32> to vector<64x128xbf16>
    %cst_22 = arith.constant dense<0.000000e+00> : vector<16x128xf32>
    %25 = tpu.matmul %21, %24, %cst_22 {dimension_numbers = #tpu.dot_dimension_numbers<[1], [0], [0], [1], [0, 0, 1, 1], [], []>} : vector<16x64xbf16>, vector<64x128xbf16>, vector<16x128xf32> -> vector<16x128xf32>
    %26 = arith.addf %19, %25 : vector<16x128xf32>
    %c3 = arith.constant 3 : index
    %c0_23 = arith.constant 0 : index
    %27 = vector.load %arg5[%c3, %c0_23] : memref<20x64xf32, #tpu.memory_space<vmem>>, vector<16x64xf32>
    %28 = arith.truncf %27 : vector<16x64xf32> to vector<16x64xbf16>
    %c3_24 = arith.constant 3 : index
    %c0_25 = arith.constant 0 : index
    %c0_26 = arith.constant 0 : index
    %29 = vector.load %arg2[%c3_24, %c0_25, %c0_26] : memref<5x64x128xf32, #tpu.memory_space<vmem>>, vector<1x64x128xf32>
    %30 = vector.shape_cast %29 : vector<1x64x128xf32> to vector<64x128xf32>
    %31 = arith.truncf %30 : vector<64x128xf32> to vector<64x128xbf16>
    %cst_27 = arith.constant dense<0.000000e+00> : vector<16x128xf32>
    %32 = tpu.matmul %28, %31, %cst_27 {dimension_numbers = #tpu.dot_dimension_numbers<[1], [0], [0], [1], [0, 0, 1, 1], [], []>} : vector<16x64xbf16>, vector<64x128xbf16>, vector<16x128xf32> -> vector<16x128xf32>
    %33 = arith.addf %26, %32 : vector<16x128xf32>
    %c4 = arith.constant 4 : index
    %c0_28 = arith.constant 0 : index
    %34 = vector.load %arg5[%c4, %c0_28] : memref<20x64xf32, #tpu.memory_space<vmem>>, vector<16x64xf32>
    %35 = arith.truncf %34 : vector<16x64xf32> to vector<16x64xbf16>
    %c4_29 = arith.constant 4 : index
    %c0_30 = arith.constant 0 : index
    %c0_31 = arith.constant 0 : index
    %36 = vector.load %arg2[%c4_29, %c0_30, %c0_31] : memref<5x64x128xf32, #tpu.memory_space<vmem>>, vector<1x64x128xf32>
    %37 = vector.shape_cast %36 : vector<1x64x128xf32> to vector<64x128xf32>
    %38 = arith.truncf %37 : vector<64x128xf32> to vector<64x128xbf16>
    %cst_32 = arith.constant dense<0.000000e+00> : vector<16x128xf32>
    %39 = tpu.matmul %35, %38, %cst_32 {dimension_numbers = #tpu.dot_dimension_numbers<[1], [0], [0], [1], [0, 0, 1, 1], [], []>} : vector<16x64xbf16>, vector<64x128xbf16>, vector<16x128xf32> -> vector<16x128xf32>
    %40 = arith.addf %33, %39 : vector<16x128xf32>
    %c0_33 = arith.constant 0 : index
    %c0_34 = arith.constant 0 : index
    %41 = vector.load %arg3[%c0_33, %c0_34] : memref<1x128xf32, #tpu.memory_space<vmem>>, vector<1x128xf32>
    %42 = vector.broadcast %41 : vector<1x128xf32> to vector<16x128xf32>
    %43 = arith.addf %40, %42 : vector<16x128xf32>
    %44 = vector.extract_strided_slice %43 {offsets = [0, 0], sizes = [16, 64], strides = [1, 1]} : vector<16x128xf32> to vector<16x64xf32>
    %45 = vector.extract_strided_slice %43 {offsets = [0, 64], sizes = [16, 64], strides = [1, 1]} : vector<16x128xf32> to vector<16x64xf32>
    %cst_35 = arith.constant 0.000000e+00 : f32
    %46 = vector.broadcast %cst_35 : f32 to vector<16x64xf32>
    %47 = arith.subf %46, %45 : vector<16x64xf32>
    %48 = math.exp %47 : vector<16x64xf32>
    %cst_36 = arith.constant 1.000000e+00 : f32
    %49 = vector.broadcast %cst_36 : f32 to vector<16x64xf32>
    %50 = arith.addf %49, %48 : vector<16x64xf32>
    %cst_37 = arith.constant 1.000000e+00 : f32
    %51 = vector.broadcast %cst_37 : f32 to vector<16x64xf32>
    %52 = arith.divf %51, %50 : vector<16x64xf32>
    %53 = arith.mulf %44, %52 : vector<16x64xf32>
    %54 = arith.addf %1, %53 : vector<16x64xf32>
    %c0_38 = arith.constant 0 : index
    %c0_39 = arith.constant 0 : index
    %c0_40 = arith.constant 0 : index
    %55 = vector.load %arg4[%c0_38, %c0_39, %c0_40] : memref<1x16x64xf32, #tpu.memory_space<vmem>>, vector<1x16x64xf32>
    %56 = vector.shape_cast %55 : vector<1x16x64xf32> to vector<16x64xf32>
    %57 = vector.shape_cast %54 : vector<16x64xf32> to vector<1x16x64xf32>
    tpu.vector_store %arg4[%c0_38, %c0_39, %c0_40], %57 {strides = array<i32>} : memref<1x16x64xf32, #tpu.memory_space<vmem>>, vector<1x16x64xf32>,
    return
  }
  func.func @transform_0(%arg0: i32) -> (i32, i32, i32) {
    %c0_i32 = arith.constant 0 : i32
    %c0_i32_0 = arith.constant 0 : i32
    %c0_i32_1 = arith.constant 0 : i32
    return %arg0, %c0_i32, %c0_i32_0 : i32, i32, i32
  }
  func.func @transform_1(%arg0: i32) -> (i32, i32, i32) {
    %c0_i32 = arith.constant 0 : i32
    %c0_i32_0 = arith.constant 0 : i32
    %c0_i32_1 = arith.constant 0 : i32
    %c0_i32_2 = arith.constant 0 : i32
    return %c0_i32, %c0_i32_0, %c0_i32_1 : i32, i32, i32
  }
  func.func @transform_2(%arg0: i32) -> (i32, i32) {
    %c0_i32 = arith.constant 0 : i32
    %c0_i32_0 = arith.constant 0 : i32
    %c0_i32_1 = arith.constant 0 : i32
    return %c0_i32, %c0_i32_0 : i32, i32
  }
  func.func @transform_3(%arg0: i32) -> (i32, i32, i32) {
    %c0_i32 = arith.constant 0 : i32
    %c0_i32_0 = arith.constant 0 : i32
    %c0_i32_1 = arith.constant 0 : i32
    return %arg0, %c0_i32, %c0_i32_0 : i32, i32, i32
  }
}

module attributes {stable_mosaic.version = 11 : i64} {
  func.func @_style_attn_kernel(%arg0: i32, %arg1: memref<1x16x64xf32, #tpu.memory_space<vmem>>, %arg2: memref<1x1x16xf32, #tpu.memory_space<vmem>>, %arg3: memref<1x16x1xf32, #tpu.memory_space<vmem>>, %arg4: memref<64x192xf32, #tpu.memory_space<vmem>>, %arg5: memref<1x192xf32, #tpu.memory_space<vmem>>, %arg6: memref<64x64xf32, #tpu.memory_space<vmem>>, %arg7: memref<1x64xf32, #tpu.memory_space<vmem>>, %arg8: memref<64x32xf32, #tpu.memory_space<vmem>>, %arg9: memref<1x32xf32, #tpu.memory_space<vmem>>, %arg10: memref<1x1x32xf32, #tpu.memory_space<vmem>>) attributes {dimension_semantics = [#tpu.dimension_semantics<parallel>], iteration_bounds = array<i64: 2>, scalar_prefetch = 0 : i64, scratch_operands = 0 : i64, tpu.core_type = #tpu.core_type<tc>, window_params = [{transform_indices = @transform_0, window_bounds = array<i64: 1, 16, 64>}, {transform_indices = @transform_1, window_bounds = array<i64: 1, 1, 16>}, {transform_indices = @transform_2, window_bounds = array<i64: 1, 16, 1>}, {pipeline_mode = #tpu.pipeline_mode<synchronous>, transform_indices = @transform_3, window_bounds = array<i64: 64, 192>}, {pipeline_mode = #tpu.pipeline_mode<synchronous>, transform_indices = @transform_4, window_bounds = array<i64: 1, 192>}, {pipeline_mode = #tpu.pipeline_mode<synchronous>, transform_indices = @transform_5, window_bounds = array<i64: 64, 64>}, {pipeline_mode = #tpu.pipeline_mode<synchronous>, transform_indices = @transform_6, window_bounds = array<i64: 1, 64>}, {pipeline_mode = #tpu.pipeline_mode<synchronous>, transform_indices = @transform_7, window_bounds = array<i64: 64, 32>}, {pipeline_mode = #tpu.pipeline_mode<synchronous>, transform_indices = @transform_8, window_bounds = array<i64: 1, 32>}, {transform_indices = @transform_9, window_bounds = array<i64: 1, 1, 32>}]} {
    %c0 = arith.constant 0 : index
    %c0_0 = arith.constant 0 : index
    %c0_1 = arith.constant 0 : index
    %0 = vector.load %arg3[%c0, %c0_0, %c0_1] : memref<1x16x1xf32, #tpu.memory_space<vmem>>, vector<1x16x1xf32>
    %1 = vector.shape_cast %0 : vector<1x16x1xf32> to vector<16x1xf32>
    %c0_2 = arith.constant 0 : index
    %c0_3 = arith.constant 0 : index
    %c0_4 = arith.constant 0 : index
    %2 = vector.load %arg1[%c0_2, %c0_3, %c0_4] : memref<1x16x64xf32, #tpu.memory_space<vmem>>, vector<1x16x64xf32>
    %3 = vector.shape_cast %2 : vector<1x16x64xf32> to vector<16x64xf32>
    %4 = vector.broadcast %1 : vector<16x1xf32> to vector<16x64xf32>
    %5 = arith.mulf %3, %4 : vector<16x64xf32>
    %6 = arith.truncf %5 : vector<16x64xf32> to vector<16x64xbf16>
    %c0_5 = arith.constant 0 : index
    %c0_6 = arith.constant 0 : index
    %7 = vector.load %arg4[%c0_5, %c0_6] : memref<64x192xf32, #tpu.memory_space<vmem>>, vector<64x192xf32>
    %8 = arith.truncf %7 : vector<64x192xf32> to vector<64x192xbf16>
    %cst = arith.constant dense<0.000000e+00> : vector<16x192xf32>
    %9 = tpu.matmul %6, %8, %cst {dimension_numbers = #tpu.dot_dimension_numbers<[1], [0], [0], [1], [0, 0, 1, 1], [], []>} : vector<16x64xbf16>, vector<64x192xbf16>, vector<16x192xf32> -> vector<16x192xf32>
    %c0_7 = arith.constant 0 : index
    %c0_8 = arith.constant 0 : index
    %10 = vector.load %arg5[%c0_7, %c0_8] : memref<1x192xf32, #tpu.memory_space<vmem>>, vector<1x192xf32>
    %11 = vector.broadcast %10 : vector<1x192xf32> to vector<16x192xf32>
    %12 = arith.addf %9, %11 : vector<16x192xf32>
    %c0_9 = arith.constant 0 : index
    %c0_10 = arith.constant 0 : index
    %c0_11 = arith.constant 0 : index
    %13 = vector.load %arg2[%c0_9, %c0_10, %c0_11] : memref<1x1x16xf32, #tpu.memory_space<vmem>>, vector<1x1x16xf32>
    %14 = vector.shape_cast %13 : vector<1x1x16xf32> to vector<1x16xf32>
    %cst_12 = arith.constant 0.000000e+00 : f32
    %15 = vector.broadcast %cst_12 : f32 to vector<1x16xf32>
    %16 = arith.cmpf ogt, %14, %15 : vector<1x16xf32>
    %c0_13 = arith.constant 0 : index
    %c0_14 = arith.constant 0 : index
    %17 = vector.load %arg6[%c0_13, %c0_14] : memref<64x64xf32, #tpu.memory_space<vmem>>, vector<64x64xf32>
    %c0_15 = arith.constant 0 : index
    %c0_16 = arith.constant 0 : index
    %18 = vector.load %arg7[%c0_15, %c0_16] : memref<1x64xf32, #tpu.memory_space<vmem>>, vector<1x64xf32>
    %19 = vector.broadcast %18 : vector<1x64xf32> to vector<16x64xf32>
    %20 = arith.addf %5, %19 : vector<16x64xf32>
    %21 = vector.extract_strided_slice %12 {offsets = [0, 0], sizes = [16, 32], strides = [1, 1]} : vector<16x192xf32> to vector<16x32xf32>
    %cst_17 = arith.constant 1.250000e-01 : f32
    %22 = vector.broadcast %cst_17 : f32 to vector<16x32xf32>
    %23 = arith.mulf %21, %22 : vector<16x32xf32>
    %24 = vector.extract_strided_slice %12 {offsets = [0, 64], sizes = [16, 32], strides = [1, 1]} : vector<16x192xf32> to vector<16x32xf32>
    %25 = vector.extract_strided_slice %12 {offsets = [0, 128], sizes = [16, 32], strides = [1, 1]} : vector<16x192xf32> to vector<16x32xf32>
    %26 = arith.truncf %23 : vector<16x32xf32> to vector<16x32xbf16>
    %27 = arith.truncf %24 : vector<16x32xf32> to vector<16x32xbf16>
    %cst_18 = arith.constant dense<0.000000e+00> : vector<16x16xf32>
    %28 = tpu.matmul %26, %27, %cst_18 {dimension_numbers = #tpu.dot_dimension_numbers<[1], [1], [0], [0], [0, 0, 1, 0], [], []>} : vector<16x32xbf16>, vector<16x32xbf16>, vector<16x16xf32> -> vector<16x16xf32>
    %cst_19 = arith.constant -1.000000e+30 : f32
    %29 = vector.shape_cast %16 : vector<1x16xi1> to vector<1x16xi1>
    %30 = vector.broadcast %29 : vector<1x16xi1> to vector<16x16xi1>
    %31 = vector.broadcast %cst_19 : f32 to vector<16x16xf32>
    %32 = arith.select %30, %28, %31 : vector<16x16xi1>, vector<16x16xf32>
    %cst_20 = arith.constant dense<0xFF800000> : vector<16xf32>
    %33 = vector.multi_reduction <maximumf>, %32, %cst_20 [1] : vector<16x16xf32> to vector<16xf32>
    %34 = vector.shape_cast %33 : vector<16xf32> to vector<16x1xf32>
    %35 = vector.broadcast %34 : vector<16x1xf32> to vector<16x16xf32>
    %36 = arith.subf %32, %35 : vector<16x16xf32>
    %37 = math.exp %36 : vector<16x16xf32>
    %cst_21 = arith.constant dense<0.000000e+00> : vector<16xf32>
    %38 = vector.multi_reduction <add>, %37, %cst_21 [1] : vector<16x16xf32> to vector<16xf32>
    %39 = vector.shape_cast %38 : vector<16xf32> to vector<16x1xf32>
    %40 = tpu.reciprocal %39 {approx = true} : vector<16x1xf32> -> vector<16x1xf32>
    %41 = vector.broadcast %40 : vector<16x1xf32> to vector<16x16xf32>
    %42 = arith.mulf %37, %41 : vector<16x16xf32>
    %43 = arith.truncf %42 : vector<16x16xf32> to vector<16x16xbf16>
    %44 = arith.truncf %25 : vector<16x32xf32> to vector<16x32xbf16>
    %cst_22 = arith.constant dense<0.000000e+00> : vector<16x32xf32>
    %45 = tpu.matmul %43, %44, %cst_22 {dimension_numbers = #tpu.dot_dimension_numbers<[1], [0], [0], [1], [0, 0, 1, 1], [], []>} : vector<16x16xbf16>, vector<16x32xbf16>, vector<16x32xf32> -> vector<16x32xf32>
    %46 = arith.truncf %45 : vector<16x32xf32> to vector<16x32xbf16>
    %47 = vector.extract_strided_slice %17 {offsets = [0, 0], sizes = [32, 64], strides = [1, 1]} : vector<64x64xf32> to vector<32x64xf32>
    %48 = arith.truncf %47 : vector<32x64xf32> to vector<32x64xbf16>
    %cst_23 = arith.constant dense<0.000000e+00> : vector<16x64xf32>
    %49 = tpu.matmul %46, %48, %cst_23 {dimension_numbers = #tpu.dot_dimension_numbers<[1], [0], [0], [1], [0, 0, 1, 1], [], []>} : vector<16x32xbf16>, vector<32x64xbf16>, vector<16x64xf32> -> vector<16x64xf32>
    %50 = arith.addf %20, %49 : vector<16x64xf32>
    %51 = vector.extract_strided_slice %12 {offsets = [0, 32], sizes = [16, 32], strides = [1, 1]} : vector<16x192xf32> to vector<16x32xf32>
    %cst_24 = arith.constant 1.250000e-01 : f32
    %52 = vector.broadcast %cst_24 : f32 to vector<16x32xf32>
    %53 = arith.mulf %51, %52 : vector<16x32xf32>
    %54 = vector.extract_strided_slice %12 {offsets = [0, 96], sizes = [16, 32], strides = [1, 1]} : vector<16x192xf32> to vector<16x32xf32>
    %55 = vector.extract_strided_slice %12 {offsets = [0, 160], sizes = [16, 32], strides = [1, 1]} : vector<16x192xf32> to vector<16x32xf32>
    %56 = arith.truncf %53 : vector<16x32xf32> to vector<16x32xbf16>
    %57 = arith.truncf %54 : vector<16x32xf32> to vector<16x32xbf16>
    %cst_25 = arith.constant dense<0.000000e+00> : vector<16x16xf32>
    %58 = tpu.matmul %56, %57, %cst_25 {dimension_numbers = #tpu.dot_dimension_numbers<[1], [1], [0], [0], [0, 0, 1, 0], [], []>} : vector<16x32xbf16>, vector<16x32xbf16>, vector<16x16xf32> -> vector<16x16xf32>
    %cst_26 = arith.constant -1.000000e+30 : f32
    %59 = vector.shape_cast %16 : vector<1x16xi1> to vector<1x16xi1>
    %60 = vector.broadcast %59 : vector<1x16xi1> to vector<16x16xi1>
    %61 = vector.broadcast %cst_26 : f32 to vector<16x16xf32>
    %62 = arith.select %60, %58, %61 : vector<16x16xi1>, vector<16x16xf32>
    %cst_27 = arith.constant dense<0xFF800000> : vector<16xf32>
    %63 = vector.multi_reduction <maximumf>, %62, %cst_27 [1] : vector<16x16xf32> to vector<16xf32>
    %64 = vector.shape_cast %63 : vector<16xf32> to vector<16x1xf32>
    %65 = vector.broadcast %64 : vector<16x1xf32> to vector<16x16xf32>
    %66 = arith.subf %62, %65 : vector<16x16xf32>
    %67 = math.exp %66 : vector<16x16xf32>
    %cst_28 = arith.constant dense<0.000000e+00> : vector<16xf32>
    %68 = vector.multi_reduction <add>, %67, %cst_28 [1] : vector<16x16xf32> to vector<16xf32>
    %69 = vector.shape_cast %68 : vector<16xf32> to vector<16x1xf32>
    %70 = tpu.reciprocal %69 {approx = true} : vector<16x1xf32> -> vector<16x1xf32>
    %71 = vector.broadcast %70 : vector<16x1xf32> to vector<16x16xf32>
    %72 = arith.mulf %67, %71 : vector<16x16xf32>
    %73 = arith.truncf %72 : vector<16x16xf32> to vector<16x16xbf16>
    %74 = arith.truncf %55 : vector<16x32xf32> to vector<16x32xbf16>
    %cst_29 = arith.constant dense<0.000000e+00> : vector<16x32xf32>
    %75 = tpu.matmul %73, %74, %cst_29 {dimension_numbers = #tpu.dot_dimension_numbers<[1], [0], [0], [1], [0, 0, 1, 1], [], []>} : vector<16x16xbf16>, vector<16x32xbf16>, vector<16x32xf32> -> vector<16x32xf32>
    %76 = arith.truncf %75 : vector<16x32xf32> to vector<16x32xbf16>
    %77 = vector.extract_strided_slice %17 {offsets = [32, 0], sizes = [32, 64], strides = [1, 1]} : vector<64x64xf32> to vector<32x64xf32>
    %78 = arith.truncf %77 : vector<32x64xf32> to vector<32x64xbf16>
    %cst_30 = arith.constant dense<0.000000e+00> : vector<16x64xf32>
    %79 = tpu.matmul %76, %78, %cst_30 {dimension_numbers = #tpu.dot_dimension_numbers<[1], [0], [0], [1], [0, 0, 1, 1], [], []>} : vector<16x32xbf16>, vector<32x64xbf16>, vector<16x64xf32> -> vector<16x64xf32>
    %80 = arith.addf %50, %79 : vector<16x64xf32>
    %81 = arith.truncf %80 : vector<16x64xf32> to vector<16x64xbf16>
    %c0_31 = arith.constant 0 : index
    %c0_32 = arith.constant 0 : index
    %82 = vector.load %arg8[%c0_31, %c0_32] : memref<64x32xf32, #tpu.memory_space<vmem>>, vector<64x32xf32>
    %83 = arith.truncf %82 : vector<64x32xf32> to vector<64x32xbf16>
    %cst_33 = arith.constant dense<0.000000e+00> : vector<16x32xf32>
    %84 = tpu.matmul %81, %83, %cst_33 {dimension_numbers = #tpu.dot_dimension_numbers<[1], [0], [0], [1], [0, 0, 1, 1], [], []>} : vector<16x64xbf16>, vector<64x32xbf16>, vector<16x32xf32> -> vector<16x32xf32>
    %c0_34 = arith.constant 0 : index
    %c0_35 = arith.constant 0 : index
    %85 = vector.load %arg9[%c0_34, %c0_35] : memref<1x32xf32, #tpu.memory_space<vmem>>, vector<1x32xf32>
    %86 = vector.broadcast %85 : vector<1x32xf32> to vector<16x32xf32>
    %87 = arith.addf %84, %86 : vector<16x32xf32>
    %cst_36 = arith.constant dense<0.000000e+00> : vector<1xf32>
    %88 = vector.multi_reduction <add>, %1, %cst_36 [0] : vector<16x1xf32> to vector<1xf32>
    %89 = vector.shape_cast %88 : vector<1xf32> to vector<1x1xf32>
    %90 = vector.broadcast %1 : vector<16x1xf32> to vector<16x32xf32>
    %91 = arith.mulf %87, %90 : vector<16x32xf32>
    %cst_37 = arith.constant dense<0.000000e+00> : vector<32xf32>
    %92 = vector.multi_reduction <add>, %91, %cst_37 [0] : vector<16x32xf32> to vector<32xf32>
    %93 = vector.shape_cast %92 : vector<32xf32> to vector<1x32xf32>
    %94 = vector.broadcast %89 : vector<1x1xf32> to vector<1x32xf32>
    %95 = arith.divf %93, %94 : vector<1x32xf32>
    %c0_38 = arith.constant 0 : index
    %c0_39 = arith.constant 0 : index
    %c0_40 = arith.constant 0 : index
    %96 = vector.load %arg10[%c0_38, %c0_39, %c0_40] : memref<1x1x32xf32, #tpu.memory_space<vmem>>, vector<1x1x32xf32>
    %97 = vector.shape_cast %96 : vector<1x1x32xf32> to vector<1x32xf32>
    %98 = vector.shape_cast %95 : vector<1x32xf32> to vector<1x1x32xf32>
    tpu.vector_store %arg10[%c0_38, %c0_39, %c0_40], %98 {strides = array<i32>} : memref<1x1x32xf32, #tpu.memory_space<vmem>>, vector<1x1x32xf32>,
    return
  }
  func.func @transform_0(%arg0: i32) -> (i32, i32, i32) {
    %c0_i32 = arith.constant 0 : i32
    %c0_i32_0 = arith.constant 0 : i32
    %c0_i32_1 = arith.constant 0 : i32
    return %arg0, %c0_i32, %c0_i32_0 : i32, i32, i32
  }
  func.func @transform_1(%arg0: i32) -> (i32, i32, i32) {
    %c0_i32 = arith.constant 0 : i32
    %c0_i32_0 = arith.constant 0 : i32
    %c0_i32_1 = arith.constant 0 : i32
    return %arg0, %c0_i32, %c0_i32_0 : i32, i32, i32
  }
  func.func @transform_2(%arg0: i32) -> (i32, i32, i32) {
    %c0_i32 = arith.constant 0 : i32
    %c0_i32_0 = arith.constant 0 : i32
    %c0_i32_1 = arith.constant 0 : i32
    return %arg0, %c0_i32, %c0_i32_0 : i32, i32, i32
  }
  func.func @transform_3(%arg0: i32) -> (i32, i32) {
    %c0_i32 = arith.constant 0 : i32
    %c0_i32_0 = arith.constant 0 : i32
    %c0_i32_1 = arith.constant 0 : i32
    return %c0_i32, %c0_i32_0 : i32, i32
  }
  func.func @transform_4(%arg0: i32) -> (i32, i32) {
    %c0_i32 = arith.constant 0 : i32
    %c0_i32_0 = arith.constant 0 : i32
    %c0_i32_1 = arith.constant 0 : i32
    return %c0_i32, %c0_i32_0 : i32, i32
  }
  func.func @transform_5(%arg0: i32) -> (i32, i32) {
    %c0_i32 = arith.constant 0 : i32
    %c0_i32_0 = arith.constant 0 : i32
    %c0_i32_1 = arith.constant 0 : i32
    return %c0_i32, %c0_i32_0 : i32, i32
  }
  func.func @transform_6(%arg0: i32) -> (i32, i32) {
    %c0_i32 = arith.constant 0 : i32
    %c0_i32_0 = arith.constant 0 : i32
    %c0_i32_1 = arith.constant 0 : i32
    return %c0_i32, %c0_i32_0 : i32, i32
  }
  func.func @transform_7(%arg0: i32) -> (i32, i32) {
    %c0_i32 = arith.constant 0 : i32
    %c0_i32_0 = arith.constant 0 : i32
    %c0_i32_1 = arith.constant 0 : i32
    return %c0_i32, %c0_i32_0 : i32, i32
  }
  func.func @transform_8(%arg0: i32) -> (i32, i32) {
    %c0_i32 = arith.constant 0 : i32
    %c0_i32_0 = arith.constant 0 : i32
    %c0_i32_1 = arith.constant 0 : i32
    return %c0_i32, %c0_i32_0 : i32, i32
  }
  func.func @transform_9(%arg0: i32) -> (i32, i32, i32) {
    %c0_i32 = arith.constant 0 : i32
    %c0_i32_0 = arith.constant 0 : i32
    %c0_i32_1 = arith.constant 0 : i32
    return %arg0, %c0_i32, %c0_i32_0 : i32, i32, i32
  }
}

module attributes {stable_mosaic.version = 11 : i64} {
  func.func @_enc_attn_kernel(%arg0: i32, %arg1: memref<1x16x32xf32, #tpu.memory_space<vmem>>, %arg2: memref<1x1x16xf32, #tpu.memory_space<vmem>>, %arg3: memref<1x16x1xf32, #tpu.memory_space<vmem>>, %arg4: memref<32x96xf32, #tpu.memory_space<vmem>>, %arg5: memref<1x96xf32, #tpu.memory_space<vmem>>, %arg6: memref<16x16x16xf32, #tpu.memory_space<vmem>>, %arg7: memref<16x16x16xf32, #tpu.memory_space<vmem>>, %arg8: memref<32x32xf32, #tpu.memory_space<vmem>>, %arg9: memref<1x32xf32, #tpu.memory_space<vmem>>, %arg10: memref<1x32xf32, #tpu.memory_space<vmem>>, %arg11: memref<1x32xf32, #tpu.memory_space<vmem>>, %arg12: memref<1x16x32xf32, #tpu.memory_space<vmem>>) attributes {dimension_semantics = [#tpu.dimension_semantics<parallel>], iteration_bounds = array<i64: 2>, scalar_prefetch = 0 : i64, scratch_operands = 0 : i64, tpu.core_type = #tpu.core_type<tc>, window_params = [{transform_indices = @transform_0, window_bounds = array<i64: 1, 16, 32>}, {transform_indices = @transform_1, window_bounds = array<i64: 1, 1, 16>}, {transform_indices = @transform_2, window_bounds = array<i64: 1, 16, 1>}, {pipeline_mode = #tpu.pipeline_mode<synchronous>, transform_indices = @transform_3, window_bounds = array<i64: 32, 96>}, {pipeline_mode = #tpu.pipeline_mode<synchronous>, transform_indices = @transform_4, window_bounds = array<i64: 1, 96>}, {pipeline_mode = #tpu.pipeline_mode<synchronous>, transform_indices = @transform_5, window_bounds = array<i64: 16, 16, 16>}, {pipeline_mode = #tpu.pipeline_mode<synchronous>, transform_indices = @transform_6, window_bounds = array<i64: 16, 16, 16>}, {pipeline_mode = #tpu.pipeline_mode<synchronous>, transform_indices = @transform_7, window_bounds = array<i64: 32, 32>}, {pipeline_mode = #tpu.pipeline_mode<synchronous>, transform_indices = @transform_8, window_bounds = array<i64: 1, 32>}, {pipeline_mode = #tpu.pipeline_mode<synchronous>, transform_indices = @transform_9, window_bounds = array<i64: 1, 32>}, {pipeline_mode = #tpu.pipeline_mode<synchronous>, transform_indices = @transform_10, window_bounds = array<i64: 1, 32>}, {transform_indices = @transform_11, window_bounds = array<i64: 1, 16, 32>}]} {
    %c0 = arith.constant 0 : index
    %c0_0 = arith.constant 0 : index
    %c0_1 = arith.constant 0 : index
    %0 = vector.load %arg1[%c0, %c0_0, %c0_1] : memref<1x16x32xf32, #tpu.memory_space<vmem>>, vector<1x16x32xf32>
    %1 = vector.shape_cast %0 : vector<1x16x32xf32> to vector<16x32xf32>
    %2 = arith.truncf %1 : vector<16x32xf32> to vector<16x32xbf16>
    %c0_2 = arith.constant 0 : index
    %c0_3 = arith.constant 0 : index
    %3 = vector.load %arg4[%c0_2, %c0_3] : memref<32x96xf32, #tpu.memory_space<vmem>>, vector<32x96xf32>
    %4 = arith.truncf %3 : vector<32x96xf32> to vector<32x96xbf16>
    %cst = arith.constant dense<0.000000e+00> : vector<16x96xf32>
    %5 = tpu.matmul %2, %4, %cst {dimension_numbers = #tpu.dot_dimension_numbers<[1], [0], [0], [1], [0, 0, 1, 1], [], []>} : vector<16x32xbf16>, vector<32x96xbf16>, vector<16x96xf32> -> vector<16x96xf32>
    %c0_4 = arith.constant 0 : index
    %c0_5 = arith.constant 0 : index
    %6 = vector.load %arg5[%c0_4, %c0_5] : memref<1x96xf32, #tpu.memory_space<vmem>>, vector<1x96xf32>
    %7 = vector.broadcast %6 : vector<1x96xf32> to vector<16x96xf32>
    %8 = arith.addf %5, %7 : vector<16x96xf32>
    %c0_6 = arith.constant 0 : index
    %c0_7 = arith.constant 0 : index
    %c0_8 = arith.constant 0 : index
    %9 = vector.load %arg2[%c0_6, %c0_7, %c0_8] : memref<1x1x16xf32, #tpu.memory_space<vmem>>, vector<1x1x16xf32>
    %10 = vector.shape_cast %9 : vector<1x1x16xf32> to vector<1x16xf32>
    %cst_9 = arith.constant 0.000000e+00 : f32
    %11 = vector.broadcast %cst_9 : f32 to vector<1x16xf32>
    %12 = arith.cmpf ogt, %10, %11 : vector<1x16xf32>
    %c0_10 = arith.constant 0 : index
    %c0_11 = arith.constant 0 : index
    %c0_12 = arith.constant 0 : index
    %13 = vector.load %arg3[%c0_10, %c0_11, %c0_12] : memref<1x16x1xf32, #tpu.memory_space<vmem>>, vector<1x16x1xf32>
    %14 = vector.shape_cast %13 : vector<1x16x1xf32> to vector<16x1xf32>
    %cst_13 = arith.constant 0.000000e+00 : f32
    %15 = vector.broadcast %cst_13 : f32 to vector<16x1xf32>
    %16 = arith.cmpf ogt, %14, %15 : vector<16x1xf32>
    %17 = vector.broadcast %12 : vector<1x16xi1> to vector<16x16xi1>
    %18 = vector.broadcast %16 : vector<16x1xi1> to vector<16x16xi1>
    %19 = arith.andi %17, %18 : vector<16x16xi1>
    %c0_14 = arith.constant 0 : index
    %c0_15 = arith.constant 0 : index
    %c0_16 = arith.constant 0 : index
    %20 = vector.load %arg6[%c0_14, %c0_15, %c0_16] : memref<16x16x16xf32, #tpu.memory_space<vmem>>, vector<16x16x16xf32>
    %c0_17 = arith.constant 0 : index
    %c0_18 = arith.constant 0 : index
    %c0_19 = arith.constant 0 : index
    %21 = vector.load %arg7[%c0_17, %c0_18, %c0_19] : memref<16x16x16xf32, #tpu.memory_space<vmem>>, vector<16x16x16xf32>
    %c0_20 = arith.constant 0 : index
    %c0_21 = arith.constant 0 : index
    %22 = vector.load %arg8[%c0_20, %c0_21] : memref<32x32xf32, #tpu.memory_space<vmem>>, vector<32x32xf32>
    %c0_22 = arith.constant 0 : index
    %c0_23 = arith.constant 0 : index
    %23 = vector.load %arg9[%c0_22, %c0_23] : memref<1x32xf32, #tpu.memory_space<vmem>>, vector<1x32xf32>
    %24 = vector.broadcast %23 : vector<1x32xf32> to vector<16x32xf32>
    %25 = arith.addf %1, %24 : vector<16x32xf32>
    %26 = vector.extract_strided_slice %8 {offsets = [0, 0], sizes = [16, 16], strides = [1, 1]} : vector<16x96xf32> to vector<16x16xf32>
    %cst_24 = arith.constant 2.500000e-01 : f32
    %27 = vector.broadcast %cst_24 : f32 to vector<16x16xf32>
    %28 = arith.mulf %26, %27 : vector<16x16xf32>
    %29 = vector.extract_strided_slice %8 {offsets = [0, 32], sizes = [16, 16], strides = [1, 1]} : vector<16x96xf32> to vector<16x16xf32>
    %30 = vector.extract_strided_slice %8 {offsets = [0, 64], sizes = [16, 16], strides = [1, 1]} : vector<16x96xf32> to vector<16x16xf32>
    %31 = arith.truncf %28 : vector<16x16xf32> to vector<16x16xbf16>
    %32 = arith.truncf %29 : vector<16x16xf32> to vector<16x16xbf16>
    %cst_25 = arith.constant dense<0.000000e+00> : vector<16x16xf32>
    %33 = tpu.matmul %31, %32, %cst_25 {dimension_numbers = #tpu.dot_dimension_numbers<[1], [1], [0], [0], [0, 0, 1, 0], [], []>} : vector<16x16xbf16>, vector<16x16xbf16>, vector<16x16xf32> -> vector<16x16xf32>
    %34 = vector.shape_cast %28 : vector<16x16xf32> to vector<16x1x16xf32>
    %35 = vector.broadcast %34 : vector<16x1x16xf32> to vector<16x16x16xf32>
    %36 = arith.mulf %35, %20 : vector<16x16x16xf32>
    %cst_26 = arith.constant dense<0.000000e+00> : vector<16x16xf32>
    %37 = vector.multi_reduction <add>, %36, %cst_26 [2] : vector<16x16x16xf32> to vector<16x16xf32>
    %38 = arith.addf %33, %37 : vector<16x16xf32>
    %cst_27 = arith.constant -1.000000e+04 : f32
    %39 = vector.broadcast %cst_27 : f32 to vector<16x16xf32>
    %40 = arith.select %19, %38, %39 : vector<16x16xi1>, vector<16x16xf32>
    %cst_28 = arith.constant dense<0xFF800000> : vector<16xf32>
    %41 = vector.multi_reduction <maximumf>, %40, %cst_28 [1] : vector<16x16xf32> to vector<16xf32>
    %42 = vector.shape_cast %41 : vector<16xf32> to vector<16x1xf32>
    %43 = vector.broadcast %42 : vector<16x1xf32> to vector<16x16xf32>
    %44 = arith.subf %40, %43 : vector<16x16xf32>
    %45 = math.exp %44 : vector<16x16xf32>
    %cst_29 = arith.constant dense<0.000000e+00> : vector<16xf32>
    %46 = vector.multi_reduction <add>, %45, %cst_29 [1] : vector<16x16xf32> to vector<16xf32>
    %47 = vector.shape_cast %46 : vector<16xf32> to vector<16x1xf32>
    %48 = tpu.reciprocal %47 {approx = true} : vector<16x1xf32> -> vector<16x1xf32>
    %49 = vector.broadcast %48 : vector<16x1xf32> to vector<16x16xf32>
    %50 = arith.mulf %45, %49 : vector<16x16xf32>
    %51 = arith.truncf %50 : vector<16x16xf32> to vector<16x16xbf16>
    %52 = arith.truncf %30 : vector<16x16xf32> to vector<16x16xbf16>
    %cst_30 = arith.constant dense<0.000000e+00> : vector<16x16xf32>
    %53 = tpu.matmul %51, %52, %cst_30 {dimension_numbers = #tpu.dot_dimension_numbers<[1], [0], [0], [1], [0, 0, 1, 1], [], []>} : vector<16x16xbf16>, vector<16x16xbf16>, vector<16x16xf32> -> vector<16x16xf32>
    %54 = vector.shape_cast %50 : vector<16x16xf32> to vector<16x1x16xf32>
    %55 = vector.broadcast %54 : vector<16x1x16xf32> to vector<16x16x16xf32>
    %56 = arith.mulf %55, %21 : vector<16x16x16xf32>
    %cst_31 = arith.constant dense<0.000000e+00> : vector<16x16xf32>
    %57 = vector.multi_reduction <add>, %56, %cst_31 [2] : vector<16x16x16xf32> to vector<16x16xf32>
    %58 = arith.addf %53, %57 : vector<16x16xf32>
    %59 = arith.truncf %58 : vector<16x16xf32> to vector<16x16xbf16>
    %60 = vector.extract_strided_slice %22 {offsets = [0, 0], sizes = [16, 32], strides = [1, 1]} : vector<32x32xf32> to vector<16x32xf32>
    %61 = arith.truncf %60 : vector<16x32xf32> to vector<16x32xbf16>
    %cst_32 = arith.constant dense<0.000000e+00> : vector<16x32xf32>
    %62 = tpu.matmul %59, %61, %cst_32 {dimension_numbers = #tpu.dot_dimension_numbers<[1], [0], [0], [1], [0, 0, 1, 1], [], []>} : vector<16x16xbf16>, vector<16x32xbf16>, vector<16x32xf32> -> vector<16x32xf32>
    %63 = arith.addf %25, %62 : vector<16x32xf32>
    %64 = vector.extract_strided_slice %8 {offsets = [0, 16], sizes = [16, 16], strides = [1, 1]} : vector<16x96xf32> to vector<16x16xf32>
    %cst_33 = arith.constant 2.500000e-01 : f32
    %65 = vector.broadcast %cst_33 : f32 to vector<16x16xf32>
    %66 = arith.mulf %64, %65 : vector<16x16xf32>
    %67 = vector.extract_strided_slice %8 {offsets = [0, 48], sizes = [16, 16], strides = [1, 1]} : vector<16x96xf32> to vector<16x16xf32>
    %68 = vector.extract_strided_slice %8 {offsets = [0, 80], sizes = [16, 16], strides = [1, 1]} : vector<16x96xf32> to vector<16x16xf32>
    %69 = arith.truncf %66 : vector<16x16xf32> to vector<16x16xbf16>
    %70 = arith.truncf %67 : vector<16x16xf32> to vector<16x16xbf16>
    %cst_34 = arith.constant dense<0.000000e+00> : vector<16x16xf32>
    %71 = tpu.matmul %69, %70, %cst_34 {dimension_numbers = #tpu.dot_dimension_numbers<[1], [1], [0], [0], [0, 0, 1, 0], [], []>} : vector<16x16xbf16>, vector<16x16xbf16>, vector<16x16xf32> -> vector<16x16xf32>
    %72 = vector.shape_cast %66 : vector<16x16xf32> to vector<16x1x16xf32>
    %73 = vector.broadcast %72 : vector<16x1x16xf32> to vector<16x16x16xf32>
    %74 = arith.mulf %73, %20 : vector<16x16x16xf32>
    %cst_35 = arith.constant dense<0.000000e+00> : vector<16x16xf32>
    %75 = vector.multi_reduction <add>, %74, %cst_35 [2] : vector<16x16x16xf32> to vector<16x16xf32>
    %76 = arith.addf %71, %75 : vector<16x16xf32>
    %cst_36 = arith.constant -1.000000e+04 : f32
    %77 = vector.broadcast %cst_36 : f32 to vector<16x16xf32>
    %78 = arith.select %19, %76, %77 : vector<16x16xi1>, vector<16x16xf32>
    %cst_37 = arith.constant dense<0xFF800000> : vector<16xf32>
    %79 = vector.multi_reduction <maximumf>, %78, %cst_37 [1] : vector<16x16xf32> to vector<16xf32>
    %80 = vector.shape_cast %79 : vector<16xf32> to vector<16x1xf32>
    %81 = vector.broadcast %80 : vector<16x1xf32> to vector<16x16xf32>
    %82 = arith.subf %78, %81 : vector<16x16xf32>
    %83 = math.exp %82 : vector<16x16xf32>
    %cst_38 = arith.constant dense<0.000000e+00> : vector<16xf32>
    %84 = vector.multi_reduction <add>, %83, %cst_38 [1] : vector<16x16xf32> to vector<16xf32>
    %85 = vector.shape_cast %84 : vector<16xf32> to vector<16x1xf32>
    %86 = tpu.reciprocal %85 {approx = true} : vector<16x1xf32> -> vector<16x1xf32>
    %87 = vector.broadcast %86 : vector<16x1xf32> to vector<16x16xf32>
    %88 = arith.mulf %83, %87 : vector<16x16xf32>
    %89 = arith.truncf %88 : vector<16x16xf32> to vector<16x16xbf16>
    %90 = arith.truncf %68 : vector<16x16xf32> to vector<16x16xbf16>
    %cst_39 = arith.constant dense<0.000000e+00> : vector<16x16xf32>
    %91 = tpu.matmul %89, %90, %cst_39 {dimension_numbers = #tpu.dot_dimension_numbers<[1], [0], [0], [1], [0, 0, 1, 1], [], []>} : vector<16x16xbf16>, vector<16x16xbf16>, vector<16x16xf32> -> vector<16x16xf32>
    %92 = vector.shape_cast %88 : vector<16x16xf32> to vector<16x1x16xf32>
    %93 = vector.broadcast %92 : vector<16x1x16xf32> to vector<16x16x16xf32>
    %94 = arith.mulf %93, %21 : vector<16x16x16xf32>
    %cst_40 = arith.constant dense<0.000000e+00> : vector<16x16xf32>
    %95 = vector.multi_reduction <add>, %94, %cst_40 [2] : vector<16x16x16xf32> to vector<16x16xf32>
    %96 = arith.addf %91, %95 : vector<16x16xf32>
    %97 = arith.truncf %96 : vector<16x16xf32> to vector<16x16xbf16>
    %98 = vector.extract_strided_slice %22 {offsets = [16, 0], sizes = [16, 32], strides = [1, 1]} : vector<32x32xf32> to vector<16x32xf32>
    %99 = arith.truncf %98 : vector<16x32xf32> to vector<16x32xbf16>
    %cst_41 = arith.constant dense<0.000000e+00> : vector<16x32xf32>
    %100 = tpu.matmul %97, %99, %cst_41 {dimension_numbers = #tpu.dot_dimension_numbers<[1], [0], [0], [1], [0, 0, 1, 1], [], []>} : vector<16x16xbf16>, vector<16x32xbf16>, vector<16x32xf32> -> vector<16x32xf32>
    %101 = arith.addf %63, %100 : vector<16x32xf32>
    %c0_42 = arith.constant 0 : index
    %c0_43 = arith.constant 0 : index
    %102 = vector.load %arg10[%c0_42, %c0_43] : memref<1x32xf32, #tpu.memory_space<vmem>>, vector<1x32xf32>
    %c0_44 = arith.constant 0 : index
    %c0_45 = arith.constant 0 : index
    %103 = vector.load %arg11[%c0_44, %c0_45] : memref<1x32xf32, #tpu.memory_space<vmem>>, vector<1x32xf32>
    %cst_46 = arith.constant dense<0.000000e+00> : vector<16xf32>
    %104 = vector.multi_reduction <add>, %101, %cst_46 [1] : vector<16x32xf32> to vector<16xf32>
    %105 = vector.shape_cast %104 : vector<16xf32> to vector<16x1xf32>
    %cst_47 = arith.constant 3.200000e+01 : f32
    %106 = vector.broadcast %cst_47 : f32 to vector<16x1xf32>
    %107 = arith.divf %105, %106 : vector<16x1xf32>
    %108 = vector.broadcast %107 : vector<16x1xf32> to vector<16x32xf32>
    %109 = arith.subf %101, %108 : vector<16x32xf32>
    %110 = arith.mulf %109, %109 : vector<16x32xf32>
    %cst_48 = arith.constant dense<0.000000e+00> : vector<16xf32>
    %111 = vector.multi_reduction <add>, %110, %cst_48 [1] : vector<16x32xf32> to vector<16xf32>
    %112 = vector.shape_cast %111 : vector<16xf32> to vector<16x1xf32>
    %cst_49 = arith.constant 3.200000e+01 : f32
    %113 = vector.broadcast %cst_49 : f32 to vector<16x1xf32>
    %114 = arith.divf %112, %113 : vector<16x1xf32>
    %115 = vector.broadcast %107 : vector<16x1xf32> to vector<16x32xf32>
    %116 = arith.subf %101, %115 : vector<16x32xf32>
    %cst_50 = arith.constant 9.99999974E-6 : f32
    %117 = vector.broadcast %cst_50 : f32 to vector<16x1xf32>
    %118 = arith.addf %114, %117 : vector<16x1xf32>
    %119 = math.rsqrt %118 : vector<16x1xf32>
    %120 = vector.broadcast %119 : vector<16x1xf32> to vector<16x32xf32>
    %121 = arith.mulf %116, %120 : vector<16x32xf32>
    %122 = vector.broadcast %102 : vector<1x32xf32> to vector<16x32xf32>
    %123 = arith.mulf %121, %122 : vector<16x32xf32>
    %124 = vector.broadcast %103 : vector<1x32xf32> to vector<16x32xf32>
    %125 = arith.addf %123, %124 : vector<16x32xf32>
    %c0_51 = arith.constant 0 : index
    %c0_52 = arith.constant 0 : index
    %c0_53 = arith.constant 0 : index
    %126 = vector.load %arg12[%c0_51, %c0_52, %c0_53] : memref<1x16x32xf32, #tpu.memory_space<vmem>>, vector<1x16x32xf32>
    %127 = vector.shape_cast %126 : vector<1x16x32xf32> to vector<16x32xf32>
    %128 = vector.shape_cast %125 : vector<16x32xf32> to vector<1x16x32xf32>
    tpu.vector_store %arg12[%c0_51, %c0_52, %c0_53], %128 {strides = array<i32>} : memref<1x16x32xf32, #tpu.memory_space<vmem>>, vector<1x16x32xf32>,
    return
  }
  func.func @transform_0(%arg0: i32) -> (i32, i32, i32) {
    %c0_i32 = arith.constant 0 : i32
    %c0_i32_0 = arith.constant 0 : i32
    %c0_i32_1 = arith.constant 0 : i32
    return %arg0, %c0_i32, %c0_i32_0 : i32, i32, i32
  }
  func.func @transform_1(%arg0: i32) -> (i32, i32, i32) {
    %c0_i32 = arith.constant 0 : i32
    %c0_i32_0 = arith.constant 0 : i32
    %c0_i32_1 = arith.constant 0 : i32
    return %arg0, %c0_i32, %c0_i32_0 : i32, i32, i32
  }
  func.func @transform_2(%arg0: i32) -> (i32, i32, i32) {
    %c0_i32 = arith.constant 0 : i32
    %c0_i32_0 = arith.constant 0 : i32
    %c0_i32_1 = arith.constant 0 : i32
    return %arg0, %c0_i32, %c0_i32_0 : i32, i32, i32
  }
  func.func @transform_3(%arg0: i32) -> (i32, i32) {
    %c0_i32 = arith.constant 0 : i32
    %c0_i32_0 = arith.constant 0 : i32
    %c0_i32_1 = arith.constant 0 : i32
    return %c0_i32, %c0_i32_0 : i32, i32
  }
  func.func @transform_4(%arg0: i32) -> (i32, i32) {
    %c0_i32 = arith.constant 0 : i32
    %c0_i32_0 = arith.constant 0 : i32
    %c0_i32_1 = arith.constant 0 : i32
    return %c0_i32, %c0_i32_0 : i32, i32
  }
  func.func @transform_5(%arg0: i32) -> (i32, i32, i32) {
    %c0_i32 = arith.constant 0 : i32
    %c0_i32_0 = arith.constant 0 : i32
    %c0_i32_1 = arith.constant 0 : i32
    %c0_i32_2 = arith.constant 0 : i32
    return %c0_i32, %c0_i32_0, %c0_i32_1 : i32, i32, i32
  }
  func.func @transform_6(%arg0: i32) -> (i32, i32, i32) {
    %c0_i32 = arith.constant 0 : i32
    %c0_i32_0 = arith.constant 0 : i32
    %c0_i32_1 = arith.constant 0 : i32
    %c0_i32_2 = arith.constant 0 : i32
    return %c0_i32, %c0_i32_0, %c0_i32_1 : i32, i32, i32
  }
  func.func @transform_7(%arg0: i32) -> (i32, i32) {
    %c0_i32 = arith.constant 0 : i32
    %c0_i32_0 = arith.constant 0 : i32
    %c0_i32_1 = arith.constant 0 : i32
    return %c0_i32, %c0_i32_0 : i32, i32
  }
  func.func @transform_8(%arg0: i32) -> (i32, i32) {
    %c0_i32 = arith.constant 0 : i32
    %c0_i32_0 = arith.constant 0 : i32
    %c0_i32_1 = arith.constant 0 : i32
    return %c0_i32, %c0_i32_0 : i32, i32
  }
  func.func @transform_9(%arg0: i32) -> (i32, i32) {
    %c0_i32 = arith.constant 0 : i32
    %c0_i32_0 = arith.constant 0 : i32
    %c0_i32_1 = arith.constant 0 : i32
    return %c0_i32, %c0_i32_0 : i32, i32
  }
  func.func @transform_10(%arg0: i32) -> (i32, i32) {
    %c0_i32 = arith.constant 0 : i32
    %c0_i32_0 = arith.constant 0 : i32
    %c0_i32_1 = arith.constant 0 : i32
    return %c0_i32, %c0_i32_0 : i32, i32
  }
  func.func @transform_11(%arg0: i32) -> (i32, i32, i32) {
    %c0_i32 = arith.constant 0 : i32
    %c0_i32_0 = arith.constant 0 : i32
    %c0_i32_1 = arith.constant 0 : i32
    return %arg0, %c0_i32, %c0_i32_0 : i32, i32, i32
  }
}

module attributes {stable_mosaic.version = 11 : i64} {
  func.func @_ffn_kernel(%arg0: i32, %arg1: memref<1x16x32xf32, #tpu.memory_space<vmem>>, %arg2: memref<1x16x1xf32, #tpu.memory_space<vmem>>, %arg3: memref<3x32x64xf32, #tpu.memory_space<vmem>>, %arg4: memref<1x64xf32, #tpu.memory_space<vmem>>, %arg5: memref<3x64x32xf32, #tpu.memory_space<vmem>>, %arg6: memref<1x32xf32, #tpu.memory_space<vmem>>, %arg7: memref<1x32xf32, #tpu.memory_space<vmem>>, %arg8: memref<1x32xf32, #tpu.memory_space<vmem>>, %arg9: memref<1x16x32xf32, #tpu.memory_space<vmem>>, %arg10: memref<18x32xf32, #tpu.memory_space<vmem>>, %arg11: memref<18x64xf32, #tpu.memory_space<vmem>>) attributes {dimension_semantics = [#tpu.dimension_semantics<parallel>], iteration_bounds = array<i64: 2>, scalar_prefetch = 0 : i64, scratch_operands = 2 : i64, tpu.core_type = #tpu.core_type<tc>, window_params = [{transform_indices = @transform_0, window_bounds = array<i64: 1, 16, 32>}, {transform_indices = @transform_1, window_bounds = array<i64: 1, 16, 1>}, {pipeline_mode = #tpu.pipeline_mode<synchronous>, transform_indices = @transform_2, window_bounds = array<i64: 3, 32, 64>}, {pipeline_mode = #tpu.pipeline_mode<synchronous>, transform_indices = @transform_3, window_bounds = array<i64: 1, 64>}, {pipeline_mode = #tpu.pipeline_mode<synchronous>, transform_indices = @transform_4, window_bounds = array<i64: 3, 64, 32>}, {pipeline_mode = #tpu.pipeline_mode<synchronous>, transform_indices = @transform_5, window_bounds = array<i64: 1, 32>}, {pipeline_mode = #tpu.pipeline_mode<synchronous>, transform_indices = @transform_6, window_bounds = array<i64: 1, 32>}, {pipeline_mode = #tpu.pipeline_mode<synchronous>, transform_indices = @transform_7, window_bounds = array<i64: 1, 32>}, {transform_indices = @transform_8, window_bounds = array<i64: 1, 16, 32>}]} {
    %c0 = arith.constant 0 : index
    %c0_0 = arith.constant 0 : index
    %c0_1 = arith.constant 0 : index
    %0 = vector.load %arg1[%c0, %c0_0, %c0_1] : memref<1x16x32xf32, #tpu.memory_space<vmem>>, vector<1x16x32xf32>
    %1 = vector.shape_cast %0 : vector<1x16x32xf32> to vector<16x32xf32>
    %c0_2 = arith.constant 0 : index
    %c0_3 = arith.constant 0 : index
    %c0_4 = arith.constant 0 : index
    %2 = vector.load %arg2[%c0_2, %c0_3, %c0_4] : memref<1x16x1xf32, #tpu.memory_space<vmem>>, vector<1x16x1xf32>
    %3 = vector.shape_cast %2 : vector<1x16x1xf32> to vector<16x1xf32>
    %cst = arith.constant 0.000000e+00 : f32
    %4 = vector.broadcast %cst : f32 to vector<18x32xf32>
    %c0_5 = arith.constant 0 : index
    %c0_6 = arith.constant 0 : index
    %5 = vector.load %arg10[%c0_5, %c0_6] : memref<18x32xf32, #tpu.memory_space<vmem>>, vector<18x32xf32>
    tpu.vector_store %arg10[%c0_5, %c0_6], %4 {strides = array<i32>} : memref<18x32xf32, #tpu.memory_space<vmem>>, vector<18x32xf32>,
    %6 = vector.broadcast %3 : vector<16x1xf32> to vector<16x32xf32>
    %7 = arith.mulf %1, %6 : vector<16x32xf32>
    %c1 = arith.constant 1 : index
    %c0_7 = arith.constant 0 : index
    %8 = vector.load %arg10[%c1, %c0_7] : memref<18x32xf32, #tpu.memory_space<vmem>>, vector<16x32xf32>
    tpu.vector_store %arg10[%c1, %c0_7], %7 {strides = array<i32>} : memref<18x32xf32, #tpu.memory_space<vmem>>, vector<16x32xf32>,
    %cst_8 = arith.constant 0.000000e+00 : f32
    %9 = vector.broadcast %cst_8 : f32 to vector<16x64xf32>
    %c0_9 = arith.constant 0 : index
    %c0_10 = arith.constant 0 : index
    %10 = vector.load %arg10[%c0_9, %c0_10] : memref<18x32xf32, #tpu.memory_space<vmem>>, vector<16x32xf32>
    %11 = arith.truncf %10 : vector<16x32xf32> to vector<16x32xbf16>
    %c0_11 = arith.constant 0 : index
    %c0_12 = arith.constant 0 : index
    %c0_13 = arith.constant 0 : index
    %12 = vector.load %arg3[%c0_11, %c0_12, %c0_13] : memref<3x32x64xf32, #tpu.memory_space<vmem>>, vector<1x32x64xf32>
    %13 = vector.shape_cast %12 : vector<1x32x64xf32> to vector<32x64xf32>
    %14 = arith.truncf %13 : vector<32x64xf32> to vector<32x64xbf16>
    %cst_14 = arith.constant dense<0.000000e+00> : vector<16x64xf32>
    %15 = tpu.matmul %11, %14, %cst_14 {dimension_numbers = #tpu.dot_dimension_numbers<[1], [0], [0], [1], [0, 0, 1, 1], [], []>} : vector<16x32xbf16>, vector<32x64xbf16>, vector<16x64xf32> -> vector<16x64xf32>
    %16 = arith.addf %9, %15 : vector<16x64xf32>
    %c1_15 = arith.constant 1 : index
    %c0_16 = arith.constant 0 : index
    %17 = vector.load %arg10[%c1_15, %c0_16] : memref<18x32xf32, #tpu.memory_space<vmem>>, vector<16x32xf32>
    %18 = arith.truncf %17 : vector<16x32xf32> to vector<16x32xbf16>
    %c1_17 = arith.constant 1 : index
    %c0_18 = arith.constant 0 : index
    %c0_19 = arith.constant 0 : index
    %19 = vector.load %arg3[%c1_17, %c0_18, %c0_19] : memref<3x32x64xf32, #tpu.memory_space<vmem>>, vector<1x32x64xf32>
    %20 = vector.shape_cast %19 : vector<1x32x64xf32> to vector<32x64xf32>
    %21 = arith.truncf %20 : vector<32x64xf32> to vector<32x64xbf16>
    %cst_20 = arith.constant dense<0.000000e+00> : vector<16x64xf32>
    %22 = tpu.matmul %18, %21, %cst_20 {dimension_numbers = #tpu.dot_dimension_numbers<[1], [0], [0], [1], [0, 0, 1, 1], [], []>} : vector<16x32xbf16>, vector<32x64xbf16>, vector<16x64xf32> -> vector<16x64xf32>
    %23 = arith.addf %16, %22 : vector<16x64xf32>
    %c2 = arith.constant 2 : index
    %c0_21 = arith.constant 0 : index
    %24 = vector.load %arg10[%c2, %c0_21] : memref<18x32xf32, #tpu.memory_space<vmem>>, vector<16x32xf32>
    %25 = arith.truncf %24 : vector<16x32xf32> to vector<16x32xbf16>
    %c2_22 = arith.constant 2 : index
    %c0_23 = arith.constant 0 : index
    %c0_24 = arith.constant 0 : index
    %26 = vector.load %arg3[%c2_22, %c0_23, %c0_24] : memref<3x32x64xf32, #tpu.memory_space<vmem>>, vector<1x32x64xf32>
    %27 = vector.shape_cast %26 : vector<1x32x64xf32> to vector<32x64xf32>
    %28 = arith.truncf %27 : vector<32x64xf32> to vector<32x64xbf16>
    %cst_25 = arith.constant dense<0.000000e+00> : vector<16x64xf32>
    %29 = tpu.matmul %25, %28, %cst_25 {dimension_numbers = #tpu.dot_dimension_numbers<[1], [0], [0], [1], [0, 0, 1, 1], [], []>} : vector<16x32xbf16>, vector<32x64xbf16>, vector<16x64xf32> -> vector<16x64xf32>
    %30 = arith.addf %23, %29 : vector<16x64xf32>
    %c0_26 = arith.constant 0 : index
    %c0_27 = arith.constant 0 : index
    %31 = vector.load %arg4[%c0_26, %c0_27] : memref<1x64xf32, #tpu.memory_space<vmem>>, vector<1x64xf32>
    %32 = vector.broadcast %31 : vector<1x64xf32> to vector<16x64xf32>
    %33 = arith.addf %30, %32 : vector<16x64xf32>
    %cst_28 = arith.constant 0.000000e+00 : f32
    %34 = vector.broadcast %cst_28 : f32 to vector<16x64xf32>
    %35 = arith.maximumf %33, %34 : vector<16x64xf32>
    %36 = vector.broadcast %3 : vector<16x1xf32> to vector<16x64xf32>
    %37 = arith.mulf %35, %36 : vector<16x64xf32>
    %cst_29 = arith.constant 0.000000e+00 : f32
    %38 = vector.broadcast %cst_29 : f32 to vector<18x64xf32>
    %c0_30 = arith.constant 0 : index
    %c0_31 = arith.constant 0 : index
    %39 = vector.load %arg11[%c0_30, %c0_31] : memref<18x64xf32, #tpu.memory_space<vmem>>, vector<18x64xf32>
    tpu.vector_store %arg11[%c0_30, %c0_31], %38 {strides = array<i32>} : memref<18x64xf32, #tpu.memory_space<vmem>>, vector<18x64xf32>,
    %c1_32 = arith.constant 1 : index
    %c0_33 = arith.constant 0 : index
    %40 = vector.load %arg11[%c1_32, %c0_33] : memref<18x64xf32, #tpu.memory_space<vmem>>, vector<16x64xf32>
    tpu.vector_store %arg11[%c1_32, %c0_33], %37 {strides = array<i32>} : memref<18x64xf32, #tpu.memory_space<vmem>>, vector<16x64xf32>,
    %cst_34 = arith.constant 0.000000e+00 : f32
    %41 = vector.broadcast %cst_34 : f32 to vector<16x32xf32>
    %c0_35 = arith.constant 0 : index
    %c0_36 = arith.constant 0 : index
    %42 = vector.load %arg11[%c0_35, %c0_36] : memref<18x64xf32, #tpu.memory_space<vmem>>, vector<16x64xf32>
    %43 = arith.truncf %42 : vector<16x64xf32> to vector<16x64xbf16>
    %c0_37 = arith.constant 0 : index
    %c0_38 = arith.constant 0 : index
    %c0_39 = arith.constant 0 : index
    %44 = vector.load %arg5[%c0_37, %c0_38, %c0_39] : memref<3x64x32xf32, #tpu.memory_space<vmem>>, vector<1x64x32xf32>
    %45 = vector.shape_cast %44 : vector<1x64x32xf32> to vector<64x32xf32>
    %46 = arith.truncf %45 : vector<64x32xf32> to vector<64x32xbf16>
    %cst_40 = arith.constant dense<0.000000e+00> : vector<16x32xf32>
    %47 = tpu.matmul %43, %46, %cst_40 {dimension_numbers = #tpu.dot_dimension_numbers<[1], [0], [0], [1], [0, 0, 1, 1], [], []>} : vector<16x64xbf16>, vector<64x32xbf16>, vector<16x32xf32> -> vector<16x32xf32>
    %48 = arith.addf %41, %47 : vector<16x32xf32>
    %c1_41 = arith.constant 1 : index
    %c0_42 = arith.constant 0 : index
    %49 = vector.load %arg11[%c1_41, %c0_42] : memref<18x64xf32, #tpu.memory_space<vmem>>, vector<16x64xf32>
    %50 = arith.truncf %49 : vector<16x64xf32> to vector<16x64xbf16>
    %c1_43 = arith.constant 1 : index
    %c0_44 = arith.constant 0 : index
    %c0_45 = arith.constant 0 : index
    %51 = vector.load %arg5[%c1_43, %c0_44, %c0_45] : memref<3x64x32xf32, #tpu.memory_space<vmem>>, vector<1x64x32xf32>
    %52 = vector.shape_cast %51 : vector<1x64x32xf32> to vector<64x32xf32>
    %53 = arith.truncf %52 : vector<64x32xf32> to vector<64x32xbf16>
    %cst_46 = arith.constant dense<0.000000e+00> : vector<16x32xf32>
    %54 = tpu.matmul %50, %53, %cst_46 {dimension_numbers = #tpu.dot_dimension_numbers<[1], [0], [0], [1], [0, 0, 1, 1], [], []>} : vector<16x64xbf16>, vector<64x32xbf16>, vector<16x32xf32> -> vector<16x32xf32>
    %55 = arith.addf %48, %54 : vector<16x32xf32>
    %c2_47 = arith.constant 2 : index
    %c0_48 = arith.constant 0 : index
    %56 = vector.load %arg11[%c2_47, %c0_48] : memref<18x64xf32, #tpu.memory_space<vmem>>, vector<16x64xf32>
    %57 = arith.truncf %56 : vector<16x64xf32> to vector<16x64xbf16>
    %c2_49 = arith.constant 2 : index
    %c0_50 = arith.constant 0 : index
    %c0_51 = arith.constant 0 : index
    %58 = vector.load %arg5[%c2_49, %c0_50, %c0_51] : memref<3x64x32xf32, #tpu.memory_space<vmem>>, vector<1x64x32xf32>
    %59 = vector.shape_cast %58 : vector<1x64x32xf32> to vector<64x32xf32>
    %60 = arith.truncf %59 : vector<64x32xf32> to vector<64x32xbf16>
    %cst_52 = arith.constant dense<0.000000e+00> : vector<16x32xf32>
    %61 = tpu.matmul %57, %60, %cst_52 {dimension_numbers = #tpu.dot_dimension_numbers<[1], [0], [0], [1], [0, 0, 1, 1], [], []>} : vector<16x64xbf16>, vector<64x32xbf16>, vector<16x32xf32> -> vector<16x32xf32>
    %62 = arith.addf %55, %61 : vector<16x32xf32>
    %c0_53 = arith.constant 0 : index
    %c0_54 = arith.constant 0 : index
    %63 = vector.load %arg6[%c0_53, %c0_54] : memref<1x32xf32, #tpu.memory_space<vmem>>, vector<1x32xf32>
    %64 = vector.broadcast %63 : vector<1x32xf32> to vector<16x32xf32>
    %65 = arith.addf %62, %64 : vector<16x32xf32>
    %66 = vector.broadcast %3 : vector<16x1xf32> to vector<16x32xf32>
    %67 = arith.mulf %65, %66 : vector<16x32xf32>
    %68 = arith.addf %1, %67 : vector<16x32xf32>
    %c0_55 = arith.constant 0 : index
    %c0_56 = arith.constant 0 : index
    %69 = vector.load %arg7[%c0_55, %c0_56] : memref<1x32xf32, #tpu.memory_space<vmem>>, vector<1x32xf32>
    %c0_57 = arith.constant 0 : index
    %c0_58 = arith.constant 0 : index
    %70 = vector.load %arg8[%c0_57, %c0_58] : memref<1x32xf32, #tpu.memory_space<vmem>>, vector<1x32xf32>
    %cst_59 = arith.constant dense<0.000000e+00> : vector<16xf32>
    %71 = vector.multi_reduction <add>, %68, %cst_59 [1] : vector<16x32xf32> to vector<16xf32>
    %72 = vector.shape_cast %71 : vector<16xf32> to vector<16x1xf32>
    %cst_60 = arith.constant 3.200000e+01 : f32
    %73 = vector.broadcast %cst_60 : f32 to vector<16x1xf32>
    %74 = arith.divf %72, %73 : vector<16x1xf32>
    %75 = vector.broadcast %74 : vector<16x1xf32> to vector<16x32xf32>
    %76 = arith.subf %68, %75 : vector<16x32xf32>
    %77 = arith.mulf %76, %76 : vector<16x32xf32>
    %cst_61 = arith.constant dense<0.000000e+00> : vector<16xf32>
    %78 = vector.multi_reduction <add>, %77, %cst_61 [1] : vector<16x32xf32> to vector<16xf32>
    %79 = vector.shape_cast %78 : vector<16xf32> to vector<16x1xf32>
    %cst_62 = arith.constant 3.200000e+01 : f32
    %80 = vector.broadcast %cst_62 : f32 to vector<16x1xf32>
    %81 = arith.divf %79, %80 : vector<16x1xf32>
    %82 = vector.broadcast %74 : vector<16x1xf32> to vector<16x32xf32>
    %83 = arith.subf %68, %82 : vector<16x32xf32>
    %cst_63 = arith.constant 9.99999974E-6 : f32
    %84 = vector.broadcast %cst_63 : f32 to vector<16x1xf32>
    %85 = arith.addf %81, %84 : vector<16x1xf32>
    %86 = math.rsqrt %85 : vector<16x1xf32>
    %87 = vector.broadcast %86 : vector<16x1xf32> to vector<16x32xf32>
    %88 = arith.mulf %83, %87 : vector<16x32xf32>
    %89 = vector.broadcast %69 : vector<1x32xf32> to vector<16x32xf32>
    %90 = arith.mulf %88, %89 : vector<16x32xf32>
    %91 = vector.broadcast %70 : vector<1x32xf32> to vector<16x32xf32>
    %92 = arith.addf %90, %91 : vector<16x32xf32>
    %c0_64 = arith.constant 0 : index
    %c0_65 = arith.constant 0 : index
    %c0_66 = arith.constant 0 : index
    %93 = vector.load %arg9[%c0_64, %c0_65, %c0_66] : memref<1x16x32xf32, #tpu.memory_space<vmem>>, vector<1x16x32xf32>
    %94 = vector.shape_cast %93 : vector<1x16x32xf32> to vector<16x32xf32>
    %95 = vector.shape_cast %92 : vector<16x32xf32> to vector<1x16x32xf32>
    tpu.vector_store %arg9[%c0_64, %c0_65, %c0_66], %95 {strides = array<i32>} : memref<1x16x32xf32, #tpu.memory_space<vmem>>, vector<1x16x32xf32>,
    return
  }
  func.func @transform_0(%arg0: i32) -> (i32, i32, i32) {
    %c0_i32 = arith.constant 0 : i32
    %c0_i32_0 = arith.constant 0 : i32
    %c0_i32_1 = arith.constant 0 : i32
    return %arg0, %c0_i32, %c0_i32_0 : i32, i32, i32
  }
  func.func @transform_1(%arg0: i32) -> (i32, i32, i32) {
    %c0_i32 = arith.constant 0 : i32
    %c0_i32_0 = arith.constant 0 : i32
    %c0_i32_1 = arith.constant 0 : i32
    return %arg0, %c0_i32, %c0_i32_0 : i32, i32, i32
  }
  func.func @transform_2(%arg0: i32) -> (i32, i32, i32) {
    %c0_i32 = arith.constant 0 : i32
    %c0_i32_0 = arith.constant 0 : i32
    %c0_i32_1 = arith.constant 0 : i32
    %c0_i32_2 = arith.constant 0 : i32
    return %c0_i32, %c0_i32_0, %c0_i32_1 : i32, i32, i32
  }
  func.func @transform_3(%arg0: i32) -> (i32, i32) {
    %c0_i32 = arith.constant 0 : i32
    %c0_i32_0 = arith.constant 0 : i32
    %c0_i32_1 = arith.constant 0 : i32
    return %c0_i32, %c0_i32_0 : i32, i32
  }
  func.func @transform_4(%arg0: i32) -> (i32, i32, i32) {
    %c0_i32 = arith.constant 0 : i32
    %c0_i32_0 = arith.constant 0 : i32
    %c0_i32_1 = arith.constant 0 : i32
    %c0_i32_2 = arith.constant 0 : i32
    return %c0_i32, %c0_i32_0, %c0_i32_1 : i32, i32, i32
  }
  func.func @transform_5(%arg0: i32) -> (i32, i32) {
    %c0_i32 = arith.constant 0 : i32
    %c0_i32_0 = arith.constant 0 : i32
    %c0_i32_1 = arith.constant 0 : i32
    return %c0_i32, %c0_i32_0 : i32, i32
  }
  func.func @transform_6(%arg0: i32) -> (i32, i32) {
    %c0_i32 = arith.constant 0 : i32
    %c0_i32_0 = arith.constant 0 : i32
    %c0_i32_1 = arith.constant 0 : i32
    return %c0_i32, %c0_i32_0 : i32, i32
  }
  func.func @transform_7(%arg0: i32) -> (i32, i32) {
    %c0_i32 = arith.constant 0 : i32
    %c0_i32_0 = arith.constant 0 : i32
    %c0_i32_1 = arith.constant 0 : i32
    return %c0_i32, %c0_i32_0 : i32, i32
  }
  func.func @transform_8(%arg0: i32) -> (i32, i32, i32) {
    %c0_i32 = arith.constant 0 : i32
    %c0_i32_0 = arith.constant 0 : i32
    %c0_i32_1 = arith.constant 0 : i32
    return %arg0, %c0_i32, %c0_i32_0 : i32, i32, i32
  }
}

module attributes {stable_mosaic.version = 11 : i64} {
  func.func @_dense_kernel(%arg0: i32, %arg1: memref<32x32xf32, #tpu.memory_space<vmem>>, %arg2: memref<32x192xf32, #tpu.memory_space<vmem>>, %arg3: memref<1x192xf32, #tpu.memory_space<vmem>>, %arg4: memref<32x1xf32, #tpu.memory_space<vmem>>, %arg5: memref<32x192xf32, #tpu.memory_space<vmem>>) attributes {dimension_semantics = [#tpu.dimension_semantics<parallel>], iteration_bounds = array<i64: 1>, scalar_prefetch = 0 : i64, scratch_operands = 0 : i64, tpu.core_type = #tpu.core_type<tc>, window_params = [{transform_indices = @transform_0, window_bounds = array<i64: 32, 32>}, {pipeline_mode = #tpu.pipeline_mode<synchronous>, transform_indices = @transform_1, window_bounds = array<i64: 32, 192>}, {pipeline_mode = #tpu.pipeline_mode<synchronous>, transform_indices = @transform_2, window_bounds = array<i64: 1, 192>}, {transform_indices = @transform_3, window_bounds = array<i64: 32, 1>}, {transform_indices = @transform_4, window_bounds = array<i64: 32, 192>}]} {
    %c0 = arith.constant 0 : index
    %c0_0 = arith.constant 0 : index
    %0 = vector.load %arg1[%c0, %c0_0] : memref<32x32xf32, #tpu.memory_space<vmem>>, vector<32x32xf32>
    %1 = arith.truncf %0 : vector<32x32xf32> to vector<32x32xbf16>
    %c0_1 = arith.constant 0 : index
    %c0_2 = arith.constant 0 : index
    %2 = vector.load %arg2[%c0_1, %c0_2] : memref<32x192xf32, #tpu.memory_space<vmem>>, vector<32x192xf32>
    %3 = arith.truncf %2 : vector<32x192xf32> to vector<32x192xbf16>
    %cst = arith.constant dense<0.000000e+00> : vector<32x192xf32>
    %4 = tpu.matmul %1, %3, %cst {dimension_numbers = #tpu.dot_dimension_numbers<[1], [0], [0], [1], [0, 0, 1, 1], [], []>} : vector<32x32xbf16>, vector<32x192xbf16>, vector<32x192xf32> -> vector<32x192xf32>
    %c0_3 = arith.constant 0 : index
    %c0_4 = arith.constant 0 : index
    %5 = vector.load %arg3[%c0_3, %c0_4] : memref<1x192xf32, #tpu.memory_space<vmem>>, vector<1x192xf32>
    %6 = vector.broadcast %5 : vector<1x192xf32> to vector<32x192xf32>
    %7 = arith.addf %4, %6 : vector<32x192xf32>
    %c0_5 = arith.constant 0 : index
    %c0_6 = arith.constant 0 : index
    %8 = vector.load %arg4[%c0_5, %c0_6] : memref<32x1xf32, #tpu.memory_space<vmem>>, vector<32x1xf32>
    %9 = vector.broadcast %8 : vector<32x1xf32> to vector<32x192xf32>
    %10 = arith.mulf %7, %9 : vector<32x192xf32>
    %c0_7 = arith.constant 0 : index
    %c0_8 = arith.constant 0 : index
    %11 = vector.load %arg5[%c0_7, %c0_8] : memref<32x192xf32, #tpu.memory_space<vmem>>, vector<32x192xf32>
    tpu.vector_store %arg5[%c0_7, %c0_8], %10 {strides = array<i32>} : memref<32x192xf32, #tpu.memory_space<vmem>>, vector<32x192xf32>,
    return
  }
  func.func @transform_0(%arg0: i32) -> (i32, i32) {
    %c0_i32 = arith.constant 0 : i32
    %c0_i32_0 = arith.constant 0 : i32
    return %arg0, %c0_i32 : i32, i32
  }
  func.func @transform_1(%arg0: i32) -> (i32, i32) {
    %c0_i32 = arith.constant 0 : i32
    %c0_i32_0 = arith.constant 0 : i32
    %c0_i32_1 = arith.constant 0 : i32
    return %c0_i32, %c0_i32_0 : i32, i32
  }
  func.func @transform_2(%arg0: i32) -> (i32, i32) {
    %c0_i32 = arith.constant 0 : i32
    %c0_i32_0 = arith.constant 0 : i32
    %c0_i32_1 = arith.constant 0 : i32
    return %c0_i32, %c0_i32_0 : i32, i32
  }
  func.func @transform_3(%arg0: i32) -> (i32, i32) {
    %c0_i32 = arith.constant 0 : i32
    %c0_i32_0 = arith.constant 0 : i32
    return %arg0, %c0_i32 : i32, i32
  }
  func.func @transform_4(%arg0: i32) -> (i32, i32) {
    %c0_i32 = arith.constant 0 : i32
    %c0_i32_0 = arith.constant 0 : i32
    return %arg0, %c0_i32 : i32, i32
  }
}

module attributes {stable_mosaic.version = 11 : i64} {
  func.func @_ce_kernel(%arg0: i32, %arg1: memref<96x64xf32, #tpu.memory_space<vmem>>, %arg2: memref<96x1xi32, #tpu.memory_space<vmem>>, %arg3: memref<96x1xf32, #tpu.memory_space<vmem>>, %arg4: memref<1x1xf32, #tpu.memory_space<vmem>>) attributes {dimension_semantics = [#tpu.dimension_semantics<arbitrary>], iteration_bounds = array<i64: 1>, scalar_prefetch = 0 : i64, scratch_operands = 0 : i64, tpu.core_type = #tpu.core_type<tc>, window_params = [{transform_indices = @transform_0, window_bounds = array<i64: 96, 64>}, {transform_indices = @transform_1, window_bounds = array<i64: 96, 1>}, {transform_indices = @transform_2, window_bounds = array<i64: 96, 1>}, {pipeline_mode = #tpu.pipeline_mode<synchronous>, transform_indices = @transform_3, window_bounds = array<i64: 1, 1>}]} {
    %c0_i32 = arith.constant 0 : i32
    %0 = arith.cmpi eq, %arg0, %c0_i32 : i32
    %1 = arith.extui %0 : i1 to i32
    %c0_i32_0 = arith.constant 0 : i32
    %2 = arith.cmpi ne, %1, %c0_i32_0 : i32
    scf.if %2 {
      %cst_16 = arith.constant 0.000000e+00 : f32
      %32 = vector.broadcast %cst_16 : f32 to vector<1x1xf32>
      %c0_17 = arith.constant 0 : index
      %c0_18 = arith.constant 0 : index
      %33 = vector.load %arg4[%c0_17, %c0_18] : memref<1x1xf32, #tpu.memory_space<vmem>>, vector<1x1xf32>
      tpu.vector_store %arg4[%c0_17, %c0_18], %32 {strides = array<i32>} : memref<1x1xf32, #tpu.memory_space<vmem>>, vector<1x1xf32>,
    } else {
    }
    %c0 = arith.constant 0 : index
    %c0_1 = arith.constant 0 : index
    %3 = vector.load %arg1[%c0, %c0_1] : memref<96x64xf32, #tpu.memory_space<vmem>>, vector<96x64xf32>
    %cst = arith.constant dense<0xFF800000> : vector<96xf32>
    %4 = vector.multi_reduction <maximumf>, %3, %cst [1] : vector<96x64xf32> to vector<96xf32>
    %5 = vector.shape_cast %4 : vector<96xf32> to vector<96x1xf32>
    %6 = vector.broadcast %5 : vector<96x1xf32> to vector<96x64xf32>
    %7 = arith.subf %3, %6 : vector<96x64xf32>
    %8 = math.exp %7 : vector<96x64xf32>
    %cst_2 = arith.constant dense<0.000000e+00> : vector<96xf32>
    %9 = vector.multi_reduction <add>, %8, %cst_2 [1] : vector<96x64xf32> to vector<96xf32>
    %10 = vector.shape_cast %9 : vector<96xf32> to vector<96x1xf32>
    %11 = math.log %10 : vector<96x1xf32>
    %12 = arith.addf %11, %5 : vector<96x1xf32>
    %13 = tpu.iota {dimensions = array<i32: 1>} : vector<96x64xi32>
    %c0_3 = arith.constant 0 : index
    %c0_4 = arith.constant 0 : index
    %14 = vector.load %arg2[%c0_3, %c0_4] : memref<96x1xi32, #tpu.memory_space<vmem>>, vector<96x1xi32>
    %15 = vector.broadcast %14 : vector<96x1xi32> to vector<96x64xi32>
    %16 = arith.cmpi eq, %13, %15 : vector<96x64xi32>
    %cst_5 = arith.constant 0.000000e+00 : f32
    %17 = vector.broadcast %cst_5 : f32 to vector<96x64xf32>
    %18 = arith.select %16, %3, %17 : vector<96x64xi1>, vector<96x64xf32>
    %cst_6 = arith.constant dense<0.000000e+00> : vector<96xf32>
    %19 = vector.multi_reduction <add>, %18, %cst_6 [1] : vector<96x64xf32> to vector<96xf32>
    %20 = vector.shape_cast %19 : vector<96xf32> to vector<96x1xf32>
    %c0_7 = arith.constant 0 : index
    %c0_8 = arith.constant 0 : index
    %21 = vector.load %arg4[%c0_7, %c0_8] : memref<1x1xf32, #tpu.memory_space<vmem>>, vector<1x1xf32>
    %22 = arith.subf %12, %20 : vector<96x1xf32>
    %c0_9 = arith.constant 0 : index
    %c0_10 = arith.constant 0 : index
    %23 = vector.load %arg3[%c0_9, %c0_10] : memref<96x1xf32, #tpu.memory_space<vmem>>, vector<96x1xf32>
    %24 = arith.mulf %22, %23 : vector<96x1xf32>
    %cst_11 = arith.constant dense<0.000000e+00> : vector<1xf32>
    %25 = vector.multi_reduction <add>, %24, %cst_11 [0] : vector<96x1xf32> to vector<1xf32>
    %26 = vector.shape_cast %25 : vector<1xf32> to vector<1x1xf32>
    %27 = arith.addf %21, %26 : vector<1x1xf32>
    %c0_12 = arith.constant 0 : index
    %c0_13 = arith.constant 0 : index
    %28 = vector.load %arg4[%c0_12, %c0_13] : memref<1x1xf32, #tpu.memory_space<vmem>>, vector<1x1xf32>
    tpu.vector_store %arg4[%c0_12, %c0_13], %27 {strides = array<i32>} : memref<1x1xf32, #tpu.memory_space<vmem>>, vector<1x1xf32>,
    %c0_i32_14 = arith.constant 0 : i32
    %29 = arith.cmpi eq, %arg0, %c0_i32_14 : i32
    %30 = arith.extui %29 : i1 to i32
    %c0_i32_15 = arith.constant 0 : i32
    %31 = arith.cmpi ne, %30, %c0_i32_15 : i32
    scf.if %31 {
      %c0_16 = arith.constant 0 : index
      %c0_17 = arith.constant 0 : index
      %32 = vector.load %arg4[%c0_16, %c0_17] : memref<1x1xf32, #tpu.memory_space<vmem>>, vector<1x1xf32>
      %cst_18 = arith.constant 0.010416667 : f32
      %33 = vector.broadcast %cst_18 : f32 to vector<1x1xf32>
      %34 = arith.mulf %32, %33 : vector<1x1xf32>
      %c0_19 = arith.constant 0 : index
      %c0_20 = arith.constant 0 : index
      %35 = vector.load %arg4[%c0_19, %c0_20] : memref<1x1xf32, #tpu.memory_space<vmem>>, vector<1x1xf32>
      tpu.vector_store %arg4[%c0_19, %c0_20], %34 {strides = array<i32>} : memref<1x1xf32, #tpu.memory_space<vmem>>, vector<1x1xf32>,
    } else {
    }
    return
  }
  func.func @transform_0(%arg0: i32) -> (i32, i32) {
    %c0_i32 = arith.constant 0 : i32
    %c0_i32_0 = arith.constant 0 : i32
    return %arg0, %c0_i32 : i32, i32
  }
  func.func @transform_1(%arg0: i32) -> (i32, i32) {
    %c0_i32 = arith.constant 0 : i32
    %c0_i32_0 = arith.constant 0 : i32
    return %arg0, %c0_i32 : i32, i32
  }
  func.func @transform_2(%arg0: i32) -> (i32, i32) {
    %c0_i32 = arith.constant 0 : i32
    %c0_i32_0 = arith.constant 0 : i32
    return %arg0, %c0_i32 : i32, i32
  }
  func.func @transform_3(%arg0: i32) -> (i32, i32) {
    %c0_i32 = arith.constant 0 : i32
    %c0_i32_0 = arith.constant 0 : i32
    %c0_i32_1 = arith.constant 0 : i32
    return %c0_i32, %c0_i32_0 : i32, i32
  }
}

</mosaic_0001>

<llo_original>
// kernel: code_predictor_forward.11
$region0: #{code_predictor_forward.11}
  #allocation0 [shape = 'u32[]', space=smem, size = 0x4, offset = 0x4, fixed_abs, tag = 'smem constant byte address 0x4 - core index']
  #allocation1 [shape = 'u32[144,128]{1,0:T(1,128)}', space=vmem, size = 0x12000, scoped, tag = 'internal scratch']
  %s0 = inlined_call_operand.vmem [shape: f32[32,64], index: 0, kind: input, shape index: {}]
  %s1 = inlined_call_operand.vmem [shape: f32[64,32], index: 1, kind: input, shape index: {}]
  %s2 = inlined_call_operand.hbm [shape: f32[1,32], index: 2, kind: input, shape index: {}]
  %s3 = inlined_call_operand.vmem [shape: f32[32,1], index: 3, kind: input, shape index: {}]
  %s4 = inlined_call_operand.vmem [shape: f32[32,32], index: 4, kind: output, shape index: {}]
  %s5 = sld [smem:[#allocation0]]
  $region30: #{code_predictor_forward.11} parent=0
    _
  %s7 = ssub.s32 1, %s5
  %s8 = scalar_select 0, %s7, %s5
  $region1: #{code_predictor_forward.11} parent=0
    #allocation2 [shape = 'u8[512]{0}', space=vmem, size = 0x400, scoped, tag = 'input window, operand 2, single buffered']
    #allocation3 [shape = 's32[1]{0}', space=sflag, size = 0x4, scoped, tag = 'scoped memory for code_predictor_forward.11']
    %9 = vsyncpa [#allocation3], 0
    // Predicated region
    $region2: #{code_predictor_forward.11} parent=1 // pred_check
      _
    $region3: #{code_predictor_forward.11} parent=1 // pred_check_branch
      %11 = sbr.rel (0) target = $region5
    $region4: #{code_predictor_forward.11} parent=1 // pred_region
      _
    $region5: #{code_predictor_forward.11} parent=1 // pred_fallthru
      _
    // Predicated region
    $region6: #{code_predictor_forward.11} parent=1 // pred_check
      _
    $region7: #{code_predictor_forward.11} parent=1 // pred_check_branch
      %13 = sbr.rel (0) target = $region9
    $region8: #{code_predictor_forward.11} parent=1 // pred_region
      _
    $region9: #{code_predictor_forward.11} parent=1 // pred_fallthru
      _
    // Predicated region
    $region10: #{code_predictor_forward.11} parent=1 // pred_check
      _
    $region11: #{code_predictor_forward.11} parent=1 // pred_check_branch
      %15 = sbr.rel (0) target = $region13
    $region12: #{code_predictor_forward.11} parent=1 // pred_region
      %s17 = ssub.s32 16, 16
      %18 = vsyncadd [#allocation3], %s17
      %s20 = sshll.u32 [#allocation2], 4
      %s21 = int_to_ptr.vmem [resolvable:$true] %s20
      %23 = dma.hbm_to_vmem [thread:$0]  %s2, 16, %s21, [#allocation3]
    $region13: #{code_predictor_forward.11} parent=1 // pred_fallthru
      _
    // Predicated region
    $region14: #{code_predictor_forward.11} parent=1 // pred_check
      _
    $region15: #{code_predictor_forward.11} parent=1 // pred_check_branch
      %25 = sbr.rel (0) target = $region17
    $region16: #{code_predictor_forward.11} parent=1 // pred_region
      _
    $region17: #{code_predictor_forward.11} parent=1 // pred_fallthru
      _
    // Predicated region
    $region18: #{code_predictor_forward.11} parent=1 // pred_check
      _
    $region19: #{code_predictor_forward.11} parent=1 // pred_check_branch
      %27 = sbr.rel (0) target = $region21
    $region20: #{code_predictor_forward.11} parent=1 // pred_region
      %28 = dma.done [#allocation3], 16
    $region21: #{code_predictor_forward.11} parent=1 // pred_fallthru
      _
    %v30 = vld [vmem:[%s0] sm:$0xff]
    %v31 = vld [vmem:[%s0 + $0x8] sm:$0xff]
    %v32 = vld [vmem:[%s0 + $0x10] sm:$0xff]
    %v33 = vld [vmem:[%s0 + $0x18] sm:$0xff]
    %v34 = vpack.c.bf16 %v31, %v30
    %v35 = vpack.c.bf16 %v33, %v32
    %v36 = vld [vmem:[%s1] sm:$0xff]
    %v37 = vld [vmem:[%s1 + $0x8] sm:$0xff]
    %v38 = vld [vmem:[%s1 + $0x10] sm:$0xff]
    %v39 = vld [vmem:[%s1 + $0x18] sm:$0xff]
    %v40 = vld [vmem:[%s1 + $0x20] sm:$0xff]
    %v41 = vld [vmem:[%s1 + $0x28] sm:$0xff]
    %v42 = vld [vmem:[%s1 + $0x30] sm:$0xff]
    %v43 = vld [vmem:[%s1 + $0x38] sm:$0xff]
    %v44 = vpack.c.bf16 %v37, %v36
    %v45 = vpack.c.bf16 %v39, %v38
    %v46 = vpack.c.bf16 %v41, %v40
    %v47 = vpack.c.bf16 %v43, %v42
    %v48 = vld [vmem:[#allocation2] sm:$0x1]
    %v50 = vlaneseq
    %v51 = vshrl.u32 %v50, 7
    %v52 = vsub.s32 0, %v51
    %v53 = vrot.slane %v48, %v52
    %vm55 = vcmask 523264
    %v57 = vsel %vm55, %v34, 0
    %v60 = vsel %vm55, %v35, 0
    %62 = vmatprep.subr.bf16.mxu0 0
    %63 = vmatpush1.bf16.msra.mxu0 0
    %64 = vmatprep.subr.bf16.mxu0 0
    %65 = vmatpush1.bf16.msra.mxu0 0
    %66 = vmatprep.subr.bf16.mxu0 0
    %67 = vmatpush1.bf16.msra.mxu0 0
    %68 = vmatprep.subr.bf16.mxu0 0
    %69 = vmatpush1.bf16.msra.mxu0 0
    %70 = vmatprep.subr.bf16.mxu0 0
    %71 = vmatpush1.bf16.msra.mxu0 %v47
    %72 = vmatprep.subr.bf16.mxu0 0
    %73 = vmatpush1.bf16.msra.mxu0 %v46
    %74 = vmatprep.subr.bf16.mxu0 0
    %75 = vmatpush1.bf16.msra.mxu0 %v45
    %76 = vmatprep.subr.bf16.mxu0 0
    %77 = vmatpush1.bf16.msra.mxu0 %v44
    %78 = vmatprep.subr.bf16.mxu0 0
    %79 = vmatpush2.bf16.msra.mxu0 0
    %80 = vmatprep.subr.bf16.mxu0 0
    %81 = vmatpush2.bf16.msra.mxu0 0
    %82 = vmatprep.subr.bf16.mxu0 0
    %83 = vmatpush2.bf16.msra.mxu0 0
    %84 = vmatprep.subr.bf16.mxu0 0
    %85 = vmatpush2.bf16.msra.mxu0 0
    %86 = vmatprep.subr.bf16.mxu0 0
    %87 = vmatpush2.bf16.msra.mxu0 0
    %88 = vmatprep.subr.bf16.mxu0 0
    %89 = vmatpush2.bf16.msra.mxu0 0
    %90 = vmatprep.subr.bf16.mxu0 0
    %91 = vmatpush2.bf16.msra.mxu0 0
    %92 = vmatprep.subr.bf16.mxu0 0
    %93 = vmatpush2.bf16.msra.mxu0 0
    %94 = vmatprep.mubr.bf16.mxu0 0
    %95 = vmatmul.mubr.bf16.gmra.mxu0 %v57
    %v96 = vpop.f32.mrf.mxu0
    %v97 = vadd.f32 %v53, %v96
    %v98 = vpop.f32.mrf.mxu0
    %v99 = vpop.f32.mrf.mxu0
    %v100 = vadd.f32 %v53, %v99
    %v101 = vpop.f32.mrf.mxu0
    %102 = vmatprep.mubr.bf16.mxu0 0
    %103 = vmatmul.mubr.bf16.gmra.mxu0 %v60
    %v104 = vpop.f32.mrf.mxu0
    %v105 = vadd.f32 %v53, %v104
    %v106 = vpop.f32.mrf.mxu0
    %v107 = vpop.f32.mrf.mxu0
    %v108 = vadd.f32 %v53, %v107
    %v109 = vpop.f32.mrf.mxu0
    %110 = vdwg.mxu0
    %v111 = vld [vmem:[%s3] sm:$0xff]
    %v112 = vld [vmem:[%s3 + $0x8] sm:$0xff]
    %v113 = vld [vmem:[%s3 + $0x10] sm:$0xff]
    %v114 = vld [vmem:[%s3 + $0x18] sm:$0xff]
    %116 = vset.pattern.permute.xlu0 0
    %117 = vperm.xlu0 %116, %v111
    %v118 = vpop.permute.xlu0 %117
    %121 = vset.pattern.permute.xlu0 0
    %122 = vperm.xlu0 %121, %v112
    %v123 = vpop.permute.xlu0 %122
    %126 = vset.pattern.permute.xlu0 0
    %127 = vperm.xlu0 %126, %v113
    %v128 = vpop.permute.xlu0 %127
    %131 = vset.pattern.permute.xlu0 0
    %132 = vperm.xlu0 %131, %v114
    %v133 = vpop.permute.xlu0 %132
    %v135 = vmul.f32 %v97, %v118
    %v136 = vmul.f32 %v100, %v123
    %v137 = vmul.f32 %v105, %v128
    %v138 = vmul.f32 %v108, %v133
    %vm139 = vcmask 261120
    %140 = vst.msk [vmem:[%s4] sm:$0xff] %vm139, %v135
    %141 = vst.msk [vmem:[%s4 + $0x8] sm:$0xff] %vm139, %v136
    %142 = vst.msk [vmem:[%s4 + $0x10] sm:$0xff] %vm139, %v137
    %143 = vst.msk [vmem:[%s4 + $0x18] sm:$0xff] %vm139, %v138
    // Predicated region
    $region22: #{code_predictor_forward.11} parent=1 // pred_check
      _
    $region23: #{code_predictor_forward.11} parent=1 // pred_check_branch
      %145 = sbr.rel (0) target = $region25
    $region24: #{code_predictor_forward.11} parent=1 // pred_region
      _
    $region25: #{code_predictor_forward.11} parent=1 // pred_fallthru
      _
    // Predicated region
    $region26: #{code_predictor_forward.11} parent=1 // pred_check
      _
    $region27: #{code_predictor_forward.11} parent=1 // pred_check_branch
      %147 = sbr.rel (0) target = $region29
    $region28: #{code_predictor_forward.11} parent=1 // pred_region
      _
    $region29: #{code_predictor_forward.11} parent=1 // pred_fallthru
      _
    %148 = vsyncpa [#allocation3], 1

// kernel: code_predictor_forward.12
$region0: #{code_predictor_forward.12}
  #allocation0 [shape = 'u32[]', space=smem, size = 0x4, offset = 0x4, fixed_abs, tag = 'smem constant byte address 0x4 - core index']
  #allocation1 [shape = 'u32[144,128]{1,0:T(1,128)}', space=vmem, size = 0x12000, scoped, tag = 'internal scratch']
  %s0 = inlined_call_operand.hbm [shape: f32[32,64], index: 0, kind: input, shape index: {}]
  %s1 = inlined_call_operand.vmem [shape: f32[64,64], index: 1, kind: input, shape index: {}]
  %s2 = inlined_call_operand.hbm [shape: f32[1,64], index: 2, kind: input, shape index: {}]
  %s3 = inlined_call_operand.hbm [shape: f32[64,64], index: 3, kind: input, shape index: {}]
  %s4 = inlined_call_operand.hbm [shape: f32[1,64], index: 4, kind: input, shape index: {}]
  %s5 = inlined_call_operand.vmem [shape: f32[32,64], index: 5, kind: output, shape index: {}]
  %s6 = sld [smem:[#allocation0]]
  $region46: #{code_predictor_forward.12} parent=0
    _
  %s8 = ssub.s32 1, %s6
  %s9 = scalar_select 0, %s8, %s6
  $region1: #{code_predictor_forward.12} parent=0
    #allocation2 [shape = 'u8[16384]{0}', space=vmem, size = 0x4000, scoped, tag = 'input window, operand 0, single buffered']
    #allocation3 [shape = 's32[1]{0}', space=sflag, size = 0x4, scoped, tag = 'scoped memory for code_predictor_forward.12']
    #allocation4 [shape = 'u8[512]{0}', space=vmem, size = 0x400, scoped, tag = 'input window, operand 2, single buffered']
    #allocation5 [shape = 's32[1]{0}', space=sflag, size = 0x4, scoped, tag = 'scoped memory for code_predictor_forward.12']
    #allocation6 [shape = 'u8[32768]{0}', space=vmem, size = 0x8000, scoped, tag = 'input window, operand 3, single buffered']
    #allocation7 [shape = 'u8[512]{0}', space=vmem, size = 0x400, scoped, tag = 'input window, operand 4, single buffered']
    #allocation8 [shape = 's32[1]{0}', space=sflag, size = 0x4, scoped, tag = 'scoped memory for code_predictor_forward.12']
    %10 = vsyncpa [#allocation3], 0
    %11 = vsyncpa [#allocation5], 0
    %12 = vsyncpa [#allocation8], 0
    // Predicated region
    $region2: #{code_predictor_forward.12} parent=1 // pred_check
      _
    $region3: #{code_predictor_forward.12} parent=1 // pred_check_branch
      %14 = sbr.rel (0) target = $region5
    $region4: #{code_predictor_forward.12} parent=1 // pred_region
      %s16 = ssub.s32 512, 512
      %17 = vsyncadd [#allocation3], %s16
      %s18 = sshll.u32 [#allocation2], 4
      %s19 = int_to_ptr.vmem [resolvable:$true] %s18
      %24 = dma.hbm_to_vmem [thread:$0]  %s0, 512, %s19, [#allocation3], 128, 128, 8
    $region5: #{code_predictor_forward.12} parent=1 // pred_fallthru
      _
    // Predicated region
    $region6: #{code_predictor_forward.12} parent=1 // pred_check
      _
    $region7: #{code_predictor_forward.12} parent=1 // pred_check_branch
      %26 = sbr.rel (0) target = $region9
    $region8: #{code_predictor_forward.12} parent=1 // pred_region
      _
    $region9: #{code_predictor_forward.12} parent=1 // pred_fallthru
      _
    // Predicated region
    $region10: #{code_predictor_forward.12} parent=1 // pred_check
      _
    $region11: #{code_predictor_forward.12} parent=1 // pred_check_branch
      %28 = sbr.rel (0) target = $region13
    $region12: #{code_predictor_forward.12} parent=1 // pred_region
      %s30 = ssub.s32 16, 16
      %31 = vsyncadd [#allocation5], %s30
      %s33 = sshll.u32 [#allocation4], 4
      %s34 = int_to_ptr.vmem [resolvable:$true] %s33
      %36 = dma.hbm_to_vmem [thread:$0]  %s2, 16, %s34, [#allocation5]
    $region13: #{code_predictor_forward.12} parent=1 // pred_fallthru
      _
    // Predicated region
    $region14: #{code_predictor_forward.12} parent=1 // pred_check
      _
    $region15: #{code_predictor_forward.12} parent=1 // pred_check_branch
      %38 = sbr.rel (0) target = $region17
    $region16: #{code_predictor_forward.12} parent=1 // pred_region
      %s40 = ssub.s32 1024, 1024
      %41 = vsyncadd [#allocation5], %s40
      %s42 = sshll.u32 [#allocation6], 4
      %s43 = int_to_ptr.vmem [resolvable:$true] %s42
      %48 = dma.hbm_to_vmem [thread:$0]  %s3, 1024, %s43, [#allocation5], 128, 128, 8
    $region17: #{code_predictor_forward.12} parent=1 // pred_fallthru
      _
    // Predicated region
    $region18: #{code_predictor_forward.12} parent=1 // pred_check
      _
    $region19: #{code_predictor_forward.12} parent=1 // pred_check_branch
      %50 = sbr.rel (0) target = $region21
    $region20: #{code_predictor_forward.12} parent=1 // pred_region
      %s52 = ssub.s32 16, 16
      %53 = vsyncadd [#allocation8], %s52
      %s55 = sshll.u32 [#allocation7], 4
      %s56 = int_to_ptr.vmem [resolvable:$true] %s55
      %58 = dma.hbm_to_vmem [thread:$0]  %s4, 16, %s56, [#allocation8]
    $region21: #{code_predictor_forward.12} parent=1 // pred_fallthru
      _
    // Predicated region
    $region22: #{code_predictor_forward.12} parent=1 // pred_check
      _
    $region23: #{code_predictor_forward.12} parent=1 // pred_check_branch
      %60 = sbr.rel (0) target = $region25
    $region24: #{code_predictor_forward.12} parent=1 // pred_region
      %61 = dma.done [#allocation3], 512
    $region25: #{code_predictor_forward.12} parent=1 // pred_fallthru
      _
    // Predicated region
    $region26: #{code_predictor_forward.12} parent=1 // pred_check
      _
    $region27: #{code_predictor_forward.12} parent=1 // pred_check_branch
      %63 = sbr.rel (0) target = $region29
    $region28: #{code_predictor_forward.12} parent=1 // pred_region
      %64 = dma.done [#allocation5], 16
    $region29: #{code_predictor_forward.12} parent=1 // pred_fallthru
      _
    // Predicated region
    $region30: #{code_predictor_forward.12} parent=1 // pred_check
      _
    $region31: #{code_predictor_forward.12} parent=1 // pred_check_branch
      %66 = sbr.rel (0) target = $region33
    $region32: #{code_predictor_forward.12} parent=1 // pred_region
      %67 = dma.done [#allocation5], 1024
    $region33: #{code_predictor_forward.12} parent=1 // pred_fallthru
      _
    // Predicated region
    $region34: #{code_predictor_forward.12} parent=1 // pred_check
      _
    $region35: #{code_predictor_forward.12} parent=1 // pred_check_branch
      %69 = sbr.rel (0) target = $region37
    $region36: #{code_predictor_forward.12} parent=1 // pred_region
      %70 = dma.done [#allocation8], 16
    $region37: #{code_predictor_forward.12} parent=1 // pred_fallthru
      _
    %v72 = vld [vmem:[#allocation2] sm:$0xff]
    %v73 = vld [vmem:[#allocation2 + $0x8] sm:$0xff]
    %v74 = vld [vmem:[#allocation2 + $0x10] sm:$0xff]
    %v75 = vld [vmem:[#allocation2 + $0x18] sm:$0xff]
    %v76 = vpack.c.bf16 %v73, %v72
    %v77 = vpack.c.bf16 %v75, %v74
    %v78 = vld [vmem:[%s1] sm:$0xff]
    %v79 = vld [vmem:[%s1 + $0x8] sm:$0xff]
    %v80 = vld [vmem:[%s1 + $0x10] sm:$0xff]
    %v81 = vld [vmem:[%s1 + $0x18] sm:$0xff]
    %v82 = vld [vmem:[%s1 + $0x20] sm:$0xff]
    %v83 = vld [vmem:[%s1 + $0x28] sm:$0xff]
    %v84 = vld [vmem:[%s1 + $0x30] sm:$0xff]
    %v85 = vld [vmem:[%s1 + $0x38] sm:$0xff]
    %v86 = vpack.c.bf16 %v79, %v78
    %v87 = vpack.c.bf16 %v81, %v80
    %v88 = vpack.c.bf16 %v83, %v82
    %v89 = vpack.c.bf16 %v85, %v84
    %v90 = vld [vmem:[#allocation4] sm:$0x1]
    %v92 = vlaneseq
    %v93 = vshrl.u32 %v92, 7
    %v94 = vsub.s32 0, %v93
    %v95 = vrot.slane %v90, %v94
    %vm97 = vcmask 523264
    %v99 = vsel %vm97, %v76, 0
    %v102 = vsel %vm97, %v77, 0
    %104 = vmatprep.subr.bf16.mxu0 0
    %105 = vmatpush1.bf16.msra.mxu0 0
    %106 = vmatprep.subr.bf16.mxu0 0
    %107 = vmatpush1.bf16.msra.mxu0 0
    %108 = vmatprep.subr.bf16.mxu0 0
    %109 = vmatpush1.bf16.msra.mxu0 0
    %110 = vmatprep.subr.bf16.mxu0 0
    %111 = vmatpush1.bf16.msra.mxu0 0
    %112 = vmatprep.subr.bf16.mxu0 0
    %113 = vmatpush1.bf16.msra.mxu0 %v89
    %114 = vmatprep.subr.bf16.mxu0 0
    %115 = vmatpush1.bf16.msra.mxu0 %v88
    %116 = vmatprep.subr.bf16.mxu0 0
    %117 = vmatpush1.bf16.msra.mxu0 %v87
    %118 = vmatprep.subr.bf16.mxu0 0
    %119 = vmatpush1.bf16.msra.mxu0 %v86
    %120 = vmatprep.subr.bf16.mxu0 0
    %121 = vmatpush2.bf16.msra.mxu0 0
    %122 = vmatprep.subr.bf16.mxu0 0
    %123 = vmatpush2.bf16.msra.mxu0 0
    %124 = vmatprep.subr.bf16.mxu0 0
    %125 = vmatpush2.bf16.msra.mxu0 0
    %126 = vmatprep.subr.bf16.mxu0 0
    %127 = vmatpush2.bf16.msra.mxu0 0
    %128 = vmatprep.subr.bf16.mxu0 0
    %129 = vmatpush2.bf16.msra.mxu0 0
    %130 = vmatprep.subr.bf16.mxu0 0
    %131 = vmatpush2.bf16.msra.mxu0 0
    %132 = vmatprep.subr.bf16.mxu0 0
    %133 = vmatpush2.bf16.msra.mxu0 0
    %134 = vmatprep.subr.bf16.mxu0 0
    %135 = vmatpush2.bf16.msra.mxu0 0
    %136 = vmatprep.mubr.bf16.mxu0 0
    %137 = vmatmul.mubr.bf16.gmra.mxu0 %v99
    %v138 = vpop.f32.mrf.mxu0
    %v139 = vadd.f32 %v95, %v138
    %v140 = vpop.f32.mrf.mxu0
    %v141 = vpop.f32.mrf.mxu0
    %v142 = vadd.f32 %v95, %v141
    %v143 = vpop.f32.mrf.mxu0
    %144 = vmatprep.mubr.bf16.mxu0 0
    %145 = vmatmul.mubr.bf16.gmra.mxu0 %v102
    %v146 = vpop.f32.mrf.mxu0
    %v147 = vadd.f32 %v95, %v146
    %v148 = vpop.f32.mrf.mxu0
    %v149 = vpop.f32.mrf.mxu0
    %v150 = vadd.f32 %v95, %v149
    %v151 = vpop.f32.mrf.mxu0
    %152 = vdwg.mxu0
    %v153 = vmax.f32 %v139, 0.0
    %v154 = vmax.f32 %v142, 0.0
    %v155 = vmax.f32 %v147, 0.0
    %v156 = vmax.f32 %v150, 0.0
    %v157 = vand.u32 2147483647, %v139
    %v158 = vand.u32 2147483647, %v142
    %v159 = vand.u32 2147483647, %v147
    %v160 = vand.u32 2147483647, %v150
    %v161 = vsub.f32 0.0, %v157
    %v162 = vsub.f32 0.0, %v158
    %v163 = vsub.f32 0.0, %v159
    %v164 = vsub.f32 0.0, %v160
    %v165 = vmul.f32 %v161, 1.442695
    %v166 = vpow.pop %v165
    %v167 = vmul.f32 %v162, 1.442695
    %v168 = vpow.pop %v167
    %v169 = vmul.f32 %v163, 1.442695
    %v170 = vpow.pop %v169
    %v171 = vmul.f32 %v164, 1.442695
    %v172 = vpow.pop %v171
    %v173 = vadd.f32 %v166, 1.0
    %v174 = vlog2.pop %v173
    %v175 = vmul.f32 %v174, 0.6931472
    %v176 = vmul.f32 -0.5, %v166
    %v177 = vadd.f32 %v176, 1.0
    %v178 = vmul.f32 %v177, %v166
    %v179 = vand.u32 2147483647, %v166
    %vm180 = vcmp.lt.f32.partialorder %v179, 0.0004427343
    %v181 = vsel %vm180, %v178, %v175
    %v182 = vadd.f32 %v168, 1.0
    %v183 = vlog2.pop %v182
    %v184 = vmul.f32 %v183, 0.6931472
    %v185 = vmul.f32 -0.5, %v168
    %v186 = vadd.f32 %v185, 1.0
    %v187 = vmul.f32 %v186, %v168
    %v188 = vand.u32 2147483647, %v168
    %vm189 = vcmp.lt.f32.partialorder %v188, 0.0004427343
    %v190 = vsel %vm189, %v187, %v184
    %v191 = vadd.f32 %v170, 1.0
    %v192 = vlog2.pop %v191
    %v193 = vmul.f32 %v192, 0.6931472
    %v194 = vmul.f32 -0.5, %v170
    %v195 = vadd.f32 %v194, 1.0
    %v196 = vmul.f32 %v195, %v170
    %v197 = vand.u32 2147483647, %v170
    %vm198 = vcmp.lt.f32.partialorder %v197, 0.0004427343
    %v199 = vsel %vm198, %v196, %v193
    %v200 = vadd.f32 %v172, 1.0
    %v201 = vlog2.pop %v200
    %v202 = vmul.f32 %v201, 0.6931472
    %v203 = vmul.f32 -0.5, %v172
    %v204 = vadd.f32 %v203, 1.0
    %v205 = vmul.f32 %v204, %v172
    %v206 = vand.u32 2147483647, %v172
    %vm207 = vcmp.lt.f32.partialorder %v206, 0.0004427343
    %v208 = vsel %vm207, %v205, %v202
    %v209 = vadd.f32 %v153, %v181
    %v210 = vadd.f32 %v154, %v190
    %v211 = vadd.f32 %v155, %v199
    %v212 = vadd.f32 %v156, %v208
    %v213 = vtanh.pop %v209
    %v214 = vtanh.pop %v210
    %v215 = vtanh.pop %v211
    %v216 = vtanh.pop %v212
    %v217 = vmul.f32 %v139, %v213
    %v218 = vmul.f32 %v142, %v214
    %v219 = vmul.f32 %v147, %v215
    %v220 = vmul.f32 %v150, %v216
    %v221 = vpack.c.bf16 %v218, %v217
    %v222 = vpack.c.bf16 %v220, %v219
    %v223 = vld [vmem:[#allocation6] sm:$0xff]
    %v224 = vld [vmem:[#allocation6 + $0x8] sm:$0xff]
    %v225 = vld [vmem:[#allocation6 + $0x10] sm:$0xff]
    %v226 = vld [vmem:[#allocation6 + $0x18] sm:$0xff]
    %v227 = vld [vmem:[#allocation6 + $0x20] sm:$0xff]
    %v228 = vld [vmem:[#allocation6 + $0x28] sm:$0xff]
    %v229 = vld [vmem:[#allocation6 + $0x30] sm:$0xff]
    %v230 = vld [vmem:[#allocation6 + $0x38] sm:$0xff]
    %v231 = vpack.c.bf16 %v224, %v223
    %v232 = vpack.c.bf16 %v226, %v225
    %v233 = vpack.c.bf16 %v228, %v227
    %v234 = vpack.c.bf16 %v230, %v229
    %v235 = vld [vmem:[#allocation7] sm:$0x1]
    %v237 = vlaneseq
    %v238 = vshrl.u32 %v237, 7
    %v239 = vsub.s32 0, %v238
    %v240 = vrot.slane %v235, %v239
    %v243 = vsel %vm97, %v221, 0
    %v246 = vsel %vm97, %v222, 0
    %248 = vmatprep.subr.bf16.mxu0 0
    %249 = vmatpush1.bf16.msra.mxu0 0
    %250 = vmatprep.subr.bf16.mxu0 0
    %251 = vmatpush1.bf16.msra.mxu0 0
    %252 = vmatprep.subr.bf16.mxu0 0
    %253 = vmatpush1.bf16.msra.mxu0 0
    %254 = vmatprep.subr.bf16.mxu0 0
    %255 = vmatpush1.bf16.msra.mxu0 0
    %256 = vmatprep.subr.bf16.mxu0 0
    %257 = vmatpush1.bf16.msra.mxu0 %v234
    %258 = vmatprep.subr.bf16.mxu0 0
    %259 = vmatpush1.bf16.msra.mxu0 %v233
    %260 = vmatprep.subr.bf16.mxu0 0
    %261 = vmatpush1.bf16.msra.mxu0 %v232
    %262 = vmatprep.subr.bf16.mxu0 0
    %263 = vmatpush1.bf16.msra.mxu0 %v231
    %264 = vmatprep.subr.bf16.mxu0 0
    %265 = vmatpush2.bf16.msra.mxu0 0
    %266 = vmatprep.subr.bf16.mxu0 0
    %267 = vmatpush2.bf16.msra.mxu0 0
    %268 = vmatprep.subr.bf16.mxu0 0
    %269 = vmatpush2.bf16.msra.mxu0 0
    %270 = vmatprep.subr.bf16.mxu0 0
    %271 = vmatpush2.bf16.msra.mxu0 0
    %272 = vmatprep.subr.bf16.mxu0 0
    %273 = vmatpush2.bf16.msra.mxu0 0
    %274 = vmatprep.subr.bf16.mxu0 0
    %275 = vmatpush2.bf16.msra.mxu0 0
    %276 = vmatprep.subr.bf16.mxu0 0
    %277 = vmatpush2.bf16.msra.mxu0 0
    %278 = vmatprep.subr.bf16.mxu0 0
    %279 = vmatpush2.bf16.msra.mxu0 0
    %280 = vmatprep.mubr.bf16.mxu0 0
    %281 = vmatmul.mubr.bf16.gmra.mxu0 %v243
    %v282 = vpop.f32.mrf.mxu0
    %v283 = vadd.f32 %v240, %v282
    %v284 = vpop.f32.mrf.mxu0
    %v285 = vpop.f32.mrf.mxu0
    %v286 = vadd.f32 %v240, %v285
    %v287 = vpop.f32.mrf.mxu0
    %288 = vmatprep.mubr.bf16.mxu0 0
    %289 = vmatmul.mubr.bf16.gmra.mxu0 %v246
    %v290 = vpop.f32.mrf.mxu0
    %v291 = vadd.f32 %v240, %v290
    %v292 = vpop.f32.mrf.mxu0
    %v293 = vpop.f32.mrf.mxu0
    %v294 = vadd.f32 %v240, %v293
    %v295 = vpop.f32.mrf.mxu0
    %296 = vdwg.mxu0
    %v297 = vmax.f32 %v283, 0.0
    %v298 = vmax.f32 %v286, 0.0
    %v299 = vmax.f32 %v291, 0.0
    %v300 = vmax.f32 %v294, 0.0
    %v301 = vand.u32 2147483647, %v283
    %v302 = vand.u32 2147483647, %v286
    %v303 = vand.u32 2147483647, %v291
    %v304 = vand.u32 2147483647, %v294
    %v305 = vsub.f32 0.0, %v301
    %v306 = vsub.f32 0.0, %v302
    %v307 = vsub.f32 0.0, %v303
    %v308 = vsub.f32 0.0, %v304
    %v309 = vmul.f32 %v305, 1.442695
    %v310 = vpow.pop %v309
    %v311 = vmul.f32 %v306, 1.442695
    %v312 = vpow.pop %v311
    %v313 = vmul.f32 %v307, 1.442695
    %v314 = vpow.pop %v313
    %v315 = vmul.f32 %v308, 1.442695
    %v316 = vpow.pop %v315
    %v317 = vadd.f32 %v310, 1.0
    %v318 = vlog2.pop %v317
    %v319 = vmul.f32 %v318, 0.6931472
    %v320 = vmul.f32 -0.5, %v310
    %v321 = vadd.f32 %v320, 1.0
    %v322 = vmul.f32 %v321, %v310
    %v323 = vand.u32 2147483647, %v310
    %vm324 = vcmp.lt.f32.partialorder %v323, 0.0004427343
    %v325 = vsel %vm324, %v322, %v319
    %v326 = vadd.f32 %v312, 1.0
    %v327 = vlog2.pop %v326
    %v328 = vmul.f32 %v327, 0.6931472
    %v329 = vmul.f32 -0.5, %v312
    %v330 = vadd.f32 %v329, 1.0
    %v331 = vmul.f32 %v330, %v312
    %v332 = vand.u32 2147483647, %v312
    %vm333 = vcmp.lt.f32.partialorder %v332, 0.0004427343
    %v334 = vsel %vm333, %v331, %v328
    %v335 = vadd.f32 %v314, 1.0
    %v336 = vlog2.pop %v335
    %v337 = vmul.f32 %v336, 0.6931472
    %v338 = vmul.f32 -0.5, %v314
    %v339 = vadd.f32 %v338, 1.0
    %v340 = vmul.f32 %v339, %v314
    %v341 = vand.u32 2147483647, %v314
    %vm342 = vcmp.lt.f32.partialorder %v341, 0.0004427343
    %v343 = vsel %vm342, %v340, %v337
    %v344 = vadd.f32 %v316, 1.0
    %v345 = vlog2.pop %v344
    %v346 = vmul.f32 %v345, 0.6931472
    %v347 = vmul.f32 -0.5, %v316
    %v348 = vadd.f32 %v347, 1.0
    %v349 = vmul.f32 %v348, %v316
    %v350 = vand.u32 2147483647, %v316
    %vm351 = vcmp.lt.f32.partialorder %v350, 0.0004427343
    %v352 = vsel %vm351, %v349, %v346
    %v353 = vadd.f32 %v297, %v325
    %v354 = vadd.f32 %v298, %v334
    %v355 = vadd.f32 %v299, %v343
    %v356 = vadd.f32 %v300, %v352
    %v357 = vtanh.pop %v353
    %v358 = vtanh.pop %v354
    %v359 = vtanh.pop %v355
    %v360 = vtanh.pop %v356
    %v361 = vmul.f32 %v283, %v357
    %v362 = vmul.f32 %v286, %v358
    %v363 = vmul.f32 %v291, %v359
    %v364 = vmul.f32 %v294, %v360
    %365 = vst.msk [vmem:[%s5] sm:$0xff] %vm97, %v361
    %366 = vst.msk [vmem:[%s5 + $0x8] sm:$0xff] %vm97, %v362
    %367 = vst.msk [vmem:[%s5 + $0x10] sm:$0xff] %vm97, %v363
    %368 = vst.msk [vmem:[%s5 + $0x18] sm:$0xff] %vm97, %v364
    // Predicated region
    $region38: #{code_predictor_forward.12} parent=1 // pred_check
      _
    $region39: #{code_predictor_forward.12} parent=1 // pred_check_branch
      %370 = sbr.rel (0) target = $region41
    $region40: #{code_predictor_forward.12} parent=1 // pred_region
      _
    $region41: #{code_predictor_forward.12} parent=1 // pred_fallthru
      _
    // Predicated region
    $region42: #{code_predictor_forward.12} parent=1 // pred_check
      _
    $region43: #{code_predictor_forward.12} parent=1 // pred_check_branch
      %372 = sbr.rel (0) target = $region45
    $region44: #{code_predictor_forward.12} parent=1 // pred_region
      _
    $region45: #{code_predictor_forward.12} parent=1 // pred_fallthru
      _
    %373 = vsyncpa [#allocation3], 1
    %374 = vsyncpa [#allocation5], 1
    %375 = vsyncpa [#allocation8], 1

// kernel: code_predictor_forward.13
$region0: #{code_predictor_forward.13}
  #allocation0 [shape = 'u32[]', space=smem, size = 0x4, offset = 0x4, fixed_abs, tag = 'smem constant byte address 0x4 - core index']
  #allocation1 [shape = 'u32[144,128]{1,0:T(1,128)}', space=vmem, size = 0x12000, scoped, tag = 'internal scratch']
  #allocation2 [shape = 'f32[20,64]{1,0:T(8,128)}', space=vmem, size = 0x3000, scoped, tag = 'scratch operand']
  %s0 = inlined_call_operand.vmem [shape: f32[2,16,64], index: 0, kind: input, shape index: {}]
  %s1 = inlined_call_operand.vmem [shape: f32[5,64,128], index: 1, kind: input, shape index: {}]
  %s2 = inlined_call_operand.vmem [shape: f32[1,128], index: 2, kind: input, shape index: {}]
  %s3 = inlined_call_operand.vmem [shape: f32[2,16,64], index: 3, kind: output, shape index: {}]
  %s4 = sld [smem:[#allocation0]]
  $region45: #{code_predictor_forward.13} parent=0
    _
  %s6 = ssub.s32 1, %s4
  %s7 = scalar_select 0, %s6, %s4
  loop: start=0, step=1, limit=4
  $region2: #{code_predictor_forward.13} parent=0 // loop_pre_header
    _
  $region3: #{code_predictor_forward.13} parent=0 // loop_header
    %s9 = sphi 0, %s13
    %p10 = scmp.ge.s32.totalorder %s9, 4
    %s19 = sphi 0, %s21
    %s22 = sphi 0, %s19
    %s23 = sphi 0, %s22
    %s39 = sphi 0, %s23
    %s43 = sphi 0, %s43
    %s45 = sphi 0, %s43
    %s46 = sphi 0, %s45
    %s60 = sphi 0, %s46
    %s64 = sphi 0, %s64
    %s66 = sphi 0, %s64
    %s67 = sphi 0, %s66
    %s81 = sphi 0, %s67
    %s87 = sphi 0, %s89
    %s90 = sphi 0, %s87
    %s91 = sphi 0, %s90
    %s107 = sphi 0, %s91
  $region4: #{code_predictor_forward.13} parent=0 // loop_header_branch
    %12 = sbr.rel (%p10) target = $region8
  $region5: #{code_predictor_forward.13} parent=0 // loop_body
    %s14 = ssub.s32 %s9, 1
    %s15 = ssub.s32 %s9, 2
    %s16 = sadd.s32 %s9, 1
    %s17 = ssub.s32 %s9, %s16
    %p18 = scmp.eq.s32.totalorder %s17, 0
    %s20 = sadd.s32 %s19, 1
    %s21 = scalar_select %p18, %s19, %s20
    %p24 = pneg %p18
    %p25 = scmp.eq.s32.totalorder %s9, 1
    %p26 = por %p24, %p25
    %p27 = scmp.ne.s32.totalorder %s19, %s22
    %p28 = scmp.eq.s32.totalorder %s9, 0
    %p29 = por %p27, %p28
    %p30 = scmp.ne.s32.totalorder %s19, %s22
    %p31 = scmp.eq.s32.totalorder %s14, 1
    %p32 = por %p30, %p31
    %p33 = scmp.ne.s32.totalorder %s22, %s23
    %p34 = scmp.eq.s32.totalorder %s14, 0
    %p35 = por %p33, %p34
    %p36 = scmp.ne.s32.totalorder %s22, %s23
    %p37 = scmp.eq.s32.totalorder %s15, 1
    %p38 = por %p36, %p37
    %p40 = scmp.ne.s32.totalorder %s23, %s39
    %p41 = scmp.eq.s32.totalorder %s15, 0
    %p42 = por %p40, %p41
    %s44 = sadd.s32 %s43, 1
    %p47 = scmp.eq.s32.totalorder %s9, 1
    %p48 = scmp.ne.s32.totalorder %s43, %s45
    %p49 = scmp.eq.s32.totalorder %s9, 0
    %p50 = por %p48, %p49
    %p51 = scmp.ne.s32.totalorder %s43, %s45
    %p52 = scmp.eq.s32.totalorder %s14, 1
    %p53 = por %p51, %p52
    %p54 = scmp.ne.s32.totalorder %s45, %s46
    %p55 = scmp.eq.s32.totalorder %s14, 0
    %p56 = por %p54, %p55
    %p57 = scmp.ne.s32.totalorder %s45, %s46
    %p58 = scmp.eq.s32.totalorder %s15, 1
    %p59 = por %p57, %p58
    %p61 = scmp.ne.s32.totalorder %s46, %s60
    %p62 = scmp.eq.s32.totalorder %s15, 0
    %p63 = por %p61, %p62
    %s65 = sadd.s32 %s64, 1
    %p68 = scmp.eq.s32.totalorder %s9, 1
    %p69 = scmp.ne.s32.totalorder %s64, %s66
    %p70 = scmp.eq.s32.totalorder %s9, 0
    %p71 = por %p69, %p70
    %p72 = scmp.ne.s32.totalorder %s64, %s66
    %p73 = scmp.eq.s32.totalorder %s14, 1
    %p74 = por %p72, %p73
    %p75 = scmp.ne.s32.totalorder %s66, %s67
    %p76 = scmp.eq.s32.totalorder %s14, 0
    %p77 = por %p75, %p76
    %p78 = scmp.ne.s32.totalorder %s66, %s67
    %p79 = scmp.eq.s32.totalorder %s15, 1
    %p80 = por %p78, %p79
    %p82 = scmp.ne.s32.totalorder %s67, %s81
    %p83 = scmp.eq.s32.totalorder %s15, 0
    %p84 = por %p82, %p83
    %s85 = ssub.s32 %s9, %s16
    %p86 = scmp.eq.s32.totalorder %s85, 0
    %s88 = sadd.s32 %s87, 1
    %s89 = scalar_select %p86, %s87, %s88
    %p92 = pneg %p86
    %p93 = scmp.eq.s32.totalorder %s9, 1
    %p94 = por %p92, %p93
    %p95 = scmp.ne.s32.totalorder %s87, %s90
    %p96 = scmp.eq.s32.totalorder %s9, 0
    %p97 = por %p95, %p96
    %p98 = scmp.ne.s32.totalorder %s87, %s90
    %p99 = scmp.eq.s32.totalorder %s14, 1
    %p100 = por %p98, %p99
    %p101 = scmp.ne.s32.totalorder %s90, %s91
    %p102 = scmp.eq.s32.totalorder %s14, 0
    %p103 = por %p101, %p102
    %p104 = scmp.ne.s32.totalorder %s90, %s91
    %p105 = scmp.eq.s32.totalorder %s15, 1
    %p106 = por %p104, %p105
    %p108 = scmp.ne.s32.totalorder %s91, %s107
    %p109 = scmp.eq.s32.totalorder %s15, 0
    %p110 = por %p108, %p109
    %p111 = scmp.le.s32.totalorder 1, %s9
    %p112 = scmp.lt.s32.totalorder %s9, 3
    %p113 = pnand %p111, %p112
    %p114 = pneg %p113
    // Predicated region
    $region9: #{code_predictor_forward.13} parent=5 // pred_check
      _
    $region10: #{code_predictor_forward.13} parent=5 // pred_check_branch
      %116 = sbr.rel (%p113) target = $region12
    $region11: #{code_predictor_forward.13} parent=5 // pred_region
      %s117 = ssub.s32 %s9, 1
      // Predicated region
      $region13: #{code_predictor_forward.13} parent=11 // pred_check
        %p118 = pneg %p56
      $region14: #{code_predictor_forward.13} parent=11 // pred_check_branch
        %120 = sbr.rel (%p118) target = $region16
      $region15: #{code_predictor_forward.13} parent=11 // pred_region
        _
      $region16: #{code_predictor_forward.13} parent=11 // pred_fallthru
        _
      // Predicated region
      $region17: #{code_predictor_forward.13} parent=11 // pred_check
        %p121 = pneg %p77
      $region18: #{code_predictor_forward.13} parent=11 // pred_check_branch
        %123 = sbr.rel (%p121) target = $region20
      $region19: #{code_predictor_forward.13} parent=11 // pred_region
        _
      $region20: #{code_predictor_forward.13} parent=11 // pred_fallthru
        _
    $region12: #{code_predictor_forward.13} parent=5 // pred_fallthru
      _
    %p124 = scmp.lt.s32.totalorder %s9, 2
    // Predicated region
    $region21: #{code_predictor_forward.13} parent=5 // pred_check
      %p125 = pneg %p124
    $region22: #{code_predictor_forward.13} parent=5 // pred_check_branch
      %127 = sbr.rel (%p125) target = $region24
    $region23: #{code_predictor_forward.13} parent=5 // pred_region
      // Predicated region
      $region25: #{code_predictor_forward.13} parent=23 // pred_check
        %p128 = pneg %p29
      $region26: #{code_predictor_forward.13} parent=23 // pred_check_branch
        %130 = sbr.rel (%p128) target = $region28
      $region27: #{code_predictor_forward.13} parent=23 // pred_region
        %p131 = scmp.lt.s32.totalorder %s9, 1
        %s132 = scalar_select %p131, %s9, 1
        %s133 = smul.addr %s132, 2
        %s134 = smul.addr %s133, 8
        %s135 = scalar_lea.vmem %s0, %s134
      $region28: #{code_predictor_forward.13} parent=23 // pred_fallthru
        _
    $region24: #{code_predictor_forward.13} parent=5 // pred_fallthru
      _
    %p136 = scmp.le.s32.totalorder 1, %s9
    %p137 = scmp.lt.s32.totalorder %s9, 3
    %p138 = pnand %p136, %p137
    %p139 = pneg %p138
    // Predicated region
    $region29: #{code_predictor_forward.13} parent=5 // pred_check
      _
    $region30: #{code_predictor_forward.13} parent=5 // pred_check_branch
      %141 = sbr.rel (%p138) target = $region32
    $region31: #{code_predictor_forward.13} parent=5 // pred_region
      %s142 = ssub.s32 %s9, 1
      %p143 = scmp.lt.s32.totalorder %s14, 1
      %s144 = scalar_select %p143, %s14, 1
      %s145 = smul.addr %s144, 2
      %s146 = smul.addr %s145, 8
      %s147 = scalar_lea.vmem %s0, %s146
      %p148 = pneg %p35
      %p149 = pneg %p32
      %p150 = pneg %p56
      %p151 = pneg %p53
      %p152 = pneg %p77
      %p153 = pneg %p74
      %p154 = pneg %p103
      %p155 = pneg %p100
      %p156 = scmp.lt.s32.totalorder %s14, 1
      %s157 = scalar_select %p156, %s14, 1
      %s158 = smul.addr %s157, 2
      %s159 = smul.addr %s158, 8
      %s160 = scalar_lea.vmem %s3, %s159
      %p161 = scmp.lt.s32.totalorder %s14, 1
      %s162 = scalar_select %p161, %s14, 1
      %s163 = smul.addr %s162, 2
      %s164 = smul.addr %s163, 8
      %s165 = scalar_lea.vmem %s0, %s164
      %p166 = scmp.lt.s32.totalorder %s14, 1
      %s167 = scalar_select %p166, %s14, 1
      %s168 = smul.addr %s167, 2
      %s169 = smul.addr %s168, 8
      %s170 = scalar_lea.vmem %s3, %s169
      %v172 = vld [vmem:[%s165] sm:$0xff]
      %v173 = vld [vmem:[%s165 + $0x8] sm:$0xff]
      %vm174 = vcmask 523264
      %175 = vst.msk [vmem:[#allocation2] sm:$0xff] %vm174, 0.0
      %176 = vst.msk [vmem:[#allocation2 + $0x8] sm:$0xff] %vm174, 0.0
      %vm177 = vcmask 519168
      %178 = vst.msk [vmem:[#allocation2 + $0x10] sm:$0xf] %vm177, 0.0
      %179 = vst.msk [vmem:[#allocation2 + $0x2] sm:$0xff] %vm174, %v172
      %180 = vst.msk [vmem:[#allocation2 + $0xa] sm:$0xff] %vm174, %v173
      %v181 = vld [vmem:[#allocation2] sm:$0xff]
      %v182 = vld [vmem:[#allocation2 + $0x8] sm:$0xff]
      %v183 = vpack.c.bf16 %v182, %v181
      %v184 = vld [vmem:[%s1] sm:$0xff]
      %v185 = vld [vmem:[%s1 + $0x8] sm:$0xff]
      %v186 = vld [vmem:[%s1 + $0x10] sm:$0xff]
      %v187 = vld [vmem:[%s1 + $0x18] sm:$0xff]
      %v188 = vld [vmem:[%s1 + $0x20] sm:$0xff]
      %v189 = vld [vmem:[%s1 + $0x28] sm:$0xff]
      %v190 = vld [vmem:[%s1 + $0x30] sm:$0xff]
      %v191 = vld [vmem:[%s1 + $0x38] sm:$0xff]
      %v192 = vpack.c.bf16 %v185, %v184
      %v193 = vpack.c.bf16 %v187, %v186
      %v194 = vpack.c.bf16 %v189, %v188
      %v195 = vpack.c.bf16 %v191, %v190
      %v196 = vld [vmem:[#allocation2 + $0x1] sm:$0xff]
      %v197 = vld [vmem:[#allocation2 + $0x9] sm:$0xff]
      %v198 = vpack.c.bf16 %v197, %v196
      %s199 = scalar_lea.vmem %s1, 64
      %v200 = vld [vmem:[%s199] sm:$0xff]
      %v201 = vld [vmem:[%s199 + $0x8] sm:$0xff]
      %v202 = vld [vmem:[%s199 + $0x10] sm:$0xff]
      %v203 = vld [vmem:[%s199 + $0x18] sm:$0xff]
      %v204 = vld [vmem:[%s199 + $0x20] sm:$0xff]
      %v205 = vld [vmem:[%s199 + $0x28] sm:$0xff]
      %v206 = vld [vmem:[%s199 + $0x30] sm:$0xff]
      %v207 = vld [vmem:[%s199 + $0x38] sm:$0xff]
      %v208 = vpack.c.bf16 %v201, %v200
      %v209 = vpack.c.bf16 %v203, %v202
      %v210 = vpack.c.bf16 %v205, %v204
      %v211 = vpack.c.bf16 %v207, %v206
      %v213 = vsel %vm174, %v198, 0
      %215 = vmatprep.subr.bf16.mxu0 0
      %216 = vmatpush1.bf16.msra.mxu0 0
      %217 = vmatprep.subr.bf16.mxu0 0
      %218 = vmatpush1.bf16.msra.mxu0 0
      %219 = vmatprep.subr.bf16.mxu0 0
      %220 = vmatpush1.bf16.msra.mxu0 0
      %221 = vmatprep.subr.bf16.mxu0 0
      %222 = vmatpush1.bf16.msra.mxu0 0
      %223 = vmatprep.subr.bf16.mxu0 0
      %224 = vmatpush1.bf16.msra.mxu0 %v211
      %225 = vmatprep.subr.bf16.mxu0 0
      %226 = vmatpush1.bf16.msra.mxu0 %v210
      %227 = vmatprep.subr.bf16.mxu0 0
      %228 = vmatpush1.bf16.msra.mxu0 %v209
      %229 = vmatprep.subr.bf16.mxu0 0
      %230 = vmatpush1.bf16.msra.mxu0 %v208
      %231 = vmatprep.subr.bf16.mxu0 0
      %232 = vmatpush2.bf16.msra.mxu0 0
      %233 = vmatprep.subr.bf16.mxu0 0
      %234 = vmatpush2.bf16.msra.mxu0 0
      %235 = vmatprep.subr.bf16.mxu0 0
      %236 = vmatpush2.bf16.msra.mxu0 0
      %237 = vmatprep.subr.bf16.mxu0 0
      %238 = vmatpush2.bf16.msra.mxu0 0
      %239 = vmatprep.subr.bf16.mxu0 0
      %240 = vmatpush2.bf16.msra.mxu0 0
      %241 = vmatprep.subr.bf16.mxu0 0
      %242 = vmatpush2.bf16.msra.mxu0 0
      %243 = vmatprep.subr.bf16.mxu0 0
      %244 = vmatpush2.bf16.msra.mxu0 0
      %245 = vmatprep.subr.bf16.mxu0 0
      %246 = vmatpush2.bf16.msra.mxu0 0
      %247 = vmatprep.mubr.bf16.mxu0 0
      %248 = vmatmul.mubr.bf16.gmra.mxu0 %v213
      %v249 = vpop.f32.mrf.mxu0
      %v250 = vadd.f32 0.0, %v249
      %v251 = vpop.f32.mrf.mxu0
      %v252 = vpop.f32.mrf.mxu0
      %v253 = vadd.f32 0.0, %v252
      %v254 = vpop.f32.mrf.mxu0
      %255 = vdwg.mxu0
      %v257 = vsel %vm174, %v183, 0
      %259 = vmatprep.subr.bf16.mxu0 0
      %260 = vmatpush1.bf16.msra.mxu0 0
      %261 = vmatprep.subr.bf16.mxu0 0
      %262 = vmatpush1.bf16.msra.mxu0 0
      %263 = vmatprep.subr.bf16.mxu0 0
      %264 = vmatpush1.bf16.msra.mxu0 0
      %265 = vmatprep.subr.bf16.mxu0 0
      %266 = vmatpush1.bf16.msra.mxu0 0
      %267 = vmatprep.subr.bf16.mxu0 0
      %268 = vmatpush1.bf16.msra.mxu0 %v195
      %269 = vmatprep.subr.bf16.mxu0 0
      %270 = vmatpush1.bf16.msra.mxu0 %v194
      %271 = vmatprep.subr.bf16.mxu0 0
      %272 = vmatpush1.bf16.msra.mxu0 %v193
      %273 = vmatprep.subr.bf16.mxu0 0
      %274 = vmatpush1.bf16.msra.mxu0 %v192
      %275 = vmatprep.subr.bf16.mxu0 0
      %276 = vmatpush2.bf16.msra.mxu0 0
      %277 = vmatprep.subr.bf16.mxu0 0
      %278 = vmatpush2.bf16.msra.mxu0 0
      %279 = vmatprep.subr.bf16.mxu0 0
      %280 = vmatpush2.bf16.msra.mxu0 0
      %281 = vmatprep.subr.bf16.mxu0 0
      %282 = vmatpush2.bf16.msra.mxu0 0
      %283 = vmatprep.subr.bf16.mxu0 0
      %284 = vmatpush2.bf16.msra.mxu0 0
      %285 = vmatprep.subr.bf16.mxu0 0
      %286 = vmatpush2.bf16.msra.mxu0 0
      %287 = vmatprep.subr.bf16.mxu0 0
      %288 = vmatpush2.bf16.msra.mxu0 0
      %289 = vmatprep.subr.bf16.mxu0 0
      %290 = vmatpush2.bf16.msra.mxu0 0
      %291 = vmatprep.mubr.bf16.mxu0 0
      %292 = vmatmul.mubr.bf16.gmra.mxu0 %v257
      %v293 = vpop.f32.mrf.mxu0
      %v294 = vadd.f32 %v250, %v293
      %v295 = vpop.f32.mrf.mxu0
      %v296 = vpop.f32.mrf.mxu0
      %v297 = vadd.f32 %v253, %v296
      %v298 = vpop.f32.mrf.mxu0
      %299 = vdwg.mxu0
      %v300 = vld [vmem:[#allocation2 + $0x2] sm:$0xff]
      %v301 = vld [vmem:[#allocation2 + $0xa] sm:$0xff]
      %v302 = vpack.c.bf16 %v301, %v300
      %s303 = scalar_lea.vmem %s1, 128
      %v304 = vld [vmem:[%s303] sm:$0xff]
      %v305 = vld [vmem:[%s303 + $0x8] sm:$0xff]
      %v306 = vld [vmem:[%s303 + $0x10] sm:$0xff]
      %v307 = vld [vmem:[%s303 + $0x18] sm:$0xff]
      %v308 = vld [vmem:[%s303 + $0x20] sm:$0xff]
      %v309 = vld [vmem:[%s303 + $0x28] sm:$0xff]
      %v310 = vld [vmem:[%s303 + $0x30] sm:$0xff]
      %v311 = vld [vmem:[%s303 + $0x38] sm:$0xff]
      %v312 = vpack.c.bf16 %v305, %v304
      %v313 = vpack.c.bf16 %v307, %v306
      %v314 = vpack.c.bf16 %v309, %v308
      %v315 = vpack.c.bf16 %v311, %v310
      %v317 = vsel %vm174, %v302, 0
      %319 = vmatprep.subr.bf16.mxu0 0
      %320 = vmatpush1.bf16.msra.mxu0 0
      %321 = vmatprep.subr.bf16.mxu0 0
      %322 = vmatpush1.bf16.msra.mxu0 0
      %323 = vmatprep.subr.bf16.mxu0 0
      %324 = vmatpush1.bf16.msra.mxu0 0
      %325 = vmatprep.subr.bf16.mxu0 0
      %326 = vmatpush1.bf16.msra.mxu0 0
      %327 = vmatprep.subr.bf16.mxu0 0
      %328 = vmatpush1.bf16.msra.mxu0 %v315
      %329 = vmatprep.subr.bf16.mxu0 0
      %330 = vmatpush1.bf16.msra.mxu0 %v314
      %331 = vmatprep.subr.bf16.mxu0 0
      %332 = vmatpush1.bf16.msra.mxu0 %v313
      %333 = vmatprep.subr.bf16.mxu0 0
      %334 = vmatpush1.bf16.msra.mxu0 %v312
      %335 = vmatprep.subr.bf16.mxu0 0
      %336 = vmatpush2.bf16.msra.mxu0 0
      %337 = vmatprep.subr.bf16.mxu0 0
      %338 = vmatpush2.bf16.msra.mxu0 0
      %339 = vmatprep.subr.bf16.mxu0 0
      %340 = vmatpush2.bf16.msra.mxu0 0
      %341 = vmatprep.subr.bf16.mxu0 0
      %342 = vmatpush2.bf16.msra.mxu0 0
      %343 = vmatprep.subr.bf16.mxu0 0
      %344 = vmatpush2.bf16.msra.mxu0 0
      %345 = vmatprep.subr.bf16.mxu0 0
      %346 = vmatpush2.bf16.msra.mxu0 0
      %347 = vmatprep.subr.bf16.mxu0 0
      %348 = vmatpush2.bf16.msra.mxu0 0
      %349 = vmatprep.subr.bf16.mxu0 0
      %350 = vmatpush2.bf16.msra.mxu0 0
      %351 = vmatprep.mubr.bf16.mxu0 0
      %352 = vmatmul.mubr.bf16.gmra.mxu0 %v317
      %v353 = vpop.f32.mrf.mxu0
      %v354 = vadd.f32 0.0, %v353
      %v355 = vpop.f32.mrf.mxu0
      %v356 = vpop.f32.mrf.mxu0
      %v357 = vadd.f32 0.0, %v356
      %v358 = vpop.f32.mrf.mxu0
      %359 = vdwg.mxu0
      %v360 = vadd.f32 %v294, %v354
      %v361 = vadd.f32 %v297, %v357
      %v362 = vld [vmem:[#allocation2 + $0x3] sm:$0xff]
      %v363 = vld [vmem:[#allocation2 + $0xb] sm:$0xff]
      %v364 = vpack.c.bf16 %v363, %v362
      %s365 = scalar_lea.vmem %s1, 192
      %v366 = vld [vmem:[%s365] sm:$0xff]
      %v367 = vld [vmem:[%s365 + $0x8] sm:$0xff]
      %v368 = vld [vmem:[%s365 + $0x10] sm:$0xff]
      %v369 = vld [vmem:[%s365 + $0x18] sm:$0xff]
      %v370 = vld [vmem:[%s365 + $0x20] sm:$0xff]
      %v371 = vld [vmem:[%s365 + $0x28] sm:$0xff]
      %v372 = vld [vmem:[%s365 + $0x30] sm:$0xff]
      %v373 = vld [vmem:[%s365 + $0x38] sm:$0xff]
      %v374 = vpack.c.bf16 %v367, %v366
      %v375 = vpack.c.bf16 %v369, %v368
      %v376 = vpack.c.bf16 %v371, %v370
      %v377 = vpack.c.bf16 %v373, %v372
      %v379 = vsel %vm174, %v364, 0
      %381 = vmatprep.subr.bf16.mxu0 0
      %382 = vmatpush1.bf16.msra.mxu0 0
      %383 = vmatprep.subr.bf16.mxu0 0
      %384 = vmatpush1.bf16.msra.mxu0 0
      %385 = vmatprep.subr.bf16.mxu0 0
      %386 = vmatpush1.bf16.msra.mxu0 0
      %387 = vmatprep.subr.bf16.mxu0 0
      %388 = vmatpush1.bf16.msra.mxu0 0
      %389 = vmatprep.subr.bf16.mxu0 0
      %390 = vmatpush1.bf16.msra.mxu0 %v377
      %391 = vmatprep.subr.bf16.mxu0 0
      %392 = vmatpush1.bf16.msra.mxu0 %v376
      %393 = vmatprep.subr.bf16.mxu0 0
      %394 = vmatpush1.bf16.msra.mxu0 %v375
      %395 = vmatprep.subr.bf16.mxu0 0
      %396 = vmatpush1.bf16.msra.mxu0 %v374
      %397 = vmatprep.subr.bf16.mxu0 0
      %398 = vmatpush2.bf16.msra.mxu0 0
      %399 = vmatprep.subr.bf16.mxu0 0
      %400 = vmatpush2.bf16.msra.mxu0 0
      %401 = vmatprep.subr.bf16.mxu0 0
      %402 = vmatpush2.bf16.msra.mxu0 0
      %403 = vmatprep.subr.bf16.mxu0 0
      %404 = vmatpush2.bf16.msra.mxu0 0
      %405 = vmatprep.subr.bf16.mxu0 0
      %406 = vmatpush2.bf16.msra.mxu0 0
      %407 = vmatprep.subr.bf16.mxu0 0
      %408 = vmatpush2.bf16.msra.mxu0 0
      %409 = vmatprep.subr.bf16.mxu0 0
      %410 = vmatpush2.bf16.msra.mxu0 0
      %411 = vmatprep.subr.bf16.mxu0 0
      %412 = vmatpush2.bf16.msra.mxu0 0
      %413 = vmatprep.mubr.bf16.mxu0 0
      %414 = vmatmul.mubr.bf16.gmra.mxu0 %v379
      %v415 = vpop.f32.mrf.mxu0
      %v416 = vadd.f32 0.0, %v415
      %v417 = vpop.f32.mrf.mxu0
      %v418 = vpop.f32.mrf.mxu0
      %v419 = vadd.f32 0.0, %v418
      %v420 = vpop.f32.mrf.mxu0
      %421 = vdwg.mxu0
      %v422 = vadd.f32 %v360, %v416
      %v423 = vadd.f32 %v361, %v419
      %v424 = vld [vmem:[#allocation2 + $0x4] sm:$0xff]
      %v425 = vld [vmem:[#allocation2 + $0xc] sm:$0xff]
      %v426 = vpack.c.bf16 %v425, %v424
      %s427 = scalar_lea.vmem %s1, 256
      %v428 = vld [vmem:[%s427] sm:$0xff]
      %v429 = vld [vmem:[%s427 + $0x8] sm:$0xff]
      %v430 = vld [vmem:[%s427 + $0x10] sm:$0xff]
      %v431 = vld [vmem:[%s427 + $0x18] sm:$0xff]
      %v432 = vld [vmem:[%s427 + $0x20] sm:$0xff]
      %v433 = vld [vmem:[%s427 + $0x28] sm:$0xff]
      %v434 = vld [vmem:[%s427 + $0x30] sm:$0xff]
      %v435 = vld [vmem:[%s427 + $0x38] sm:$0xff]
      %v436 = vpack.c.bf16 %v429, %v428
      %v437 = vpack.c.bf16 %v431, %v430
      %v438 = vpack.c.bf16 %v433, %v432
      %v439 = vpack.c.bf16 %v435, %v434
      %v441 = vsel %vm174, %v426, 0
      %443 = vmatprep.subr.bf16.mxu0 0
      %444 = vmatpush1.bf16.msra.mxu0 0
      %445 = vmatprep.subr.bf16.mxu0 0
      %446 = vmatpush1.bf16.msra.mxu0 0
      %447 = vmatprep.subr.bf16.mxu0 0
      %448 = vmatpush1.bf16.msra.mxu0 0
      %449 = vmatprep.subr.bf16.mxu0 0
      %450 = vmatpush1.bf16.msra.mxu0 0
      %451 = vmatprep.subr.bf16.mxu0 0
      %452 = vmatpush1.bf16.msra.mxu0 %v439
      %453 = vmatprep.subr.bf16.mxu0 0
      %454 = vmatpush1.bf16.msra.mxu0 %v438
      %455 = vmatprep.subr.bf16.mxu0 0
      %456 = vmatpush1.bf16.msra.mxu0 %v437
      %457 = vmatprep.subr.bf16.mxu0 0
      %458 = vmatpush1.bf16.msra.mxu0 %v436
      %459 = vmatprep.subr.bf16.mxu0 0
      %460 = vmatpush2.bf16.msra.mxu0 0
      %461 = vmatprep.subr.bf16.mxu0 0
      %462 = vmatpush2.bf16.msra.mxu0 0
      %463 = vmatprep.subr.bf16.mxu0 0
      %464 = vmatpush2.bf16.msra.mxu0 0
      %465 = vmatprep.subr.bf16.mxu0 0
      %466 = vmatpush2.bf16.msra.mxu0 0
      %467 = vmatprep.subr.bf16.mxu0 0
      %468 = vmatpush2.bf16.msra.mxu0 0
      %469 = vmatprep.subr.bf16.mxu0 0
      %470 = vmatpush2.bf16.msra.mxu0 0
      %471 = vmatprep.subr.bf16.mxu0 0
      %472 = vmatpush2.bf16.msra.mxu0 0
      %473 = vmatprep.subr.bf16.mxu0 0
      %474 = vmatpush2.bf16.msra.mxu0 0
      %475 = vmatprep.mubr.bf16.mxu0 0
      %476 = vmatmul.mubr.bf16.gmra.mxu0 %v441
      %v477 = vpop.f32.mrf.mxu0
      %v478 = vadd.f32 0.0, %v477
      %v479 = vpop.f32.mrf.mxu0
      %v480 = vpop.f32.mrf.mxu0
      %v481 = vadd.f32 0.0, %v480
      %v482 = vpop.f32.mrf.mxu0
      %483 = vdwg.mxu0
      %v484 = vadd.f32 %v422, %v478
      %v485 = vadd.f32 %v423, %v481
      %v486 = vld [vmem:[%s2] sm:$0x1]
      %v488 = vlaneseq
      %v489 = vshrl.u32 %v488, 7
      %v490 = vsub.s32 0, %v489
      %v491 = vrot.slane %v486, %v490
      %v493 = vadd.f32 %v484, %v491
      %v494 = vadd.f32 %v485, %v491
      %v495 = vsub.f32 0.0, %v493
      %v496 = vsub.f32 0.0, %v494
      %v497 = vmul.f32 %v495, 1.442695
      %v498 = vpow.pop %v497
      %v499 = vmul.f32 %v496, 1.442695
      %v500 = vpow.pop %v499
      %v501 = vadd.f32 %v498, 1.0
      %v502 = vadd.f32 %v500, 1.0
      %v503 = vrcp.pop %v501
      %v504 = vmul.f32 1.0, %v503
      %v505 = vrcp.pop %v502
      %v506 = vmul.f32 1.0, %v505
      %509 = vrot.lane.b32.xlu0 %v504, 64
      %v510 = vpop.permute.xlu0 %509
      %511 = vrot.lane.b32.xlu0 %v506, 64
      %v512 = vpop.permute.xlu0 %511
      %v515 = vmul.f32 %v493, %v510
      %v516 = vmul.f32 %v494, %v512
      %v517 = vadd.f32 %v172, %v515
      %v518 = vadd.f32 %v173, %v516
      %519 = vst.msk [vmem:[%s170] sm:$0xff] %vm174, %v517
      %520 = vst.msk [vmem:[%s170 + $0x8] sm:$0xff] %vm174, %v518
      %p521 = scmp.lt.s32.totalorder %s14, 1
      %s522 = scalar_select %p521, %s14, 1
      %s523 = smul.addr %s522, 2
      %s524 = smul.addr %s523, 8
      %s525 = scalar_lea.vmem %s3, %s524
      // Predicated region
      $region33: #{code_predictor_forward.13} parent=31 // pred_check
        %p526 = pneg %p100
      $region34: #{code_predictor_forward.13} parent=31 // pred_check_branch
        %528 = sbr.rel (%p526) target = $region36
      $region35: #{code_predictor_forward.13} parent=31 // pred_region
        _
      $region36: #{code_predictor_forward.13} parent=31 // pred_fallthru
        _
    $region32: #{code_predictor_forward.13} parent=5 // pred_fallthru
      _
    %p529 = scmp.le.s32.totalorder 2, %s9
    // Predicated region
    $region37: #{code_predictor_forward.13} parent=5 // pred_check
      %p530 = pneg %p529
    $region38: #{code_predictor_forward.13} parent=5 // pred_check_branch
      %532 = sbr.rel (%p530) target = $region40
    $region39: #{code_predictor_forward.13} parent=5 // pred_region
      %s533 = ssub.s32 %s9, 2
      // Predicated region
      $region41: #{code_predictor_forward.13} parent=39 // pred_check
        %p534 = pneg %p106
      $region42: #{code_predictor_forward.13} parent=39 // pred_check_branch
        %536 = sbr.rel (%p534) target = $region44
      $region43: #{code_predictor_forward.13} parent=39 // pred_region
        %p537 = scmp.lt.s32.totalorder %s15, 1
        %s538 = scalar_select %p537, %s15, 1
        %s539 = smul.addr %s538, 2
        %s540 = smul.addr %s539, 8
        %s541 = scalar_lea.vmem %s3, %s540
      $region44: #{code_predictor_forward.13} parent=39 // pred_fallthru
        _
    $region40: #{code_predictor_forward.13} parent=5 // pred_fallthru
      _
  $region6: #{code_predictor_forward.13} parent=0 // loop_footer
    %s13 = sadd.s32 1, %s9
  $region7: #{code_predictor_forward.13} parent=0 // loop_footer_branch
    %8 = sbr.rel target = $region3
  $region8: #{code_predictor_forward.13} parent=0 // loop_exit
    _

// kernel: code_predictor_forward.15
$region0: #{code_predictor_forward.15}
  #allocation0 [shape = 'u32[]', space=smem, size = 0x4, offset = 0x4, fixed_abs, tag = 'smem constant byte address 0x4 - core index']
  #allocation1 [shape = 'u32[144,128]{1,0:T(1,128)}', space=vmem, size = 0x12000, scoped, tag = 'internal scratch']
  %s0 = inlined_call_operand.vmem [shape: f32[2,16,64], index: 0, kind: input, shape index: {}]
  %s1 = inlined_call_operand.vmem [shape: f32[2,1,16], index: 1, kind: input, shape index: {}]
  %s2 = inlined_call_operand.vmem [shape: f32[2,16,1], index: 2, kind: input, shape index: {}]
  %s3 = inlined_call_operand.vmem [shape: f32[64,192], index: 3, kind: input, shape index: {}]
  %s4 = inlined_call_operand.vmem [shape: f32[1,192], index: 4, kind: input, shape index: {}]
  %s5 = inlined_call_operand.vmem [shape: f32[64,64], index: 5, kind: input, shape index: {}]
  %s6 = inlined_call_operand.vmem [shape: f32[1,64], index: 6, kind: input, shape index: {}]
  %s7 = inlined_call_operand.vmem [shape: f32[64,32], index: 7, kind: input, shape index: {}]
  %s8 = inlined_call_operand.vmem [shape: f32[1,32], index: 8, kind: input, shape index: {}]
  %s9 = inlined_call_operand.vmem [shape: f32[2,1,32], index: 9, kind: output, shape index: {}]
  %s10 = sld [smem:[#allocation0]]
  $region69: #{code_predictor_forward.15} parent=0
    _
  %s12 = ssub.s32 1, %s10
  %s13 = scalar_select 0, %s12, %s10
  loop: start=0, step=1, limit=4
  $region2: #{code_predictor_forward.15} parent=0 // loop_pre_header
    _
  $region3: #{code_predictor_forward.15} parent=0 // loop_header
    %s15 = sphi 0, %s19
    %p16 = scmp.ge.s32.totalorder %s15, 4
    %s25 = sphi 0, %s27
    %s28 = sphi 0, %s25
    %s29 = sphi 0, %s28
    %s45 = sphi 0, %s29
    %s51 = sphi 0, %s53
    %s54 = sphi 0, %s51
    %s55 = sphi 0, %s54
    %s71 = sphi 0, %s55
    %s77 = sphi 0, %s79
    %s80 = sphi 0, %s77
    %s81 = sphi 0, %s80
    %s97 = sphi 0, %s81
    %s101 = sphi 0, %s101
    %s103 = sphi 0, %s101
    %s104 = sphi 0, %s103
    %s118 = sphi 0, %s104
    %s122 = sphi 0, %s122
    %s124 = sphi 0, %s122
    %s125 = sphi 0, %s124
    %s139 = sphi 0, %s125
    %s143 = sphi 0, %s143
    %s145 = sphi 0, %s143
    %s146 = sphi 0, %s145
    %s160 = sphi 0, %s146
    %s164 = sphi 0, %s164
    %s166 = sphi 0, %s164
    %s167 = sphi 0, %s166
    %s181 = sphi 0, %s167
    %s185 = sphi 0, %s185
    %s187 = sphi 0, %s185
    %s188 = sphi 0, %s187
    %s202 = sphi 0, %s188
    %s206 = sphi 0, %s206
    %s208 = sphi 0, %s206
    %s209 = sphi 0, %s208
    %s223 = sphi 0, %s209
    %s229 = sphi 0, %s231
    %s232 = sphi 0, %s229
    %s233 = sphi 0, %s232
    %s249 = sphi 0, %s233
  $region4: #{code_predictor_forward.15} parent=0 // loop_header_branch
    %18 = sbr.rel (%p16) target = $region8
  $region5: #{code_predictor_forward.15} parent=0 // loop_body
    %s20 = ssub.s32 %s15, 1
    %s21 = ssub.s32 %s15, 2
    %s22 = sadd.s32 %s15, 1
    %s23 = ssub.s32 %s15, %s22
    %p24 = scmp.eq.s32.totalorder %s23, 0
    %s26 = sadd.s32 %s25, 1
    %s27 = scalar_select %p24, %s25, %s26
    %p30 = pneg %p24
    %p31 = scmp.eq.s32.totalorder %s15, 1
    %p32 = por %p30, %p31
    %p33 = scmp.ne.s32.totalorder %s25, %s28
    %p34 = scmp.eq.s32.totalorder %s15, 0
    %p35 = por %p33, %p34
    %p36 = scmp.ne.s32.totalorder %s25, %s28
    %p37 = scmp.eq.s32.totalorder %s20, 1
    %p38 = por %p36, %p37
    %p39 = scmp.ne.s32.totalorder %s28, %s29
    %p40 = scmp.eq.s32.totalorder %s20, 0
    %p41 = por %p39, %p40
    %p42 = scmp.ne.s32.totalorder %s28, %s29
    %p43 = scmp.eq.s32.totalorder %s21, 1
    %p44 = por %p42, %p43
    %p46 = scmp.ne.s32.totalorder %s29, %s45
    %p47 = scmp.eq.s32.totalorder %s21, 0
    %p48 = por %p46, %p47
    %s49 = ssub.s32 %s15, %s22
    %p50 = scmp.eq.s32.totalorder %s49, 0
    %s52 = sadd.s32 %s51, 1
    %s53 = scalar_select %p50, %s51, %s52
    %p56 = pneg %p50
    %p57 = scmp.eq.s32.totalorder %s15, 1
    %p58 = por %p56, %p57
    %p59 = scmp.ne.s32.totalorder %s51, %s54
    %p60 = scmp.eq.s32.totalorder %s15, 0
    %p61 = por %p59, %p60
    %p62 = scmp.ne.s32.totalorder %s51, %s54
    %p63 = scmp.eq.s32.totalorder %s20, 1
    %p64 = por %p62, %p63
    %p65 = scmp.ne.s32.totalorder %s54, %s55
    %p66 = scmp.eq.s32.totalorder %s20, 0
    %p67 = por %p65, %p66
    %p68 = scmp.ne.s32.totalorder %s54, %s55
    %p69 = scmp.eq.s32.totalorder %s21, 1
    %p70 = por %p68, %p69
    %p72 = scmp.ne.s32.totalorder %s55, %s71
    %p73 = scmp.eq.s32.totalorder %s21, 0
    %p74 = por %p72, %p73
    %s75 = ssub.s32 %s15, %s22
    %p76 = scmp.eq.s32.totalorder %s75, 0
    %s78 = sadd.s32 %s77, 1
    %s79 = scalar_select %p76, %s77, %s78
    %p82 = pneg %p76
    %p83 = scmp.eq.s32.totalorder %s15, 1
    %p84 = por %p82, %p83
    %p85 = scmp.ne.s32.totalorder %s77, %s80
    %p86 = scmp.eq.s32.totalorder %s15, 0
    %p87 = por %p85, %p86
    %p88 = scmp.ne.s32.totalorder %s77, %s80
    %p89 = scmp.eq.s32.totalorder %s20, 1
    %p90 = por %p88, %p89
    %p91 = scmp.ne.s32.totalorder %s80, %s81
    %p92 = scmp.eq.s32.totalorder %s20, 0
    %p93 = por %p91, %p92
    %p94 = scmp.ne.s32.totalorder %s80, %s81
    %p95 = scmp.eq.s32.totalorder %s21, 1
    %p96 = por %p94, %p95
    %p98 = scmp.ne.s32.totalorder %s81, %s97
    %p99 = scmp.eq.s32.totalorder %s21, 0
    %p100 = por %p98, %p99
    %s102 = sadd.s32 %s101, 1
    %p105 = scmp.eq.s32.totalorder %s15, 1
    %p106 = scmp.ne.s32.totalorder %s101, %s103
    %p107 = scmp.eq.s32.totalorder %s15, 0
    %p108 = por %p106, %p107
    %p109 = scmp.ne.s32.totalorder %s101, %s103
    %p110 = scmp.eq.s32.totalorder %s20, 1
    %p111 = por %p109, %p110
    %p112 = scmp.ne.s32.totalorder %s103, %s104
    %p113 = scmp.eq.s32.totalorder %s20, 0
    %p114 = por %p112, %p113
    %p115 = scmp.ne.s32.totalorder %s103, %s104
    %p116 = scmp.eq.s32.totalorder %s21, 1
    %p117 = por %p115, %p116
    %p119 = scmp.ne.s32.totalorder %s104, %s118
    %p120 = scmp.eq.s32.totalorder %s21, 0
    %p121 = por %p119, %p120
    %s123 = sadd.s32 %s122, 1
    %p126 = scmp.eq.s32.totalorder %s15, 1
    %p127 = scmp.ne.s32.totalorder %s122, %s124
    %p128 = scmp.eq.s32.totalorder %s15, 0
    %p129 = por %p127, %p128
    %p130 = scmp.ne.s32.totalorder %s122, %s124
    %p131 = scmp.eq.s32.totalorder %s20, 1
    %p132 = por %p130, %p131
    %p133 = scmp.ne.s32.totalorder %s124, %s125
    %p134 = scmp.eq.s32.totalorder %s20, 0
    %p135 = por %p133, %p134
    %p136 = scmp.ne.s32.totalorder %s124, %s125
    %p137 = scmp.eq.s32.totalorder %s21, 1
    %p138 = por %p136, %p137
    %p140 = scmp.ne.s32.totalorder %s125, %s139
    %p141 = scmp.eq.s32.totalorder %s21, 0
    %p142 = por %p140, %p141
    %s144 = sadd.s32 %s143, 1
    %p147 = scmp.eq.s32.totalorder %s15, 1
    %p148 = scmp.ne.s32.totalorder %s143, %s145
    %p149 = scmp.eq.s32.totalorder %s15, 0
    %p150 = por %p148, %p149
    %p151 = scmp.ne.s32.totalorder %s143, %s145
    %p152 = scmp.eq.s32.totalorder %s20, 1
    %p153 = por %p151, %p152
    %p154 = scmp.ne.s32.totalorder %s145, %s146
    %p155 = scmp.eq.s32.totalorder %s20, 0
    %p156 = por %p154, %p155
    %p157 = scmp.ne.s32.totalorder %s145, %s146
    %p158 = scmp.eq.s32.totalorder %s21, 1
    %p159 = por %p157, %p158
    %p161 = scmp.ne.s32.totalorder %s146, %s160
    %p162 = scmp.eq.s32.totalorder %s21, 0
    %p163 = por %p161, %p162
    %s165 = sadd.s32 %s164, 1
    %p168 = scmp.eq.s32.totalorder %s15, 1
    %p169 = scmp.ne.s32.totalorder %s164, %s166
    %p170 = scmp.eq.s32.totalorder %s15, 0
    %p171 = por %p169, %p170
    %p172 = scmp.ne.s32.totalorder %s164, %s166
    %p173 = scmp.eq.s32.totalorder %s20, 1
    %p174 = por %p172, %p173
    %p175 = scmp.ne.s32.totalorder %s166, %s167
    %p176 = scmp.eq.s32.totalorder %s20, 0
    %p177 = por %p175, %p176
    %p178 = scmp.ne.s32.totalorder %s166, %s167
    %p179 = scmp.eq.s32.totalorder %s21, 1
    %p180 = por %p178, %p179
    %p182 = scmp.ne.s32.totalorder %s167, %s181
    %p183 = scmp.eq.s32.totalorder %s21, 0
    %p184 = por %p182, %p183
    %s186 = sadd.s32 %s185, 1
    %p189 = scmp.eq.s32.totalorder %s15, 1
    %p190 = scmp.ne.s32.totalorder %s185, %s187
    %p191 = scmp.eq.s32.totalorder %s15, 0
    %p192 = por %p190, %p191
    %p193 = scmp.ne.s32.totalorder %s185, %s187
    %p194 = scmp.eq.s32.totalorder %s20, 1
    %p195 = por %p193, %p194
    %p196 = scmp.ne.s32.totalorder %s187, %s188
    %p197 = scmp.eq.s32.totalorder %s20, 0
    %p198 = por %p196, %p197
    %p199 = scmp.ne.s32.totalorder %s187, %s188
    %p200 = scmp.eq.s32.totalorder %s21, 1
    %p201 = por %p199, %p200
    %p203 = scmp.ne.s32.totalorder %s188, %s202
    %p204 = scmp.eq.s32.totalorder %s21, 0
    %p205 = por %p203, %p204
    %s207 = sadd.s32 %s206, 1
    %p210 = scmp.eq.s32.totalorder %s15, 1
    %p211 = scmp.ne.s32.totalorder %s206, %s208
    %p212 = scmp.eq.s32.totalorder %s15, 0
    %p213 = por %p211, %p212
    %p214 = scmp.ne.s32.totalorder %s206, %s208
    %p215 = scmp.eq.s32.totalorder %s20, 1
    %p216 = por %p214, %p215
    %p217 = scmp.ne.s32.totalorder %s208, %s209
    %p218 = scmp.eq.s32.totalorder %s20, 0
    %p219 = por %p217, %p218
    %p220 = scmp.ne.s32.totalorder %s208, %s209
    %p221 = scmp.eq.s32.totalorder %s21, 1
    %p222 = por %p220, %p221
    %p224 = scmp.ne.s32.totalorder %s209, %s223
    %p225 = scmp.eq.s32.totalorder %s21, 0
    %p226 = por %p224, %p225
    %s227 = ssub.s32 %s15, %s22
    %p228 = scmp.eq.s32.totalorder %s227, 0
    %s230 = sadd.s32 %s229, 1
    %s231 = scalar_select %p228, %s229, %s230
    %p234 = pneg %p228
    %p235 = scmp.eq.s32.totalorder %s15, 1
    %p236 = por %p234, %p235
    %p237 = scmp.ne.s32.totalorder %s229, %s232
    %p238 = scmp.eq.s32.totalorder %s15, 0
    %p239 = por %p237, %p238
    %p240 = scmp.ne.s32.totalorder %s229, %s232
    %p241 = scmp.eq.s32.totalorder %s20, 1
    %p242 = por %p240, %p241
    %p243 = scmp.ne.s32.totalorder %s232, %s233
    %p244 = scmp.eq.s32.totalorder %s20, 0
    %p245 = por %p243, %p244
    %p246 = scmp.ne.s32.totalorder %s232, %s233
    %p247 = scmp.eq.s32.totalorder %s21, 1
    %p248 = por %p246, %p247
    %p250 = scmp.ne.s32.totalorder %s233, %s249
    %p251 = scmp.eq.s32.totalorder %s21, 0
    %p252 = por %p250, %p251
    %p253 = scmp.le.s32.totalorder 1, %s15
    %p254 = scmp.lt.s32.totalorder %s15, 3
    %p255 = pnand %p253, %p254
    %p256 = pneg %p255
    // Predicated region
    $region9: #{code_predictor_forward.15} parent=5 // pred_check
      _
    $region10: #{code_predictor_forward.15} parent=5 // pred_check_branch
      %258 = sbr.rel (%p255) target = $region12
    $region11: #{code_predictor_forward.15} parent=5 // pred_region
      %s259 = ssub.s32 %s15, 1
      // Predicated region
      $region13: #{code_predictor_forward.15} parent=11 // pred_check
        %p260 = pneg %p114
      $region14: #{code_predictor_forward.15} parent=11 // pred_check_branch
        %262 = sbr.rel (%p260) target = $region16
      $region15: #{code_predictor_forward.15} parent=11 // pred_region
        _
      $region16: #{code_predictor_forward.15} parent=11 // pred_fallthru
        _
      // Predicated region
      $region17: #{code_predictor_forward.15} parent=11 // pred_check
        %p263 = pneg %p135
      $region18: #{code_predictor_forward.15} parent=11 // pred_check_branch
        %265 = sbr.rel (%p263) target = $region20
      $region19: #{code_predictor_forward.15} parent=11 // pred_region
        _
      $region20: #{code_predictor_forward.15} parent=11 // pred_fallthru
        _
      // Predicated region
      $region21: #{code_predictor_forward.15} parent=11 // pred_check
        %p266 = pneg %p156
      $region22: #{code_predictor_forward.15} parent=11 // pred_check_branch
        %268 = sbr.rel (%p266) target = $region24
      $region23: #{code_predictor_forward.15} parent=11 // pred_region
        _
      $region24: #{code_predictor_forward.15} parent=11 // pred_fallthru
        _
      // Predicated region
      $region25: #{code_predictor_forward.15} parent=11 // pred_check
        %p269 = pneg %p177
      $region26: #{code_predictor_forward.15} parent=11 // pred_check_branch
        %271 = sbr.rel (%p269) target = $region28
      $region27: #{code_predictor_forward.15} parent=11 // pred_region
        _
      $region28: #{code_predictor_forward.15} parent=11 // pred_fallthru
        _
      // Predicated region
      $region29: #{code_predictor_forward.15} parent=11 // pred_check
        %p272 = pneg %p198
      $region30: #{code_predictor_forward.15} parent=11 // pred_check_branch
        %274 = sbr.rel (%p272) target = $region32
      $region31: #{code_predictor_forward.15} parent=11 // pred_region
        _
      $region32: #{code_predictor_forward.15} parent=11 // pred_fallthru
        _
      // Predicated region
      $region33: #{code_predictor_forward.15} parent=11 // pred_check
        %p275 = pneg %p219
      $region34: #{code_predictor_forward.15} parent=11 // pred_check_branch
        %277 = sbr.rel (%p275) target = $region36
      $region35: #{code_predictor_forward.15} parent=11 // pred_region
        _
      $region36: #{code_predictor_forward.15} parent=11 // pred_fallthru
        _
    $region12: #{code_predictor_forward.15} parent=5 // pred_fallthru
      _
    %p278 = scmp.lt.s32.totalorder %s15, 2
    // Predicated region
    $region37: #{code_predictor_forward.15} parent=5 // pred_check
      %p279 = pneg %p278
    $region38: #{code_predictor_forward.15} parent=5 // pred_check_branch
      %281 = sbr.rel (%p279) target = $region40
    $region39: #{code_predictor_forward.15} parent=5 // pred_region
      // Predicated region
      $region41: #{code_predictor_forward.15} parent=39 // pred_check
        %p282 = pneg %p35
      $region42: #{code_predictor_forward.15} parent=39 // pred_check_branch
        %284 = sbr.rel (%p282) target = $region44
      $region43: #{code_predictor_forward.15} parent=39 // pred_region
        %p285 = scmp.lt.s32.totalorder %s15, 1
        %s286 = scalar_select %p285, %s15, 1
        %s287 = smul.addr %s286, 2
        %s288 = smul.addr %s287, 8
        %s289 = scalar_lea.vmem %s0, %s288
      $region44: #{code_predictor_forward.15} parent=39 // pred_fallthru
        _
      // Predicated region
      $region45: #{code_predictor_forward.15} parent=39 // pred_check
        %p290 = pneg %p61
      $region46: #{code_predictor_forward.15} parent=39 // pred_check_branch
        %292 = sbr.rel (%p290) target = $region48
      $region47: #{code_predictor_forward.15} parent=39 // pred_region
        %p293 = scmp.lt.s32.totalorder %s15, 1
        %s294 = scalar_select %p293, %s15, 1
        %s295 = scalar_lea.vmem %s1, %s294
      $region48: #{code_predictor_forward.15} parent=39 // pred_fallthru
        _
      // Predicated region
      $region49: #{code_predictor_forward.15} parent=39 // pred_check
        %p296 = pneg %p87
      $region50: #{code_predictor_forward.15} parent=39 // pred_check_branch
        %298 = sbr.rel (%p296) target = $region52
      $region51: #{code_predictor_forward.15} parent=39 // pred_region
        %p299 = scmp.lt.s32.totalorder %s15, 1
        %s300 = scalar_select %p299, %s15, 1
        %s301 = smul.addr %s300, 2
        %s302 = smul.addr %s301, 8
        %s303 = scalar_lea.vmem %s2, %s302
      $region52: #{code_predictor_forward.15} parent=39 // pred_fallthru
        _
    $region40: #{code_predictor_forward.15} parent=5 // pred_fallthru
      _
    %p304 = scmp.le.s32.totalorder 1, %s15
    %p305 = scmp.lt.s32.totalorder %s15, 3
    %p306 = pnand %p304, %p305
    %p307 = pneg %p306
    // Predicated region
    $region53: #{code_predictor_forward.15} parent=5 // pred_check
      _
    $region54: #{code_predictor_forward.15} parent=5 // pred_check_branch
      %309 = sbr.rel (%p306) target = $region56
    $region55: #{code_predictor_forward.15} parent=5 // pred_region
      %s310 = ssub.s32 %s15, 1
      %p311 = scmp.lt.s32.totalorder %s20, 1
      %s312 = scalar_select %p311, %s20, 1
      %s313 = smul.addr %s312, 2
      %s314 = smul.addr %s313, 8
      %s315 = scalar_lea.vmem %s0, %s314
      %p316 = pneg %p41
      %p317 = pneg %p38
      %p318 = scmp.lt.s32.totalorder %s20, 1
      %s319 = scalar_select %p318, %s20, 1
      %s320 = scalar_lea.vmem %s1, %s319
      %p321 = pneg %p67
      %p322 = pneg %p64
      %p323 = scmp.lt.s32.totalorder %s20, 1
      %s324 = scalar_select %p323, %s20, 1
      %s325 = smul.addr %s324, 2
      %s326 = smul.addr %s325, 8
      %s327 = scalar_lea.vmem %s2, %s326
      %p328 = pneg %p93
      %p329 = pneg %p90
      %p330 = pneg %p114
      %p331 = pneg %p111
      %p332 = pneg %p135
      %p333 = pneg %p132
      %p334 = pneg %p156
      %p335 = pneg %p153
      %p336 = pneg %p177
      %p337 = pneg %p174
      %p338 = pneg %p198
      %p339 = pneg %p195
      %p340 = pneg %p219
      %p341 = pneg %p216
      %p342 = pneg %p245
      %p343 = pneg %p242
      %p344 = scmp.lt.s32.totalorder %s20, 1
      %s345 = scalar_select %p344, %s20, 1
      %s346 = scalar_lea.vmem %s9, %s345
      %p347 = scmp.lt.s32.totalorder %s20, 1
      %s348 = scalar_select %p347, %s20, 1
      %s349 = smul.addr %s348, 2
      %s350 = smul.addr %s349, 8
      %s351 = scalar_lea.vmem %s0, %s350
      %p352 = scmp.lt.s32.totalorder %s20, 1
      %s353 = scalar_select %p352, %s20, 1
      %s354 = scalar_lea.vmem %s1, %s353
      %p355 = scmp.lt.s32.totalorder %s20, 1
      %s356 = scalar_select %p355, %s20, 1
      %s357 = smul.addr %s356, 2
      %s358 = smul.addr %s357, 8
      %s359 = scalar_lea.vmem %s2, %s358
      %p360 = scmp.lt.s32.totalorder %s20, 1
      %s361 = scalar_select %p360, %s20, 1
      %s362 = scalar_lea.vmem %s9, %s361
      %v364 = vld [vmem:[%s359] sm:$0xff]
      %v365 = vld [vmem:[%s359 + $0x8] sm:$0xff]
      %v366 = vld [vmem:[%s351] sm:$0xff]
      %v367 = vld [vmem:[%s351 + $0x8] sm:$0xff]
      %369 = vset.pattern.permute.xlu0 0
      %370 = vperm.xlu0 %369, %v364
      %v371 = vpop.permute.xlu0 %370
      %374 = vset.pattern.permute.xlu0 0
      %375 = vperm.xlu0 %374, %v365
      %v376 = vpop.permute.xlu0 %375
      %v378 = vmul.f32 %v366, %v371
      %v379 = vmul.f32 %v367, %v376
      %v380 = vpack.c.bf16 %v379, %v378
      %v381 = vld [vmem:[%s3] sm:$0xff]
      %v382 = vld [vmem:[%s3 + $0x8] sm:$0xff]
      %v383 = vld [vmem:[%s3 + $0x10] sm:$0xff]
      %v384 = vld [vmem:[%s3 + $0x18] sm:$0xff]
      %v385 = vld [vmem:[%s3 + $0x20] sm:$0xff]
      %v386 = vld [vmem:[%s3 + $0x28] sm:$0xff]
      %v387 = vld [vmem:[%s3 + $0x30] sm:$0xff]
      %v388 = vld [vmem:[%s3 + $0x38] sm:$0xff]
      %v389 = vld [vmem:[%s3 + $0x40] sm:$0xff]
      %v390 = vld [vmem:[%s3 + $0x48] sm:$0xff]
      %v391 = vld [vmem:[%s3 + $0x50] sm:$0xff]
      %v392 = vld [vmem:[%s3 + $0x58] sm:$0xff]
      %v393 = vld [vmem:[%s3 + $0x60] sm:$0xff]
      %v394 = vld [vmem:[%s3 + $0x68] sm:$0xff]
      %v395 = vld [vmem:[%s3 + $0x70] sm:$0xff]
      %v396 = vld [vmem:[%s3 + $0x78] sm:$0xff]
      %v397 = vpack.c.bf16 %v383, %v381
      %v398 = vpack.c.bf16 %v384, %v382
      %v399 = vpack.c.bf16 %v387, %v385
      %v400 = vpack.c.bf16 %v388, %v386
      %v401 = vpack.c.bf16 %v391, %v389
      %v402 = vpack.c.bf16 %v392, %v390
      %v403 = vpack.c.bf16 %v395, %v393
      %v404 = vpack.c.bf16 %v396, %v394
      %v405 = vld [vmem:[%s4] sm:$0x3]
      %v407 = vlaneseq
      %v408 = vshrl.u32 %v407, 7
      %v409 = vsub.s32 0, %v408
      %v410 = vrot.slane %v405, %v409
      %v411 = vlaneseq
      %v412 = vshrl.u32 %v411, 7
      %v413 = vsub.s32 1, %v412
      %v414 = vrot.slane %v405, %v413
      %vm417 = vcmask 523264
      %v419 = vsel %vm417, %v380, 0
      %421 = vmatprep.subr.bf16.mxu0 0
      %422 = vmatpush1.bf16.msra.mxu0 0
      %423 = vmatprep.subr.bf16.mxu0 0
      %424 = vmatpush1.bf16.msra.mxu0 0
      %425 = vmatprep.subr.bf16.mxu0 0
      %426 = vmatpush1.bf16.msra.mxu0 0
      %427 = vmatprep.subr.bf16.mxu0 0
      %428 = vmatpush1.bf16.msra.mxu0 0
      %429 = vmatprep.subr.bf16.mxu0 %v404
      %430 = vmatpush1.bf16.msra.mxu0 %v403
      %431 = vmatprep.subr.bf16.mxu0 %v402
      %432 = vmatpush1.bf16.msra.mxu0 %v401
      %433 = vmatprep.subr.bf16.mxu0 %v400
      %434 = vmatpush1.bf16.msra.mxu0 %v399
      %435 = vmatprep.subr.bf16.mxu0 %v398
      %436 = vmatpush1.bf16.msra.mxu0 %v397
      %437 = vmatprep.subr.bf16.mxu0 0
      %438 = vmatpush2.bf16.msra.mxu0 0
      %439 = vmatprep.subr.bf16.mxu0 0
      %440 = vmatpush2.bf16.msra.mxu0 0
      %441 = vmatprep.subr.bf16.mxu0 0
      %442 = vmatpush2.bf16.msra.mxu0 0
      %443 = vmatprep.subr.bf16.mxu0 0
      %444 = vmatpush2.bf16.msra.mxu0 0
      %445 = vmatprep.subr.bf16.mxu0 0
      %446 = vmatpush2.bf16.msra.mxu0 0
      %447 = vmatprep.subr.bf16.mxu0 0
      %448 = vmatpush2.bf16.msra.mxu0 0
      %449 = vmatprep.subr.bf16.mxu0 0
      %450 = vmatpush2.bf16.msra.mxu0 0
      %451 = vmatprep.subr.bf16.mxu0 0
      %452 = vmatpush2.bf16.msra.mxu0 0
      %453 = vmatprep.mubr.bf16.mxu0 0
      %454 = vmatmul.mubr.bf16.gmra.mxu0 %v419
      %v455 = vpop.f32.mrf.mxu0
      %v456 = vadd.f32 %v410, %v455
      %v457 = vpop.f32.mrf.mxu0
      %v458 = vadd.f32 %v414, %v457
      %v459 = vpop.f32.mrf.mxu0
      %v460 = vadd.f32 %v410, %v459
      %v461 = vpop.f32.mrf.mxu0
      %v462 = vadd.f32 %v414, %v461
      %463 = vdwg.mxu0
      %v464 = vld [vmem:[%s354] sm:$0x1]
      %vm465 = vcmp.gt.f32.partialorder %v464, 0.0
      %v466 = vld [vmem:[%s5] sm:$0xff]
      %v467 = vld [vmem:[%s5 + $0x8] sm:$0xff]
      %v468 = vld [vmem:[%s5 + $0x10] sm:$0xff]
      %v469 = vld [vmem:[%s5 + $0x18] sm:$0xff]
      %v470 = vld [vmem:[%s5 + $0x20] sm:$0xff]
      %v471 = vld [vmem:[%s5 + $0x28] sm:$0xff]
      %v472 = vld [vmem:[%s5 + $0x30] sm:$0xff]
      %v473 = vld [vmem:[%s5 + $0x38] sm:$0xff]
      %v474 = vld [vmem:[%s6] sm:$0x1]
      %v476 = vlaneseq
      %v477 = vshrl.u32 %v476, 7
      %v478 = vsub.s32 0, %v477
      %v479 = vrot.slane %v474, %v478
      %v481 = vadd.f32 %v378, %v479
      %v482 = vadd.f32 %v379, %v479
      %v483 = vmul.f32 %v456, 0.125
      %v484 = vmul.f32 %v460, 0.125
      %v485 = vpack.c.bf16 %v484, %v483
      %v486 = vpack.c.bf16 %v460, %v456
      %488 = vrot.lane.b32.xlu0 %v486, 64
      %v489 = vpop.permute.xlu0 %488
      %vm490 = vcmask 261120
      %v492 = vsel %vm490, %v485, 0
      %v495 = vsel %vm490, %v489, 0
      %497 = vmatprep.subr.bf16.mxu0 0
      %498 = vmatpush1.bf16.xpose.msra.mxu0 0
      %499 = vmatprep.subr.bf16.mxu0 0
      %500 = vmatpush1.bf16.xpose.msra.mxu0 0
      %501 = vmatprep.subr.bf16.mxu0 0
      %502 = vmatpush1.bf16.xpose.msra.mxu0 0
      %503 = vmatprep.subr.bf16.mxu0 0
      %504 = vmatpush1.bf16.xpose.msra.mxu0 0
      %505 = vmatprep.subr.bf16.mxu0 0
      %506 = vmatpush1.bf16.xpose.msra.mxu0 0
      %507 = vmatprep.subr.bf16.mxu0 0
      %508 = vmatpush1.bf16.xpose.msra.mxu0 0
      %509 = vmatprep.subr.bf16.mxu0 0
      %510 = vmatpush1.bf16.xpose.msra.mxu0 0
      %511 = vmatprep.subr.bf16.mxu0 0
      %512 = vmatpush1.bf16.xpose.msra.mxu0 %v495
      %513 = vmatprep.subr.bf16.mxu0 0
      %514 = vmatpush2.bf16.xpose.msra.mxu0 0
      %515 = vmatprep.subr.bf16.mxu0 0
      %516 = vmatpush2.bf16.xpose.msra.mxu0 0
      %517 = vmatprep.subr.bf16.mxu0 0
      %518 = vmatpush2.bf16.xpose.msra.mxu0 0
      %519 = vmatprep.subr.bf16.mxu0 0
      %520 = vmatpush2.bf16.xpose.msra.mxu0 0
      %521 = vmatprep.subr.bf16.mxu0 0
      %522 = vmatpush2.bf16.xpose.msra.mxu0 0
      %523 = vmatprep.subr.bf16.mxu0 0
      %524 = vmatpush2.bf16.xpose.msra.mxu0 0
      %525 = vmatprep.subr.bf16.mxu0 0
      %526 = vmatpush2.bf16.xpose.msra.mxu0 0
      %527 = vmatprep.subr.bf16.mxu0 0
      %528 = vmatpush2.bf16.xpose.msra.mxu0 0
      %529 = vmatprep.mubr.bf16.mxu0 0
      %530 = vmatmul.mubr.bf16.gmra.mxu0 %v492
      %v531 = vpop.f32.mrf.mxu0
      %v532 = vadd.f32 0.0, %v531
      %v533 = vpop.f32.mrf.mxu0
      %v534 = vpop.f32.mrf.mxu0
      %v535 = vadd.f32 0.0, %v534
      %v536 = vpop.f32.mrf.mxu0
      %537 = vdwg.mxu0
      %v538 = vsel %vm465, 1, 0
      %v539 = vlaneseq
      %v540 = vshrl.u32 %v539, 7
      %v541 = vsub.s32 0, %v540
      %v542 = vrot.slane %v538, %v541
      %vm543 = vcmp.eq.s32.totalorder %v542, 1
      %v544 = vsel %vm543, %v532, -1e+30
      %v545 = vsel %vm543, %v535, -1e+30
      %vm546 = vcmask 130048
      %v547 = vsel %vm546, %v544, -inf
      %548 = vmax.xlane.f32.xlu0 %v547
      %v549 = vpop.xlane.xlu0 %548
      %v550 = vsel %vm546, %v545, -inf
      %551 = vmax.xlane.f32.xlu0 %v550
      %v552 = vpop.xlane.xlu0 %551
      %v553 = vsub.f32 %v544, %v549
      %v554 = vsub.f32 %v545, %v552
      %v555 = vmul.f32 %v553, 1.442695
      %v556 = vpow.pop %v555
      %v557 = vmul.f32 %v554, 1.442695
      %v558 = vpow.pop %v557
      %v559 = vsel %vm546, %v556, 0.0
      %560 = vadd.xlane.f32.xlu0 %v559
      %v561 = vpop.xlane.xlu0 %560
      %v562 = vsel %vm546, %v558, 0.0
      %563 = vadd.xlane.f32.xlu0 %v562
      %v564 = vpop.xlane.xlu0 %563
      %v565 = vrcp.pop %v561
      %v566 = vrcp.pop %v564
      %v567 = vmul.f32 %v556, %v565
      %v568 = vmul.f32 %v558, %v566
      %v569 = vpack.c.bf16 %v568, %v567
      %v570 = vpack.c.bf16 %v462, %v458
      %v572 = vsel %vm546, %v569, 0
      %574 = vmatprep.subr.bf16.mxu0 0
      %575 = vmatpush1.bf16.msra.mxu0 0
      %576 = vmatprep.subr.bf16.mxu0 0
      %577 = vmatpush1.bf16.msra.mxu0 0
      %578 = vmatprep.subr.bf16.mxu0 0
      %579 = vmatpush1.bf16.msra.mxu0 0
      %580 = vmatprep.subr.bf16.mxu0 0
      %581 = vmatpush1.bf16.msra.mxu0 0
      %582 = vmatprep.subr.bf16.mxu0 0
      %583 = vmatpush1.bf16.msra.mxu0 0
      %584 = vmatprep.subr.bf16.mxu0 0
      %585 = vmatpush1.bf16.msra.mxu0 0
      %586 = vmatprep.subr.bf16.mxu0 0
      %587 = vmatpush1.bf16.msra.mxu0 0
      %588 = vmatprep.subr.bf16.mxu0 0
      %589 = vmatpush1.bf16.msra.mxu0 %v570
      %590 = vmatprep.subr.bf16.mxu0 0
      %591 = vmatpush2.bf16.msra.mxu0 0
      %592 = vmatprep.subr.bf16.mxu0 0
      %593 = vmatpush2.bf16.msra.mxu0 0
      %594 = vmatprep.subr.bf16.mxu0 0
      %595 = vmatpush2.bf16.msra.mxu0 0
      %596 = vmatprep.subr.bf16.mxu0 0
      %597 = vmatpush2.bf16.msra.mxu0 0
      %598 = vmatprep.subr.bf16.mxu0 0
      %599 = vmatpush2.bf16.msra.mxu0 0
      %600 = vmatprep.subr.bf16.mxu0 0
      %601 = vmatpush2.bf16.msra.mxu0 0
      %602 = vmatprep.subr.bf16.mxu0 0
      %603 = vmatpush2.bf16.msra.mxu0 0
      %604 = vmatprep.subr.bf16.mxu0 0
      %605 = vmatpush2.bf16.msra.mxu0 0
      %606 = vmatprep.mubr.bf16.mxu0 0
      %607 = vmatmul.mubr.bf16.gmra.mxu0 %v572
      %v608 = vpop.f32.mrf.mxu0
      %v609 = vadd.f32 0.0, %v608
      %v610 = vpop.f32.mrf.mxu0
      %v611 = vpop.f32.mrf.mxu0
      %v612 = vadd.f32 0.0, %v611
      %v613 = vpop.f32.mrf.mxu0
      %614 = vdwg.mxu0
      %v615 = vpack.c.bf16 %v612, %v609
      %v616 = vpack.c.bf16 %v467, %v466
      %v617 = vpack.c.bf16 %v469, %v468
      %v619 = vsel %vm490, %v615, 0
      %621 = vmatprep.subr.bf16.mxu0 0
      %622 = vmatpush1.bf16.msra.mxu0 0
      %623 = vmatprep.subr.bf16.mxu0 0
      %624 = vmatpush1.bf16.msra.mxu0 0
      %625 = vmatprep.subr.bf16.mxu0 0
      %626 = vmatpush1.bf16.msra.mxu0 0
      %627 = vmatprep.subr.bf16.mxu0 0
      %628 = vmatpush1.bf16.msra.mxu0 0
      %629 = vmatprep.subr.bf16.mxu0 0
      %630 = vmatpush1.bf16.msra.mxu0 0
      %631 = vmatprep.subr.bf16.mxu0 0
      %632 = vmatpush1.bf16.msra.mxu0 0
      %633 = vmatprep.subr.bf16.mxu0 0
      %634 = vmatpush1.bf16.msra.mxu0 %v617
      %635 = vmatprep.subr.bf16.mxu0 0
      %636 = vmatpush1.bf16.msra.mxu0 %v616
      %637 = vmatprep.subr.bf16.mxu0 0
      %638 = vmatpush2.bf16.msra.mxu0 0
      %639 = vmatprep.subr.bf16.mxu0 0
      %640 = vmatpush2.bf16.msra.mxu0 0
      %641 = vmatprep.subr.bf16.mxu0 0
      %642 = vmatpush2.bf16.msra.mxu0 0
      %643 = vmatprep.subr.bf16.mxu0 0
      %644 = vmatpush2.bf16.msra.mxu0 0
      %645 = vmatprep.subr.bf16.mxu0 0
      %646 = vmatpush2.bf16.msra.mxu0 0
      %647 = vmatprep.subr.bf16.mxu0 0
      %648 = vmatpush2.bf16.msra.mxu0 0
      %649 = vmatprep.subr.bf16.mxu0 0
      %650 = vmatpush2.bf16.msra.mxu0 0
      %651 = vmatprep.subr.bf16.mxu0 0
      %652 = vmatpush2.bf16.msra.mxu0 0
      %653 = vmatprep.mubr.bf16.mxu0 0
      %654 = vmatmul.mubr.bf16.gmra.mxu0 %v619
      %v655 = vpop.f32.mrf.mxu0
      %v656 = vadd.f32 0.0, %v655
      %v657 = vpop.f32.mrf.mxu0
      %v658 = vpop.f32.mrf.mxu0
      %v659 = vadd.f32 0.0, %v658
      %v660 = vpop.f32.mrf.mxu0
      %661 = vdwg.mxu0
      %v662 = vadd.f32 %v481, %v656
      %v663 = vadd.f32 %v482, %v659
      %665 = vrot.lane.b32.xlu0 %v485, 96
      %v666 = vpop.permute.xlu0 %665
      %667 = vrot.lane.b32.xlu0 %v486, 32
      %v668 = vpop.permute.xlu0 %667
      %v670 = vsel %vm490, %v666, 0
      %v673 = vsel %vm490, %v668, 0
      %675 = vmatprep.subr.bf16.mxu0 0
      %676 = vmatpush1.bf16.xpose.msra.mxu0 0
      %677 = vmatprep.subr.bf16.mxu0 0
      %678 = vmatpush1.bf16.xpose.msra.mxu0 0
      %679 = vmatprep.subr.bf16.mxu0 0
      %680 = vmatpush1.bf16.xpose.msra.mxu0 0
      %681 = vmatprep.subr.bf16.mxu0 0
      %682 = vmatpush1.bf16.xpose.msra.mxu0 0
      %683 = vmatprep.subr.bf16.mxu0 0
      %684 = vmatpush1.bf16.xpose.msra.mxu0 0
      %685 = vmatprep.subr.bf16.mxu0 0
      %686 = vmatpush1.bf16.xpose.msra.mxu0 0
      %687 = vmatprep.subr.bf16.mxu0 0
      %688 = vmatpush1.bf16.xpose.msra.mxu0 0
      %689 = vmatprep.subr.bf16.mxu0 0
      %690 = vmatpush1.bf16.xpose.msra.mxu0 %v673
      %691 = vmatprep.subr.bf16.mxu0 0
      %692 = vmatpush2.bf16.xpose.msra.mxu0 0
      %693 = vmatprep.subr.bf16.mxu0 0
      %694 = vmatpush2.bf16.xpose.msra.mxu0 0
      %695 = vmatprep.subr.bf16.mxu0 0
      %696 = vmatpush2.bf16.xpose.msra.mxu0 0
      %697 = vmatprep.subr.bf16.mxu0 0
      %698 = vmatpush2.bf16.xpose.msra.mxu0 0
      %699 = vmatprep.subr.bf16.mxu0 0
      %700 = vmatpush2.bf16.xpose.msra.mxu0 0
      %701 = vmatprep.subr.bf16.mxu0 0
      %702 = vmatpush2.bf16.xpose.msra.mxu0 0
      %703 = vmatprep.subr.bf16.mxu0 0
      %704 = vmatpush2.bf16.xpose.msra.mxu0 0
      %705 = vmatprep.subr.bf16.mxu0 0
      %706 = vmatpush2.bf16.xpose.msra.mxu0 0
      %707 = vmatprep.mubr.bf16.mxu0 0
      %708 = vmatmul.mubr.bf16.gmra.mxu0 %v670
      %v709 = vpop.f32.mrf.mxu0
      %v710 = vadd.f32 0.0, %v709
      %v711 = vpop.f32.mrf.mxu0
      %v712 = vpop.f32.mrf.mxu0
      %v713 = vadd.f32 0.0, %v712
      %v714 = vpop.f32.mrf.mxu0
      %715 = vdwg.mxu0
      %v716 = vsel %vm543, %v710, -1e+30
      %v717 = vsel %vm543, %v713, -1e+30
      %v718 = vsel %vm546, %v716, -inf
      %719 = vmax.xlane.f32.xlu0 %v718
      %v720 = vpop.xlane.xlu0 %719
      %v721 = vsel %vm546, %v717, -inf
      %722 = vmax.xlane.f32.xlu0 %v721
      %v723 = vpop.xlane.xlu0 %722
      %v724 = vsub.f32 %v716, %v720
      %v725 = vsub.f32 %v717, %v723
      %v726 = vmul.f32 %v724, 1.442695
      %v727 = vpow.pop %v726
      %v728 = vmul.f32 %v725, 1.442695
      %v729 = vpow.pop %v728
      %v730 = vsel %vm546, %v727, 0.0
      %731 = vadd.xlane.f32.xlu0 %v730
      %v732 = vpop.xlane.xlu0 %731
      %v733 = vsel %vm546, %v729, 0.0
      %734 = vadd.xlane.f32.xlu0 %v733
      %v735 = vpop.xlane.xlu0 %734
      %v736 = vrcp.pop %v732
      %v737 = vrcp.pop %v735
      %v738 = vmul.f32 %v727, %v736
      %v739 = vmul.f32 %v729, %v737
      %v740 = vpack.c.bf16 %v739, %v738
      %742 = vrot.lane.b32.xlu0 %v570, 96
      %v743 = vpop.permute.xlu0 %742
      %v746 = vsel %vm546, %v740, 0
      %748 = vmatprep.subr.bf16.mxu0 0
      %749 = vmatpush1.bf16.msra.mxu0 0
      %750 = vmatprep.subr.bf16.mxu0 0
      %751 = vmatpush1.bf16.msra.mxu0 0
      %752 = vmatprep.subr.bf16.mxu0 0
      %753 = vmatpush1.bf16.msra.mxu0 0
      %754 = vmatprep.subr.bf16.mxu0 0
      %755 = vmatpush1.bf16.msra.mxu0 0
      %756 = vmatprep.subr.bf16.mxu0 0
      %757 = vmatpush1.bf16.msra.mxu0 0
      %758 = vmatprep.subr.bf16.mxu0 0
      %759 = vmatpush1.bf16.msra.mxu0 0
      %760 = vmatprep.subr.bf16.mxu0 0
      %761 = vmatpush1.bf16.msra.mxu0 0
      %762 = vmatprep.subr.bf16.mxu0 0
      %763 = vmatpush1.bf16.msra.mxu0 %v743
      %764 = vmatprep.subr.bf16.mxu0 0
      %765 = vmatpush2.bf16.msra.mxu0 0
      %766 = vmatprep.subr.bf16.mxu0 0
      %767 = vmatpush2.bf16.msra.mxu0 0
      %768 = vmatprep.subr.bf16.mxu0 0
      %769 = vmatpush2.bf16.msra.mxu0 0
      %770 = vmatprep.subr.bf16.mxu0 0
      %771 = vmatpush2.bf16.msra.mxu0 0
      %772 = vmatprep.subr.bf16.mxu0 0
      %773 = vmatpush2.bf16.msra.mxu0 0
      %774 = vmatprep.subr.bf16.mxu0 0
      %775 = vmatpush2.bf16.msra.mxu0 0
      %776 = vmatprep.subr.bf16.mxu0 0
      %777 = vmatpush2.bf16.msra.mxu0 0
      %778 = vmatprep.subr.bf16.mxu0 0
      %779 = vmatpush2.bf16.msra.mxu0 0
      %780 = vmatprep.mubr.bf16.mxu0 0
      %781 = vmatmul.mubr.bf16.gmra.mxu0 %v746
      %v782 = vpop.f32.mrf.mxu0
      %v783 = vadd.f32 0.0, %v782
      %v784 = vpop.f32.mrf.mxu0
      %v785 = vpop.f32.mrf.mxu0
      %v786 = vadd.f32 0.0, %v785
      %v787 = vpop.f32.mrf.mxu0
      %788 = vdwg.mxu0
      %v789 = vpack.c.bf16 %v786, %v783
      %v790 = vpack.c.bf16 %v471, %v470
      %v791 = vpack.c.bf16 %v473, %v472
      %v793 = vsel %vm490, %v789, 0
      %795 = vmatprep.subr.bf16.mxu0 0
      %796 = vmatpush1.bf16.msra.mxu0 0
      %797 = vmatprep.subr.bf16.mxu0 0
      %798 = vmatpush1.bf16.msra.mxu0 0
      %799 = vmatprep.subr.bf16.mxu0 0
      %800 = vmatpush1.bf16.msra.mxu0 0
      %801 = vmatprep.subr.bf16.mxu0 0
      %802 = vmatpush1.bf16.msra.mxu0 0
      %803 = vmatprep.subr.bf16.mxu0 0
      %804 = vmatpush1.bf16.msra.mxu0 0
      %805 = vmatprep.subr.bf16.mxu0 0
      %806 = vmatpush1.bf16.msra.mxu0 0
      %807 = vmatprep.subr.bf16.mxu0 0
      %808 = vmatpush1.bf16.msra.mxu0 %v791
      %809 = vmatprep.subr.bf16.mxu0 0
      %810 = vmatpush1.bf16.msra.mxu0 %v790
      %811 = vmatprep.subr.bf16.mxu0 0
      %812 = vmatpush2.bf16.msra.mxu0 0
      %813 = vmatprep.subr.bf16.mxu0 0
      %814 = vmatpush2.bf16.msra.mxu0 0
      %815 = vmatprep.subr.bf16.mxu0 0
      %816 = vmatpush2.bf16.msra.mxu0 0
      %817 = vmatprep.subr.bf16.mxu0 0
      %818 = vmatpush2.bf16.msra.mxu0 0
      %819 = vmatprep.subr.bf16.mxu0 0
      %820 = vmatpush2.bf16.msra.mxu0 0
      %821 = vmatprep.subr.bf16.mxu0 0
      %822 = vmatpush2.bf16.msra.mxu0 0
      %823 = vmatprep.subr.bf16.mxu0 0
      %824 = vmatpush2.bf16.msra.mxu0 0
      %825 = vmatprep.subr.bf16.mxu0 0
      %826 = vmatpush2.bf16.msra.mxu0 0
      %827 = vmatprep.mubr.bf16.mxu0 0
      %828 = vmatmul.mubr.bf16.gmra.mxu0 %v793
      %v829 = vpop.f32.mrf.mxu0
      %v830 = vadd.f32 0.0, %v829
      %v831 = vpop.f32.mrf.mxu0
      %v832 = vpop.f32.mrf.mxu0
      %v833 = vadd.f32 0.0, %v832
      %v834 = vpop.f32.mrf.mxu0
      %835 = vdwg.mxu0
      %v836 = vadd.f32 %v662, %v830
      %v837 = vadd.f32 %v663, %v833
      %v838 = vpack.c.bf16 %v837, %v836
      %v839 = vld [vmem:[%s7] sm:$0xff]
      %v840 = vld [vmem:[%s7 + $0x8] sm:$0xff]
      %v841 = vld [vmem:[%s7 + $0x10] sm:$0xff]
      %v842 = vld [vmem:[%s7 + $0x18] sm:$0xff]
      %v843 = vld [vmem:[%s7 + $0x20] sm:$0xff]
      %v844 = vld [vmem:[%s7 + $0x28] sm:$0xff]
      %v845 = vld [vmem:[%s7 + $0x30] sm:$0xff]
      %v846 = vld [vmem:[%s7 + $0x38] sm:$0xff]
      %v847 = vpack.c.bf16 %v840, %v839
      %v848 = vpack.c.bf16 %v842, %v841
      %v849 = vpack.c.bf16 %v844, %v843
      %v850 = vpack.c.bf16 %v846, %v845
      %v851 = vld [vmem:[%s8] sm:$0x1]
      %v853 = vlaneseq
      %v854 = vshrl.u32 %v853, 7
      %v855 = vsub.s32 0, %v854
      %v856 = vrot.slane %v851, %v855
      %v859 = vsel %vm417, %v838, 0
      %861 = vmatprep.subr.bf16.mxu0 0
      %862 = vmatpush1.bf16.msra.mxu0 0
      %863 = vmatprep.subr.bf16.mxu0 0
      %864 = vmatpush1.bf16.msra.mxu0 0
      %865 = vmatprep.subr.bf16.mxu0 0
      %866 = vmatpush1.bf16.msra.mxu0 0
      %867 = vmatprep.subr.bf16.mxu0 0
      %868 = vmatpush1.bf16.msra.mxu0 0
      %869 = vmatprep.subr.bf16.mxu0 0
      %870 = vmatpush1.bf16.msra.mxu0 %v850
      %871 = vmatprep.subr.bf16.mxu0 0
      %872 = vmatpush1.bf16.msra.mxu0 %v849
      %873 = vmatprep.subr.bf16.mxu0 0
      %874 = vmatpush1.bf16.msra.mxu0 %v848
      %875 = vmatprep.subr.bf16.mxu0 0
      %876 = vmatpush1.bf16.msra.mxu0 %v847
      %877 = vmatprep.subr.bf16.mxu0 0
      %878 = vmatpush2.bf16.msra.mxu0 0
      %879 = vmatprep.subr.bf16.mxu0 0
      %880 = vmatpush2.bf16.msra.mxu0 0
      %881 = vmatprep.subr.bf16.mxu0 0
      %882 = vmatpush2.bf16.msra.mxu0 0
      %883 = vmatprep.subr.bf16.mxu0 0
      %884 = vmatpush2.bf16.msra.mxu0 0
      %885 = vmatprep.subr.bf16.mxu0 0
      %886 = vmatpush2.bf16.msra.mxu0 0
      %887 = vmatprep.subr.bf16.mxu0 0
      %888 = vmatpush2.bf16.msra.mxu0 0
      %889 = vmatprep.subr.bf16.mxu0 0
      %890 = vmatpush2.bf16.msra.mxu0 0
      %891 = vmatprep.subr.bf16.mxu0 0
      %892 = vmatpush2.bf16.msra.mxu0 0
      %893 = vmatprep.mubr.bf16.mxu0 0
      %894 = vmatmul.mubr.bf16.gmra.mxu0 %v859
      %v895 = vpop.f32.mrf.mxu0
      %v896 = vadd.f32 %v856, %v895
      %v897 = vpop.f32.mrf.mxu0
      %v898 = vpop.f32.mrf.mxu0
      %v899 = vadd.f32 %v856, %v898
      %v900 = vpop.f32.mrf.mxu0
      %901 = vdwg.mxu0
      %vm902 = vcmask 7168
      %v903 = vsel %vm902, %v364, 0.0
      %v904 = vsel %vm902, %v365, 0.0
      %v905 = vadd.f32 %v903, %v904
      %v906 = vrot.slane %v905, 4
      %v907 = vadd.f32 %v905, %v906
      %v908 = vrot.slane %v907, 2
      %v909 = vadd.f32 %v907, %v908
      %v910 = vrot.slane %v909, 1
      %v911 = vadd.f32 %v909, %v910
      %v912 = vmul.f32 %v896, %v371
      %v913 = vmul.f32 %v899, %v376
      %v914 = vsel %vm490, %v912, 0.0
      %v915 = vsel %vm490, %v913, 0.0
      %v916 = vadd.f32 %v914, %v915
      %v917 = vrot.slane %v916, 4
      %v918 = vadd.f32 %v916, %v917
      %v919 = vrot.slane %v918, 2
      %v920 = vadd.f32 %v918, %v919
      %v921 = vrot.slane %v920, 1
      %v922 = vadd.f32 %v920, %v921
      %924 = vset.pattern.permute.xlu0 0
      %925 = vperm.xlu0 %924, %v911
      %v926 = vpop.permute.xlu0 %925
      %v928 = vrcp.pop %v926
      %v929 = vmul.f32 %v922, %v928
      %vm930 = vcmask 253952
      %931 = vst.msk [vmem:[%s362] sm:$0x1] %vm930, %v929
      %p932 = scmp.lt.s32.totalorder %s20, 1
      %s933 = scalar_select %p932, %s20, 1
      %s934 = scalar_lea.vmem %s9, %s933
      // Predicated region
      $region57: #{code_predictor_forward.15} parent=55 // pred_check
        %p935 = pneg %p242
      $region58: #{code_predictor_forward.15} parent=55 // pred_check_branch
        %937 = sbr.rel (%p935) target = $region60
      $region59: #{code_predictor_forward.15} parent=55 // pred_region
        _
      $region60: #{code_predictor_forward.15} parent=55 // pred_fallthru
        _
    $region56: #{code_predictor_forward.15} parent=5 // pred_fallthru
      _
    %p938 = scmp.le.s32.totalorder 2, %s15
    // Predicated region
    $region61: #{code_predictor_forward.15} parent=5 // pred_check
      %p939 = pneg %p938
    $region62: #{code_predictor_forward.15} parent=5 // pred_check_branch
      %941 = sbr.rel (%p939) target = $region64
    $region63: #{code_predictor_forward.15} parent=5 // pred_region
      %s942 = ssub.s32 %s15, 2
      // Predicated region
      $region65: #{code_predictor_forward.15} parent=63 // pred_check
        %p943 = pneg %p248
      $region66: #{code_predictor_forward.15} parent=63 // pred_check_branch
        %945 = sbr.rel (%p943) target = $region68
      $region67: #{code_predictor_forward.15} parent=63 // pred_region
        %p946 = scmp.lt.s32.totalorder %s21, 1
        %s947 = scalar_select %p946, %s21, 1
        %s948 = scalar_lea.vmem %s9, %s947
      $region68: #{code_predictor_forward.15} parent=63 // pred_fallthru
        _
    $region64: #{code_predictor_forward.15} parent=5 // pred_fallthru
      _
  $region6: #{code_predictor_forward.15} parent=0 // loop_footer
    %s19 = sadd.s32 1, %s15
  $region7: #{code_predictor_forward.15} parent=0 // loop_footer_branch
    %14 = sbr.rel target = $region3
  $region8: #{code_predictor_forward.15} parent=0 // loop_exit
    _

// kernel: code_predictor_forward.20
$region0: #{code_predictor_forward.20}
  #allocation0 [shape = 'u32[]', space=smem, size = 0x4, offset = 0x4, fixed_abs, tag = 'smem constant byte address 0x4 - core index']
  #allocation1 [shape = 'u32[144,128]{1,0:T(1,128)}', space=vmem, size = 0x12000, scoped, tag = 'internal scratch']
  %s0 = inlined_call_operand.vmem [shape: f32[32,32], index: 0, kind: input, shape index: {}]
  %s1 = inlined_call_operand.vmem [shape: f32[32,192], index: 1, kind: input, shape index: {}]
  %s2 = inlined_call_operand.vmem [shape: f32[1,192], index: 2, kind: input, shape index: {}]
  %s3 = inlined_call_operand.vmem [shape: f32[32,1], index: 3, kind: input, shape index: {}]
  %s4 = inlined_call_operand.vmem [shape: f32[32,192], index: 4, kind: output, shape index: {}]
  %s5 = sld [smem:[#allocation0]]
  $region26: #{code_predictor_forward.20} parent=0
    _
  %s7 = ssub.s32 1, %s5
  %s8 = scalar_select 0, %s7, %s5
  // Predicated region
  $region2: #{code_predictor_forward.20} parent=0 // pred_check
    _
  $region3: #{code_predictor_forward.20} parent=0 // pred_check_branch
    %10 = sbr.rel (0) target = $region5
  $region4: #{code_predictor_forward.20} parent=0 // pred_region
    _
  $region5: #{code_predictor_forward.20} parent=0 // pred_fallthru
    _
  // Predicated region
  $region6: #{code_predictor_forward.20} parent=0 // pred_check
    _
  $region7: #{code_predictor_forward.20} parent=0 // pred_check_branch
    %12 = sbr.rel (0) target = $region9
  $region8: #{code_predictor_forward.20} parent=0 // pred_region
    _
  $region9: #{code_predictor_forward.20} parent=0 // pred_fallthru
    _
  // Predicated region
  $region10: #{code_predictor_forward.20} parent=0 // pred_check
    _
  $region11: #{code_predictor_forward.20} parent=0 // pred_check_branch
    %14 = sbr.rel (0) target = $region13
  $region12: #{code_predictor_forward.20} parent=0 // pred_region
    _
  $region13: #{code_predictor_forward.20} parent=0 // pred_fallthru
    _
  // Predicated region
  $region14: #{code_predictor_forward.20} parent=0 // pred_check
    _
  $region15: #{code_predictor_forward.20} parent=0 // pred_check_branch
    %16 = sbr.rel (0) target = $region17
  $region16: #{code_predictor_forward.20} parent=0 // pred_region
    _
  $region17: #{code_predictor_forward.20} parent=0 // pred_fallthru
    _
  %v18 = vld [vmem:[%s0] sm:$0xff]
  %v19 = vld [vmem:[%s0 + $0x8] sm:$0xff]
  %v20 = vld [vmem:[%s0 + $0x10] sm:$0xff]
  %v21 = vld [vmem:[%s0 + $0x18] sm:$0xff]
  %v22 = vpack.c.bf16 %v19, %v18
  %v23 = vpack.c.bf16 %v21, %v20
  %v24 = vld [vmem:[%s1] sm:$0xff]
  %v25 = vld [vmem:[%s1 + $0x8] sm:$0xff]
  %v26 = vld [vmem:[%s1 + $0x10] sm:$0xff]
  %v27 = vld [vmem:[%s1 + $0x18] sm:$0xff]
  %v28 = vld [vmem:[%s1 + $0x20] sm:$0xff]
  %v29 = vld [vmem:[%s1 + $0x28] sm:$0xff]
  %v30 = vld [vmem:[%s1 + $0x30] sm:$0xff]
  %v31 = vld [vmem:[%s1 + $0x38] sm:$0xff]
  %v32 = vpack.c.bf16 %v26, %v24
  %v33 = vpack.c.bf16 %v27, %v25
  %v34 = vpack.c.bf16 %v30, %v28
  %v35 = vpack.c.bf16 %v31, %v29
  %v36 = vld [vmem:[%s2] sm:$0x3]
  %v38 = vlaneseq
  %v39 = vshrl.u32 %v38, 7
  %v40 = vsub.s32 0, %v39
  %v41 = vrot.slane %v36, %v40
  %v42 = vlaneseq
  %v43 = vshrl.u32 %v42, 7
  %v44 = vsub.s32 1, %v43
  %v45 = vrot.slane %v36, %v44
  %vm48 = vcmask 261120
  %v50 = vsel %vm48, %v22, 0
  %v53 = vsel %vm48, %v23, 0
  %55 = vmatprep.subr.bf16.mxu0 0
  %56 = vmatpush1.bf16.msra.mxu0 0
  %57 = vmatprep.subr.bf16.mxu0 0
  %58 = vmatpush1.bf16.msra.mxu0 0
  %59 = vmatprep.subr.bf16.mxu0 0
  %60 = vmatpush1.bf16.msra.mxu0 0
  %61 = vmatprep.subr.bf16.mxu0 0
  %62 = vmatpush1.bf16.msra.mxu0 0
  %63 = vmatprep.subr.bf16.mxu0 0
  %64 = vmatpush1.bf16.msra.mxu0 0
  %65 = vmatprep.subr.bf16.mxu0 0
  %66 = vmatpush1.bf16.msra.mxu0 0
  %67 = vmatprep.subr.bf16.mxu0 %v35
  %68 = vmatpush1.bf16.msra.mxu0 %v34
  %69 = vmatprep.subr.bf16.mxu0 %v33
  %70 = vmatpush1.bf16.msra.mxu0 %v32
  %71 = vmatprep.subr.bf16.mxu0 0
  %72 = vmatpush2.bf16.msra.mxu0 0
  %73 = vmatprep.subr.bf16.mxu0 0
  %74 = vmatpush2.bf16.msra.mxu0 0
  %75 = vmatprep.subr.bf16.mxu0 0
  %76 = vmatpush2.bf16.msra.mxu0 0
  %77 = vmatprep.subr.bf16.mxu0 0
  %78 = vmatpush2.bf16.msra.mxu0 0
  %79 = vmatprep.subr.bf16.mxu0 0
  %80 = vmatpush2.bf16.msra.mxu0 0
  %81 = vmatprep.subr.bf16.mxu0 0
  %82 = vmatpush2.bf16.msra.mxu0 0
  %83 = vmatprep.subr.bf16.mxu0 0
  %84 = vmatpush2.bf16.msra.mxu0 0
  %85 = vmatprep.subr.bf16.mxu0 0
  %86 = vmatpush2.bf16.msra.mxu0 0
  %87 = vmatprep.mubr.bf16.mxu0 0
  %88 = vmatmul.mubr.bf16.gmra.mxu0 %v50
  %v89 = vpop.f32.mrf.mxu0
  %v90 = vadd.f32 %v41, %v89
  %v91 = vpop.f32.mrf.mxu0
  %v92 = vadd.f32 %v45, %v91
  %v93 = vpop.f32.mrf.mxu0
  %v94 = vadd.f32 %v41, %v93
  %v95 = vpop.f32.mrf.mxu0
  %v96 = vadd.f32 %v45, %v95
  %97 = vmatprep.mubr.bf16.mxu0 0
  %98 = vmatmul.mubr.bf16.gmra.mxu0 %v53
  %v99 = vpop.f32.mrf.mxu0
  %v100 = vadd.f32 %v41, %v99
  %v101 = vpop.f32.mrf.mxu0
  %v102 = vadd.f32 %v45, %v101
  %v103 = vpop.f32.mrf.mxu0
  %v104 = vadd.f32 %v41, %v103
  %v105 = vpop.f32.mrf.mxu0
  %v106 = vadd.f32 %v45, %v105
  %107 = vdwg.mxu0
  %v108 = vld [vmem:[%s3] sm:$0xff]
  %v109 = vld [vmem:[%s3 + $0x8] sm:$0xff]
  %v110 = vld [vmem:[%s3 + $0x10] sm:$0xff]
  %v111 = vld [vmem:[%s3 + $0x18] sm:$0xff]
  %113 = vset.pattern.permute.xlu0 0
  %114 = vperm.xlu0 %113, %v108
  %v115 = vpop.permute.xlu0 %114
  %118 = vset.pattern.permute.xlu0 0
  %119 = vperm.xlu0 %118, %v109
  %v120 = vpop.permute.xlu0 %119
  %123 = vset.pattern.permute.xlu0 0
  %124 = vperm.xlu0 %123, %v110
  %v125 = vpop.permute.xlu0 %124
  %128 = vset.pattern.permute.xlu0 0
  %129 = vperm.xlu0 %128, %v111
  %v130 = vpop.permute.xlu0 %129
  %v132 = vmul.f32 %v90, %v115
  %v133 = vmul.f32 %v92, %v115
  %v134 = vmul.f32 %v94, %v120
  %v135 = vmul.f32 %v96, %v120
  %v136 = vmul.f32 %v100, %v125
  %v137 = vmul.f32 %v102, %v125
  %v138 = vmul.f32 %v104, %v130
  %v139 = vmul.f32 %v106, %v130
  %140 = vst [vmem:[%s4] sm:$0xff] %v132
  %vm141 = vcmask 523264
  %142 = vst.msk [vmem:[%s4 + $0x8] sm:$0xff] %vm141, %v133
  %143 = vst [vmem:[%s4 + $0x10] sm:$0xff] %v134
  %144 = vst.msk [vmem:[%s4 + $0x18] sm:$0xff] %vm141, %v135
  %145 = vst [vmem:[%s4 + $0x20] sm:$0xff] %v136
  %146 = vst.msk [vmem:[%s4 + $0x28] sm:$0xff] %vm141, %v137
  %147 = vst [vmem:[%s4 + $0x30] sm:$0xff] %v138
  %148 = vst.msk [vmem:[%s4 + $0x38] sm:$0xff] %vm141, %v139
  // Predicated region
  $region18: #{code_predictor_forward.20} parent=0 // pred_check
    _
  $region19: #{code_predictor_forward.20} parent=0 // pred_check_branch
    %150 = sbr.rel (0) target = $region21
  $region20: #{code_predictor_forward.20} parent=0 // pred_region
    _
  $region21: #{code_predictor_forward.20} parent=0 // pred_fallthru
    _
  // Predicated region
  $region22: #{code_predictor_forward.20} parent=0 // pred_check
    _
  $region23: #{code_predictor_forward.20} parent=0 // pred_check_branch
    %152 = sbr.rel (0) target = $region25
  $region24: #{code_predictor_forward.20} parent=0 // pred_region
    _
  $region25: #{code_predictor_forward.20} parent=0 // pred_fallthru
    _

// kernel: code_predictor_forward.17
$region0: #{code_predictor_forward.17}
  #allocation0 [shape = 'u32[]', space=smem, size = 0x4, offset = 0x4, fixed_abs, tag = 'smem constant byte address 0x4 - core index']
  #allocation1 [shape = 'u32[144,128]{1,0:T(1,128)}', space=vmem, size = 0x12000, scoped, tag = 'internal scratch']
  #allocation2 [shape = 'f32[18,32]{1,0:T(8,128)}', space=vmem, size = 0x3000, scoped, tag = 'scratch operand']
  #allocation3 [shape = 'f32[18,64]{1,0:T(8,128)}', space=vmem, size = 0x3000, scoped, tag = 'scratch operand']
  %s0 = inlined_call_operand.vmem [shape: f32[2,16,32], index: 0, kind: input, shape index: {}]
  %s1 = inlined_call_operand.vmem [shape: f32[2,16,1], index: 1, kind: input, shape index: {}]
  %s2 = inlined_call_operand.vmem [shape: f32[3,32,64], index: 2, kind: input, shape index: {}]
  %s3 = inlined_call_operand.vmem [shape: f32[1,64], index: 3, kind: input, shape index: {}]
  %s4 = inlined_call_operand.vmem [shape: f32[3,64,32], index: 4, kind: input, shape index: {}]
  %s5 = inlined_call_operand.vmem [shape: f32[1,32], index: 5, kind: input, shape index: {}]
  %s6 = inlined_call_operand.vmem [shape: f32[1,32], index: 6, kind: input, shape index: {}]
  %s7 = inlined_call_operand.vmem [shape: f32[1,32], index: 7, kind: input, shape index: {}]
  %s8 = inlined_call_operand.vmem [shape: f32[2,16,32], index: 8, kind: output, shape index: {}]
  %s9 = sld [smem:[#allocation0]]
  $region65: #{code_predictor_forward.17} parent=0
    _
  %s11 = ssub.s32 1, %s9
  %s12 = scalar_select 0, %s11, %s9
  loop: start=0, step=1, limit=4
  $region2: #{code_predictor_forward.17} parent=0 // loop_pre_header
    _
  $region3: #{code_predictor_forward.17} parent=0 // loop_header
    %s14 = sphi 0, %s18
    %p15 = scmp.ge.s32.totalorder %s14, 4
    %s24 = sphi 0, %s26
    %s27 = sphi 0, %s24
    %s28 = sphi 0, %s27
    %s44 = sphi 0, %s28
    %s50 = sphi 0, %s52
    %s53 = sphi 0, %s50
    %s54 = sphi 0, %s53
    %s70 = sphi 0, %s54
    %s74 = sphi 0, %s74
    %s76 = sphi 0, %s74
    %s77 = sphi 0, %s76
    %s91 = sphi 0, %s77
    %s95 = sphi 0, %s95
    %s97 = sphi 0, %s95
    %s98 = sphi 0, %s97
    %s112 = sphi 0, %s98
    %s116 = sphi 0, %s116
    %s118 = sphi 0, %s116
    %s119 = sphi 0, %s118
    %s133 = sphi 0, %s119
    %s137 = sphi 0, %s137
    %s139 = sphi 0, %s137
    %s140 = sphi 0, %s139
    %s154 = sphi 0, %s140
    %s158 = sphi 0, %s158
    %s160 = sphi 0, %s158
    %s161 = sphi 0, %s160
    %s175 = sphi 0, %s161
    %s179 = sphi 0, %s179
    %s181 = sphi 0, %s179
    %s182 = sphi 0, %s181
    %s196 = sphi 0, %s182
    %s202 = sphi 0, %s204
    %s205 = sphi 0, %s202
    %s206 = sphi 0, %s205
    %s222 = sphi 0, %s206
  $region4: #{code_predictor_forward.17} parent=0 // loop_header_branch
    %17 = sbr.rel (%p15) target = $region8
  $region5: #{code_predictor_forward.17} parent=0 // loop_body
    %s19 = ssub.s32 %s14, 1
    %s20 = ssub.s32 %s14, 2
    %s21 = sadd.s32 %s14, 1
    %s22 = ssub.s32 %s14, %s21
    %p23 = scmp.eq.s32.totalorder %s22, 0
    %s25 = sadd.s32 %s24, 1
    %s26 = scalar_select %p23, %s24, %s25
    %p29 = pneg %p23
    %p30 = scmp.eq.s32.totalorder %s14, 1
    %p31 = por %p29, %p30
    %p32 = scmp.ne.s32.totalorder %s24, %s27
    %p33 = scmp.eq.s32.totalorder %s14, 0
    %p34 = por %p32, %p33
    %p35 = scmp.ne.s32.totalorder %s24, %s27
    %p36 = scmp.eq.s32.totalorder %s19, 1
    %p37 = por %p35, %p36
    %p38 = scmp.ne.s32.totalorder %s27, %s28
    %p39 = scmp.eq.s32.totalorder %s19, 0
    %p40 = por %p38, %p39
    %p41 = scmp.ne.s32.totalorder %s27, %s28
    %p42 = scmp.eq.s32.totalorder %s20, 1
    %p43 = por %p41, %p42
    %p45 = scmp.ne.s32.totalorder %s28, %s44
    %p46 = scmp.eq.s32.totalorder %s20, 0
    %p47 = por %p45, %p46
    %s48 = ssub.s32 %s14, %s21
    %p49 = scmp.eq.s32.totalorder %s48, 0
    %s51 = sadd.s32 %s50, 1
    %s52 = scalar_select %p49, %s50, %s51
    %p55 = pneg %p49
    %p56 = scmp.eq.s32.totalorder %s14, 1
    %p57 = por %p55, %p56
    %p58 = scmp.ne.s32.totalorder %s50, %s53
    %p59 = scmp.eq.s32.totalorder %s14, 0
    %p60 = por %p58, %p59
    %p61 = scmp.ne.s32.totalorder %s50, %s53
    %p62 = scmp.eq.s32.totalorder %s19, 1
    %p63 = por %p61, %p62
    %p64 = scmp.ne.s32.totalorder %s53, %s54
    %p65 = scmp.eq.s32.totalorder %s19, 0
    %p66 = por %p64, %p65
    %p67 = scmp.ne.s32.totalorder %s53, %s54
    %p68 = scmp.eq.s32.totalorder %s20, 1
    %p69 = por %p67, %p68
    %p71 = scmp.ne.s32.totalorder %s54, %s70
    %p72 = scmp.eq.s32.totalorder %s20, 0
    %p73 = por %p71, %p72
    %s75 = sadd.s32 %s74, 1
    %p78 = scmp.eq.s32.totalorder %s14, 1
    %p79 = scmp.ne.s32.totalorder %s74, %s76
    %p80 = scmp.eq.s32.totalorder %s14, 0
    %p81 = por %p79, %p80
    %p82 = scmp.ne.s32.totalorder %s74, %s76
    %p83 = scmp.eq.s32.totalorder %s19, 1
    %p84 = por %p82, %p83
    %p85 = scmp.ne.s32.totalorder %s76, %s77
    %p86 = scmp.eq.s32.totalorder %s19, 0
    %p87 = por %p85, %p86
    %p88 = scmp.ne.s32.totalorder %s76, %s77
    %p89 = scmp.eq.s32.totalorder %s20, 1
    %p90 = por %p88, %p89
    %p92 = scmp.ne.s32.totalorder %s77, %s91
    %p93 = scmp.eq.s32.totalorder %s20, 0
    %p94 = por %p92, %p93
    %s96 = sadd.s32 %s95, 1
    %p99 = scmp.eq.s32.totalorder %s14, 1
    %p100 = scmp.ne.s32.totalorder %s95, %s97
    %p101 = scmp.eq.s32.totalorder %s14, 0
    %p102 = por %p100, %p101
    %p103 = scmp.ne.s32.totalorder %s95, %s97
    %p104 = scmp.eq.s32.totalorder %s19, 1
    %p105 = por %p103, %p104
    %p106 = scmp.ne.s32.totalorder %s97, %s98
    %p107 = scmp.eq.s32.totalorder %s19, 0
    %p108 = por %p106, %p107
    %p109 = scmp.ne.s32.totalorder %s97, %s98
    %p110 = scmp.eq.s32.totalorder %s20, 1
    %p111 = por %p109, %p110
    %p113 = scmp.ne.s32.totalorder %s98, %s112
    %p114 = scmp.eq.s32.totalorder %s20, 0
    %p115 = por %p113, %p114
    %s117 = sadd.s32 %s116, 1
    %p120 = scmp.eq.s32.totalorder %s14, 1
    %p121 = scmp.ne.s32.totalorder %s116, %s118
    %p122 = scmp.eq.s32.totalorder %s14, 0
    %p123 = por %p121, %p122
    %p124 = scmp.ne.s32.totalorder %s116, %s118
    %p125 = scmp.eq.s32.totalorder %s19, 1
    %p126 = por %p124, %p125
    %p127 = scmp.ne.s32.totalorder %s118, %s119
    %p128 = scmp.eq.s32.totalorder %s19, 0
    %p129 = por %p127, %p128
    %p130 = scmp.ne.s32.totalorder %s118, %s119
    %p131 = scmp.eq.s32.totalorder %s20, 1
    %p132 = por %p130, %p131
    %p134 = scmp.ne.s32.totalorder %s119, %s133
    %p135 = scmp.eq.s32.totalorder %s20, 0
    %p136 = por %p134, %p135
    %s138 = sadd.s32 %s137, 1
    %p141 = scmp.eq.s32.totalorder %s14, 1
    %p142 = scmp.ne.s32.totalorder %s137, %s139
    %p143 = scmp.eq.s32.totalorder %s14, 0
    %p144 = por %p142, %p143
    %p145 = scmp.ne.s32.totalorder %s137, %s139
    %p146 = scmp.eq.s32.totalorder %s19, 1
    %p147 = por %p145, %p146
    %p148 = scmp.ne.s32.totalorder %s139, %s140
    %p149 = scmp.eq.s32.totalorder %s19, 0
    %p150 = por %p148, %p149
    %p151 = scmp.ne.s32.totalorder %s139, %s140
    %p152 = scmp.eq.s32.totalorder %s20, 1
    %p153 = por %p151, %p152
    %p155 = scmp.ne.s32.totalorder %s140, %s154
    %p156 = scmp.eq.s32.totalorder %s20, 0
    %p157 = por %p155, %p156
    %s159 = sadd.s32 %s158, 1
    %p162 = scmp.eq.s32.totalorder %s14, 1
    %p163 = scmp.ne.s32.totalorder %s158, %s160
    %p164 = scmp.eq.s32.totalorder %s14, 0
    %p165 = por %p163, %p164
    %p166 = scmp.ne.s32.totalorder %s158, %s160
    %p167 = scmp.eq.s32.totalorder %s19, 1
    %p168 = por %p166, %p167
    %p169 = scmp.ne.s32.totalorder %s160, %s161
    %p170 = scmp.eq.s32.totalorder %s19, 0
    %p171 = por %p169, %p170
    %p172 = scmp.ne.s32.totalorder %s160, %s161
    %p173 = scmp.eq.s32.totalorder %s20, 1
    %p174 = por %p172, %p173
    %p176 = scmp.ne.s32.totalorder %s161, %s175
    %p177 = scmp.eq.s32.totalorder %s20, 0
    %p178 = por %p176, %p177
    %s180 = sadd.s32 %s179, 1
    %p183 = scmp.eq.s32.totalorder %s14, 1
    %p184 = scmp.ne.s32.totalorder %s179, %s181
    %p185 = scmp.eq.s32.totalorder %s14, 0
    %p186 = por %p184, %p185
    %p187 = scmp.ne.s32.totalorder %s179, %s181
    %p188 = scmp.eq.s32.totalorder %s19, 1
    %p189 = por %p187, %p188
    %p190 = scmp.ne.s32.totalorder %s181, %s182
    %p191 = scmp.eq.s32.totalorder %s19, 0
    %p192 = por %p190, %p191
    %p193 = scmp.ne.s32.totalorder %s181, %s182
    %p194 = scmp.eq.s32.totalorder %s20, 1
    %p195 = por %p193, %p194
    %p197 = scmp.ne.s32.totalorder %s182, %s196
    %p198 = scmp.eq.s32.totalorder %s20, 0
    %p199 = por %p197, %p198
    %s200 = ssub.s32 %s14, %s21
    %p201 = scmp.eq.s32.totalorder %s200, 0
    %s203 = sadd.s32 %s202, 1
    %s204 = scalar_select %p201, %s202, %s203
    %p207 = pneg %p201
    %p208 = scmp.eq.s32.totalorder %s14, 1
    %p209 = por %p207, %p208
    %p210 = scmp.ne.s32.totalorder %s202, %s205
    %p211 = scmp.eq.s32.totalorder %s14, 0
    %p212 = por %p210, %p211
    %p213 = scmp.ne.s32.totalorder %s202, %s205
    %p214 = scmp.eq.s32.totalorder %s19, 1
    %p215 = por %p213, %p214
    %p216 = scmp.ne.s32.totalorder %s205, %s206
    %p217 = scmp.eq.s32.totalorder %s19, 0
    %p218 = por %p216, %p217
    %p219 = scmp.ne.s32.totalorder %s205, %s206
    %p220 = scmp.eq.s32.totalorder %s20, 1
    %p221 = por %p219, %p220
    %p223 = scmp.ne.s32.totalorder %s206, %s222
    %p224 = scmp.eq.s32.totalorder %s20, 0
    %p225 = por %p223, %p224
    %p226 = scmp.le.s32.totalorder 1, %s14
    %p227 = scmp.lt.s32.totalorder %s14, 3
    %p228 = pnand %p226, %p227
    %p229 = pneg %p228
    // Predicated region
    $region9: #{code_predictor_forward.17} parent=5 // pred_check
      _
    $region10: #{code_predictor_forward.17} parent=5 // pred_check_branch
      %231 = sbr.rel (%p228) target = $region12
    $region11: #{code_predictor_forward.17} parent=5 // pred_region
      %s232 = ssub.s32 %s14, 1
      // Predicated region
      $region13: #{code_predictor_forward.17} parent=11 // pred_check
        %p233 = pneg %p87
      $region14: #{code_predictor_forward.17} parent=11 // pred_check_branch
        %235 = sbr.rel (%p233) target = $region16
      $region15: #{code_predictor_forward.17} parent=11 // pred_region
        _
      $region16: #{code_predictor_forward.17} parent=11 // pred_fallthru
        _
      // Predicated region
      $region17: #{code_predictor_forward.17} parent=11 // pred_check
        %p236 = pneg %p108
      $region18: #{code_predictor_forward.17} parent=11 // pred_check_branch
        %238 = sbr.rel (%p236) target = $region20
      $region19: #{code_predictor_forward.17} parent=11 // pred_region
        _
      $region20: #{code_predictor_forward.17} parent=11 // pred_fallthru
        _
      // Predicated region
      $region21: #{code_predictor_forward.17} parent=11 // pred_check
        %p239 = pneg %p129
      $region22: #{code_predictor_forward.17} parent=11 // pred_check_branch
        %241 = sbr.rel (%p239) target = $region24
      $region23: #{code_predictor_forward.17} parent=11 // pred_region
        _
      $region24: #{code_predictor_forward.17} parent=11 // pred_fallthru
        _
      // Predicated region
      $region25: #{code_predictor_forward.17} parent=11 // pred_check
        %p242 = pneg %p150
      $region26: #{code_predictor_forward.17} parent=11 // pred_check_branch
        %244 = sbr.rel (%p242) target = $region28
      $region27: #{code_predictor_forward.17} parent=11 // pred_region
        _
      $region28: #{code_predictor_forward.17} parent=11 // pred_fallthru
        _
      // Predicated region
      $region29: #{code_predictor_forward.17} parent=11 // pred_check
        %p245 = pneg %p171
      $region30: #{code_predictor_forward.17} parent=11 // pred_check_branch
        %247 = sbr.rel (%p245) target = $region32
      $region31: #{code_predictor_forward.17} parent=11 // pred_region
        _
      $region32: #{code_predictor_forward.17} parent=11 // pred_fallthru
        _
      // Predicated region
      $region33: #{code_predictor_forward.17} parent=11 // pred_check
        %p248 = pneg %p192
      $region34: #{code_predictor_forward.17} parent=11 // pred_check_branch
        %250 = sbr.rel (%p248) target = $region36
      $region35: #{code_predictor_forward.17} parent=11 // pred_region
        _
      $region36: #{code_predictor_forward.17} parent=11 // pred_fallthru
        _
    $region12: #{code_predictor_forward.17} parent=5 // pred_fallthru
      _
    %p251 = scmp.lt.s32.totalorder %s14, 2
    // Predicated region
    $region37: #{code_predictor_forward.17} parent=5 // pred_check
      %p252 = pneg %p251
    $region38: #{code_predictor_forward.17} parent=5 // pred_check_branch
      %254 = sbr.rel (%p252) target = $region40
    $region39: #{code_predictor_forward.17} parent=5 // pred_region
      // Predicated region
      $region41: #{code_predictor_forward.17} parent=39 // pred_check
        %p255 = pneg %p34
      $region42: #{code_predictor_forward.17} parent=39 // pred_check_branch
        %257 = sbr.rel (%p255) target = $region44
      $region43: #{code_predictor_forward.17} parent=39 // pred_region
        %p258 = scmp.lt.s32.totalorder %s14, 1
        %s259 = scalar_select %p258, %s14, 1
        %s260 = smul.addr %s259, 2
        %s261 = smul.addr %s260, 8
        %s262 = scalar_lea.vmem %s0, %s261
      $region44: #{code_predictor_forward.17} parent=39 // pred_fallthru
        _
      // Predicated region
      $region45: #{code_predictor_forward.17} parent=39 // pred_check
        %p263 = pneg %p60
      $region46: #{code_predictor_forward.17} parent=39 // pred_check_branch
        %265 = sbr.rel (%p263) target = $region48
      $region47: #{code_predictor_forward.17} parent=39 // pred_region
        %p266 = scmp.lt.s32.totalorder %s14, 1
        %s267 = scalar_select %p266, %s14, 1
        %s268 = smul.addr %s267, 2
        %s269 = smul.addr %s268, 8
        %s270 = scalar_lea.vmem %s1, %s269
      $region48: #{code_predictor_forward.17} parent=39 // pred_fallthru
        _
    $region40: #{code_predictor_forward.17} parent=5 // pred_fallthru
      _
    %p271 = scmp.le.s32.totalorder 1, %s14
    %p272 = scmp.lt.s32.totalorder %s14, 3
    %p273 = pnand %p271, %p272
    %p274 = pneg %p273
    // Predicated region
    $region49: #{code_predictor_forward.17} parent=5 // pred_check
      _
    $region50: #{code_predictor_forward.17} parent=5 // pred_check_branch
      %276 = sbr.rel (%p273) target = $region52
    $region51: #{code_predictor_forward.17} parent=5 // pred_region
      %s277 = ssub.s32 %s14, 1
      %p278 = scmp.lt.s32.totalorder %s19, 1
      %s279 = scalar_select %p278, %s19, 1
      %s280 = smul.addr %s279, 2
      %s281 = smul.addr %s280, 8
      %s282 = scalar_lea.vmem %s0, %s281
      %p283 = pneg %p40
      %p284 = pneg %p37
      %p285 = scmp.lt.s32.totalorder %s19, 1
      %s286 = scalar_select %p285, %s19, 1
      %s287 = smul.addr %s286, 2
      %s288 = smul.addr %s287, 8
      %s289 = scalar_lea.vmem %s1, %s288
      %p290 = pneg %p66
      %p291 = pneg %p63
      %p292 = pneg %p87
      %p293 = pneg %p84
      %p294 = pneg %p108
      %p295 = pneg %p105
      %p296 = pneg %p129
      %p297 = pneg %p126
      %p298 = pneg %p150
      %p299 = pneg %p147
      %p300 = pneg %p171
      %p301 = pneg %p168
      %p302 = pneg %p192
      %p303 = pneg %p189
      %p304 = pneg %p218
      %p305 = pneg %p215
      %p306 = scmp.lt.s32.totalorder %s19, 1
      %s307 = scalar_select %p306, %s19, 1
      %s308 = smul.addr %s307, 2
      %s309 = smul.addr %s308, 8
      %s310 = scalar_lea.vmem %s8, %s309
      %p311 = scmp.lt.s32.totalorder %s19, 1
      %s312 = scalar_select %p311, %s19, 1
      %s313 = smul.addr %s312, 2
      %s314 = smul.addr %s313, 8
      %s315 = scalar_lea.vmem %s0, %s314
      %p316 = scmp.lt.s32.totalorder %s19, 1
      %s317 = scalar_select %p316, %s19, 1
      %s318 = smul.addr %s317, 2
      %s319 = smul.addr %s318, 8
      %s320 = scalar_lea.vmem %s1, %s319
      %p321 = scmp.lt.s32.totalorder %s19, 1
      %s322 = scalar_select %p321, %s19, 1
      %s323 = smul.addr %s322, 2
      %s324 = smul.addr %s323, 8
      %s325 = scalar_lea.vmem %s8, %s324
      %v327 = vld [vmem:[%s315] sm:$0xff]
      %v328 = vld [vmem:[%s315 + $0x8] sm:$0xff]
      %v329 = vld [vmem:[%s320] sm:$0xff]
      %v330 = vld [vmem:[%s320 + $0x8] sm:$0xff]
      %vm331 = vcmask 261120
      %332 = vst.msk [vmem:[#allocation2] sm:$0xff] %vm331, 0.0
      %333 = vst.msk [vmem:[#allocation2 + $0x8] sm:$0xff] %vm331, 0.0
      %vm334 = vcmask 254976
      %335 = vst.msk [vmem:[#allocation2 + $0x10] sm:$0x3] %vm334, 0.0
      %337 = vset.pattern.permute.xlu0 0
      %338 = vperm.xlu0 %337, %v329
      %v339 = vpop.permute.xlu0 %338
      %342 = vset.pattern.permute.xlu0 0
      %343 = vperm.xlu0 %342, %v330
      %v344 = vpop.permute.xlu0 %343
      %v346 = vmul.f32 %v327, %v339
      %v347 = vmul.f32 %v328, %v344
      %348 = vst.msk [vmem:[#allocation2 + $0x1] sm:$0xff] %vm331, %v346
      %349 = vst.msk [vmem:[#allocation2 + $0x9] sm:$0xff] %vm331, %v347
      %v350 = vld [vmem:[#allocation2] sm:$0xff]
      %v351 = vld [vmem:[#allocation2 + $0x8] sm:$0xff]
      %v352 = vpack.c.bf16 %v351, %v350
      %v353 = vld [vmem:[%s2] sm:$0xff]
      %v354 = vld [vmem:[%s2 + $0x8] sm:$0xff]
      %v355 = vld [vmem:[%s2 + $0x10] sm:$0xff]
      %v356 = vld [vmem:[%s2 + $0x18] sm:$0xff]
      %v357 = vpack.c.bf16 %v354, %v353
      %v358 = vpack.c.bf16 %v356, %v355
      %v359 = vld [vmem:[#allocation2 + $0x1] sm:$0xff]
      %v360 = vld [vmem:[#allocation2 + $0x9] sm:$0xff]
      %v361 = vpack.c.bf16 %v360, %v359
      %s362 = scalar_lea.vmem %s2, 32
      %v363 = vld [vmem:[%s362] sm:$0xff]
      %v364 = vld [vmem:[%s362 + $0x8] sm:$0xff]
      %v365 = vld [vmem:[%s362 + $0x10] sm:$0xff]
      %v366 = vld [vmem:[%s362 + $0x18] sm:$0xff]
      %v367 = vpack.c.bf16 %v364, %v363
      %v368 = vpack.c.bf16 %v366, %v365
      %v370 = vsel %vm331, %v361, 0
      %372 = vmatprep.subr.bf16.mxu0 0
      %373 = vmatpush1.bf16.msra.mxu0 0
      %374 = vmatprep.subr.bf16.mxu0 0
      %375 = vmatpush1.bf16.msra.mxu0 0
      %376 = vmatprep.subr.bf16.mxu0 0
      %377 = vmatpush1.bf16.msra.mxu0 0
      %378 = vmatprep.subr.bf16.mxu0 0
      %379 = vmatpush1.bf16.msra.mxu0 0
      %380 = vmatprep.subr.bf16.mxu0 0
      %381 = vmatpush1.bf16.msra.mxu0 0
      %382 = vmatprep.subr.bf16.mxu0 0
      %383 = vmatpush1.bf16.msra.mxu0 0
      %384 = vmatprep.subr.bf16.mxu0 0
      %385 = vmatpush1.bf16.msra.mxu0 %v368
      %386 = vmatprep.subr.bf16.mxu0 0
      %387 = vmatpush1.bf16.msra.mxu0 %v367
      %388 = vmatprep.subr.bf16.mxu0 0
      %389 = vmatpush2.bf16.msra.mxu0 0
      %390 = vmatprep.subr.bf16.mxu0 0
      %391 = vmatpush2.bf16.msra.mxu0 0
      %392 = vmatprep.subr.bf16.mxu0 0
      %393 = vmatpush2.bf16.msra.mxu0 0
      %394 = vmatprep.subr.bf16.mxu0 0
      %395 = vmatpush2.bf16.msra.mxu0 0
      %396 = vmatprep.subr.bf16.mxu0 0
      %397 = vmatpush2.bf16.msra.mxu0 0
      %398 = vmatprep.subr.bf16.mxu0 0
      %399 = vmatpush2.bf16.msra.mxu0 0
      %400 = vmatprep.subr.bf16.mxu0 0
      %401 = vmatpush2.bf16.msra.mxu0 0
      %402 = vmatprep.subr.bf16.mxu0 0
      %403 = vmatpush2.bf16.msra.mxu0 0
      %404 = vmatprep.mubr.bf16.mxu0 0
      %405 = vmatmul.mubr.bf16.gmra.mxu0 %v370
      %v406 = vpop.f32.mrf.mxu0
      %v407 = vadd.f32 0.0, %v406
      %v408 = vpop.f32.mrf.mxu0
      %v409 = vpop.f32.mrf.mxu0
      %v410 = vadd.f32 0.0, %v409
      %v411 = vpop.f32.mrf.mxu0
      %412 = vdwg.mxu0
      %v414 = vsel %vm331, %v352, 0
      %416 = vmatprep.subr.bf16.mxu0 0
      %417 = vmatpush1.bf16.msra.mxu0 0
      %418 = vmatprep.subr.bf16.mxu0 0
      %419 = vmatpush1.bf16.msra.mxu0 0
      %420 = vmatprep.subr.bf16.mxu0 0
      %421 = vmatpush1.bf16.msra.mxu0 0
      %422 = vmatprep.subr.bf16.mxu0 0
      %423 = vmatpush1.bf16.msra.mxu0 0
      %424 = vmatprep.subr.bf16.mxu0 0
      %425 = vmatpush1.bf16.msra.mxu0 0
      %426 = vmatprep.subr.bf16.mxu0 0
      %427 = vmatpush1.bf16.msra.mxu0 0
      %428 = vmatprep.subr.bf16.mxu0 0
      %429 = vmatpush1.bf16.msra.mxu0 %v358
      %430 = vmatprep.subr.bf16.mxu0 0
      %431 = vmatpush1.bf16.msra.mxu0 %v357
      %432 = vmatprep.subr.bf16.mxu0 0
      %433 = vmatpush2.bf16.msra.mxu0 0
      %434 = vmatprep.subr.bf16.mxu0 0
      %435 = vmatpush2.bf16.msra.mxu0 0
      %436 = vmatprep.subr.bf16.mxu0 0
      %437 = vmatpush2.bf16.msra.mxu0 0
      %438 = vmatprep.subr.bf16.mxu0 0
      %439 = vmatpush2.bf16.msra.mxu0 0
      %440 = vmatprep.subr.bf16.mxu0 0
      %441 = vmatpush2.bf16.msra.mxu0 0
      %442 = vmatprep.subr.bf16.mxu0 0
      %443 = vmatpush2.bf16.msra.mxu0 0
      %444 = vmatprep.subr.bf16.mxu0 0
      %445 = vmatpush2.bf16.msra.mxu0 0
      %446 = vmatprep.subr.bf16.mxu0 0
      %447 = vmatpush2.bf16.msra.mxu0 0
      %448 = vmatprep.mubr.bf16.mxu0 0
      %449 = vmatmul.mubr.bf16.gmra.mxu0 %v414
      %v450 = vpop.f32.mrf.mxu0
      %v451 = vadd.f32 %v407, %v450
      %v452 = vpop.f32.mrf.mxu0
      %v453 = vpop.f32.mrf.mxu0
      %v454 = vadd.f32 %v410, %v453
      %v455 = vpop.f32.mrf.mxu0
      %456 = vdwg.mxu0
      %v457 = vld [vmem:[#allocation2 + $0x2] sm:$0xff]
      %v458 = vld [vmem:[#allocation2 + $0xa] sm:$0xff]
      %v459 = vpack.c.bf16 %v458, %v457
      %s460 = scalar_lea.vmem %s2, 64
      %v461 = vld [vmem:[%s460] sm:$0xff]
      %v462 = vld [vmem:[%s460 + $0x8] sm:$0xff]
      %v463 = vld [vmem:[%s460 + $0x10] sm:$0xff]
      %v464 = vld [vmem:[%s460 + $0x18] sm:$0xff]
      %v465 = vpack.c.bf16 %v462, %v461
      %v466 = vpack.c.bf16 %v464, %v463
      %v468 = vsel %vm331, %v459, 0
      %470 = vmatprep.subr.bf16.mxu0 0
      %471 = vmatpush1.bf16.msra.mxu0 0
      %472 = vmatprep.subr.bf16.mxu0 0
      %473 = vmatpush1.bf16.msra.mxu0 0
      %474 = vmatprep.subr.bf16.mxu0 0
      %475 = vmatpush1.bf16.msra.mxu0 0
      %476 = vmatprep.subr.bf16.mxu0 0
      %477 = vmatpush1.bf16.msra.mxu0 0
      %478 = vmatprep.subr.bf16.mxu0 0
      %479 = vmatpush1.bf16.msra.mxu0 0
      %480 = vmatprep.subr.bf16.mxu0 0
      %481 = vmatpush1.bf16.msra.mxu0 0
      %482 = vmatprep.subr.bf16.mxu0 0
      %483 = vmatpush1.bf16.msra.mxu0 %v466
      %484 = vmatprep.subr.bf16.mxu0 0
      %485 = vmatpush1.bf16.msra.mxu0 %v465
      %486 = vmatprep.subr.bf16.mxu0 0
      %487 = vmatpush2.bf16.msra.mxu0 0
      %488 = vmatprep.subr.bf16.mxu0 0
      %489 = vmatpush2.bf16.msra.mxu0 0
      %490 = vmatprep.subr.bf16.mxu0 0
      %491 = vmatpush2.bf16.msra.mxu0 0
      %492 = vmatprep.subr.bf16.mxu0 0
      %493 = vmatpush2.bf16.msra.mxu0 0
      %494 = vmatprep.subr.bf16.mxu0 0
      %495 = vmatpush2.bf16.msra.mxu0 0
      %496 = vmatprep.subr.bf16.mxu0 0
      %497 = vmatpush2.bf16.msra.mxu0 0
      %498 = vmatprep.subr.bf16.mxu0 0
      %499 = vmatpush2.bf16.msra.mxu0 0
      %500 = vmatprep.subr.bf16.mxu0 0
      %501 = vmatpush2.bf16.msra.mxu0 0
      %502 = vmatprep.mubr.bf16.mxu0 0
      %503 = vmatmul.mubr.bf16.gmra.mxu0 %v468
      %v504 = vpop.f32.mrf.mxu0
      %v505 = vadd.f32 0.0, %v504
      %v506 = vpop.f32.mrf.mxu0
      %v507 = vpop.f32.mrf.mxu0
      %v508 = vadd.f32 0.0, %v507
      %v509 = vpop.f32.mrf.mxu0
      %510 = vdwg.mxu0
      %v511 = vadd.f32 %v451, %v505
      %v512 = vadd.f32 %v454, %v508
      %v513 = vld [vmem:[%s3] sm:$0x1]
      %v515 = vlaneseq
      %v516 = vshrl.u32 %v515, 7
      %v517 = vsub.s32 0, %v516
      %v518 = vrot.slane %v513, %v517
      %v520 = vadd.f32 %v511, %v518
      %v521 = vadd.f32 %v512, %v518
      %v522 = vmax.f32 %v520, 0.0
      %v523 = vmax.f32 %v521, 0.0
      %v524 = vmul.f32 %v522, %v339
      %v525 = vmul.f32 %v523, %v344
      %vm526 = vcmask 523264
      %527 = vst.msk [vmem:[#allocation3] sm:$0xff] %vm526, 0.0
      %528 = vst.msk [vmem:[#allocation3 + $0x8] sm:$0xff] %vm526, 0.0
      %vm529 = vcmask 517120
      %530 = vst.msk [vmem:[#allocation3 + $0x10] sm:$0x3] %vm529, 0.0
      %531 = vst.msk [vmem:[#allocation3 + $0x1] sm:$0xff] %vm526, %v524
      %532 = vst.msk [vmem:[#allocation3 + $0x9] sm:$0xff] %vm526, %v525
      %v533 = vld [vmem:[#allocation3] sm:$0xff]
      %v534 = vld [vmem:[#allocation3 + $0x8] sm:$0xff]
      %v535 = vpack.c.bf16 %v534, %v533
      %v536 = vld [vmem:[%s4] sm:$0xff]
      %v537 = vld [vmem:[%s4 + $0x8] sm:$0xff]
      %v538 = vld [vmem:[%s4 + $0x10] sm:$0xff]
      %v539 = vld [vmem:[%s4 + $0x18] sm:$0xff]
      %v540 = vld [vmem:[%s4 + $0x20] sm:$0xff]
      %v541 = vld [vmem:[%s4 + $0x28] sm:$0xff]
      %v542 = vld [vmem:[%s4 + $0x30] sm:$0xff]
      %v543 = vld [vmem:[%s4 + $0x38] sm:$0xff]
      %v544 = vpack.c.bf16 %v537, %v536
      %v545 = vpack.c.bf16 %v539, %v538
      %v546 = vpack.c.bf16 %v541, %v540
      %v547 = vpack.c.bf16 %v543, %v542
      %v548 = vld [vmem:[#allocation3 + $0x1] sm:$0xff]
      %v549 = vld [vmem:[#allocation3 + $0x9] sm:$0xff]
      %v550 = vpack.c.bf16 %v549, %v548
      %s551 = scalar_lea.vmem %s4, 64
      %v552 = vld [vmem:[%s551] sm:$0xff]
      %v553 = vld [vmem:[%s551 + $0x8] sm:$0xff]
      %v554 = vld [vmem:[%s551 + $0x10] sm:$0xff]
      %v555 = vld [vmem:[%s551 + $0x18] sm:$0xff]
      %v556 = vld [vmem:[%s551 + $0x20] sm:$0xff]
      %v557 = vld [vmem:[%s551 + $0x28] sm:$0xff]
      %v558 = vld [vmem:[%s551 + $0x30] sm:$0xff]
      %v559 = vld [vmem:[%s551 + $0x38] sm:$0xff]
      %v560 = vpack.c.bf16 %v553, %v552
      %v561 = vpack.c.bf16 %v555, %v554
      %v562 = vpack.c.bf16 %v557, %v556
      %v563 = vpack.c.bf16 %v559, %v558
      %v565 = vsel %vm526, %v550, 0
      %567 = vmatprep.subr.bf16.mxu0 0
      %568 = vmatpush1.bf16.msra.mxu0 0
      %569 = vmatprep.subr.bf16.mxu0 0
      %570 = vmatpush1.bf16.msra.mxu0 0
      %571 = vmatprep.subr.bf16.mxu0 0
      %572 = vmatpush1.bf16.msra.mxu0 0
      %573 = vmatprep.subr.bf16.mxu0 0
      %574 = vmatpush1.bf16.msra.mxu0 0
      %575 = vmatprep.subr.bf16.mxu0 0
      %576 = vmatpush1.bf16.msra.mxu0 %v563
      %577 = vmatprep.subr.bf16.mxu0 0
      %578 = vmatpush1.bf16.msra.mxu0 %v562
      %579 = vmatprep.subr.bf16.mxu0 0
      %580 = vmatpush1.bf16.msra.mxu0 %v561
      %581 = vmatprep.subr.bf16.mxu0 0
      %582 = vmatpush1.bf16.msra.mxu0 %v560
      %583 = vmatprep.subr.bf16.mxu0 0
      %584 = vmatpush2.bf16.msra.mxu0 0
      %585 = vmatprep.subr.bf16.mxu0 0
      %586 = vmatpush2.bf16.msra.mxu0 0
      %587 = vmatprep.subr.bf16.mxu0 0
      %588 = vmatpush2.bf16.msra.mxu0 0
      %589 = vmatprep.subr.bf16.mxu0 0
      %590 = vmatpush2.bf16.msra.mxu0 0
      %591 = vmatprep.subr.bf16.mxu0 0
      %592 = vmatpush2.bf16.msra.mxu0 0
      %593 = vmatprep.subr.bf16.mxu0 0
      %594 = vmatpush2.bf16.msra.mxu0 0
      %595 = vmatprep.subr.bf16.mxu0 0
      %596 = vmatpush2.bf16.msra.mxu0 0
      %597 = vmatprep.subr.bf16.mxu0 0
      %598 = vmatpush2.bf16.msra.mxu0 0
      %599 = vmatprep.mubr.bf16.mxu0 0
      %600 = vmatmul.mubr.bf16.gmra.mxu0 %v565
      %v601 = vpop.f32.mrf.mxu0
      %v602 = vadd.f32 0.0, %v601
      %v603 = vpop.f32.mrf.mxu0
      %v604 = vpop.f32.mrf.mxu0
      %v605 = vadd.f32 0.0, %v604
      %v606 = vpop.f32.mrf.mxu0
      %607 = vdwg.mxu0
      %v609 = vsel %vm526, %v535, 0
      %611 = vmatprep.subr.bf16.mxu0 0
      %612 = vmatpush1.bf16.msra.mxu0 0
      %613 = vmatprep.subr.bf16.mxu0 0
      %614 = vmatpush1.bf16.msra.mxu0 0
      %615 = vmatprep.subr.bf16.mxu0 0
      %616 = vmatpush1.bf16.msra.mxu0 0
      %617 = vmatprep.subr.bf16.mxu0 0
      %618 = vmatpush1.bf16.msra.mxu0 0
      %619 = vmatprep.subr.bf16.mxu0 0
      %620 = vmatpush1.bf16.msra.mxu0 %v547
      %621 = vmatprep.subr.bf16.mxu0 0
      %622 = vmatpush1.bf16.msra.mxu0 %v546
      %623 = vmatprep.subr.bf16.mxu0 0
      %624 = vmatpush1.bf16.msra.mxu0 %v545
      %625 = vmatprep.subr.bf16.mxu0 0
      %626 = vmatpush1.bf16.msra.mxu0 %v544
      %627 = vmatprep.subr.bf16.mxu0 0
      %628 = vmatpush2.bf16.msra.mxu0 0
      %629 = vmatprep.subr.bf16.mxu0 0
      %630 = vmatpush2.bf16.msra.mxu0 0
      %631 = vmatprep.subr.bf16.mxu0 0
      %632 = vmatpush2.bf16.msra.mxu0 0
      %633 = vmatprep.subr.bf16.mxu0 0
      %634 = vmatpush2.bf16.msra.mxu0 0
      %635 = vmatprep.subr.bf16.mxu0 0
      %636 = vmatpush2.bf16.msra.mxu0 0
      %637 = vmatprep.subr.bf16.mxu0 0
      %638 = vmatpush2.bf16.msra.mxu0 0
      %639 = vmatprep.subr.bf16.mxu0 0
      %640 = vmatpush2.bf16.msra.mxu0 0
      %641 = vmatprep.subr.bf16.mxu0 0
      %642 = vmatpush2.bf16.msra.mxu0 0
      %643 = vmatprep.mubr.bf16.mxu0 0
      %644 = vmatmul.mubr.bf16.gmra.mxu0 %v609
      %v645 = vpop.f32.mrf.mxu0
      %v646 = vadd.f32 %v602, %v645
      %v647 = vpop.f32.mrf.mxu0
      %v648 = vpop.f32.mrf.mxu0
      %v649 = vadd.f32 %v605, %v648
      %v650 = vpop.f32.mrf.mxu0
      %651 = vdwg.mxu0
      %v652 = vld [vmem:[#allocation3 + $0x2] sm:$0xff]
      %v653 = vld [vmem:[#allocation3 + $0xa] sm:$0xff]
      %v654 = vpack.c.bf16 %v653, %v652
      %s655 = scalar_lea.vmem %s4, 128
      %v656 = vld [vmem:[%s655] sm:$0xff]
      %v657 = vld [vmem:[%s655 + $0x8] sm:$0xff]
      %v658 = vld [vmem:[%s655 + $0x10] sm:$0xff]
      %v659 = vld [vmem:[%s655 + $0x18] sm:$0xff]
      %v660 = vld [vmem:[%s655 + $0x20] sm:$0xff]
      %v661 = vld [vmem:[%s655 + $0x28] sm:$0xff]
      %v662 = vld [vmem:[%s655 + $0x30] sm:$0xff]
      %v663 = vld [vmem:[%s655 + $0x38] sm:$0xff]
      %v664 = vpack.c.bf16 %v657, %v656
      %v665 = vpack.c.bf16 %v659, %v658
      %v666 = vpack.c.bf16 %v661, %v660
      %v667 = vpack.c.bf16 %v663, %v662
      %v669 = vsel %vm526, %v654, 0
      %671 = vmatprep.subr.bf16.mxu0 0
      %672 = vmatpush1.bf16.msra.mxu0 0
      %673 = vmatprep.subr.bf16.mxu0 0
      %674 = vmatpush1.bf16.msra.mxu0 0
      %675 = vmatprep.subr.bf16.mxu0 0
      %676 = vmatpush1.bf16.msra.mxu0 0
      %677 = vmatprep.subr.bf16.mxu0 0
      %678 = vmatpush1.bf16.msra.mxu0 0
      %679 = vmatprep.subr.bf16.mxu0 0
      %680 = vmatpush1.bf16.msra.mxu0 %v667
      %681 = vmatprep.subr.bf16.mxu0 0
      %682 = vmatpush1.bf16.msra.mxu0 %v666
      %683 = vmatprep.subr.bf16.mxu0 0
      %684 = vmatpush1.bf16.msra.mxu0 %v665
      %685 = vmatprep.subr.bf16.mxu0 0
      %686 = vmatpush1.bf16.msra.mxu0 %v664
      %687 = vmatprep.subr.bf16.mxu0 0
      %688 = vmatpush2.bf16.msra.mxu0 0
      %689 = vmatprep.subr.bf16.mxu0 0
      %690 = vmatpush2.bf16.msra.mxu0 0
      %691 = vmatprep.subr.bf16.mxu0 0
      %692 = vmatpush2.bf16.msra.mxu0 0
      %693 = vmatprep.subr.bf16.mxu0 0
      %694 = vmatpush2.bf16.msra.mxu0 0
      %695 = vmatprep.subr.bf16.mxu0 0
      %696 = vmatpush2.bf16.msra.mxu0 0
      %697 = vmatprep.subr.bf16.mxu0 0
      %698 = vmatpush2.bf16.msra.mxu0 0
      %699 = vmatprep.subr.bf16.mxu0 0
      %700 = vmatpush2.bf16.msra.mxu0 0
      %701 = vmatprep.subr.bf16.mxu0 0
      %702 = vmatpush2.bf16.msra.mxu0 0
      %703 = vmatprep.mubr.bf16.mxu0 0
      %704 = vmatmul.mubr.bf16.gmra.mxu0 %v669
      %v705 = vpop.f32.mrf.mxu0
      %v706 = vadd.f32 0.0, %v705
      %v707 = vpop.f32.mrf.mxu0
      %v708 = vpop.f32.mrf.mxu0
      %v709 = vadd.f32 0.0, %v708
      %v710 = vpop.f32.mrf.mxu0
      %711 = vdwg.mxu0
      %v712 = vadd.f32 %v646, %v706
      %v713 = vadd.f32 %v649, %v709
      %v714 = vld [vmem:[%s5] sm:$0x1]
      %v716 = vlaneseq
      %v717 = vshrl.u32 %v716, 7
      %v718 = vsub.s32 0, %v717
      %v719 = vrot.slane %v714, %v718
      %v721 = vadd.f32 %v712, %v719
      %v722 = vadd.f32 %v713, %v719
      %v723 = vmul.f32 %v721, %v339
      %v724 = vmul.f32 %v722, %v344
      %v725 = vadd.f32 %v327, %v723
      %v726 = vadd.f32 %v328, %v724
      %v727 = vld [vmem:[%s6] sm:$0x1]
      %v728 = vld [vmem:[%s7] sm:$0x1]
      %v729 = vsel %vm331, %v725, 0.0
      %730 = vadd.xlane.f32.xlu0 %v729
      %v731 = vpop.xlane.xlu0 %730
      %v732 = vsel %vm331, %v726, 0.0
      %733 = vadd.xlane.f32.xlu0 %v732
      %v734 = vpop.xlane.xlu0 %733
      %v735 = vrcp.pop 32.0
      %v736 = vmul.f32 %v731, %v735
      %v737 = vmul.f32 %v734, %v735
      %v738 = vsub.f32 %v725, %v736
      %v739 = vsub.f32 %v726, %v737
      %v740 = vmul.f32 %v738, %v738
      %v741 = vmul.f32 %v739, %v739
      %v742 = vsel %vm331, %v740, 0.0
      %743 = vadd.xlane.f32.xlu0 %v742
      %v744 = vpop.xlane.xlu0 %743
      %v745 = vsel %vm331, %v741, 0.0
      %746 = vadd.xlane.f32.xlu0 %v745
      %v747 = vpop.xlane.xlu0 %746
      %v748 = vmul.f32 %v744, %v735
      %v749 = vmul.f32 %v747, %v735
      %v750 = vadd.f32 %v748, 1e-05
      %v751 = vadd.f32 %v749, 1e-05
      %v752 = vrsqrt.pop %v750
      %v753 = vrsqrt.pop %v751
      %v754 = vmul.f32 %v738, %v752
      %v755 = vmul.f32 %v739, %v753
      %v757 = vlaneseq
      %v758 = vshrl.u32 %v757, 7
      %v759 = vsub.s32 0, %v758
      %v760 = vrot.slane %v727, %v759
      %v762 = vmul.f32 %v754, %v760
      %v763 = vmul.f32 %v755, %v760
      %v765 = vlaneseq
      %v766 = vshrl.u32 %v765, 7
      %v767 = vsub.s32 0, %v766
      %v768 = vrot.slane %v728, %v767
      %v770 = vadd.f32 %v762, %v768
      %v771 = vadd.f32 %v763, %v768
      %772 = vst.msk [vmem:[%s325] sm:$0xff] %vm331, %v770
      %773 = vst.msk [vmem:[%s325 + $0x8] sm:$0xff] %vm331, %v771
      %p774 = scmp.lt.s32.totalorder %s19, 1
      %s775 = scalar_select %p774, %s19, 1
      %s776 = smul.addr %s775, 2
      %s777 = smul.addr %s776, 8
      %s778 = scalar_lea.vmem %s8, %s777
      // Predicated region
      $region53: #{code_predictor_forward.17} parent=51 // pred_check
        %p779 = pneg %p215
      $region54: #{code_predictor_forward.17} parent=51 // pred_check_branch
        %781 = sbr.rel (%p779) target = $region56
      $region55: #{code_predictor_forward.17} parent=51 // pred_region
        _
      $region56: #{code_predictor_forward.17} parent=51 // pred_fallthru
        _
    $region52: #{code_predictor_forward.17} parent=5 // pred_fallthru
      _
    %p782 = scmp.le.s32.totalorder 2, %s14
    // Predicated region
    $region57: #{code_predictor_forward.17} parent=5 // pred_check
      %p783 = pneg %p782
    $region58: #{code_predictor_forward.17} parent=5 // pred_check_branch
      %785 = sbr.rel (%p783) target = $region60
    $region59: #{code_predictor_forward.17} parent=5 // pred_region
      %s786 = ssub.s32 %s14, 2
      // Predicated region
      $region61: #{code_predictor_forward.17} parent=59 // pred_check
        %p787 = pneg %p221
      $region62: #{code_predictor_forward.17} parent=59 // pred_check_branch
        %789 = sbr.rel (%p787) target = $region64
      $region63: #{code_predictor_forward.17} parent=59 // pred_region
        %p790 = scmp.lt.s32.totalorder %s20, 1
        %s791 = scalar_select %p790, %s20, 1
        %s792 = smul.addr %s791, 2
        %s793 = smul.addr %s792, 8
        %s794 = scalar_lea.vmem %s8, %s793
      $region64: #{code_predictor_forward.17} parent=59 // pred_fallthru
        _
    $region60: #{code_predictor_forward.17} parent=5 // pred_fallthru
      _
  $region6: #{code_predictor_forward.17} parent=0 // loop_footer
    %s18 = sadd.s32 1, %s14
  $region7: #{code_predictor_forward.17} parent=0 // loop_footer_branch
    %13 = sbr.rel target = $region3
  $region8: #{code_predictor_forward.17} parent=0 // loop_exit
    _

// kernel: code_predictor_forward.21
$region0: #{code_predictor_forward.21}
  #allocation0 [shape = 'u32[]', space=smem, size = 0x4, offset = 0x4, fixed_abs, tag = 'smem constant byte address 0x4 - core index']
  #allocation1 [shape = 'u32[144,128]{1,0:T(1,128)}', space=vmem, size = 0x12000, scoped, tag = 'internal scratch']
  %s0 = inlined_call_operand.vmem [shape: f32[96,64], index: 0, kind: input, shape index: {}]
  %s1 = inlined_call_operand.vmem [shape: s32[96,1], index: 1, kind: input, shape index: {}]
  %s2 = inlined_call_operand.vmem [shape: f32[96,1], index: 2, kind: input, shape index: {}]
  %s3 = inlined_call_operand.hbm [shape: f32[1,1], index: 3, kind: output, shape index: {}]
  %s4 = sld [smem:[#allocation0]]
  $region30: #{code_predictor_forward.21} parent=0
    _
  %s6 = ssub.s32 1, %s4
  %s7 = scalar_select 0, %s6, %s4
  $region1: #{code_predictor_forward.21} parent=0
    #allocation2 [shape = 'u8[512]{0}', space=vmem, size = 0x400, scoped, tag = 'output window, operand 0, single buffered']
    #allocation3 [shape = 's32[1]{0}', space=sflag, size = 0x4, scoped, tag = 'scoped memory for code_predictor_forward.21']
    %8 = vsyncpa [#allocation3], 0
    // Predicated region
    $region2: #{code_predictor_forward.21} parent=1 // pred_check
      _
    $region3: #{code_predictor_forward.21} parent=1 // pred_check_branch
      %10 = sbr.rel (0) target = $region5
    $region4: #{code_predictor_forward.21} parent=1 // pred_region
      _
    $region5: #{code_predictor_forward.21} parent=1 // pred_fallthru
      _
    // Predicated region
    $region6: #{code_predictor_forward.21} parent=1 // pred_check
      _
    $region7: #{code_predictor_forward.21} parent=1 // pred_check_branch
      %12 = sbr.rel (0) target = $region9
    $region8: #{code_predictor_forward.21} parent=1 // pred_region
      _
    $region9: #{code_predictor_forward.21} parent=1 // pred_fallthru
      _
    // Predicated region
    $region10: #{code_predictor_forward.21} parent=1 // pred_check
      _
    $region11: #{code_predictor_forward.21} parent=1 // pred_check_branch
      %14 = sbr.rel (0) target = $region13
    $region12: #{code_predictor_forward.21} parent=1 // pred_region
      _
    $region13: #{code_predictor_forward.21} parent=1 // pred_fallthru
      _
    %p15 = scmp.eq.s32.totalorder 0, 0
    // Predicated region
    $region14: #{code_predictor_forward.21} parent=1 // pred_check
      %p16 = pneg %p15
    $region15: #{code_predictor_forward.21} parent=1 // pred_check_branch
      %18 = sbr.rel (%p16) target = $region17
    $region16: #{code_predictor_forward.21} parent=1 // pred_region
      %vm19 = vcmask 0
      %20 = vst.msk [vmem:[#allocation2] sm:$0x1] %vm19, 0.0
    $region17: #{code_predictor_forward.21} parent=1 // pred_fallthru
      _
    %v21 = vld [vmem:[%s0] sm:$0xff]
    %v22 = vld [vmem:[%s0 + $0x8] sm:$0xff]
    %v23 = vld [vmem:[%s0 + $0x10] sm:$0xff]
    %v24 = vld [vmem:[%s0 + $0x18] sm:$0xff]
    %v25 = vld [vmem:[%s0 + $0x20] sm:$0xff]
    %v26 = vld [vmem:[%s0 + $0x28] sm:$0xff]
    %v27 = vld [vmem:[%s0 + $0x30] sm:$0xff]
    %v28 = vld [vmem:[%s0 + $0x38] sm:$0xff]
    %v29 = vld [vmem:[%s0 + $0x40] sm:$0xff]
    %v30 = vld [vmem:[%s0 + $0x48] sm:$0xff]
    %v31 = vld [vmem:[%s0 + $0x50] sm:$0xff]
    %v32 = vld [vmem:[%s0 + $0x58] sm:$0xff]
    %vm33 = vcmask 523264
    %v34 = vsel %vm33, %v21, -inf
    %35 = vmax.xlane.f32.xlu0 %v34
    %v36 = vpop.xlane.xlu0 %35
    %v37 = vsel %vm33, %v22, -inf
    %38 = vmax.xlane.f32.xlu0 %v37
    %v39 = vpop.xlane.xlu0 %38
    %v40 = vsel %vm33, %v23, -inf
    %41 = vmax.xlane.f32.xlu0 %v40
    %v42 = vpop.xlane.xlu0 %41
    %v43 = vsel %vm33, %v24, -inf
    %44 = vmax.xlane.f32.xlu0 %v43
    %v45 = vpop.xlane.xlu0 %44
    %v46 = vsel %vm33, %v25, -inf
    %47 = vmax.xlane.f32.xlu0 %v46
    %v48 = vpop.xlane.xlu0 %47
    %v49 = vsel %vm33, %v26, -inf
    %50 = vmax.xlane.f32.xlu0 %v49
    %v51 = vpop.xlane.xlu0 %50
    %v52 = vsel %vm33, %v27, -inf
    %53 = vmax.xlane.f32.xlu0 %v52
    %v54 = vpop.xlane.xlu0 %53
    %v55 = vsel %vm33, %v28, -inf
    %56 = vmax.xlane.f32.xlu0 %v55
    %v57 = vpop.xlane.xlu0 %56
    %v58 = vsel %vm33, %v29, -inf
    %59 = vmax.xlane.f32.xlu0 %v58
    %v60 = vpop.xlane.xlu0 %59
    %v61 = vsel %vm33, %v30, -inf
    %62 = vmax.xlane.f32.xlu0 %v61
    %v63 = vpop.xlane.xlu0 %62
    %v64 = vsel %vm33, %v31, -inf
    %65 = vmax.xlane.f32.xlu0 %v64
    %v66 = vpop.xlane.xlu0 %65
    %v67 = vsel %vm33, %v32, -inf
    %68 = vmax.xlane.f32.xlu0 %v67
    %v69 = vpop.xlane.xlu0 %68
    %v70 = vsub.f32 %v21, %v36
    %v71 = vsub.f32 %v22, %v39
    %v72 = vsub.f32 %v23, %v42
    %v73 = vsub.f32 %v24, %v45
    %v74 = vsub.f32 %v25, %v48
    %v75 = vsub.f32 %v26, %v51
    %v76 = vsub.f32 %v27, %v54
    %v77 = vsub.f32 %v28, %v57
    %v78 = vsub.f32 %v29, %v60
    %v79 = vsub.f32 %v30, %v63
    %v80 = vsub.f32 %v31, %v66
    %v81 = vsub.f32 %v32, %v69
    %v82 = vmul.f32 %v70, 1.442695
    %v83 = vpow.pop %v82
    %v84 = vmul.f32 %v71, 1.442695
    %v85 = vpow.pop %v84
    %v86 = vmul.f32 %v72, 1.442695
    %v87 = vpow.pop %v86
    %v88 = vmul.f32 %v73, 1.442695
    %v89 = vpow.pop %v88
    %v90 = vmul.f32 %v74, 1.442695
    %v91 = vpow.pop %v90
    %v92 = vmul.f32 %v75, 1.442695
    %v93 = vpow.pop %v92
    %v94 = vmul.f32 %v76, 1.442695
    %v95 = vpow.pop %v94
    %v96 = vmul.f32 %v77, 1.442695
    %v97 = vpow.pop %v96
    %v98 = vmul.f32 %v78, 1.442695
    %v99 = vpow.pop %v98
    %v100 = vmul.f32 %v79, 1.442695
    %v101 = vpow.pop %v100
    %v102 = vmul.f32 %v80, 1.442695
    %v103 = vpow.pop %v102
    %v104 = vmul.f32 %v81, 1.442695
    %v105 = vpow.pop %v104
    %v106 = vsel %vm33, %v83, 0.0
    %107 = vadd.xlane.f32.xlu0 %v106
    %v108 = vpop.xlane.xlu0 %107
    %v109 = vsel %vm33, %v85, 0.0
    %110 = vadd.xlane.f32.xlu0 %v109
    %v111 = vpop.xlane.xlu0 %110
    %v112 = vsel %vm33, %v87, 0.0
    %113 = vadd.xlane.f32.xlu0 %v112
    %v114 = vpop.xlane.xlu0 %113
    %v115 = vsel %vm33, %v89, 0.0
    %116 = vadd.xlane.f32.xlu0 %v115
    %v117 = vpop.xlane.xlu0 %116
    %v118 = vsel %vm33, %v91, 0.0
    %119 = vadd.xlane.f32.xlu0 %v118
    %v120 = vpop.xlane.xlu0 %119
    %v121 = vsel %vm33, %v93, 0.0
    %122 = vadd.xlane.f32.xlu0 %v121
    %v123 = vpop.xlane.xlu0 %122
    %v124 = vsel %vm33, %v95, 0.0
    %125 = vadd.xlane.f32.xlu0 %v124
    %v126 = vpop.xlane.xlu0 %125
    %v127 = vsel %vm33, %v97, 0.0
    %128 = vadd.xlane.f32.xlu0 %v127
    %v129 = vpop.xlane.xlu0 %128
    %v130 = vsel %vm33, %v99, 0.0
    %131 = vadd.xlane.f32.xlu0 %v130
    %v132 = vpop.xlane.xlu0 %131
    %v133 = vsel %vm33, %v101, 0.0
    %134 = vadd.xlane.f32.xlu0 %v133
    %v135 = vpop.xlane.xlu0 %134
    %v136 = vsel %vm33, %v103, 0.0
    %137 = vadd.xlane.f32.xlu0 %v136
    %v138 = vpop.xlane.xlu0 %137
    %v139 = vsel %vm33, %v105, 0.0
    %140 = vadd.xlane.f32.xlu0 %v139
    %v141 = vpop.xlane.xlu0 %140
    %v142 = vlog2.pop %v108
    %v143 = vmul.f32 %v142, 0.6931472
    %v144 = vlog2.pop %v111
    %v145 = vmul.f32 %v144, 0.6931472
    %v146 = vlog2.pop %v114
    %v147 = vmul.f32 %v146, 0.6931472
    %v148 = vlog2.pop %v117
    %v149 = vmul.f32 %v148, 0.6931472
    %v150 = vlog2.pop %v120
    %v151 = vmul.f32 %v150, 0.6931472
    %v152 = vlog2.pop %v123
    %v153 = vmul.f32 %v152, 0.6931472
    %v154 = vlog2.pop %v126
    %v155 = vmul.f32 %v154, 0.6931472
    %v156 = vlog2.pop %v129
    %v157 = vmul.f32 %v156, 0.6931472
    %v158 = vlog2.pop %v132
    %v159 = vmul.f32 %v158, 0.6931472
    %v160 = vlog2.pop %v135
    %v161 = vmul.f32 %v160, 0.6931472
    %v162 = vlog2.pop %v138
    %v163 = vmul.f32 %v162, 0.6931472
    %v164 = vlog2.pop %v141
    %v165 = vmul.f32 %v164, 0.6931472
    %v166 = vadd.f32 %v143, %v36
    %v167 = vadd.f32 %v145, %v39
    %v168 = vadd.f32 %v147, %v42
    %v169 = vadd.f32 %v149, %v45
    %v170 = vadd.f32 %v151, %v48
    %v171 = vadd.f32 %v153, %v51
    %v172 = vadd.f32 %v155, %v54
    %v173 = vadd.f32 %v157, %v57
    %v174 = vadd.f32 %v159, %v60
    %v175 = vadd.f32 %v161, %v63
    %v176 = vadd.f32 %v163, %v66
    %v177 = vadd.f32 %v165, %v69
    %v178 = vlaneseq
    %v179 = vand.u32 %v178, 127
    %v180 = vld [vmem:[%s1] sm:$0xff]
    %v181 = vld [vmem:[%s1 + $0x8] sm:$0xff]
    %v182 = vld [vmem:[%s1 + $0x10] sm:$0xff]
    %v183 = vld [vmem:[%s1 + $0x18] sm:$0xff]
    %v184 = vld [vmem:[%s1 + $0x20] sm:$0xff]
    %v185 = vld [vmem:[%s1 + $0x28] sm:$0xff]
    %v186 = vld [vmem:[%s1 + $0x30] sm:$0xff]
    %v187 = vld [vmem:[%s1 + $0x38] sm:$0xff]
    %v188 = vld [vmem:[%s1 + $0x40] sm:$0xff]
    %v189 = vld [vmem:[%s1 + $0x48] sm:$0xff]
    %v190 = vld [vmem:[%s1 + $0x50] sm:$0xff]
    %v191 = vld [vmem:[%s1 + $0x58] sm:$0xff]
    %192 = vset.pattern.permute.xlu0 0
    %193 = vperm.xlu0 %192, %v180
    %v194 = vpop.permute.xlu0 %193
    %195 = vset.pattern.permute.xlu0 0
    %196 = vperm.xlu0 %195, %v181
    %v197 = vpop.permute.xlu0 %196
    %198 = vset.pattern.permute.xlu0 0
    %199 = vperm.xlu0 %198, %v182
    %v200 = vpop.permute.xlu0 %199
    %201 = vset.pattern.permute.xlu0 0
    %202 = vperm.xlu0 %201, %v183
    %v203 = vpop.permute.xlu0 %202
    %204 = vset.pattern.permute.xlu0 0
    %205 = vperm.xlu0 %204, %v184
    %v206 = vpop.permute.xlu0 %205
    %207 = vset.pattern.permute.xlu0 0
    %208 = vperm.xlu0 %207, %v185
    %v209 = vpop.permute.xlu0 %208
    %210 = vset.pattern.permute.xlu0 0
    %211 = vperm.xlu0 %210, %v186
    %v212 = vpop.permute.xlu0 %211
    %213 = vset.pattern.permute.xlu0 0
    %214 = vperm.xlu0 %213, %v187
    %v215 = vpop.permute.xlu0 %214
    %216 = vset.pattern.permute.xlu0 0
    %217 = vperm.xlu0 %216, %v188
    %v218 = vpop.permute.xlu0 %217
    %219 = vset.pattern.permute.xlu0 0
    %220 = vperm.xlu0 %219, %v189
    %v221 = vpop.permute.xlu0 %220
    %222 = vset.pattern.permute.xlu0 0
    %223 = vperm.xlu0 %222, %v190
    %v224 = vpop.permute.xlu0 %223
    %225 = vset.pattern.permute.xlu0 0
    %226 = vperm.xlu0 %225, %v191
    %v227 = vpop.permute.xlu0 %226
    %vm228 = vcmp.eq.s32.totalorder %v179, %v194
    %vm229 = vcmp.eq.s32.totalorder %v179, %v197
    %vm230 = vcmp.eq.s32.totalorder %v179, %v200
    %vm231 = vcmp.eq.s32.totalorder %v179, %v203
    %vm232 = vcmp.eq.s32.totalorder %v179, %v206
    %vm233 = vcmp.eq.s32.totalorder %v179, %v209
    %vm234 = vcmp.eq.s32.totalorder %v179, %v212
    %vm235 = vcmp.eq.s32.totalorder %v179, %v215
    %vm236 = vcmp.eq.s32.totalorder %v179, %v218
    %vm237 = vcmp.eq.s32.totalorder %v179, %v221
    %vm238 = vcmp.eq.s32.totalorder %v179, %v224
    %vm239 = vcmp.eq.s32.totalorder %v179, %v227
    %v240 = vsel %vm228, %v21, 0.0
    %v241 = vsel %vm229, %v22, 0.0
    %v242 = vsel %vm230, %v23, 0.0
    %v243 = vsel %vm231, %v24, 0.0
    %v244 = vsel %vm232, %v25, 0.0
    %v245 = vsel %vm233, %v26, 0.0
    %v246 = vsel %vm234, %v27, 0.0
    %v247 = vsel %vm235, %v28, 0.0
    %v248 = vsel %vm236, %v29, 0.0
    %v249 = vsel %vm237, %v30, 0.0
    %v250 = vsel %vm238, %v31, 0.0
    %v251 = vsel %vm239, %v32, 0.0
    %v252 = vsel %vm33, %v240, 0.0
    %253 = vadd.xlane.f32.xlu0 %v252
    %v254 = vpop.xlane.xlu0 %253
    %v255 = vsel %vm33, %v241, 0.0
    %256 = vadd.xlane.f32.xlu0 %v255
    %v257 = vpop.xlane.xlu0 %256
    %v258 = vsel %vm33, %v242, 0.0
    %259 = vadd.xlane.f32.xlu0 %v258
    %v260 = vpop.xlane.xlu0 %259
    %v261 = vsel %vm33, %v243, 0.0
    %262 = vadd.xlane.f32.xlu0 %v261
    %v263 = vpop.xlane.xlu0 %262
    %v264 = vsel %vm33, %v244, 0.0
    %265 = vadd.xlane.f32.xlu0 %v264
    %v266 = vpop.xlane.xlu0 %265
    %v267 = vsel %vm33, %v245, 0.0
    %268 = vadd.xlane.f32.xlu0 %v267
    %v269 = vpop.xlane.xlu0 %268
    %v270 = vsel %vm33, %v246, 0.0
    %271 = vadd.xlane.f32.xlu0 %v270
    %v272 = vpop.xlane.xlu0 %271
    %v273 = vsel %vm33, %v247, 0.0
    %274 = vadd.xlane.f32.xlu0 %v273
    %v275 = vpop.xlane.xlu0 %274
    %v276 = vsel %vm33, %v248, 0.0
    %277 = vadd.xlane.f32.xlu0 %v276
    %v278 = vpop.xlane.xlu0 %277
    %v279 = vsel %vm33, %v249, 0.0
    %280 = vadd.xlane.f32.xlu0 %v279
    %v281 = vpop.xlane.xlu0 %280
    %v282 = vsel %vm33, %v250, 0.0
    %283 = vadd.xlane.f32.xlu0 %v282
    %v284 = vpop.xlane.xlu0 %283
    %v285 = vsel %vm33, %v251, 0.0
    %286 = vadd.xlane.f32.xlu0 %v285
    %v287 = vpop.xlane.xlu0 %286
    %v288 = vld [vmem:[#allocation2] sm:$0x1]
    %v289 = vsub.f32 %v166, %v254
    %v290 = vsub.f32 %v167, %v257
    %v291 = vsub.f32 %v168, %v260
    %v292 = vsub.f32 %v169, %v263
    %v293 = vsub.f32 %v170, %v266
    %v294 = vsub.f32 %v171, %v269
    %v295 = vsub.f32 %v172, %v272
    %v296 = vsub.f32 %v173, %v275
    %v297 = vsub.f32 %v174, %v278
    %v298 = vsub.f32 %v175, %v281
    %v299 = vsub.f32 %v176, %v284
    %v300 = vsub.f32 %v177, %v287
    %v301 = vld [vmem:[%s2] sm:$0xff]
    %v302 = vld [vmem:[%s2 + $0x8] sm:$0xff]
    %v303 = vld [vmem:[%s2 + $0x10] sm:$0xff]
    %v304 = vld [vmem:[%s2 + $0x18] sm:$0xff]
    %v305 = vld [vmem:[%s2 + $0x20] sm:$0xff]
    %v306 = vld [vmem:[%s2 + $0x28] sm:$0xff]
    %v307 = vld [vmem:[%s2 + $0x30] sm:$0xff]
    %v308 = vld [vmem:[%s2 + $0x38] sm:$0xff]
    %v309 = vld [vmem:[%s2 + $0x40] sm:$0xff]
    %v310 = vld [vmem:[%s2 + $0x48] sm:$0xff]
    %v311 = vld [vmem:[%s2 + $0x50] sm:$0xff]
    %v312 = vld [vmem:[%s2 + $0x58] sm:$0xff]
    %v313 = vmul.f32 %v289, %v301
    %v314 = vmul.f32 %v290, %v302
    %v315 = vmul.f32 %v291, %v303
    %v316 = vmul.f32 %v292, %v304
    %v317 = vmul.f32 %v293, %v305
    %v318 = vmul.f32 %v294, %v306
    %v319 = vmul.f32 %v295, %v307
    %v320 = vmul.f32 %v296, %v308
    %v321 = vmul.f32 %v297, %v309
    %v322 = vmul.f32 %v298, %v310
    %v323 = vmul.f32 %v299, %v311
    %v324 = vmul.f32 %v300, %v312
    %vm325 = vcmask 7168
    %v326 = vsel %vm325, %v313, 0.0
    %v327 = vsel %vm325, %v314, 0.0
    %v328 = vadd.f32 %v326, %v327
    %v329 = vsel %vm325, %v315, 0.0
    %v330 = vadd.f32 %v328, %v329
    %v331 = vsel %vm325, %v316, 0.0
    %v332 = vadd.f32 %v330, %v331
    %v333 = vsel %vm325, %v317, 0.0
    %v334 = vadd.f32 %v332, %v333
    %v335 = vsel %vm325, %v318, 0.0
    %v336 = vadd.f32 %v334, %v335
    %v337 = vsel %vm325, %v319, 0.0
    %v338 = vadd.f32 %v336, %v337
    %v339 = vsel %vm325, %v320, 0.0
    %v340 = vadd.f32 %v338, %v339
    %v341 = vsel %vm325, %v321, 0.0
    %v342 = vadd.f32 %v340, %v341
    %v343 = vsel %vm325, %v322, 0.0
    %v344 = vadd.f32 %v342, %v343
    %v345 = vsel %vm325, %v323, 0.0
    %v346 = vadd.f32 %v344, %v345
    %v347 = vsel %vm325, %v324, 0.0
    %v348 = vadd.f32 %v346, %v347
    %v349 = vrot.slane %v348, 4
    %v350 = vadd.f32 %v348, %v349
    %v351 = vrot.slane %v350, 2
    %v352 = vadd.f32 %v350, %v351
    %v353 = vrot.slane %v352, 1
    %v354 = vadd.f32 %v352, %v353
    %v355 = vadd.f32 %v288, %v354
    %vm356 = vcmask 0
    %357 = vst.msk [vmem:[#allocation2] sm:$0x1] %vm356, %v355
    // Predicated region
    $region18: #{code_predictor_forward.21} parent=1 // pred_check
      %p358 = pneg %p15
    $region19: #{code_predictor_forward.21} parent=1 // pred_check_branch
      %360 = sbr.rel (%p358) target = $region21
    $region20: #{code_predictor_forward.21} parent=1 // pred_region
      %v361 = vld [vmem:[#allocation2] sm:$0x1]
      %v362 = vmul.f32 %v361, 0.010416667
      %363 = vst.msk [vmem:[#allocation2] sm:$0x1] %vm356, %v362
    $region21: #{code_predictor_forward.21} parent=1 // pred_fallthru
      _
    // Predicated region
    $region22: #{code_predictor_forward.21} parent=1 // pred_check
      _
    $region23: #{code_predictor_forward.21} parent=1 // pred_check_branch
      %365 = sbr.rel (0) target = $region25
    $region24: #{code_predictor_forward.21} parent=1 // pred_region
      %s367 = ssub.s32 16, 16
      %368 = vsyncadd [#allocation3], %s367
      %s370 = sshll.u32 [#allocation2], 4
      %s371 = int_to_ptr.vmem [resolvable:$true] %s370
      %373 = dma.vmem_to_hbm [thread:$0]  %s371, 16, %s3, [#allocation3]
    $region25: #{code_predictor_forward.21} parent=1 // pred_fallthru
      _
    // Predicated region
    $region26: #{code_predictor_forward.21} parent=1 // pred_check
      _
    $region27: #{code_predictor_forward.21} parent=1 // pred_check_branch
      %375 = sbr.rel (0) target = $region29
    $region28: #{code_predictor_forward.21} parent=1 // pred_region
      %376 = dma.done [#allocation3], 16
    $region29: #{code_predictor_forward.21} parent=1 // pred_fallthru
      _
    %377 = vsyncpa [#allocation3], 1

// kernel: code_predictor_forward.16
$region0: #{code_predictor_forward.16}
  #allocation0 [shape = 'u32[]', space=smem, size = 0x4, offset = 0x4, fixed_abs, tag = 'smem constant byte address 0x4 - core index']
  #allocation1 [shape = 'u32[144,128]{1,0:T(1,128)}', space=vmem, size = 0x12000, scoped, tag = 'internal scratch']
  %s0 = inlined_call_operand.vmem [shape: f32[2,16,32], index: 0, kind: input, shape index: {}]
  %s1 = inlined_call_operand.vmem [shape: f32[2,1,16], index: 1, kind: input, shape index: {}]
  %s2 = inlined_call_operand.vmem [shape: f32[2,16,1], index: 2, kind: input, shape index: {}]
  %s3 = inlined_call_operand.vmem [shape: f32[32,96], index: 3, kind: input, shape index: {}]
  %s4 = inlined_call_operand.vmem [shape: f32[1,96], index: 4, kind: input, shape index: {}]
  %s5 = inlined_call_operand.vmem [shape: f32[16,16,16], index: 5, kind: input, shape index: {}]
  %s6 = inlined_call_operand.vmem [shape: f32[16,16,16], index: 6, kind: input, shape index: {}]
  %s7 = inlined_call_operand.vmem [shape: f32[32,32], index: 7, kind: input, shape index: {}]
  %s8 = inlined_call_operand.vmem [shape: f32[1,32], index: 8, kind: input, shape index: {}]
  %s9 = inlined_call_operand.vmem [shape: f32[1,32], index: 9, kind: input, shape index: {}]
  %s10 = inlined_call_operand.vmem [shape: f32[1,32], index: 10, kind: input, shape index: {}]
  %s11 = inlined_call_operand.vmem [shape: f32[2,16,32], index: 11, kind: output, shape index: {}]
  %s12 = sld [smem:[#allocation0]]
  $region77: #{code_predictor_forward.16} parent=0
    _
  %s14 = ssub.s32 1, %s12
  %s15 = scalar_select 0, %s14, %s12
  loop: start=0, step=1, limit=4
  $region2: #{code_predictor_forward.16} parent=0 // loop_pre_header
    _
  $region3: #{code_predictor_forward.16} parent=0 // loop_header
    %s17 = sphi 0, %s21
    %p18 = scmp.ge.s32.totalorder %s17, 4
    %s27 = sphi 0, %s29
    %s30 = sphi 0, %s27
    %s31 = sphi 0, %s30
    %s47 = sphi 0, %s31
    %s53 = sphi 0, %s55
    %s56 = sphi 0, %s53
    %s57 = sphi 0, %s56
    %s73 = sphi 0, %s57
    %s79 = sphi 0, %s81
    %s82 = sphi 0, %s79
    %s83 = sphi 0, %s82
    %s99 = sphi 0, %s83
    %s103 = sphi 0, %s103
    %s105 = sphi 0, %s103
    %s106 = sphi 0, %s105
    %s120 = sphi 0, %s106
    %s124 = sphi 0, %s124
    %s126 = sphi 0, %s124
    %s127 = sphi 0, %s126
    %s141 = sphi 0, %s127
    %s145 = sphi 0, %s145
    %s147 = sphi 0, %s145
    %s148 = sphi 0, %s147
    %s162 = sphi 0, %s148
    %s166 = sphi 0, %s166
    %s168 = sphi 0, %s166
    %s169 = sphi 0, %s168
    %s183 = sphi 0, %s169
    %s187 = sphi 0, %s187
    %s189 = sphi 0, %s187
    %s190 = sphi 0, %s189
    %s204 = sphi 0, %s190
    %s208 = sphi 0, %s208
    %s210 = sphi 0, %s208
    %s211 = sphi 0, %s210
    %s225 = sphi 0, %s211
    %s229 = sphi 0, %s229
    %s231 = sphi 0, %s229
    %s232 = sphi 0, %s231
    %s246 = sphi 0, %s232
    %s250 = sphi 0, %s250
    %s252 = sphi 0, %s250
    %s253 = sphi 0, %s252
    %s267 = sphi 0, %s253
    %s273 = sphi 0, %s275
    %s276 = sphi 0, %s273
    %s277 = sphi 0, %s276
    %s293 = sphi 0, %s277
  $region4: #{code_predictor_forward.16} parent=0 // loop_header_branch
    %20 = sbr.rel (%p18) target = $region8
  $region5: #{code_predictor_forward.16} parent=0 // loop_body
    %s22 = ssub.s32 %s17, 1
    %s23 = ssub.s32 %s17, 2
    %s24 = sadd.s32 %s17, 1
    %s25 = ssub.s32 %s17, %s24
    %p26 = scmp.eq.s32.totalorder %s25, 0
    %s28 = sadd.s32 %s27, 1
    %s29 = scalar_select %p26, %s27, %s28
    %p32 = pneg %p26
    %p33 = scmp.eq.s32.totalorder %s17, 1
    %p34 = por %p32, %p33
    %p35 = scmp.ne.s32.totalorder %s27, %s30
    %p36 = scmp.eq.s32.totalorder %s17, 0
    %p37 = por %p35, %p36
    %p38 = scmp.ne.s32.totalorder %s27, %s30
    %p39 = scmp.eq.s32.totalorder %s22, 1
    %p40 = por %p38, %p39
    %p41 = scmp.ne.s32.totalorder %s30, %s31
    %p42 = scmp.eq.s32.totalorder %s22, 0
    %p43 = por %p41, %p42
    %p44 = scmp.ne.s32.totalorder %s30, %s31
    %p45 = scmp.eq.s32.totalorder %s23, 1
    %p46 = por %p44, %p45
    %p48 = scmp.ne.s32.totalorder %s31, %s47
    %p49 = scmp.eq.s32.totalorder %s23, 0
    %p50 = por %p48, %p49
    %s51 = ssub.s32 %s17, %s24
    %p52 = scmp.eq.s32.totalorder %s51, 0
    %s54 = sadd.s32 %s53, 1
    %s55 = scalar_select %p52, %s53, %s54
    %p58 = pneg %p52
    %p59 = scmp.eq.s32.totalorder %s17, 1
    %p60 = por %p58, %p59
    %p61 = scmp.ne.s32.totalorder %s53, %s56
    %p62 = scmp.eq.s32.totalorder %s17, 0
    %p63 = por %p61, %p62
    %p64 = scmp.ne.s32.totalorder %s53, %s56
    %p65 = scmp.eq.s32.totalorder %s22, 1
    %p66 = por %p64, %p65
    %p67 = scmp.ne.s32.totalorder %s56, %s57
    %p68 = scmp.eq.s32.totalorder %s22, 0
    %p69 = por %p67, %p68
    %p70 = scmp.ne.s32.totalorder %s56, %s57
    %p71 = scmp.eq.s32.totalorder %s23, 1
    %p72 = por %p70, %p71
    %p74 = scmp.ne.s32.totalorder %s57, %s73
    %p75 = scmp.eq.s32.totalorder %s23, 0
    %p76 = por %p74, %p75
    %s77 = ssub.s32 %s17, %s24
    %p78 = scmp.eq.s32.totalorder %s77, 0
    %s80 = sadd.s32 %s79, 1
    %s81 = scalar_select %p78, %s79, %s80
    %p84 = pneg %p78
    %p85 = scmp.eq.s32.totalorder %s17, 1
    %p86 = por %p84, %p85
    %p87 = scmp.ne.s32.totalorder %s79, %s82
    %p88 = scmp.eq.s32.totalorder %s17, 0
    %p89 = por %p87, %p88
    %p90 = scmp.ne.s32.totalorder %s79, %s82
    %p91 = scmp.eq.s32.totalorder %s22, 1
    %p92 = por %p90, %p91
    %p93 = scmp.ne.s32.totalorder %s82, %s83
    %p94 = scmp.eq.s32.totalorder %s22, 0
    %p95 = por %p93, %p94
    %p96 = scmp.ne.s32.totalorder %s82, %s83
    %p97 = scmp.eq.s32.totalorder %s23, 1
    %p98 = por %p96, %p97
    %p100 = scmp.ne.s32.totalorder %s83, %s99
    %p101 = scmp.eq.s32.totalorder %s23, 0
    %p102 = por %p100, %p101
    %s104 = sadd.s32 %s103, 1
    %p107 = scmp.eq.s32.totalorder %s17, 1
    %p108 = scmp.ne.s32.totalorder %s103, %s105
    %p109 = scmp.eq.s32.totalorder %s17, 0
    %p110 = por %p108, %p109
    %p111 = scmp.ne.s32.totalorder %s103, %s105
    %p112 = scmp.eq.s32.totalorder %s22, 1
    %p113 = por %p111, %p112
    %p114 = scmp.ne.s32.totalorder %s105, %s106
    %p115 = scmp.eq.s32.totalorder %s22, 0
    %p116 = por %p114, %p115
    %p117 = scmp.ne.s32.totalorder %s105, %s106
    %p118 = scmp.eq.s32.totalorder %s23, 1
    %p119 = por %p117, %p118
    %p121 = scmp.ne.s32.totalorder %s106, %s120
    %p122 = scmp.eq.s32.totalorder %s23, 0
    %p123 = por %p121, %p122
    %s125 = sadd.s32 %s124, 1
    %p128 = scmp.eq.s32.totalorder %s17, 1
    %p129 = scmp.ne.s32.totalorder %s124, %s126
    %p130 = scmp.eq.s32.totalorder %s17, 0
    %p131 = por %p129, %p130
    %p132 = scmp.ne.s32.totalorder %s124, %s126
    %p133 = scmp.eq.s32.totalorder %s22, 1
    %p134 = por %p132, %p133
    %p135 = scmp.ne.s32.totalorder %s126, %s127
    %p136 = scmp.eq.s32.totalorder %s22, 0
    %p137 = por %p135, %p136
    %p138 = scmp.ne.s32.totalorder %s126, %s127
    %p139 = scmp.eq.s32.totalorder %s23, 1
    %p140 = por %p138, %p139
    %p142 = scmp.ne.s32.totalorder %s127, %s141
    %p143 = scmp.eq.s32.totalorder %s23, 0
    %p144 = por %p142, %p143
    %s146 = sadd.s32 %s145, 1
    %p149 = scmp.eq.s32.totalorder %s17, 1
    %p150 = scmp.ne.s32.totalorder %s145, %s147
    %p151 = scmp.eq.s32.totalorder %s17, 0
    %p152 = por %p150, %p151
    %p153 = scmp.ne.s32.totalorder %s145, %s147
    %p154 = scmp.eq.s32.totalorder %s22, 1
    %p155 = por %p153, %p154
    %p156 = scmp.ne.s32.totalorder %s147, %s148
    %p157 = scmp.eq.s32.totalorder %s22, 0
    %p158 = por %p156, %p157
    %p159 = scmp.ne.s32.totalorder %s147, %s148
    %p160 = scmp.eq.s32.totalorder %s23, 1
    %p161 = por %p159, %p160
    %p163 = scmp.ne.s32.totalorder %s148, %s162
    %p164 = scmp.eq.s32.totalorder %s23, 0
    %p165 = por %p163, %p164
    %s167 = sadd.s32 %s166, 1
    %p170 = scmp.eq.s32.totalorder %s17, 1
    %p171 = scmp.ne.s32.totalorder %s166, %s168
    %p172 = scmp.eq.s32.totalorder %s17, 0
    %p173 = por %p171, %p172
    %p174 = scmp.ne.s32.totalorder %s166, %s168
    %p175 = scmp.eq.s32.totalorder %s22, 1
    %p176 = por %p174, %p175
    %p177 = scmp.ne.s32.totalorder %s168, %s169
    %p178 = scmp.eq.s32.totalorder %s22, 0
    %p179 = por %p177, %p178
    %p180 = scmp.ne.s32.totalorder %s168, %s169
    %p181 = scmp.eq.s32.totalorder %s23, 1
    %p182 = por %p180, %p181
    %p184 = scmp.ne.s32.totalorder %s169, %s183
    %p185 = scmp.eq.s32.totalorder %s23, 0
    %p186 = por %p184, %p185
    %s188 = sadd.s32 %s187, 1
    %p191 = scmp.eq.s32.totalorder %s17, 1
    %p192 = scmp.ne.s32.totalorder %s187, %s189
    %p193 = scmp.eq.s32.totalorder %s17, 0
    %p194 = por %p192, %p193
    %p195 = scmp.ne.s32.totalorder %s187, %s189
    %p196 = scmp.eq.s32.totalorder %s22, 1
    %p197 = por %p195, %p196
    %p198 = scmp.ne.s32.totalorder %s189, %s190
    %p199 = scmp.eq.s32.totalorder %s22, 0
    %p200 = por %p198, %p199
    %p201 = scmp.ne.s32.totalorder %s189, %s190
    %p202 = scmp.eq.s32.totalorder %s23, 1
    %p203 = por %p201, %p202
    %p205 = scmp.ne.s32.totalorder %s190, %s204
    %p206 = scmp.eq.s32.totalorder %s23, 0
    %p207 = por %p205, %p206
    %s209 = sadd.s32 %s208, 1
    %p212 = scmp.eq.s32.totalorder %s17, 1
    %p213 = scmp.ne.s32.totalorder %s208, %s210
    %p214 = scmp.eq.s32.totalorder %s17, 0
    %p215 = por %p213, %p214
    %p216 = scmp.ne.s32.totalorder %s208, %s210
    %p217 = scmp.eq.s32.totalorder %s22, 1
    %p218 = por %p216, %p217
    %p219 = scmp.ne.s32.totalorder %s210, %s211
    %p220 = scmp.eq.s32.totalorder %s22, 0
    %p221 = por %p219, %p220
    %p222 = scmp.ne.s32.totalorder %s210, %s211
    %p223 = scmp.eq.s32.totalorder %s23, 1
    %p224 = por %p222, %p223
    %p226 = scmp.ne.s32.totalorder %s211, %s225
    %p227 = scmp.eq.s32.totalorder %s23, 0
    %p228 = por %p226, %p227
    %s230 = sadd.s32 %s229, 1
    %p233 = scmp.eq.s32.totalorder %s17, 1
    %p234 = scmp.ne.s32.totalorder %s229, %s231
    %p235 = scmp.eq.s32.totalorder %s17, 0
    %p236 = por %p234, %p235
    %p237 = scmp.ne.s32.totalorder %s229, %s231
    %p238 = scmp.eq.s32.totalorder %s22, 1
    %p239 = por %p237, %p238
    %p240 = scmp.ne.s32.totalorder %s231, %s232
    %p241 = scmp.eq.s32.totalorder %s22, 0
    %p242 = por %p240, %p241
    %p243 = scmp.ne.s32.totalorder %s231, %s232
    %p244 = scmp.eq.s32.totalorder %s23, 1
    %p245 = por %p243, %p244
    %p247 = scmp.ne.s32.totalorder %s232, %s246
    %p248 = scmp.eq.s32.totalorder %s23, 0
    %p249 = por %p247, %p248
    %s251 = sadd.s32 %s250, 1
    %p254 = scmp.eq.s32.totalorder %s17, 1
    %p255 = scmp.ne.s32.totalorder %s250, %s252
    %p256 = scmp.eq.s32.totalorder %s17, 0
    %p257 = por %p255, %p256
    %p258 = scmp.ne.s32.totalorder %s250, %s252
    %p259 = scmp.eq.s32.totalorder %s22, 1
    %p260 = por %p258, %p259
    %p261 = scmp.ne.s32.totalorder %s252, %s253
    %p262 = scmp.eq.s32.totalorder %s22, 0
    %p263 = por %p261, %p262
    %p264 = scmp.ne.s32.totalorder %s252, %s253
    %p265 = scmp.eq.s32.totalorder %s23, 1
    %p266 = por %p264, %p265
    %p268 = scmp.ne.s32.totalorder %s253, %s267
    %p269 = scmp.eq.s32.totalorder %s23, 0
    %p270 = por %p268, %p269
    %s271 = ssub.s32 %s17, %s24
    %p272 = scmp.eq.s32.totalorder %s271, 0
    %s274 = sadd.s32 %s273, 1
    %s275 = scalar_select %p272, %s273, %s274
    %p278 = pneg %p272
    %p279 = scmp.eq.s32.totalorder %s17, 1
    %p280 = por %p278, %p279
    %p281 = scmp.ne.s32.totalorder %s273, %s276
    %p282 = scmp.eq.s32.totalorder %s17, 0
    %p283 = por %p281, %p282
    %p284 = scmp.ne.s32.totalorder %s273, %s276
    %p285 = scmp.eq.s32.totalorder %s22, 1
    %p286 = por %p284, %p285
    %p287 = scmp.ne.s32.totalorder %s276, %s277
    %p288 = scmp.eq.s32.totalorder %s22, 0
    %p289 = por %p287, %p288
    %p290 = scmp.ne.s32.totalorder %s276, %s277
    %p291 = scmp.eq.s32.totalorder %s23, 1
    %p292 = por %p290, %p291
    %p294 = scmp.ne.s32.totalorder %s277, %s293
    %p295 = scmp.eq.s32.totalorder %s23, 0
    %p296 = por %p294, %p295
    %p297 = scmp.le.s32.totalorder 1, %s17
    %p298 = scmp.lt.s32.totalorder %s17, 3
    %p299 = pnand %p297, %p298
    %p300 = pneg %p299
    // Predicated region
    $region9: #{code_predictor_forward.16} parent=5 // pred_check
      _
    $region10: #{code_predictor_forward.16} parent=5 // pred_check_branch
      %302 = sbr.rel (%p299) target = $region12
    $region11: #{code_predictor_forward.16} parent=5 // pred_region
      %s303 = ssub.s32 %s17, 1
      // Predicated region
      $region13: #{code_predictor_forward.16} parent=11 // pred_check
        %p304 = pneg %p116
      $region14: #{code_predictor_forward.16} parent=11 // pred_check_branch
        %306 = sbr.rel (%p304) target = $region16
      $region15: #{code_predictor_forward.16} parent=11 // pred_region
        _
      $region16: #{code_predictor_forward.16} parent=11 // pred_fallthru
        _
      // Predicated region
      $region17: #{code_predictor_forward.16} parent=11 // pred_check
        %p307 = pneg %p137
      $region18: #{code_predictor_forward.16} parent=11 // pred_check_branch
        %309 = sbr.rel (%p307) target = $region20
      $region19: #{code_predictor_forward.16} parent=11 // pred_region
        _
      $region20: #{code_predictor_forward.16} parent=11 // pred_fallthru
        _
      // Predicated region
      $region21: #{code_predictor_forward.16} parent=11 // pred_check
        %p310 = pneg %p158
      $region22: #{code_predictor_forward.16} parent=11 // pred_check_branch
        %312 = sbr.rel (%p310) target = $region24
      $region23: #{code_predictor_forward.16} parent=11 // pred_region
        _
      $region24: #{code_predictor_forward.16} parent=11 // pred_fallthru
        _
      // Predicated region
      $region25: #{code_predictor_forward.16} parent=11 // pred_check
        %p313 = pneg %p179
      $region26: #{code_predictor_forward.16} parent=11 // pred_check_branch
        %315 = sbr.rel (%p313) target = $region28
      $region27: #{code_predictor_forward.16} parent=11 // pred_region
        _
      $region28: #{code_predictor_forward.16} parent=11 // pred_fallthru
        _
      // Predicated region
      $region29: #{code_predictor_forward.16} parent=11 // pred_check
        %p316 = pneg %p200
      $region30: #{code_predictor_forward.16} parent=11 // pred_check_branch
        %318 = sbr.rel (%p316) target = $region32
      $region31: #{code_predictor_forward.16} parent=11 // pred_region
        _
      $region32: #{code_predictor_forward.16} parent=11 // pred_fallthru
        _
      // Predicated region
      $region33: #{code_predictor_forward.16} parent=11 // pred_check
        %p319 = pneg %p221
      $region34: #{code_predictor_forward.16} parent=11 // pred_check_branch
        %321 = sbr.rel (%p319) target = $region36
      $region35: #{code_predictor_forward.16} parent=11 // pred_region
        _
      $region36: #{code_predictor_forward.16} parent=11 // pred_fallthru
        _
      // Predicated region
      $region37: #{code_predictor_forward.16} parent=11 // pred_check
        %p322 = pneg %p242
      $region38: #{code_predictor_forward.16} parent=11 // pred_check_branch
        %324 = sbr.rel (%p322) target = $region40
      $region39: #{code_predictor_forward.16} parent=11 // pred_region
        _
      $region40: #{code_predictor_forward.16} parent=11 // pred_fallthru
        _
      // Predicated region
      $region41: #{code_predictor_forward.16} parent=11 // pred_check
        %p325 = pneg %p263
      $region42: #{code_predictor_forward.16} parent=11 // pred_check_branch
        %327 = sbr.rel (%p325) target = $region44
      $region43: #{code_predictor_forward.16} parent=11 // pred_region
        _
      $region44: #{code_predictor_forward.16} parent=11 // pred_fallthru
        _
    $region12: #{code_predictor_forward.16} parent=5 // pred_fallthru
      _
    %p328 = scmp.lt.s32.totalorder %s17, 2
    // Predicated region
    $region45: #{code_predictor_forward.16} parent=5 // pred_check
      %p329 = pneg %p328
    $region46: #{code_predictor_forward.16} parent=5 // pred_check_branch
      %331 = sbr.rel (%p329) target = $region48
    $region47: #{code_predictor_forward.16} parent=5 // pred_region
      // Predicated region
      $region49: #{code_predictor_forward.16} parent=47 // pred_check
        %p332 = pneg %p37
      $region50: #{code_predictor_forward.16} parent=47 // pred_check_branch
        %334 = sbr.rel (%p332) target = $region52
      $region51: #{code_predictor_forward.16} parent=47 // pred_region
        %p335 = scmp.lt.s32.totalorder %s17, 1
        %s336 = scalar_select %p335, %s17, 1
        %s337 = smul.addr %s336, 2
        %s338 = smul.addr %s337, 8
        %s339 = scalar_lea.vmem %s0, %s338
      $region52: #{code_predictor_forward.16} parent=47 // pred_fallthru
        _
      // Predicated region
      $region53: #{code_predictor_forward.16} parent=47 // pred_check
        %p340 = pneg %p63
      $region54: #{code_predictor_forward.16} parent=47 // pred_check_branch
        %342 = sbr.rel (%p340) target = $region56
      $region55: #{code_predictor_forward.16} parent=47 // pred_region
        %p343 = scmp.lt.s32.totalorder %s17, 1
        %s344 = scalar_select %p343, %s17, 1
        %s345 = scalar_lea.vmem %s1, %s344
      $region56: #{code_predictor_forward.16} parent=47 // pred_fallthru
        _
      // Predicated region
      $region57: #{code_predictor_forward.16} parent=47 // pred_check
        %p346 = pneg %p89
      $region58: #{code_predictor_forward.16} parent=47 // pred_check_branch
        %348 = sbr.rel (%p346) target = $region60
      $region59: #{code_predictor_forward.16} parent=47 // pred_region
        %p349 = scmp.lt.s32.totalorder %s17, 1
        %s350 = scalar_select %p349, %s17, 1
        %s351 = smul.addr %s350, 2
        %s352 = smul.addr %s351, 8
        %s353 = scalar_lea.vmem %s2, %s352
      $region60: #{code_predictor_forward.16} parent=47 // pred_fallthru
        _
    $region48: #{code_predictor_forward.16} parent=5 // pred_fallthru
      _
    %p354 = scmp.le.s32.totalorder 1, %s17
    %p355 = scmp.lt.s32.totalorder %s17, 3
    %p356 = pnand %p354, %p355
    %p357 = pneg %p356
    // Predicated region
    $region61: #{code_predictor_forward.16} parent=5 // pred_check
      _
    $region62: #{code_predictor_forward.16} parent=5 // pred_check_branch
      %359 = sbr.rel (%p356) target = $region64
    $region63: #{code_predictor_forward.16} parent=5 // pred_region
      %s360 = ssub.s32 %s17, 1
      %p361 = scmp.lt.s32.totalorder %s22, 1
      %s362 = scalar_select %p361, %s22, 1
      %s363 = smul.addr %s362, 2
      %s364 = smul.addr %s363, 8
      %s365 = scalar_lea.vmem %s0, %s364
      %p366 = pneg %p43
      %p367 = pneg %p40
      %p368 = scmp.lt.s32.totalorder %s22, 1
      %s369 = scalar_select %p368, %s22, 1
      %s370 = scalar_lea.vmem %s1, %s369
      %p371 = pneg %p69
      %p372 = pneg %p66
      %p373 = scmp.lt.s32.totalorder %s22, 1
      %s374 = scalar_select %p373, %s22, 1
      %s375 = smul.addr %s374, 2
      %s376 = smul.addr %s375, 8
      %s377 = scalar_lea.vmem %s2, %s376
      %p378 = pneg %p95
      %p379 = pneg %p92
      %p380 = pneg %p116
      %p381 = pneg %p113
      %p382 = pneg %p137
      %p383 = pneg %p134
      %p384 = pneg %p158
      %p385 = pneg %p155
      %p386 = pneg %p179
      %p387 = pneg %p176
      %p388 = pneg %p200
      %p389 = pneg %p197
      %p390 = pneg %p221
      %p391 = pneg %p218
      %p392 = pneg %p242
      %p393 = pneg %p239
      %p394 = pneg %p263
      %p395 = pneg %p260
      %p396 = pneg %p289
      %p397 = pneg %p286
      %p398 = scmp.lt.s32.totalorder %s22, 1
      %s399 = scalar_select %p398, %s22, 1
      %s400 = smul.addr %s399, 2
      %s401 = smul.addr %s400, 8
      %s402 = scalar_lea.vmem %s11, %s401
      %p403 = scmp.lt.s32.totalorder %s22, 1
      %s404 = scalar_select %p403, %s22, 1
      %s405 = smul.addr %s404, 2
      %s406 = smul.addr %s405, 8
      %s407 = scalar_lea.vmem %s0, %s406
      %p408 = scmp.lt.s32.totalorder %s22, 1
      %s409 = scalar_select %p408, %s22, 1
      %s410 = scalar_lea.vmem %s1, %s409
      %p411 = scmp.lt.s32.totalorder %s22, 1
      %s412 = scalar_select %p411, %s22, 1
      %s413 = smul.addr %s412, 2
      %s414 = smul.addr %s413, 8
      %s415 = scalar_lea.vmem %s2, %s414
      %p416 = scmp.lt.s32.totalorder %s22, 1
      %s417 = scalar_select %p416, %s22, 1
      %s418 = smul.addr %s417, 2
      %s419 = smul.addr %s418, 8
      %s420 = scalar_lea.vmem %s11, %s419
      %v422 = vld [vmem:[%s407] sm:$0xff]
      %v423 = vld [vmem:[%s407 + $0x8] sm:$0xff]
      %v424 = vpack.c.bf16 %v423, %v422
      %v425 = vld [vmem:[%s3] sm:$0xff]
      %v426 = vld [vmem:[%s3 + $0x8] sm:$0xff]
      %v427 = vld [vmem:[%s3 + $0x10] sm:$0xff]
      %v428 = vld [vmem:[%s3 + $0x18] sm:$0xff]
      %v429 = vpack.c.bf16 %v426, %v425
      %v430 = vpack.c.bf16 %v428, %v427
      %v431 = vld [vmem:[%s4] sm:$0x1]
      %v433 = vlaneseq
      %v434 = vshrl.u32 %v433, 7
      %v435 = vsub.s32 0, %v434
      %v436 = vrot.slane %v431, %v435
      %vm438 = vcmask 261120
      %v440 = vsel %vm438, %v424, 0
      %442 = vmatprep.subr.bf16.mxu0 0
      %443 = vmatpush1.bf16.msra.mxu0 0
      %444 = vmatprep.subr.bf16.mxu0 0
      %445 = vmatpush1.bf16.msra.mxu0 0
      %446 = vmatprep.subr.bf16.mxu0 0
      %447 = vmatpush1.bf16.msra.mxu0 0
      %448 = vmatprep.subr.bf16.mxu0 0
      %449 = vmatpush1.bf16.msra.mxu0 0
      %450 = vmatprep.subr.bf16.mxu0 0
      %451 = vmatpush1.bf16.msra.mxu0 0
      %452 = vmatprep.subr.bf16.mxu0 0
      %453 = vmatpush1.bf16.msra.mxu0 0
      %454 = vmatprep.subr.bf16.mxu0 0
      %455 = vmatpush1.bf16.msra.mxu0 %v430
      %456 = vmatprep.subr.bf16.mxu0 0
      %457 = vmatpush1.bf16.msra.mxu0 %v429
      %458 = vmatprep.subr.bf16.mxu0 0
      %459 = vmatpush2.bf16.msra.mxu0 0
      %460 = vmatprep.subr.bf16.mxu0 0
      %461 = vmatpush2.bf16.msra.mxu0 0
      %462 = vmatprep.subr.bf16.mxu0 0
      %463 = vmatpush2.bf16.msra.mxu0 0
      %464 = vmatprep.subr.bf16.mxu0 0
      %465 = vmatpush2.bf16.msra.mxu0 0
      %466 = vmatprep.subr.bf16.mxu0 0
      %467 = vmatpush2.bf16.msra.mxu0 0
      %468 = vmatprep.subr.bf16.mxu0 0
      %469 = vmatpush2.bf16.msra.mxu0 0
      %470 = vmatprep.subr.bf16.mxu0 0
      %471 = vmatpush2.bf16.msra.mxu0 0
      %472 = vmatprep.subr.bf16.mxu0 0
      %473 = vmatpush2.bf16.msra.mxu0 0
      %474 = vmatprep.mubr.bf16.mxu0 0
      %475 = vmatmul.mubr.bf16.gmra.mxu0 %v440
      %v476 = vpop.f32.mrf.mxu0
      %v477 = vadd.f32 %v436, %v476
      %v478 = vpop.f32.mrf.mxu0
      %v479 = vpop.f32.mrf.mxu0
      %v480 = vadd.f32 %v436, %v479
      %v481 = vpop.f32.mrf.mxu0
      %482 = vdwg.mxu0
      %v483 = vld [vmem:[%s410] sm:$0x1]
      %vm484 = vcmp.gt.f32.partialorder %v483, 0.0
      %v485 = vld [vmem:[%s415] sm:$0xff]
      %v486 = vld [vmem:[%s415 + $0x8] sm:$0xff]
      %vm487 = vcmp.gt.f32.partialorder %v485, 0.0
      %vm488 = vcmp.gt.f32.partialorder %v486, 0.0
      %v489 = vsel %vm484, 1, 0
      %v490 = vlaneseq
      %v491 = vshrl.u32 %v490, 7
      %v492 = vsub.s32 0, %v491
      %v493 = vrot.slane %v489, %v492
      %vm494 = vcmp.eq.s32.totalorder %v493, 1
      %v495 = vsel %vm487, 1, 0
      %v496 = vsel %vm488, 1, 0
      %497 = vset.pattern.permute.xlu0 0
      %498 = vperm.xlu0 %497, %v495
      %v499 = vpop.permute.xlu0 %498
      %500 = vset.pattern.permute.xlu0 0
      %501 = vperm.xlu0 %500, %v496
      %v502 = vpop.permute.xlu0 %501
      %vm503 = vcmp.eq.s32.totalorder %v499, 1
      %vm504 = vcmp.eq.s32.totalorder %v502, 1
      %vm505 = vmand %vm494, %vm503
      %vm506 = vmand %vm494, %vm504
      %v507 = vld [vmem:[%s5] sm:$0xff]
      %v508 = vld [vmem:[%s5 + $0x8] sm:$0xff]
      %v509 = vld [vmem:[%s5 + $0x10] sm:$0xff]
      %v510 = vld [vmem:[%s5 + $0x18] sm:$0xff]
      %v511 = vld [vmem:[%s5 + $0x20] sm:$0xff]
      %v512 = vld [vmem:[%s5 + $0x28] sm:$0xff]
      %v513 = vld [vmem:[%s5 + $0x30] sm:$0xff]
      %v514 = vld [vmem:[%s5 + $0x38] sm:$0xff]
      %v515 = vld [vmem:[%s5 + $0x40] sm:$0xff]
      %v516 = vld [vmem:[%s5 + $0x48] sm:$0xff]
      %v517 = vld [vmem:[%s5 + $0x50] sm:$0xff]
      %v518 = vld [vmem:[%s5 + $0x58] sm:$0xff]
      %v519 = vld [vmem:[%s5 + $0x60] sm:$0xff]
      %v520 = vld [vmem:[%s5 + $0x68] sm:$0xff]
      %v521 = vld [vmem:[%s5 + $0x70] sm:$0xff]
      %v522 = vld [vmem:[%s5 + $0x78] sm:$0xff]
      %v523 = vld [vmem:[%s5 + $0x80] sm:$0xff]
      %v524 = vld [vmem:[%s5 + $0x88] sm:$0xff]
      %v525 = vld [vmem:[%s5 + $0x90] sm:$0xff]
      %v526 = vld [vmem:[%s5 + $0x98] sm:$0xff]
      %v527 = vld [vmem:[%s5 + $0xa0] sm:$0xff]
      %v528 = vld [vmem:[%s5 + $0xa8] sm:$0xff]
      %v529 = vld [vmem:[%s5 + $0xb0] sm:$0xff]
      %v530 = vld [vmem:[%s5 + $0xb8] sm:$0xff]
      %v531 = vld [vmem:[%s5 + $0xc0] sm:$0xff]
      %v532 = vld [vmem:[%s5 + $0xc8] sm:$0xff]
      %v533 = vld [vmem:[%s5 + $0xd0] sm:$0xff]
      %v534 = vld [vmem:[%s5 + $0xd8] sm:$0xff]
      %v535 = vld [vmem:[%s5 + $0xe0] sm:$0xff]
      %v536 = vld [vmem:[%s5 + $0xe8] sm:$0xff]
      %v537 = vld [vmem:[%s5 + $0xf0] sm:$0xff]
      %v538 = vld [vmem:[%s5 + $0xf8] sm:$0xff]
      %v539 = vld [vmem:[%s6] sm:$0xff]
      %v540 = vld [vmem:[%s6 + $0x8] sm:$0xff]
      %v541 = vld [vmem:[%s6 + $0x10] sm:$0xff]
      %v542 = vld [vmem:[%s6 + $0x18] sm:$0xff]
      %v543 = vld [vmem:[%s6 + $0x20] sm:$0xff]
      %v544 = vld [vmem:[%s6 + $0x28] sm:$0xff]
      %v545 = vld [vmem:[%s6 + $0x30] sm:$0xff]
      %v546 = vld [vmem:[%s6 + $0x38] sm:$0xff]
      %v547 = vld [vmem:[%s6 + $0x40] sm:$0xff]
      %v548 = vld [vmem:[%s6 + $0x48] sm:$0xff]
      %v549 = vld [vmem:[%s6 + $0x50] sm:$0xff]
      %v550 = vld [vmem:[%s6 + $0x58] sm:$0xff]
      %v551 = vld [vmem:[%s6 + $0x60] sm:$0xff]
      %v552 = vld [vmem:[%s6 + $0x68] sm:$0xff]
      %v553 = vld [vmem:[%s6 + $0x70] sm:$0xff]
      %v554 = vld [vmem:[%s6 + $0x78] sm:$0xff]
      %v555 = vld [vmem:[%s6 + $0x80] sm:$0xff]
      %v556 = vld [vmem:[%s6 + $0x88] sm:$0xff]
      %v557 = vld [vmem:[%s6 + $0x90] sm:$0xff]
      %v558 = vld [vmem:[%s6 + $0x98] sm:$0xff]
      %v559 = vld [vmem:[%s6 + $0xa0] sm:$0xff]
      %v560 = vld [vmem:[%s6 + $0xa8] sm:$0xff]
      %v561 = vld [vmem:[%s6 + $0xb0] sm:$0xff]
      %v562 = vld [vmem:[%s6 + $0xb8] sm:$0xff]
      %v563 = vld [vmem:[%s6 + $0xc0] sm:$0xff]
      %v564 = vld [vmem:[%s6 + $0xc8] sm:$0xff]
      %v565 = vld [vmem:[%s6 + $0xd0] sm:$0xff]
      %v566 = vld [vmem:[%s6 + $0xd8] sm:$0xff]
      %v567 = vld [vmem:[%s6 + $0xe0] sm:$0xff]
      %v568 = vld [vmem:[%s6 + $0xe8] sm:$0xff]
      %v569 = vld [vmem:[%s6 + $0xf0] sm:$0xff]
      %v570 = vld [vmem:[%s6 + $0xf8] sm:$0xff]
      %v571 = vld [vmem:[%s7] sm:$0xff]
      %v572 = vld [vmem:[%s7 + $0x8] sm:$0xff]
      %v573 = vld [vmem:[%s7 + $0x10] sm:$0xff]
      %v574 = vld [vmem:[%s7 + $0x18] sm:$0xff]
      %v575 = vld [vmem:[%s8] sm:$0x1]
      %v577 = vlaneseq
      %v578 = vshrl.u32 %v577, 7
      %v579 = vsub.s32 0, %v578
      %v580 = vrot.slane %v575, %v579
      %v582 = vadd.f32 %v422, %v580
      %v583 = vadd.f32 %v423, %v580
      %v584 = vmul.f32 %v477, 0.25
      %v585 = vmul.f32 %v480, 0.25
      %v586 = vpack.c.bf16 %v585, %v584
      %v587 = vpack.c.bf16 %v480, %v477
      %v590 = vcombine.high %v584, %v584
      %v592 = vunpack.c.l.s4 1966171168
      %v593 = vunpack.c.0.s8 %v592
      %v594 = vlaneseq
      %v595 = vshrl.u32 %v594, 7
      %v596 = vsub.s32 %v593, %v595
      %v597 = vrot.slane %v584, %v596
      %v599 = vunpack.c.l.s4 1966171168
      %v600 = vunpack.c.0.s8 %v599
      %v601 = vlaneseq
      %v602 = vshrl.u32 %v601, 7
      %v603 = vsub.s32 %v600, %v602
      %v604 = vrot.slane %v590, %v603
      %v605 = vcombine.high %v597, %v597
      %v606 = vcombine.high %v604, %v604
      %v608 = vunpack.c.l.s4 1966171168
      %v609 = vunpack.c.0.s8 %v608
      %v610 = vlaneseq
      %v611 = vshrl.u32 %v610, 7
      %v612 = vsub.s32 %v609, %v611
      %v613 = vrot.slane %v597, %v612
      %v615 = vunpack.c.l.s4 1966171168
      %v616 = vunpack.c.0.s8 %v615
      %v617 = vlaneseq
      %v618 = vshrl.u32 %v617, 7
      %v619 = vsub.s32 %v616, %v618
      %v620 = vrot.slane %v604, %v619
      %v622 = vunpack.c.l.s4 1966171168
      %v623 = vunpack.c.0.s8 %v622
      %v624 = vlaneseq
      %v625 = vshrl.u32 %v624, 7
      %v626 = vsub.s32 %v623, %v625
      %v627 = vrot.slane %v605, %v626
      %v629 = vunpack.c.l.s4 1966171168
      %v630 = vunpack.c.0.s8 %v629
      %v631 = vlaneseq
      %v632 = vshrl.u32 %v631, 7
      %v633 = vsub.s32 %v630, %v632
      %v634 = vrot.slane %v606, %v633
      %v635 = vcombine.high %v613, %v613
      %v636 = vcombine.high %v620, %v620
      %v637 = vcombine.high %v627, %v627
      %v638 = vcombine.high %v634, %v634
      %v639 = vcombine.high %v585, %v585
      %v641 = vunpack.c.l.s4 1966171168
      %v642 = vunpack.c.0.s8 %v641
      %v643 = vlaneseq
      %v644 = vshrl.u32 %v643, 7
      %v645 = vsub.s32 %v642, %v644
      %v646 = vrot.slane %v585, %v645
      %v648 = vunpack.c.l.s4 1966171168
      %v649 = vunpack.c.0.s8 %v648
      %v650 = vlaneseq
      %v651 = vshrl.u32 %v650, 7
      %v652 = vsub.s32 %v649, %v651
      %v653 = vrot.slane %v639, %v652
      %v654 = vcombine.high %v646, %v646
      %v655 = vcombine.high %v653, %v653
      %v657 = vunpack.c.l.s4 1966171168
      %v658 = vunpack.c.0.s8 %v657
      %v659 = vlaneseq
      %v660 = vshrl.u32 %v659, 7
      %v661 = vsub.s32 %v658, %v660
      %v662 = vrot.slane %v646, %v661
      %v664 = vunpack.c.l.s4 1966171168
      %v665 = vunpack.c.0.s8 %v664
      %v666 = vlaneseq
      %v667 = vshrl.u32 %v666, 7
      %v668 = vsub.s32 %v665, %v667
      %v669 = vrot.slane %v653, %v668
      %v671 = vunpack.c.l.s4 1966171168
      %v672 = vunpack.c.0.s8 %v671
      %v673 = vlaneseq
      %v674 = vshrl.u32 %v673, 7
      %v675 = vsub.s32 %v672, %v674
      %v676 = vrot.slane %v654, %v675
      %v678 = vunpack.c.l.s4 1966171168
      %v679 = vunpack.c.0.s8 %v678
      %v680 = vlaneseq
      %v681 = vshrl.u32 %v680, 7
      %v682 = vsub.s32 %v679, %v681
      %v683 = vrot.slane %v655, %v682
      %v684 = vcombine.high %v662, %v662
      %v685 = vcombine.high %v669, %v669
      %v686 = vcombine.high %v676, %v676
      %v687 = vcombine.high %v683, %v683
      %v688 = vlaneseq
      %v689 = vshrl.u32 %v688, 7
      %v690 = vsub.s32 0, %v689
      %v691 = vrot.slane %v613, %v690
      %v692 = vlaneseq
      %v693 = vshrl.u32 %v692, 7
      %v694 = vsub.s32 0, %v693
      %v695 = vrot.slane %v627, %v694
      %v696 = vlaneseq
      %v697 = vshrl.u32 %v696, 7
      %v698 = vsub.s32 0, %v697
      %v699 = vrot.slane %v635, %v698
      %v700 = vlaneseq
      %v701 = vshrl.u32 %v700, 7
      %v702 = vsub.s32 0, %v701
      %v703 = vrot.slane %v637, %v702
      %v704 = vlaneseq
      %v705 = vshrl.u32 %v704, 7
      %v706 = vsub.s32 0, %v705
      %v707 = vrot.slane %v620, %v706
      %v708 = vlaneseq
      %v709 = vshrl.u32 %v708, 7
      %v710 = vsub.s32 0, %v709
      %v711 = vrot.slane %v634, %v710
      %v712 = vlaneseq
      %v713 = vshrl.u32 %v712, 7
      %v714 = vsub.s32 0, %v713
      %v715 = vrot.slane %v636, %v714
      %v716 = vlaneseq
      %v717 = vshrl.u32 %v716, 7
      %v718 = vsub.s32 0, %v717
      %v719 = vrot.slane %v638, %v718
      %v720 = vlaneseq
      %v721 = vshrl.u32 %v720, 7
      %v722 = vsub.s32 0, %v721
      %v723 = vrot.slane %v662, %v722
      %v724 = vlaneseq
      %v725 = vshrl.u32 %v724, 7
      %v726 = vsub.s32 0, %v725
      %v727 = vrot.slane %v676, %v726
      %v728 = vlaneseq
      %v729 = vshrl.u32 %v728, 7
      %v730 = vsub.s32 0, %v729
      %v731 = vrot.slane %v684, %v730
      %v732 = vlaneseq
      %v733 = vshrl.u32 %v732, 7
      %v734 = vsub.s32 0, %v733
      %v735 = vrot.slane %v686, %v734
      %v736 = vlaneseq
      %v737 = vshrl.u32 %v736, 7
      %v738 = vsub.s32 0, %v737
      %v739 = vrot.slane %v669, %v738
      %v740 = vlaneseq
      %v741 = vshrl.u32 %v740, 7
      %v742 = vsub.s32 0, %v741
      %v743 = vrot.slane %v683, %v742
      %v744 = vlaneseq
      %v745 = vshrl.u32 %v744, 7
      %v746 = vsub.s32 0, %v745
      %v747 = vrot.slane %v685, %v746
      %v748 = vlaneseq
      %v749 = vshrl.u32 %v748, 7
      %v750 = vsub.s32 0, %v749
      %v751 = vrot.slane %v687, %v750
      %v768 = vmul.f32 %v691, %v507
      %v769 = vmul.f32 %v691, %v508
      %v770 = vmul.f32 %v695, %v509
      %v771 = vmul.f32 %v695, %v510
      %v772 = vmul.f32 %v699, %v511
      %v773 = vmul.f32 %v699, %v512
      %v774 = vmul.f32 %v703, %v513
      %v775 = vmul.f32 %v703, %v514
      %v776 = vmul.f32 %v707, %v515
      %v777 = vmul.f32 %v707, %v516
      %v778 = vmul.f32 %v711, %v517
      %v779 = vmul.f32 %v711, %v518
      %v780 = vmul.f32 %v715, %v519
      %v781 = vmul.f32 %v715, %v520
      %v782 = vmul.f32 %v719, %v521
      %v783 = vmul.f32 %v719, %v522
      %v784 = vmul.f32 %v723, %v523
      %v785 = vmul.f32 %v723, %v524
      %v786 = vmul.f32 %v727, %v525
      %v787 = vmul.f32 %v727, %v526
      %v788 = vmul.f32 %v731, %v527
      %v789 = vmul.f32 %v731, %v528
      %v790 = vmul.f32 %v735, %v529
      %v791 = vmul.f32 %v735, %v530
      %v792 = vmul.f32 %v739, %v531
      %v793 = vmul.f32 %v739, %v532
      %v794 = vmul.f32 %v743, %v533
      %v795 = vmul.f32 %v743, %v534
      %v796 = vmul.f32 %v747, %v535
      %v797 = vmul.f32 %v747, %v536
      %v798 = vmul.f32 %v751, %v537
      %v799 = vmul.f32 %v751, %v538
      %vm800 = vcmask 130048
      %v801 = vsel %vm800, %v768, 0.0
      %802 = vadd.xlane.f32.xlu0 %v801
      %v803 = vpop.xlane.xlu0 %802
      %v804 = vsel %vm800, %v769, 0.0
      %805 = vadd.xlane.f32.xlu0 %v804
      %v806 = vpop.xlane.xlu0 %805
      %v807 = vsel %vm800, %v770, 0.0
      %808 = vadd.xlane.f32.xlu0 %v807
      %v809 = vpop.xlane.xlu0 %808
      %v810 = vsel %vm800, %v771, 0.0
      %811 = vadd.xlane.f32.xlu0 %v810
      %v812 = vpop.xlane.xlu0 %811
      %v813 = vsel %vm800, %v772, 0.0
      %814 = vadd.xlane.f32.xlu0 %v813
      %v815 = vpop.xlane.xlu0 %814
      %v816 = vsel %vm800, %v773, 0.0
      %817 = vadd.xlane.f32.xlu0 %v816
      %v818 = vpop.xlane.xlu0 %817
      %v819 = vsel %vm800, %v774, 0.0
      %820 = vadd.xlane.f32.xlu0 %v819
      %v821 = vpop.xlane.xlu0 %820
      %v822 = vsel %vm800, %v775, 0.0
      %823 = vadd.xlane.f32.xlu0 %v822
      %v824 = vpop.xlane.xlu0 %823
      %v825 = vsel %vm800, %v776, 0.0
      %826 = vadd.xlane.f32.xlu0 %v825
      %v827 = vpop.xlane.xlu0 %826
      %v828 = vsel %vm800, %v777, 0.0
      %829 = vadd.xlane.f32.xlu0 %v828
      %v830 = vpop.xlane.xlu0 %829
      %v831 = vsel %vm800, %v778, 0.0
      %832 = vadd.xlane.f32.xlu0 %v831
      %v833 = vpop.xlane.xlu0 %832
      %v834 = vsel %vm800, %v779, 0.0
      %835 = vadd.xlane.f32.xlu0 %v834
      %v836 = vpop.xlane.xlu0 %835
      %v837 = vsel %vm800, %v780, 0.0
      %838 = vadd.xlane.f32.xlu0 %v837
      %v839 = vpop.xlane.xlu0 %838
      %v840 = vsel %vm800, %v781, 0.0
      %841 = vadd.xlane.f32.xlu0 %v840
      %v842 = vpop.xlane.xlu0 %841
      %v843 = vsel %vm800, %v782, 0.0
      %844 = vadd.xlane.f32.xlu0 %v843
      %v845 = vpop.xlane.xlu0 %844
      %v846 = vsel %vm800, %v783, 0.0
      %847 = vadd.xlane.f32.xlu0 %v846
      %v848 = vpop.xlane.xlu0 %847
      %v849 = vsel %vm800, %v784, 0.0
      %850 = vadd.xlane.f32.xlu0 %v849
      %v851 = vpop.xlane.xlu0 %850
      %v852 = vsel %vm800, %v785, 0.0
      %853 = vadd.xlane.f32.xlu0 %v852
      %v854 = vpop.xlane.xlu0 %853
      %v855 = vsel %vm800, %v786, 0.0
      %856 = vadd.xlane.f32.xlu0 %v855
      %v857 = vpop.xlane.xlu0 %856
      %v858 = vsel %vm800, %v787, 0.0
      %859 = vadd.xlane.f32.xlu0 %v858
      %v860 = vpop.xlane.xlu0 %859
      %v861 = vsel %vm800, %v788, 0.0
      %862 = vadd.xlane.f32.xlu0 %v861
      %v863 = vpop.xlane.xlu0 %862
      %v864 = vsel %vm800, %v789, 0.0
      %865 = vadd.xlane.f32.xlu0 %v864
      %v866 = vpop.xlane.xlu0 %865
      %v867 = vsel %vm800, %v790, 0.0
      %868 = vadd.xlane.f32.xlu0 %v867
      %v869 = vpop.xlane.xlu0 %868
      %v870 = vsel %vm800, %v791, 0.0
      %871 = vadd.xlane.f32.xlu0 %v870
      %v872 = vpop.xlane.xlu0 %871
      %v873 = vsel %vm800, %v792, 0.0
      %874 = vadd.xlane.f32.xlu0 %v873
      %v875 = vpop.xlane.xlu0 %874
      %v876 = vsel %vm800, %v793, 0.0
      %877 = vadd.xlane.f32.xlu0 %v876
      %v878 = vpop.xlane.xlu0 %877
      %v879 = vsel %vm800, %v794, 0.0
      %880 = vadd.xlane.f32.xlu0 %v879
      %v881 = vpop.xlane.xlu0 %880
      %v882 = vsel %vm800, %v795, 0.0
      %883 = vadd.xlane.f32.xlu0 %v882
      %v884 = vpop.xlane.xlu0 %883
      %v885 = vsel %vm800, %v796, 0.0
      %886 = vadd.xlane.f32.xlu0 %v885
      %v887 = vpop.xlane.xlu0 %886
      %v888 = vsel %vm800, %v797, 0.0
      %889 = vadd.xlane.f32.xlu0 %v888
      %v890 = vpop.xlane.xlu0 %889
      %v891 = vsel %vm800, %v798, 0.0
      %892 = vadd.xlane.f32.xlu0 %v891
      %v893 = vpop.xlane.xlu0 %892
      %v894 = vsel %vm800, %v799, 0.0
      %895 = vadd.xlane.f32.xlu0 %v894
      %v896 = vpop.xlane.xlu0 %895
      %898 = vrot.lane.b32.xlu0 %v587, 96
      %v899 = vpop.permute.xlu0 %898
      %v932 = vlaneseq
      %v933 = vand.u32 %v932, 127
      %v934 = vlaneseq
      %v935 = vshrl.u32 %v934, 7
      %v936 = vsub.s32 %v933, %v935
      %v937 = vrot.slane %v803, %v936
      %v938 = vadd.s32 %v933, 4294967288
      %v939 = vlaneseq
      %v940 = vshrl.u32 %v939, 7
      %v941 = vsub.s32 %v938, %v940
      %v942 = vrot.slane %v806, %v941
      %vm943 = vcmask 130112
      %v944 = vsel %vm943, %v942, %v937
      %v945 = vlaneseq
      %v946 = vshrl.u32 %v945, 7
      %v947 = vsub.s32 %v933, %v946
      %v948 = vrot.slane %v809, %v947
      %v949 = vlaneseq
      %v950 = vshrl.u32 %v949, 7
      %v951 = vsub.s32 %v938, %v950
      %v952 = vrot.slane %v812, %v951
      %v953 = vsel %vm943, %v952, %v948
      %v954 = vlaneseq
      %v955 = vshrl.u32 %v954, 7
      %v956 = vsub.s32 %v933, %v955
      %v957 = vrot.slane %v815, %v956
      %v958 = vlaneseq
      %v959 = vshrl.u32 %v958, 7
      %v960 = vsub.s32 %v938, %v959
      %v961 = vrot.slane %v818, %v960
      %v962 = vsel %vm943, %v961, %v957
      %v963 = vlaneseq
      %v964 = vshrl.u32 %v963, 7
      %v965 = vsub.s32 %v933, %v964
      %v966 = vrot.slane %v821, %v965
      %v967 = vlaneseq
      %v968 = vshrl.u32 %v967, 7
      %v969 = vsub.s32 %v938, %v968
      %v970 = vrot.slane %v824, %v969
      %v971 = vsel %vm943, %v970, %v966
      %v972 = vlaneseq
      %v973 = vshrl.u32 %v972, 7
      %v974 = vsub.s32 %v933, %v973
      %v975 = vrot.slane %v827, %v974
      %v976 = vlaneseq
      %v977 = vshrl.u32 %v976, 7
      %v978 = vsub.s32 %v938, %v977
      %v979 = vrot.slane %v830, %v978
      %v980 = vsel %vm943, %v979, %v975
      %v981 = vlaneseq
      %v982 = vshrl.u32 %v981, 7
      %v983 = vsub.s32 %v933, %v982
      %v984 = vrot.slane %v833, %v983
      %v985 = vlaneseq
      %v986 = vshrl.u32 %v985, 7
      %v987 = vsub.s32 %v938, %v986
      %v988 = vrot.slane %v836, %v987
      %v989 = vsel %vm943, %v988, %v984
      %v990 = vlaneseq
      %v991 = vshrl.u32 %v990, 7
      %v992 = vsub.s32 %v933, %v991
      %v993 = vrot.slane %v839, %v992
      %v994 = vlaneseq
      %v995 = vshrl.u32 %v994, 7
      %v996 = vsub.s32 %v938, %v995
      %v997 = vrot.slane %v842, %v996
      %v998 = vsel %vm943, %v997, %v993
      %v999 = vlaneseq
      %v1000 = vshrl.u32 %v999, 7
      %v1001 = vsub.s32 %v933, %v1000
      %v1002 = vrot.slane %v845, %v1001
      %v1003 = vlaneseq
      %v1004 = vshrl.u32 %v1003, 7
      %v1005 = vsub.s32 %v938, %v1004
      %v1006 = vrot.slane %v848, %v1005
      %v1007 = vsel %vm943, %v1006, %v1002
      %v1008 = vlaneseq
      %v1009 = vshrl.u32 %v1008, 7
      %v1010 = vsub.s32 %v933, %v1009
      %v1011 = vrot.slane %v851, %v1010
      %v1012 = vlaneseq
      %v1013 = vshrl.u32 %v1012, 7
      %v1014 = vsub.s32 %v938, %v1013
      %v1015 = vrot.slane %v854, %v1014
      %v1016 = vsel %vm943, %v1015, %v1011
      %v1017 = vlaneseq
      %v1018 = vshrl.u32 %v1017, 7
      %v1019 = vsub.s32 %v933, %v1018
      %v1020 = vrot.slane %v857, %v1019
      %v1021 = vlaneseq
      %v1022 = vshrl.u32 %v1021, 7
      %v1023 = vsub.s32 %v938, %v1022
      %v1024 = vrot.slane %v860, %v1023
      %v1025 = vsel %vm943, %v1024, %v1020
      %v1026 = vlaneseq
      %v1027 = vshrl.u32 %v1026, 7
      %v1028 = vsub.s32 %v933, %v1027
      %v1029 = vrot.slane %v863, %v1028
      %v1030 = vlaneseq
      %v1031 = vshrl.u32 %v1030, 7
      %v1032 = vsub.s32 %v938, %v1031
      %v1033 = vrot.slane %v866, %v1032
      %v1034 = vsel %vm943, %v1033, %v1029
      %v1035 = vlaneseq
      %v1036 = vshrl.u32 %v1035, 7
      %v1037 = vsub.s32 %v933, %v1036
      %v1038 = vrot.slane %v869, %v1037
      %v1039 = vlaneseq
      %v1040 = vshrl.u32 %v1039, 7
      %v1041 = vsub.s32 %v938, %v1040
      %v1042 = vrot.slane %v872, %v1041
      %v1043 = vsel %vm943, %v1042, %v1038
      %v1044 = vlaneseq
      %v1045 = vshrl.u32 %v1044, 7
      %v1046 = vsub.s32 %v933, %v1045
      %v1047 = vrot.slane %v875, %v1046
      %v1048 = vlaneseq
      %v1049 = vshrl.u32 %v1048, 7
      %v1050 = vsub.s32 %v938, %v1049
      %v1051 = vrot.slane %v878, %v1050
      %v1052 = vsel %vm943, %v1051, %v1047
      %v1053 = vlaneseq
      %v1054 = vshrl.u32 %v1053, 7
      %v1055 = vsub.s32 %v933, %v1054
      %v1056 = vrot.slane %v881, %v1055
      %v1057 = vlaneseq
      %v1058 = vshrl.u32 %v1057, 7
      %v1059 = vsub.s32 %v938, %v1058
      %v1060 = vrot.slane %v884, %v1059
      %v1061 = vsel %vm943, %v1060, %v1056
      %v1062 = vlaneseq
      %v1063 = vshrl.u32 %v1062, 7
      %v1064 = vsub.s32 %v933, %v1063
      %v1065 = vrot.slane %v887, %v1064
      %v1066 = vlaneseq
      %v1067 = vshrl.u32 %v1066, 7
      %v1068 = vsub.s32 %v938, %v1067
      %v1069 = vrot.slane %v890, %v1068
      %v1070 = vsel %vm943, %v1069, %v1065
      %v1071 = vlaneseq
      %v1072 = vshrl.u32 %v1071, 7
      %v1073 = vsub.s32 %v933, %v1072
      %v1074 = vrot.slane %v893, %v1073
      %v1075 = vlaneseq
      %v1076 = vshrl.u32 %v1075, 7
      %v1077 = vsub.s32 %v938, %v1076
      %v1078 = vrot.slane %v896, %v1077
      %v1079 = vsel %vm943, %v1078, %v1074
      %vm1080 = vcmask 1041409
      %v1081 = vsel %vm1080, %v953, %v944
      %vm1082 = vcmask 1042434
      %v1083 = vsel %vm1082, %v962, %v1081
      %vm1084 = vcmask 1043459
      %v1085 = vsel %vm1084, %v971, %v1083
      %vm1086 = vcmask 1044484
      %v1087 = vsel %vm1086, %v980, %v1085
      %vm1088 = vcmask 1045509
      %v1089 = vsel %vm1088, %v989, %v1087
      %vm1090 = vcmask 1046534
      %v1091 = vsel %vm1090, %v998, %v1089
      %vm1092 = vcmask 1047559
      %v1093 = vsel %vm1092, %v1007, %v1091
      %v1094 = vsel %vm1080, %v1025, %v1016
      %v1095 = vsel %vm1082, %v1034, %v1094
      %v1096 = vsel %vm1084, %v1043, %v1095
      %v1097 = vsel %vm1086, %v1052, %v1096
      %v1098 = vsel %vm1088, %v1061, %v1097
      %v1099 = vsel %vm1090, %v1070, %v1098
      %v1100 = vsel %vm1092, %v1079, %v1099
      %v1104 = vsel %vm800, %v586, 0
      %v1107 = vsel %vm800, %v899, 0
      %1109 = vmatprep.subr.bf16.mxu0 0
      %1110 = vmatpush1.bf16.xpose.msra.mxu0 0
      %1111 = vmatprep.subr.bf16.mxu0 0
      %1112 = vmatpush1.bf16.xpose.msra.mxu0 0
      %1113 = vmatprep.subr.bf16.mxu0 0
      %1114 = vmatpush1.bf16.xpose.msra.mxu0 0
      %1115 = vmatprep.subr.bf16.mxu0 0
      %1116 = vmatpush1.bf16.xpose.msra.mxu0 0
      %1117 = vmatprep.subr.bf16.mxu0 0
      %1118 = vmatpush1.bf16.xpose.msra.mxu0 0
      %1119 = vmatprep.subr.bf16.mxu0 0
      %1120 = vmatpush1.bf16.xpose.msra.mxu0 0
      %1121 = vmatprep.subr.bf16.mxu0 0
      %1122 = vmatpush1.bf16.xpose.msra.mxu0 0
      %1123 = vmatprep.subr.bf16.mxu0 0
      %1124 = vmatpush1.bf16.xpose.msra.mxu0 %v1107
      %1125 = vmatprep.subr.bf16.mxu0 0
      %1126 = vmatpush2.bf16.xpose.msra.mxu0 0
      %1127 = vmatprep.subr.bf16.mxu0 0
      %1128 = vmatpush2.bf16.xpose.msra.mxu0 0
      %1129 = vmatprep.subr.bf16.mxu0 0
      %1130 = vmatpush2.bf16.xpose.msra.mxu0 0
      %1131 = vmatprep.subr.bf16.mxu0 0
      %1132 = vmatpush2.bf16.xpose.msra.mxu0 0
      %1133 = vmatprep.subr.bf16.mxu0 0
      %1134 = vmatpush2.bf16.xpose.msra.mxu0 0
      %1135 = vmatprep.subr.bf16.mxu0 0
      %1136 = vmatpush2.bf16.xpose.msra.mxu0 0
      %1137 = vmatprep.subr.bf16.mxu0 0
      %1138 = vmatpush2.bf16.xpose.msra.mxu0 0
      %1139 = vmatprep.subr.bf16.mxu0 0
      %1140 = vmatpush2.bf16.xpose.msra.mxu0 0
      %1141 = vmatprep.mubr.bf16.mxu0 0
      %1142 = vmatmul.mubr.bf16.gmra.mxu0 %v1104
      %v1143 = vpop.f32.mrf.mxu0
      %v1144 = vadd.f32 %v1093, %v1143
      %v1145 = vpop.f32.mrf.mxu0
      %v1146 = vpop.f32.mrf.mxu0
      %v1147 = vadd.f32 %v1100, %v1146
      %v1148 = vpop.f32.mrf.mxu0
      %1149 = vdwg.mxu0
      %v1150 = vsel %vm505, %v1144, -10000.0
      %v1151 = vsel %vm506, %v1147, -10000.0
      %v1152 = vsel %vm800, %v1150, -inf
      %1153 = vmax.xlane.f32.xlu0 %v1152
      %v1154 = vpop.xlane.xlu0 %1153
      %v1155 = vsel %vm800, %v1151, -inf
      %1156 = vmax.xlane.f32.xlu0 %v1155
      %v1157 = vpop.xlane.xlu0 %1156
      %v1158 = vsub.f32 %v1150, %v1154
      %v1159 = vsub.f32 %v1151, %v1157
      %v1160 = vmul.f32 %v1158, 1.442695
      %v1161 = vpow.pop %v1160
      %v1162 = vmul.f32 %v1159, 1.442695
      %v1163 = vpow.pop %v1162
      %v1164 = vsel %vm800, %v1161, 0.0
      %1165 = vadd.xlane.f32.xlu0 %v1164
      %v1166 = vpop.xlane.xlu0 %1165
      %v1167 = vsel %vm800, %v1163, 0.0
      %1168 = vadd.xlane.f32.xlu0 %v1167
      %v1169 = vpop.xlane.xlu0 %1168
      %v1170 = vrcp.pop %v1166
      %v1171 = vrcp.pop %v1169
      %v1172 = vmul.f32 %v1161, %v1170
      %v1173 = vmul.f32 %v1163, %v1171
      %v1174 = vpack.c.bf16 %v1173, %v1172
      %v1177 = vcombine.high %v1172, %v1172
      %v1179 = vunpack.c.l.s4 1966171168
      %v1180 = vunpack.c.0.s8 %v1179
      %v1181 = vlaneseq
      %v1182 = vshrl.u32 %v1181, 7
      %v1183 = vsub.s32 %v1180, %v1182
      %v1184 = vrot.slane %v1172, %v1183
      %v1186 = vunpack.c.l.s4 1966171168
      %v1187 = vunpack.c.0.s8 %v1186
      %v1188 = vlaneseq
      %v1189 = vshrl.u32 %v1188, 7
      %v1190 = vsub.s32 %v1187, %v1189
      %v1191 = vrot.slane %v1177, %v1190
      %v1192 = vcombine.high %v1184, %v1184
      %v1193 = vcombine.high %v1191, %v1191
      %v1195 = vunpack.c.l.s4 1966171168
      %v1196 = vunpack.c.0.s8 %v1195
      %v1197 = vlaneseq
      %v1198 = vshrl.u32 %v1197, 7
      %v1199 = vsub.s32 %v1196, %v1198
      %v1200 = vrot.slane %v1184, %v1199
      %v1202 = vunpack.c.l.s4 1966171168
      %v1203 = vunpack.c.0.s8 %v1202
      %v1204 = vlaneseq
      %v1205 = vshrl.u32 %v1204, 7
      %v1206 = vsub.s32 %v1203, %v1205
      %v1207 = vrot.slane %v1191, %v1206
      %v1209 = vunpack.c.l.s4 1966171168
      %v1210 = vunpack.c.0.s8 %v1209
      %v1211 = vlaneseq
      %v1212 = vshrl.u32 %v1211, 7
      %v1213 = vsub.s32 %v1210, %v1212
      %v1214 = vrot.slane %v1192, %v1213
      %v1216 = vunpack.c.l.s4 1966171168
      %v1217 = vunpack.c.0.s8 %v1216
      %v1218 = vlaneseq
      %v1219 = vshrl.u32 %v1218, 7
      %v1220 = vsub.s32 %v1217, %v1219
      %v1221 = vrot.slane %v1193, %v1220
      %v1222 = vcombine.high %v1200, %v1200
      %v1223 = vcombine.high %v1207, %v1207
      %v1224 = vcombine.high %v1214, %v1214
      %v1225 = vcombine.high %v1221, %v1221
      %v1226 = vcombine.high %v1173, %v1173
      %v1228 = vunpack.c.l.s4 1966171168
      %v1229 = vunpack.c.0.s8 %v1228
      %v1230 = vlaneseq
      %v1231 = vshrl.u32 %v1230, 7
      %v1232 = vsub.s32 %v1229, %v1231
      %v1233 = vrot.slane %v1173, %v1232
      %v1235 = vunpack.c.l.s4 1966171168
      %v1236 = vunpack.c.0.s8 %v1235
      %v1237 = vlaneseq
      %v1238 = vshrl.u32 %v1237, 7
      %v1239 = vsub.s32 %v1236, %v1238
      %v1240 = vrot.slane %v1226, %v1239
      %v1241 = vcombine.high %v1233, %v1233
      %v1242 = vcombine.high %v1240, %v1240
      %v1244 = vunpack.c.l.s4 1966171168
      %v1245 = vunpack.c.0.s8 %v1244
      %v1246 = vlaneseq
      %v1247 = vshrl.u32 %v1246, 7
      %v1248 = vsub.s32 %v1245, %v1247
      %v1249 = vrot.slane %v1233, %v1248
      %v1251 = vunpack.c.l.s4 1966171168
      %v1252 = vunpack.c.0.s8 %v1251
      %v1253 = vlaneseq
      %v1254 = vshrl.u32 %v1253, 7
      %v1255 = vsub.s32 %v1252, %v1254
      %v1256 = vrot.slane %v1240, %v1255
      %v1258 = vunpack.c.l.s4 1966171168
      %v1259 = vunpack.c.0.s8 %v1258
      %v1260 = vlaneseq
      %v1261 = vshrl.u32 %v1260, 7
      %v1262 = vsub.s32 %v1259, %v1261
      %v1263 = vrot.slane %v1241, %v1262
      %v1265 = vunpack.c.l.s4 1966171168
      %v1266 = vunpack.c.0.s8 %v1265
      %v1267 = vlaneseq
      %v1268 = vshrl.u32 %v1267, 7
      %v1269 = vsub.s32 %v1266, %v1268
      %v1270 = vrot.slane %v1242, %v1269
      %v1271 = vcombine.high %v1249, %v1249
      %v1272 = vcombine.high %v1256, %v1256
      %v1273 = vcombine.high %v1263, %v1263
      %v1274 = vcombine.high %v1270, %v1270
      %v1275 = vlaneseq
      %v1276 = vshrl.u32 %v1275, 7
      %v1277 = vsub.s32 0, %v1276
      %v1278 = vrot.slane %v1200, %v1277
      %v1279 = vlaneseq
      %v1280 = vshrl.u32 %v1279, 7
      %v1281 = vsub.s32 0, %v1280
      %v1282 = vrot.slane %v1214, %v1281
      %v1283 = vlaneseq
      %v1284 = vshrl.u32 %v1283, 7
      %v1285 = vsub.s32 0, %v1284
      %v1286 = vrot.slane %v1222, %v1285
      %v1287 = vlaneseq
      %v1288 = vshrl.u32 %v1287, 7
      %v1289 = vsub.s32 0, %v1288
      %v1290 = vrot.slane %v1224, %v1289
      %v1291 = vlaneseq
      %v1292 = vshrl.u32 %v1291, 7
      %v1293 = vsub.s32 0, %v1292
      %v1294 = vrot.slane %v1207, %v1293
      %v1295 = vlaneseq
      %v1296 = vshrl.u32 %v1295, 7
      %v1297 = vsub.s32 0, %v1296
      %v1298 = vrot.slane %v1221, %v1297
      %v1299 = vlaneseq
      %v1300 = vshrl.u32 %v1299, 7
      %v1301 = vsub.s32 0, %v1300
      %v1302 = vrot.slane %v1223, %v1301
      %v1303 = vlaneseq
      %v1304 = vshrl.u32 %v1303, 7
      %v1305 = vsub.s32 0, %v1304
      %v1306 = vrot.slane %v1225, %v1305
      %v1307 = vlaneseq
      %v1308 = vshrl.u32 %v1307, 7
      %v1309 = vsub.s32 0, %v1308
      %v1310 = vrot.slane %v1249, %v1309
      %v1311 = vlaneseq
      %v1312 = vshrl.u32 %v1311, 7
      %v1313 = vsub.s32 0, %v1312
      %v1314 = vrot.slane %v1263, %v1313
      %v1315 = vlaneseq
      %v1316 = vshrl.u32 %v1315, 7
      %v1317 = vsub.s32 0, %v1316
      %v1318 = vrot.slane %v1271, %v1317
      %v1319 = vlaneseq
      %v1320 = vshrl.u32 %v1319, 7
      %v1321 = vsub.s32 0, %v1320
      %v1322 = vrot.slane %v1273, %v1321
      %v1323 = vlaneseq
      %v1324 = vshrl.u32 %v1323, 7
      %v1325 = vsub.s32 0, %v1324
      %v1326 = vrot.slane %v1256, %v1325
      %v1327 = vlaneseq
      %v1328 = vshrl.u32 %v1327, 7
      %v1329 = vsub.s32 0, %v1328
      %v1330 = vrot.slane %v1270, %v1329
      %v1331 = vlaneseq
      %v1332 = vshrl.u32 %v1331, 7
      %v1333 = vsub.s32 0, %v1332
      %v1334 = vrot.slane %v1272, %v1333
      %v1335 = vlaneseq
      %v1336 = vshrl.u32 %v1335, 7
      %v1337 = vsub.s32 0, %v1336
      %v1338 = vrot.slane %v1274, %v1337
      %v1355 = vmul.f32 %v1278, %v539
      %v1356 = vmul.f32 %v1278, %v540
      %v1357 = vmul.f32 %v1282, %v541
      %v1358 = vmul.f32 %v1282, %v542
      %v1359 = vmul.f32 %v1286, %v543
      %v1360 = vmul.f32 %v1286, %v544
      %v1361 = vmul.f32 %v1290, %v545
      %v1362 = vmul.f32 %v1290, %v546
      %v1363 = vmul.f32 %v1294, %v547
      %v1364 = vmul.f32 %v1294, %v548
      %v1365 = vmul.f32 %v1298, %v549
      %v1366 = vmul.f32 %v1298, %v550
      %v1367 = vmul.f32 %v1302, %v551
      %v1368 = vmul.f32 %v1302, %v552
      %v1369 = vmul.f32 %v1306, %v553
      %v1370 = vmul.f32 %v1306, %v554
      %v1371 = vmul.f32 %v1310, %v555
      %v1372 = vmul.f32 %v1310, %v556
      %v1373 = vmul.f32 %v1314, %v557
      %v1374 = vmul.f32 %v1314, %v558
      %v1375 = vmul.f32 %v1318, %v559
      %v1376 = vmul.f32 %v1318, %v560
      %v1377 = vmul.f32 %v1322, %v561
      %v1378 = vmul.f32 %v1322, %v562
      %v1379 = vmul.f32 %v1326, %v563
      %v1380 = vmul.f32 %v1326, %v564
      %v1381 = vmul.f32 %v1330, %v565
      %v1382 = vmul.f32 %v1330, %v566
      %v1383 = vmul.f32 %v1334, %v567
      %v1384 = vmul.f32 %v1334, %v568
      %v1385 = vmul.f32 %v1338, %v569
      %v1386 = vmul.f32 %v1338, %v570
      %v1387 = vsel %vm800, %v1355, 0.0
      %1388 = vadd.xlane.f32.xlu0 %v1387
      %v1389 = vpop.xlane.xlu0 %1388
      %v1390 = vsel %vm800, %v1356, 0.0
      %1391 = vadd.xlane.f32.xlu0 %v1390
      %v1392 = vpop.xlane.xlu0 %1391
      %v1393 = vsel %vm800, %v1357, 0.0
      %1394 = vadd.xlane.f32.xlu0 %v1393
      %v1395 = vpop.xlane.xlu0 %1394
      %v1396 = vsel %vm800, %v1358, 0.0
      %1397 = vadd.xlane.f32.xlu0 %v1396
      %v1398 = vpop.xlane.xlu0 %1397
      %v1399 = vsel %vm800, %v1359, 0.0
      %1400 = vadd.xlane.f32.xlu0 %v1399
      %v1401 = vpop.xlane.xlu0 %1400
      %v1402 = vsel %vm800, %v1360, 0.0
      %1403 = vadd.xlane.f32.xlu0 %v1402
      %v1404 = vpop.xlane.xlu0 %1403
      %v1405 = vsel %vm800, %v1361, 0.0
      %1406 = vadd.xlane.f32.xlu0 %v1405
      %v1407 = vpop.xlane.xlu0 %1406
      %v1408 = vsel %vm800, %v1362, 0.0
      %1409 = vadd.xlane.f32.xlu0 %v1408
      %v1410 = vpop.xlane.xlu0 %1409
      %v1411 = vsel %vm800, %v1363, 0.0
      %1412 = vadd.xlane.f32.xlu0 %v1411
      %v1413 = vpop.xlane.xlu0 %1412
      %v1414 = vsel %vm800, %v1364, 0.0
      %1415 = vadd.xlane.f32.xlu0 %v1414
      %v1416 = vpop.xlane.xlu0 %1415
      %v1417 = vsel %vm800, %v1365, 0.0
      %1418 = vadd.xlane.f32.xlu0 %v1417
      %v1419 = vpop.xlane.xlu0 %1418
      %v1420 = vsel %vm800, %v1366, 0.0
      %1421 = vadd.xlane.f32.xlu0 %v1420
      %v1422 = vpop.xlane.xlu0 %1421
      %v1423 = vsel %vm800, %v1367, 0.0
      %1424 = vadd.xlane.f32.xlu0 %v1423
      %v1425 = vpop.xlane.xlu0 %1424
      %v1426 = vsel %vm800, %v1368, 0.0
      %1427 = vadd.xlane.f32.xlu0 %v1426
      %v1428 = vpop.xlane.xlu0 %1427
      %v1429 = vsel %vm800, %v1369, 0.0
      %1430 = vadd.xlane.f32.xlu0 %v1429
      %v1431 = vpop.xlane.xlu0 %1430
      %v1432 = vsel %vm800, %v1370, 0.0
      %1433 = vadd.xlane.f32.xlu0 %v1432
      %v1434 = vpop.xlane.xlu0 %1433
      %v1435 = vsel %vm800, %v1371, 0.0
      %1436 = vadd.xlane.f32.xlu0 %v1435
      %v1437 = vpop.xlane.xlu0 %1436
      %v1438 = vsel %vm800, %v1372, 0.0
      %1439 = vadd.xlane.f32.xlu0 %v1438
      %v1440 = vpop.xlane.xlu0 %1439
      %v1441 = vsel %vm800, %v1373, 0.0
      %1442 = vadd.xlane.f32.xlu0 %v1441
      %v1443 = vpop.xlane.xlu0 %1442
      %v1444 = vsel %vm800, %v1374, 0.0
      %1445 = vadd.xlane.f32.xlu0 %v1444
      %v1446 = vpop.xlane.xlu0 %1445
      %v1447 = vsel %vm800, %v1375, 0.0
      %1448 = vadd.xlane.f32.xlu0 %v1447
      %v1449 = vpop.xlane.xlu0 %1448
      %v1450 = vsel %vm800, %v1376, 0.0
      %1451 = vadd.xlane.f32.xlu0 %v1450
      %v1452 = vpop.xlane.xlu0 %1451
      %v1453 = vsel %vm800, %v1377, 0.0
      %1454 = vadd.xlane.f32.xlu0 %v1453
      %v1455 = vpop.xlane.xlu0 %1454
      %v1456 = vsel %vm800, %v1378, 0.0
      %1457 = vadd.xlane.f32.xlu0 %v1456
      %v1458 = vpop.xlane.xlu0 %1457
      %v1459 = vsel %vm800, %v1379, 0.0
      %1460 = vadd.xlane.f32.xlu0 %v1459
      %v1461 = vpop.xlane.xlu0 %1460
      %v1462 = vsel %vm800, %v1380, 0.0
      %1463 = vadd.xlane.f32.xlu0 %v1462
      %v1464 = vpop.xlane.xlu0 %1463
      %v1465 = vsel %vm800, %v1381, 0.0
      %1466 = vadd.xlane.f32.xlu0 %v1465
      %v1467 = vpop.xlane.xlu0 %1466
      %v1468 = vsel %vm800, %v1382, 0.0
      %1469 = vadd.xlane.f32.xlu0 %v1468
      %v1470 = vpop.xlane.xlu0 %1469
      %v1471 = vsel %vm800, %v1383, 0.0
      %1472 = vadd.xlane.f32.xlu0 %v1471
      %v1473 = vpop.xlane.xlu0 %1472
      %v1474 = vsel %vm800, %v1384, 0.0
      %1475 = vadd.xlane.f32.xlu0 %v1474
      %v1476 = vpop.xlane.xlu0 %1475
      %v1477 = vsel %vm800, %v1385, 0.0
      %1478 = vadd.xlane.f32.xlu0 %v1477
      %v1479 = vpop.xlane.xlu0 %1478
      %v1480 = vsel %vm800, %v1386, 0.0
      %1481 = vadd.xlane.f32.xlu0 %v1480
      %v1482 = vpop.xlane.xlu0 %1481
      %1483 = vrot.lane.b32.xlu0 %v587, 64
      %v1484 = vpop.permute.xlu0 %1483
      %v1518 = vlaneseq
      %v1519 = vshrl.u32 %v1518, 7
      %v1520 = vsub.s32 %v933, %v1519
      %v1521 = vrot.slane %v1389, %v1520
      %v1522 = vlaneseq
      %v1523 = vshrl.u32 %v1522, 7
      %v1524 = vsub.s32 %v938, %v1523
      %v1525 = vrot.slane %v1392, %v1524
      %v1526 = vsel %vm943, %v1525, %v1521
      %v1527 = vlaneseq
      %v1528 = vshrl.u32 %v1527, 7
      %v1529 = vsub.s32 %v933, %v1528
      %v1530 = vrot.slane %v1395, %v1529
      %v1531 = vlaneseq
      %v1532 = vshrl.u32 %v1531, 7
      %v1533 = vsub.s32 %v938, %v1532
      %v1534 = vrot.slane %v1398, %v1533
      %v1535 = vsel %vm943, %v1534, %v1530
      %v1536 = vlaneseq
      %v1537 = vshrl.u32 %v1536, 7
      %v1538 = vsub.s32 %v933, %v1537
      %v1539 = vrot.slane %v1401, %v1538
      %v1540 = vlaneseq
      %v1541 = vshrl.u32 %v1540, 7
      %v1542 = vsub.s32 %v938, %v1541
      %v1543 = vrot.slane %v1404, %v1542
      %v1544 = vsel %vm943, %v1543, %v1539
      %v1545 = vlaneseq
      %v1546 = vshrl.u32 %v1545, 7
      %v1547 = vsub.s32 %v933, %v1546
      %v1548 = vrot.slane %v1407, %v1547
      %v1549 = vlaneseq
      %v1550 = vshrl.u32 %v1549, 7
      %v1551 = vsub.s32 %v938, %v1550
      %v1552 = vrot.slane %v1410, %v1551
      %v1553 = vsel %vm943, %v1552, %v1548
      %v1554 = vlaneseq
      %v1555 = vshrl.u32 %v1554, 7
      %v1556 = vsub.s32 %v933, %v1555
      %v1557 = vrot.slane %v1413, %v1556
      %v1558 = vlaneseq
      %v1559 = vshrl.u32 %v1558, 7
      %v1560 = vsub.s32 %v938, %v1559
      %v1561 = vrot.slane %v1416, %v1560
      %v1562 = vsel %vm943, %v1561, %v1557
      %v1563 = vlaneseq
      %v1564 = vshrl.u32 %v1563, 7
      %v1565 = vsub.s32 %v933, %v1564
      %v1566 = vrot.slane %v1419, %v1565
      %v1567 = vlaneseq
      %v1568 = vshrl.u32 %v1567, 7
      %v1569 = vsub.s32 %v938, %v1568
      %v1570 = vrot.slane %v1422, %v1569
      %v1571 = vsel %vm943, %v1570, %v1566
      %v1572 = vlaneseq
      %v1573 = vshrl.u32 %v1572, 7
      %v1574 = vsub.s32 %v933, %v1573
      %v1575 = vrot.slane %v1425, %v1574
      %v1576 = vlaneseq
      %v1577 = vshrl.u32 %v1576, 7
      %v1578 = vsub.s32 %v938, %v1577
      %v1579 = vrot.slane %v1428, %v1578
      %v1580 = vsel %vm943, %v1579, %v1575
      %v1581 = vlaneseq
      %v1582 = vshrl.u32 %v1581, 7
      %v1583 = vsub.s32 %v933, %v1582
      %v1584 = vrot.slane %v1431, %v1583
      %v1585 = vlaneseq
      %v1586 = vshrl.u32 %v1585, 7
      %v1587 = vsub.s32 %v938, %v1586
      %v1588 = vrot.slane %v1434, %v1587
      %v1589 = vsel %vm943, %v1588, %v1584
      %v1590 = vlaneseq
      %v1591 = vshrl.u32 %v1590, 7
      %v1592 = vsub.s32 %v933, %v1591
      %v1593 = vrot.slane %v1437, %v1592
      %v1594 = vlaneseq
      %v1595 = vshrl.u32 %v1594, 7
      %v1596 = vsub.s32 %v938, %v1595
      %v1597 = vrot.slane %v1440, %v1596
      %v1598 = vsel %vm943, %v1597, %v1593
      %v1599 = vlaneseq
      %v1600 = vshrl.u32 %v1599, 7
      %v1601 = vsub.s32 %v933, %v1600
      %v1602 = vrot.slane %v1443, %v1601
      %v1603 = vlaneseq
      %v1604 = vshrl.u32 %v1603, 7
      %v1605 = vsub.s32 %v938, %v1604
      %v1606 = vrot.slane %v1446, %v1605
      %v1607 = vsel %vm943, %v1606, %v1602
      %v1608 = vlaneseq
      %v1609 = vshrl.u32 %v1608, 7
      %v1610 = vsub.s32 %v933, %v1609
      %v1611 = vrot.slane %v1449, %v1610
      %v1612 = vlaneseq
      %v1613 = vshrl.u32 %v1612, 7
      %v1614 = vsub.s32 %v938, %v1613
      %v1615 = vrot.slane %v1452, %v1614
      %v1616 = vsel %vm943, %v1615, %v1611
      %v1617 = vlaneseq
      %v1618 = vshrl.u32 %v1617, 7
      %v1619 = vsub.s32 %v933, %v1618
      %v1620 = vrot.slane %v1455, %v1619
      %v1621 = vlaneseq
      %v1622 = vshrl.u32 %v1621, 7
      %v1623 = vsub.s32 %v938, %v1622
      %v1624 = vrot.slane %v1458, %v1623
      %v1625 = vsel %vm943, %v1624, %v1620
      %v1626 = vlaneseq
      %v1627 = vshrl.u32 %v1626, 7
      %v1628 = vsub.s32 %v933, %v1627
      %v1629 = vrot.slane %v1461, %v1628
      %v1630 = vlaneseq
      %v1631 = vshrl.u32 %v1630, 7
      %v1632 = vsub.s32 %v938, %v1631
      %v1633 = vrot.slane %v1464, %v1632
      %v1634 = vsel %vm943, %v1633, %v1629
      %v1635 = vlaneseq
      %v1636 = vshrl.u32 %v1635, 7
      %v1637 = vsub.s32 %v933, %v1636
      %v1638 = vrot.slane %v1467, %v1637
      %v1639 = vlaneseq
      %v1640 = vshrl.u32 %v1639, 7
      %v1641 = vsub.s32 %v938, %v1640
      %v1642 = vrot.slane %v1470, %v1641
      %v1643 = vsel %vm943, %v1642, %v1638
      %v1644 = vlaneseq
      %v1645 = vshrl.u32 %v1644, 7
      %v1646 = vsub.s32 %v933, %v1645
      %v1647 = vrot.slane %v1473, %v1646
      %v1648 = vlaneseq
      %v1649 = vshrl.u32 %v1648, 7
      %v1650 = vsub.s32 %v938, %v1649
      %v1651 = vrot.slane %v1476, %v1650
      %v1652 = vsel %vm943, %v1651, %v1647
      %v1653 = vlaneseq
      %v1654 = vshrl.u32 %v1653, 7
      %v1655 = vsub.s32 %v933, %v1654
      %v1656 = vrot.slane %v1479, %v1655
      %v1657 = vlaneseq
      %v1658 = vshrl.u32 %v1657, 7
      %v1659 = vsub.s32 %v938, %v1658
      %v1660 = vrot.slane %v1482, %v1659
      %v1661 = vsel %vm943, %v1660, %v1656
      %v1662 = vsel %vm1080, %v1535, %v1526
      %v1663 = vsel %vm1082, %v1544, %v1662
      %v1664 = vsel %vm1084, %v1553, %v1663
      %v1665 = vsel %vm1086, %v1562, %v1664
      %v1666 = vsel %vm1088, %v1571, %v1665
      %v1667 = vsel %vm1090, %v1580, %v1666
      %v1668 = vsel %vm1092, %v1589, %v1667
      %v1669 = vsel %vm1080, %v1607, %v1598
      %v1670 = vsel %vm1082, %v1616, %v1669
      %v1671 = vsel %vm1084, %v1625, %v1670
      %v1672 = vsel %vm1086, %v1634, %v1671
      %v1673 = vsel %vm1088, %v1643, %v1672
      %v1674 = vsel %vm1090, %v1652, %v1673
      %v1675 = vsel %vm1092, %v1661, %v1674
      %v1679 = vsel %vm800, %v1174, 0
      %1681 = vmatprep.subr.bf16.mxu0 0
      %1682 = vmatpush1.bf16.msra.mxu0 0
      %1683 = vmatprep.subr.bf16.mxu0 0
      %1684 = vmatpush1.bf16.msra.mxu0 0
      %1685 = vmatprep.subr.bf16.mxu0 0
      %1686 = vmatpush1.bf16.msra.mxu0 0
      %1687 = vmatprep.subr.bf16.mxu0 0
      %1688 = vmatpush1.bf16.msra.mxu0 0
      %1689 = vmatprep.subr.bf16.mxu0 0
      %1690 = vmatpush1.bf16.msra.mxu0 0
      %1691 = vmatprep.subr.bf16.mxu0 0
      %1692 = vmatpush1.bf16.msra.mxu0 0
      %1693 = vmatprep.subr.bf16.mxu0 0
      %1694 = vmatpush1.bf16.msra.mxu0 0
      %1695 = vmatprep.subr.bf16.mxu0 0
      %1696 = vmatpush1.bf16.msra.mxu0 %v1484
      %1697 = vmatprep.subr.bf16.mxu0 0
      %1698 = vmatpush2.bf16.msra.mxu0 0
      %1699 = vmatprep.subr.bf16.mxu0 0
      %1700 = vmatpush2.bf16.msra.mxu0 0
      %1701 = vmatprep.subr.bf16.mxu0 0
      %1702 = vmatpush2.bf16.msra.mxu0 0
      %1703 = vmatprep.subr.bf16.mxu0 0
      %1704 = vmatpush2.bf16.msra.mxu0 0
      %1705 = vmatprep.subr.bf16.mxu0 0
      %1706 = vmatpush2.bf16.msra.mxu0 0
      %1707 = vmatprep.subr.bf16.mxu0 0
      %1708 = vmatpush2.bf16.msra.mxu0 0
      %1709 = vmatprep.subr.bf16.mxu0 0
      %1710 = vmatpush2.bf16.msra.mxu0 0
      %1711 = vmatprep.subr.bf16.mxu0 0
      %1712 = vmatpush2.bf16.msra.mxu0 0
      %1713 = vmatprep.mubr.bf16.mxu0 0
      %1714 = vmatmul.mubr.bf16.gmra.mxu0 %v1679
      %v1715 = vpop.f32.mrf.mxu0
      %v1716 = vadd.f32 %v1668, %v1715
      %v1717 = vpop.f32.mrf.mxu0
      %v1718 = vpop.f32.mrf.mxu0
      %v1719 = vadd.f32 %v1675, %v1718
      %v1720 = vpop.f32.mrf.mxu0
      %1721 = vdwg.mxu0
      %v1722 = vpack.c.bf16 %v1719, %v1716
      %v1723 = vpack.c.bf16 %v572, %v571
      %v1725 = vsel %vm800, %v1722, 0
      %1727 = vmatprep.subr.bf16.mxu0 0
      %1728 = vmatpush1.bf16.msra.mxu0 0
      %1729 = vmatprep.subr.bf16.mxu0 0
      %1730 = vmatpush1.bf16.msra.mxu0 0
      %1731 = vmatprep.subr.bf16.mxu0 0
      %1732 = vmatpush1.bf16.msra.mxu0 0
      %1733 = vmatprep.subr.bf16.mxu0 0
      %1734 = vmatpush1.bf16.msra.mxu0 0
      %1735 = vmatprep.subr.bf16.mxu0 0
      %1736 = vmatpush1.bf16.msra.mxu0 0
      %1737 = vmatprep.subr.bf16.mxu0 0
      %1738 = vmatpush1.bf16.msra.mxu0 0
      %1739 = vmatprep.subr.bf16.mxu0 0
      %1740 = vmatpush1.bf16.msra.mxu0 0
      %1741 = vmatprep.subr.bf16.mxu0 0
      %1742 = vmatpush1.bf16.msra.mxu0 %v1723
      %1743 = vmatprep.subr.bf16.mxu0 0
      %1744 = vmatpush2.bf16.msra.mxu0 0
      %1745 = vmatprep.subr.bf16.mxu0 0
      %1746 = vmatpush2.bf16.msra.mxu0 0
      %1747 = vmatprep.subr.bf16.mxu0 0
      %1748 = vmatpush2.bf16.msra.mxu0 0
      %1749 = vmatprep.subr.bf16.mxu0 0
      %1750 = vmatpush2.bf16.msra.mxu0 0
      %1751 = vmatprep.subr.bf16.mxu0 0
      %1752 = vmatpush2.bf16.msra.mxu0 0
      %1753 = vmatprep.subr.bf16.mxu0 0
      %1754 = vmatpush2.bf16.msra.mxu0 0
      %1755 = vmatprep.subr.bf16.mxu0 0
      %1756 = vmatpush2.bf16.msra.mxu0 0
      %1757 = vmatprep.subr.bf16.mxu0 0
      %1758 = vmatpush2.bf16.msra.mxu0 0
      %1759 = vmatprep.mubr.bf16.mxu0 0
      %1760 = vmatmul.mubr.bf16.gmra.mxu0 %v1725
      %v1761 = vpop.f32.mrf.mxu0
      %v1762 = vadd.f32 0.0, %v1761
      %v1763 = vpop.f32.mrf.mxu0
      %v1764 = vpop.f32.mrf.mxu0
      %v1765 = vadd.f32 0.0, %v1764
      %v1766 = vpop.f32.mrf.mxu0
      %1767 = vdwg.mxu0
      %v1768 = vadd.f32 %v582, %v1762
      %v1769 = vadd.f32 %v583, %v1765
      %1802 = vrot.lane.b32.xlu0 %v507, 16
      %v1803 = vpop.permute.xlu0 %1802
      %1804 = vrot.lane.b32.xlu0 %v508, 16
      %v1805 = vpop.permute.xlu0 %1804
      %1806 = vrot.lane.b32.xlu0 %v509, 16
      %v1807 = vpop.permute.xlu0 %1806
      %1808 = vrot.lane.b32.xlu0 %v510, 16
      %v1809 = vpop.permute.xlu0 %1808
      %1810 = vrot.lane.b32.xlu0 %v511, 16
      %v1811 = vpop.permute.xlu0 %1810
      %1812 = vrot.lane.b32.xlu0 %v512, 16
      %v1813 = vpop.permute.xlu0 %1812
      %1814 = vrot.lane.b32.xlu0 %v513, 16
      %v1815 = vpop.permute.xlu0 %1814
      %1816 = vrot.lane.b32.xlu0 %v514, 16
      %v1817 = vpop.permute.xlu0 %1816
      %1818 = vrot.lane.b32.xlu0 %v515, 16
      %v1819 = vpop.permute.xlu0 %1818
      %1820 = vrot.lane.b32.xlu0 %v516, 16
      %v1821 = vpop.permute.xlu0 %1820
      %1822 = vrot.lane.b32.xlu0 %v517, 16
      %v1823 = vpop.permute.xlu0 %1822
      %1824 = vrot.lane.b32.xlu0 %v518, 16
      %v1825 = vpop.permute.xlu0 %1824
      %1826 = vrot.lane.b32.xlu0 %v519, 16
      %v1827 = vpop.permute.xlu0 %1826
      %1828 = vrot.lane.b32.xlu0 %v520, 16
      %v1829 = vpop.permute.xlu0 %1828
      %1830 = vrot.lane.b32.xlu0 %v521, 16
      %v1831 = vpop.permute.xlu0 %1830
      %1832 = vrot.lane.b32.xlu0 %v522, 16
      %v1833 = vpop.permute.xlu0 %1832
      %1834 = vrot.lane.b32.xlu0 %v523, 16
      %v1835 = vpop.permute.xlu0 %1834
      %1836 = vrot.lane.b32.xlu0 %v524, 16
      %v1837 = vpop.permute.xlu0 %1836
      %1838 = vrot.lane.b32.xlu0 %v525, 16
      %v1839 = vpop.permute.xlu0 %1838
      %1840 = vrot.lane.b32.xlu0 %v526, 16
      %v1841 = vpop.permute.xlu0 %1840
      %1842 = vrot.lane.b32.xlu0 %v527, 16
      %v1843 = vpop.permute.xlu0 %1842
      %1844 = vrot.lane.b32.xlu0 %v528, 16
      %v1845 = vpop.permute.xlu0 %1844
      %1846 = vrot.lane.b32.xlu0 %v529, 16
      %v1847 = vpop.permute.xlu0 %1846
      %1848 = vrot.lane.b32.xlu0 %v530, 16
      %v1849 = vpop.permute.xlu0 %1848
      %1850 = vrot.lane.b32.xlu0 %v531, 16
      %v1851 = vpop.permute.xlu0 %1850
      %1852 = vrot.lane.b32.xlu0 %v532, 16
      %v1853 = vpop.permute.xlu0 %1852
      %1854 = vrot.lane.b32.xlu0 %v533, 16
      %v1855 = vpop.permute.xlu0 %1854
      %1856 = vrot.lane.b32.xlu0 %v534, 16
      %v1857 = vpop.permute.xlu0 %1856
      %1858 = vrot.lane.b32.xlu0 %v535, 16
      %v1859 = vpop.permute.xlu0 %1858
      %1860 = vrot.lane.b32.xlu0 %v536, 16
      %v1861 = vpop.permute.xlu0 %1860
      %1862 = vrot.lane.b32.xlu0 %v537, 16
      %v1863 = vpop.permute.xlu0 %1862
      %1864 = vrot.lane.b32.xlu0 %v538, 16
      %v1865 = vpop.permute.xlu0 %1864
      %v1898 = vmul.f32 %v691, %v1803
      %v1899 = vmul.f32 %v691, %v1805
      %v1900 = vmul.f32 %v695, %v1807
      %v1901 = vmul.f32 %v695, %v1809
      %v1902 = vmul.f32 %v699, %v1811
      %v1903 = vmul.f32 %v699, %v1813
      %v1904 = vmul.f32 %v703, %v1815
      %v1905 = vmul.f32 %v703, %v1817
      %v1906 = vmul.f32 %v707, %v1819
      %v1907 = vmul.f32 %v707, %v1821
      %v1908 = vmul.f32 %v711, %v1823
      %v1909 = vmul.f32 %v711, %v1825
      %v1910 = vmul.f32 %v715, %v1827
      %v1911 = vmul.f32 %v715, %v1829
      %v1912 = vmul.f32 %v719, %v1831
      %v1913 = vmul.f32 %v719, %v1833
      %v1914 = vmul.f32 %v723, %v1835
      %v1915 = vmul.f32 %v723, %v1837
      %v1916 = vmul.f32 %v727, %v1839
      %v1917 = vmul.f32 %v727, %v1841
      %v1918 = vmul.f32 %v731, %v1843
      %v1919 = vmul.f32 %v731, %v1845
      %v1920 = vmul.f32 %v735, %v1847
      %v1921 = vmul.f32 %v735, %v1849
      %v1922 = vmul.f32 %v739, %v1851
      %v1923 = vmul.f32 %v739, %v1853
      %v1924 = vmul.f32 %v743, %v1855
      %v1925 = vmul.f32 %v743, %v1857
      %v1926 = vmul.f32 %v747, %v1859
      %v1927 = vmul.f32 %v747, %v1861
      %v1928 = vmul.f32 %v751, %v1863
      %v1929 = vmul.f32 %v751, %v1865
      %1962 = vrot.lane.b32.xlu0 %v1898, 112
      %v1963 = vpop.permute.xlu0 %1962
      %1964 = vrot.lane.b32.xlu0 %v1899, 112
      %v1965 = vpop.permute.xlu0 %1964
      %1966 = vrot.lane.b32.xlu0 %v1900, 112
      %v1967 = vpop.permute.xlu0 %1966
      %1968 = vrot.lane.b32.xlu0 %v1901, 112
      %v1969 = vpop.permute.xlu0 %1968
      %1970 = vrot.lane.b32.xlu0 %v1902, 112
      %v1971 = vpop.permute.xlu0 %1970
      %1972 = vrot.lane.b32.xlu0 %v1903, 112
      %v1973 = vpop.permute.xlu0 %1972
      %1974 = vrot.lane.b32.xlu0 %v1904, 112
      %v1975 = vpop.permute.xlu0 %1974
      %1976 = vrot.lane.b32.xlu0 %v1905, 112
      %v1977 = vpop.permute.xlu0 %1976
      %1978 = vrot.lane.b32.xlu0 %v1906, 112
      %v1979 = vpop.permute.xlu0 %1978
      %1980 = vrot.lane.b32.xlu0 %v1907, 112
      %v1981 = vpop.permute.xlu0 %1980
      %1982 = vrot.lane.b32.xlu0 %v1908, 112
      %v1983 = vpop.permute.xlu0 %1982
      %1984 = vrot.lane.b32.xlu0 %v1909, 112
      %v1985 = vpop.permute.xlu0 %1984
      %1986 = vrot.lane.b32.xlu0 %v1910, 112
      %v1987 = vpop.permute.xlu0 %1986
      %1988 = vrot.lane.b32.xlu0 %v1911, 112
      %v1989 = vpop.permute.xlu0 %1988
      %1990 = vrot.lane.b32.xlu0 %v1912, 112
      %v1991 = vpop.permute.xlu0 %1990
      %1992 = vrot.lane.b32.xlu0 %v1913, 112
      %v1993 = vpop.permute.xlu0 %1992
      %1994 = vrot.lane.b32.xlu0 %v1914, 112
      %v1995 = vpop.permute.xlu0 %1994
      %1996 = vrot.lane.b32.xlu0 %v1915, 112
      %v1997 = vpop.permute.xlu0 %1996
      %1998 = vrot.lane.b32.xlu0 %v1916, 112
      %v1999 = vpop.permute.xlu0 %1998
      %2000 = vrot.lane.b32.xlu0 %v1917, 112
      %v2001 = vpop.permute.xlu0 %2000
      %2002 = vrot.lane.b32.xlu0 %v1918, 112
      %v2003 = vpop.permute.xlu0 %2002
      %2004 = vrot.lane.b32.xlu0 %v1919, 112
      %v2005 = vpop.permute.xlu0 %2004
      %2006 = vrot.lane.b32.xlu0 %v1920, 112
      %v2007 = vpop.permute.xlu0 %2006
      %2008 = vrot.lane.b32.xlu0 %v1921, 112
      %v2009 = vpop.permute.xlu0 %2008
      %2010 = vrot.lane.b32.xlu0 %v1922, 112
      %v2011 = vpop.permute.xlu0 %2010
      %2012 = vrot.lane.b32.xlu0 %v1923, 112
      %v2013 = vpop.permute.xlu0 %2012
      %2014 = vrot.lane.b32.xlu0 %v1924, 112
      %v2015 = vpop.permute.xlu0 %2014
      %2016 = vrot.lane.b32.xlu0 %v1925, 112
      %v2017 = vpop.permute.xlu0 %2016
      %2018 = vrot.lane.b32.xlu0 %v1926, 112
      %v2019 = vpop.permute.xlu0 %2018
      %2020 = vrot.lane.b32.xlu0 %v1927, 112
      %v2021 = vpop.permute.xlu0 %2020
      %2022 = vrot.lane.b32.xlu0 %v1928, 112
      %v2023 = vpop.permute.xlu0 %2022
      %2024 = vrot.lane.b32.xlu0 %v1929, 112
      %v2025 = vpop.permute.xlu0 %2024
      %v2058 = vsel %vm800, %v1963, 0.0
      %2059 = vadd.xlane.f32.xlu0 %v2058
      %v2060 = vpop.xlane.xlu0 %2059
      %v2061 = vsel %vm800, %v1965, 0.0
      %2062 = vadd.xlane.f32.xlu0 %v2061
      %v2063 = vpop.xlane.xlu0 %2062
      %v2064 = vsel %vm800, %v1967, 0.0
      %2065 = vadd.xlane.f32.xlu0 %v2064
      %v2066 = vpop.xlane.xlu0 %2065
      %v2067 = vsel %vm800, %v1969, 0.0
      %2068 = vadd.xlane.f32.xlu0 %v2067
      %v2069 = vpop.xlane.xlu0 %2068
      %v2070 = vsel %vm800, %v1971, 0.0
      %2071 = vadd.xlane.f32.xlu0 %v2070
      %v2072 = vpop.xlane.xlu0 %2071
      %v2073 = vsel %vm800, %v1973, 0.0
      %2074 = vadd.xlane.f32.xlu0 %v2073
      %v2075 = vpop.xlane.xlu0 %2074
      %v2076 = vsel %vm800, %v1975, 0.0
      %2077 = vadd.xlane.f32.xlu0 %v2076
      %v2078 = vpop.xlane.xlu0 %2077
      %v2079 = vsel %vm800, %v1977, 0.0
      %2080 = vadd.xlane.f32.xlu0 %v2079
      %v2081 = vpop.xlane.xlu0 %2080
      %v2082 = vsel %vm800, %v1979, 0.0
      %2083 = vadd.xlane.f32.xlu0 %v2082
      %v2084 = vpop.xlane.xlu0 %2083
      %v2085 = vsel %vm800, %v1981, 0.0
      %2086 = vadd.xlane.f32.xlu0 %v2085
      %v2087 = vpop.xlane.xlu0 %2086
      %v2088 = vsel %vm800, %v1983, 0.0
      %2089 = vadd.xlane.f32.xlu0 %v2088
      %v2090 = vpop.xlane.xlu0 %2089
      %v2091 = vsel %vm800, %v1985, 0.0
      %2092 = vadd.xlane.f32.xlu0 %v2091
      %v2093 = vpop.xlane.xlu0 %2092
      %v2094 = vsel %vm800, %v1987, 0.0
      %2095 = vadd.xlane.f32.xlu0 %v2094
      %v2096 = vpop.xlane.xlu0 %2095
      %v2097 = vsel %vm800, %v1989, 0.0
      %2098 = vadd.xlane.f32.xlu0 %v2097
      %v2099 = vpop.xlane.xlu0 %2098
      %v2100 = vsel %vm800, %v1991, 0.0
      %2101 = vadd.xlane.f32.xlu0 %v2100
      %v2102 = vpop.xlane.xlu0 %2101
      %v2103 = vsel %vm800, %v1993, 0.0
      %2104 = vadd.xlane.f32.xlu0 %v2103
      %v2105 = vpop.xlane.xlu0 %2104
      %v2106 = vsel %vm800, %v1995, 0.0
      %2107 = vadd.xlane.f32.xlu0 %v2106
      %v2108 = vpop.xlane.xlu0 %2107
      %v2109 = vsel %vm800, %v1997, 0.0
      %2110 = vadd.xlane.f32.xlu0 %v2109
      %v2111 = vpop.xlane.xlu0 %2110
      %v2112 = vsel %vm800, %v1999, 0.0
      %2113 = vadd.xlane.f32.xlu0 %v2112
      %v2114 = vpop.xlane.xlu0 %2113
      %v2115 = vsel %vm800, %v2001, 0.0
      %2116 = vadd.xlane.f32.xlu0 %v2115
      %v2117 = vpop.xlane.xlu0 %2116
      %v2118 = vsel %vm800, %v2003, 0.0
      %2119 = vadd.xlane.f32.xlu0 %v2118
      %v2120 = vpop.xlane.xlu0 %2119
      %v2121 = vsel %vm800, %v2005, 0.0
      %2122 = vadd.xlane.f32.xlu0 %v2121
      %v2123 = vpop.xlane.xlu0 %2122
      %v2124 = vsel %vm800, %v2007, 0.0
      %2125 = vadd.xlane.f32.xlu0 %v2124
      %v2126 = vpop.xlane.xlu0 %2125
      %v2127 = vsel %vm800, %v2009, 0.0
      %2128 = vadd.xlane.f32.xlu0 %v2127
      %v2129 = vpop.xlane.xlu0 %2128
      %v2130 = vsel %vm800, %v2011, 0.0
      %2131 = vadd.xlane.f32.xlu0 %v2130
      %v2132 = vpop.xlane.xlu0 %2131
      %v2133 = vsel %vm800, %v2013, 0.0
      %2134 = vadd.xlane.f32.xlu0 %v2133
      %v2135 = vpop.xlane.xlu0 %2134
      %v2136 = vsel %vm800, %v2015, 0.0
      %2137 = vadd.xlane.f32.xlu0 %v2136
      %v2138 = vpop.xlane.xlu0 %2137
      %v2139 = vsel %vm800, %v2017, 0.0
      %2140 = vadd.xlane.f32.xlu0 %v2139
      %v2141 = vpop.xlane.xlu0 %2140
      %v2142 = vsel %vm800, %v2019, 0.0
      %2143 = vadd.xlane.f32.xlu0 %v2142
      %v2144 = vpop.xlane.xlu0 %2143
      %v2145 = vsel %vm800, %v2021, 0.0
      %2146 = vadd.xlane.f32.xlu0 %v2145
      %v2147 = vpop.xlane.xlu0 %2146
      %v2148 = vsel %vm800, %v2023, 0.0
      %2149 = vadd.xlane.f32.xlu0 %v2148
      %v2150 = vpop.xlane.xlu0 %2149
      %v2151 = vsel %vm800, %v2025, 0.0
      %2152 = vadd.xlane.f32.xlu0 %v2151
      %v2153 = vpop.xlane.xlu0 %2152
      %2155 = vrot.lane.b32.xlu0 %v586, 112
      %v2156 = vpop.permute.xlu0 %2155
      %2157 = vrot.lane.b32.xlu0 %v587, 80
      %v2158 = vpop.permute.xlu0 %2157
      %v2191 = vlaneseq
      %v2192 = vshrl.u32 %v2191, 7
      %v2193 = vsub.s32 %v933, %v2192
      %v2194 = vrot.slane %v2060, %v2193
      %v2195 = vlaneseq
      %v2196 = vshrl.u32 %v2195, 7
      %v2197 = vsub.s32 %v938, %v2196
      %v2198 = vrot.slane %v2063, %v2197
      %v2199 = vsel %vm943, %v2198, %v2194
      %v2200 = vlaneseq
      %v2201 = vshrl.u32 %v2200, 7
      %v2202 = vsub.s32 %v933, %v2201
      %v2203 = vrot.slane %v2066, %v2202
      %v2204 = vlaneseq
      %v2205 = vshrl.u32 %v2204, 7
      %v2206 = vsub.s32 %v938, %v2205
      %v2207 = vrot.slane %v2069, %v2206
      %v2208 = vsel %vm943, %v2207, %v2203
      %v2209 = vlaneseq
      %v2210 = vshrl.u32 %v2209, 7
      %v2211 = vsub.s32 %v933, %v2210
      %v2212 = vrot.slane %v2072, %v2211
      %v2213 = vlaneseq
      %v2214 = vshrl.u32 %v2213, 7
      %v2215 = vsub.s32 %v938, %v2214
      %v2216 = vrot.slane %v2075, %v2215
      %v2217 = vsel %vm943, %v2216, %v2212
      %v2218 = vlaneseq
      %v2219 = vshrl.u32 %v2218, 7
      %v2220 = vsub.s32 %v933, %v2219
      %v2221 = vrot.slane %v2078, %v2220
      %v2222 = vlaneseq
      %v2223 = vshrl.u32 %v2222, 7
      %v2224 = vsub.s32 %v938, %v2223
      %v2225 = vrot.slane %v2081, %v2224
      %v2226 = vsel %vm943, %v2225, %v2221
      %v2227 = vlaneseq
      %v2228 = vshrl.u32 %v2227, 7
      %v2229 = vsub.s32 %v933, %v2228
      %v2230 = vrot.slane %v2084, %v2229
      %v2231 = vlaneseq
      %v2232 = vshrl.u32 %v2231, 7
      %v2233 = vsub.s32 %v938, %v2232
      %v2234 = vrot.slane %v2087, %v2233
      %v2235 = vsel %vm943, %v2234, %v2230
      %v2236 = vlaneseq
      %v2237 = vshrl.u32 %v2236, 7
      %v2238 = vsub.s32 %v933, %v2237
      %v2239 = vrot.slane %v2090, %v2238
      %v2240 = vlaneseq
      %v2241 = vshrl.u32 %v2240, 7
      %v2242 = vsub.s32 %v938, %v2241
      %v2243 = vrot.slane %v2093, %v2242
      %v2244 = vsel %vm943, %v2243, %v2239
      %v2245 = vlaneseq
      %v2246 = vshrl.u32 %v2245, 7
      %v2247 = vsub.s32 %v933, %v2246
      %v2248 = vrot.slane %v2096, %v2247
      %v2249 = vlaneseq
      %v2250 = vshrl.u32 %v2249, 7
      %v2251 = vsub.s32 %v938, %v2250
      %v2252 = vrot.slane %v2099, %v2251
      %v2253 = vsel %vm943, %v2252, %v2248
      %v2254 = vlaneseq
      %v2255 = vshrl.u32 %v2254, 7
      %v2256 = vsub.s32 %v933, %v2255
      %v2257 = vrot.slane %v2102, %v2256
      %v2258 = vlaneseq
      %v2259 = vshrl.u32 %v2258, 7
      %v2260 = vsub.s32 %v938, %v2259
      %v2261 = vrot.slane %v2105, %v2260
      %v2262 = vsel %vm943, %v2261, %v2257
      %v2263 = vlaneseq
      %v2264 = vshrl.u32 %v2263, 7
      %v2265 = vsub.s32 %v933, %v2264
      %v2266 = vrot.slane %v2108, %v2265
      %v2267 = vlaneseq
      %v2268 = vshrl.u32 %v2267, 7
      %v2269 = vsub.s32 %v938, %v2268
      %v2270 = vrot.slane %v2111, %v2269
      %v2271 = vsel %vm943, %v2270, %v2266
      %v2272 = vlaneseq
      %v2273 = vshrl.u32 %v2272, 7
      %v2274 = vsub.s32 %v933, %v2273
      %v2275 = vrot.slane %v2114, %v2274
      %v2276 = vlaneseq
      %v2277 = vshrl.u32 %v2276, 7
      %v2278 = vsub.s32 %v938, %v2277
      %v2279 = vrot.slane %v2117, %v2278
      %v2280 = vsel %vm943, %v2279, %v2275
      %v2281 = vlaneseq
      %v2282 = vshrl.u32 %v2281, 7
      %v2283 = vsub.s32 %v933, %v2282
      %v2284 = vrot.slane %v2120, %v2283
      %v2285 = vlaneseq
      %v2286 = vshrl.u32 %v2285, 7
      %v2287 = vsub.s32 %v938, %v2286
      %v2288 = vrot.slane %v2123, %v2287
      %v2289 = vsel %vm943, %v2288, %v2284
      %v2290 = vlaneseq
      %v2291 = vshrl.u32 %v2290, 7
      %v2292 = vsub.s32 %v933, %v2291
      %v2293 = vrot.slane %v2126, %v2292
      %v2294 = vlaneseq
      %v2295 = vshrl.u32 %v2294, 7
      %v2296 = vsub.s32 %v938, %v2295
      %v2297 = vrot.slane %v2129, %v2296
      %v2298 = vsel %vm943, %v2297, %v2293
      %v2299 = vlaneseq
      %v2300 = vshrl.u32 %v2299, 7
      %v2301 = vsub.s32 %v933, %v2300
      %v2302 = vrot.slane %v2132, %v2301
      %v2303 = vlaneseq
      %v2304 = vshrl.u32 %v2303, 7
      %v2305 = vsub.s32 %v938, %v2304
      %v2306 = vrot.slane %v2135, %v2305
      %v2307 = vsel %vm943, %v2306, %v2302
      %v2308 = vlaneseq
      %v2309 = vshrl.u32 %v2308, 7
      %v2310 = vsub.s32 %v933, %v2309
      %v2311 = vrot.slane %v2138, %v2310
      %v2312 = vlaneseq
      %v2313 = vshrl.u32 %v2312, 7
      %v2314 = vsub.s32 %v938, %v2313
      %v2315 = vrot.slane %v2141, %v2314
      %v2316 = vsel %vm943, %v2315, %v2311
      %v2317 = vlaneseq
      %v2318 = vshrl.u32 %v2317, 7
      %v2319 = vsub.s32 %v933, %v2318
      %v2320 = vrot.slane %v2144, %v2319
      %v2321 = vlaneseq
      %v2322 = vshrl.u32 %v2321, 7
      %v2323 = vsub.s32 %v938, %v2322
      %v2324 = vrot.slane %v2147, %v2323
      %v2325 = vsel %vm943, %v2324, %v2320
      %v2326 = vlaneseq
      %v2327 = vshrl.u32 %v2326, 7
      %v2328 = vsub.s32 %v933, %v2327
      %v2329 = vrot.slane %v2150, %v2328
      %v2330 = vlaneseq
      %v2331 = vshrl.u32 %v2330, 7
      %v2332 = vsub.s32 %v938, %v2331
      %v2333 = vrot.slane %v2153, %v2332
      %v2334 = vsel %vm943, %v2333, %v2329
      %v2335 = vsel %vm1080, %v2208, %v2199
      %v2336 = vsel %vm1082, %v2217, %v2335
      %v2337 = vsel %vm1084, %v2226, %v2336
      %v2338 = vsel %vm1086, %v2235, %v2337
      %v2339 = vsel %vm1088, %v2244, %v2338
      %v2340 = vsel %vm1090, %v2253, %v2339
      %v2341 = vsel %vm1092, %v2262, %v2340
      %v2342 = vsel %vm1080, %v2280, %v2271
      %v2343 = vsel %vm1082, %v2289, %v2342
      %v2344 = vsel %vm1084, %v2298, %v2343
      %v2345 = vsel %vm1086, %v2307, %v2344
      %v2346 = vsel %vm1088, %v2316, %v2345
      %v2347 = vsel %vm1090, %v2325, %v2346
      %v2348 = vsel %vm1092, %v2334, %v2347
      %v2352 = vsel %vm800, %v2156, 0
      %v2355 = vsel %vm800, %v2158, 0
      %2357 = vmatprep.subr.bf16.mxu0 0
      %2358 = vmatpush1.bf16.xpose.msra.mxu0 0
      %2359 = vmatprep.subr.bf16.mxu0 0
      %2360 = vmatpush1.bf16.xpose.msra.mxu0 0
      %2361 = vmatprep.subr.bf16.mxu0 0
      %2362 = vmatpush1.bf16.xpose.msra.mxu0 0
      %2363 = vmatprep.subr.bf16.mxu0 0
      %2364 = vmatpush1.bf16.xpose.msra.mxu0 0
      %2365 = vmatprep.subr.bf16.mxu0 0
      %2366 = vmatpush1.bf16.xpose.msra.mxu0 0
      %2367 = vmatprep.subr.bf16.mxu0 0
      %2368 = vmatpush1.bf16.xpose.msra.mxu0 0
      %2369 = vmatprep.subr.bf16.mxu0 0
      %2370 = vmatpush1.bf16.xpose.msra.mxu0 0
      %2371 = vmatprep.subr.bf16.mxu0 0
      %2372 = vmatpush1.bf16.xpose.msra.mxu0 %v2355
      %2373 = vmatprep.subr.bf16.mxu0 0
      %2374 = vmatpush2.bf16.xpose.msra.mxu0 0
      %2375 = vmatprep.subr.bf16.mxu0 0
      %2376 = vmatpush2.bf16.xpose.msra.mxu0 0
      %2377 = vmatprep.subr.bf16.mxu0 0
      %2378 = vmatpush2.bf16.xpose.msra.mxu0 0
      %2379 = vmatprep.subr.bf16.mxu0 0
      %2380 = vmatpush2.bf16.xpose.msra.mxu0 0
      %2381 = vmatprep.subr.bf16.mxu0 0
      %2382 = vmatpush2.bf16.xpose.msra.mxu0 0
      %2383 = vmatprep.subr.bf16.mxu0 0
      %2384 = vmatpush2.bf16.xpose.msra.mxu0 0
      %2385 = vmatprep.subr.bf16.mxu0 0
      %2386 = vmatpush2.bf16.xpose.msra.mxu0 0
      %2387 = vmatprep.subr.bf16.mxu0 0
      %2388 = vmatpush2.bf16.xpose.msra.mxu0 0
      %2389 = vmatprep.mubr.bf16.mxu0 0
      %2390 = vmatmul.mubr.bf16.gmra.mxu0 %v2352
      %v2391 = vpop.f32.mrf.mxu0
      %v2392 = vadd.f32 %v2341, %v2391
      %v2393 = vpop.f32.mrf.mxu0
      %v2394 = vpop.f32.mrf.mxu0
      %v2395 = vadd.f32 %v2348, %v2394
      %v2396 = vpop.f32.mrf.mxu0
      %2397 = vdwg.mxu0
      %v2398 = vsel %vm505, %v2392, -10000.0
      %v2399 = vsel %vm506, %v2395, -10000.0
      %v2400 = vsel %vm800, %v2398, -inf
      %2401 = vmax.xlane.f32.xlu0 %v2400
      %v2402 = vpop.xlane.xlu0 %2401
      %v2403 = vsel %vm800, %v2399, -inf
      %2404 = vmax.xlane.f32.xlu0 %v2403
      %v2405 = vpop.xlane.xlu0 %2404
      %v2406 = vsub.f32 %v2398, %v2402
      %v2407 = vsub.f32 %v2399, %v2405
      %v2408 = vmul.f32 %v2406, 1.442695
      %v2409 = vpow.pop %v2408
      %v2410 = vmul.f32 %v2407, 1.442695
      %v2411 = vpow.pop %v2410
      %v2412 = vsel %vm800, %v2409, 0.0
      %2413 = vadd.xlane.f32.xlu0 %v2412
      %v2414 = vpop.xlane.xlu0 %2413
      %v2415 = vsel %vm800, %v2411, 0.0
      %2416 = vadd.xlane.f32.xlu0 %v2415
      %v2417 = vpop.xlane.xlu0 %2416
      %v2418 = vrcp.pop %v2414
      %v2419 = vrcp.pop %v2417
      %v2420 = vmul.f32 %v2409, %v2418
      %v2421 = vmul.f32 %v2411, %v2419
      %v2422 = vpack.c.bf16 %v2421, %v2420
      %v2425 = vcombine.high %v2420, %v2420
      %v2427 = vunpack.c.l.s4 1966171168
      %v2428 = vunpack.c.0.s8 %v2427
      %v2429 = vlaneseq
      %v2430 = vshrl.u32 %v2429, 7
      %v2431 = vsub.s32 %v2428, %v2430
      %v2432 = vrot.slane %v2420, %v2431
      %v2434 = vunpack.c.l.s4 1966171168
      %v2435 = vunpack.c.0.s8 %v2434
      %v2436 = vlaneseq
      %v2437 = vshrl.u32 %v2436, 7
      %v2438 = vsub.s32 %v2435, %v2437
      %v2439 = vrot.slane %v2425, %v2438
      %v2440 = vcombine.high %v2432, %v2432
      %v2441 = vcombine.high %v2439, %v2439
      %v2443 = vunpack.c.l.s4 1966171168
      %v2444 = vunpack.c.0.s8 %v2443
      %v2445 = vlaneseq
      %v2446 = vshrl.u32 %v2445, 7
      %v2447 = vsub.s32 %v2444, %v2446
      %v2448 = vrot.slane %v2432, %v2447
      %v2450 = vunpack.c.l.s4 1966171168
      %v2451 = vunpack.c.0.s8 %v2450
      %v2452 = vlaneseq
      %v2453 = vshrl.u32 %v2452, 7
      %v2454 = vsub.s32 %v2451, %v2453
      %v2455 = vrot.slane %v2439, %v2454
      %v2457 = vunpack.c.l.s4 1966171168
      %v2458 = vunpack.c.0.s8 %v2457
      %v2459 = vlaneseq
      %v2460 = vshrl.u32 %v2459, 7
      %v2461 = vsub.s32 %v2458, %v2460
      %v2462 = vrot.slane %v2440, %v2461
      %v2464 = vunpack.c.l.s4 1966171168
      %v2465 = vunpack.c.0.s8 %v2464
      %v2466 = vlaneseq
      %v2467 = vshrl.u32 %v2466, 7
      %v2468 = vsub.s32 %v2465, %v2467
      %v2469 = vrot.slane %v2441, %v2468
      %v2470 = vcombine.high %v2448, %v2448
      %v2471 = vcombine.high %v2455, %v2455
      %v2472 = vcombine.high %v2462, %v2462
      %v2473 = vcombine.high %v2469, %v2469
      %v2474 = vcombine.high %v2421, %v2421
      %v2476 = vunpack.c.l.s4 1966171168
      %v2477 = vunpack.c.0.s8 %v2476
      %v2478 = vlaneseq
      %v2479 = vshrl.u32 %v2478, 7
      %v2480 = vsub.s32 %v2477, %v2479
      %v2481 = vrot.slane %v2421, %v2480
      %v2483 = vunpack.c.l.s4 1966171168
      %v2484 = vunpack.c.0.s8 %v2483
      %v2485 = vlaneseq
      %v2486 = vshrl.u32 %v2485, 7
      %v2487 = vsub.s32 %v2484, %v2486
      %v2488 = vrot.slane %v2474, %v2487
      %v2489 = vcombine.high %v2481, %v2481
      %v2490 = vcombine.high %v2488, %v2488
      %v2492 = vunpack.c.l.s4 1966171168
      %v2493 = vunpack.c.0.s8 %v2492
      %v2494 = vlaneseq
      %v2495 = vshrl.u32 %v2494, 7
      %v2496 = vsub.s32 %v2493, %v2495
      %v2497 = vrot.slane %v2481, %v2496
      %v2499 = vunpack.c.l.s4 1966171168
      %v2500 = vunpack.c.0.s8 %v2499
      %v2501 = vlaneseq
      %v2502 = vshrl.u32 %v2501, 7
      %v2503 = vsub.s32 %v2500, %v2502
      %v2504 = vrot.slane %v2488, %v2503
      %v2506 = vunpack.c.l.s4 1966171168
      %v2507 = vunpack.c.0.s8 %v2506
      %v2508 = vlaneseq
      %v2509 = vshrl.u32 %v2508, 7
      %v2510 = vsub.s32 %v2507, %v2509
      %v2511 = vrot.slane %v2489, %v2510
      %v2513 = vunpack.c.l.s4 1966171168
      %v2514 = vunpack.c.0.s8 %v2513
      %v2515 = vlaneseq
      %v2516 = vshrl.u32 %v2515, 7
      %v2517 = vsub.s32 %v2514, %v2516
      %v2518 = vrot.slane %v2490, %v2517
      %v2519 = vcombine.high %v2497, %v2497
      %v2520 = vcombine.high %v2504, %v2504
      %v2521 = vcombine.high %v2511, %v2511
      %v2522 = vcombine.high %v2518, %v2518
      %v2523 = vlaneseq
      %v2524 = vshrl.u32 %v2523, 7
      %v2525 = vsub.s32 0, %v2524
      %v2526 = vrot.slane %v2448, %v2525
      %v2527 = vlaneseq
      %v2528 = vshrl.u32 %v2527, 7
      %v2529 = vsub.s32 0, %v2528
      %v2530 = vrot.slane %v2462, %v2529
      %v2531 = vlaneseq
      %v2532 = vshrl.u32 %v2531, 7
      %v2533 = vsub.s32 0, %v2532
      %v2534 = vrot.slane %v2470, %v2533
      %v2535 = vlaneseq
      %v2536 = vshrl.u32 %v2535, 7
      %v2537 = vsub.s32 0, %v2536
      %v2538 = vrot.slane %v2472, %v2537
      %v2539 = vlaneseq
      %v2540 = vshrl.u32 %v2539, 7
      %v2541 = vsub.s32 0, %v2540
      %v2542 = vrot.slane %v2455, %v2541
      %v2543 = vlaneseq
      %v2544 = vshrl.u32 %v2543, 7
      %v2545 = vsub.s32 0, %v2544
      %v2546 = vrot.slane %v2469, %v2545
      %v2547 = vlaneseq
      %v2548 = vshrl.u32 %v2547, 7
      %v2549 = vsub.s32 0, %v2548
      %v2550 = vrot.slane %v2471, %v2549
      %v2551 = vlaneseq
      %v2552 = vshrl.u32 %v2551, 7
      %v2553 = vsub.s32 0, %v2552
      %v2554 = vrot.slane %v2473, %v2553
      %v2555 = vlaneseq
      %v2556 = vshrl.u32 %v2555, 7
      %v2557 = vsub.s32 0, %v2556
      %v2558 = vrot.slane %v2497, %v2557
      %v2559 = vlaneseq
      %v2560 = vshrl.u32 %v2559, 7
      %v2561 = vsub.s32 0, %v2560
      %v2562 = vrot.slane %v2511, %v2561
      %v2563 = vlaneseq
      %v2564 = vshrl.u32 %v2563, 7
      %v2565 = vsub.s32 0, %v2564
      %v2566 = vrot.slane %v2519, %v2565
      %v2567 = vlaneseq
      %v2568 = vshrl.u32 %v2567, 7
      %v2569 = vsub.s32 0, %v2568
      %v2570 = vrot.slane %v2521, %v2569
      %v2571 = vlaneseq
      %v2572 = vshrl.u32 %v2571, 7
      %v2573 = vsub.s32 0, %v2572
      %v2574 = vrot.slane %v2504, %v2573
      %v2575 = vlaneseq
      %v2576 = vshrl.u32 %v2575, 7
      %v2577 = vsub.s32 0, %v2576
      %v2578 = vrot.slane %v2518, %v2577
      %v2579 = vlaneseq
      %v2580 = vshrl.u32 %v2579, 7
      %v2581 = vsub.s32 0, %v2580
      %v2582 = vrot.slane %v2520, %v2581
      %v2583 = vlaneseq
      %v2584 = vshrl.u32 %v2583, 7
      %v2585 = vsub.s32 0, %v2584
      %v2586 = vrot.slane %v2522, %v2585
      %v2603 = vmul.f32 %v2526, %v539
      %v2604 = vmul.f32 %v2526, %v540
      %v2605 = vmul.f32 %v2530, %v541
      %v2606 = vmul.f32 %v2530, %v542
      %v2607 = vmul.f32 %v2534, %v543
      %v2608 = vmul.f32 %v2534, %v544
      %v2609 = vmul.f32 %v2538, %v545
      %v2610 = vmul.f32 %v2538, %v546
      %v2611 = vmul.f32 %v2542, %v547
      %v2612 = vmul.f32 %v2542, %v548
      %v2613 = vmul.f32 %v2546, %v549
      %v2614 = vmul.f32 %v2546, %v550
      %v2615 = vmul.f32 %v2550, %v551
      %v2616 = vmul.f32 %v2550, %v552
      %v2617 = vmul.f32 %v2554, %v553
      %v2618 = vmul.f32 %v2554, %v554
      %v2619 = vmul.f32 %v2558, %v555
      %v2620 = vmul.f32 %v2558, %v556
      %v2621 = vmul.f32 %v2562, %v557
      %v2622 = vmul.f32 %v2562, %v558
      %v2623 = vmul.f32 %v2566, %v559
      %v2624 = vmul.f32 %v2566, %v560
      %v2625 = vmul.f32 %v2570, %v561
      %v2626 = vmul.f32 %v2570, %v562
      %v2627 = vmul.f32 %v2574, %v563
      %v2628 = vmul.f32 %v2574, %v564
      %v2629 = vmul.f32 %v2578, %v565
      %v2630 = vmul.f32 %v2578, %v566
      %v2631 = vmul.f32 %v2582, %v567
      %v2632 = vmul.f32 %v2582, %v568
      %v2633 = vmul.f32 %v2586, %v569
      %v2634 = vmul.f32 %v2586, %v570
      %v2635 = vsel %vm800, %v2603, 0.0
      %2636 = vadd.xlane.f32.xlu0 %v2635
      %v2637 = vpop.xlane.xlu0 %2636
      %v2638 = vsel %vm800, %v2604, 0.0
      %2639 = vadd.xlane.f32.xlu0 %v2638
      %v2640 = vpop.xlane.xlu0 %2639
      %v2641 = vsel %vm800, %v2605, 0.0
      %2642 = vadd.xlane.f32.xlu0 %v2641
      %v2643 = vpop.xlane.xlu0 %2642
      %v2644 = vsel %vm800, %v2606, 0.0
      %2645 = vadd.xlane.f32.xlu0 %v2644
      %v2646 = vpop.xlane.xlu0 %2645
      %v2647 = vsel %vm800, %v2607, 0.0
      %2648 = vadd.xlane.f32.xlu0 %v2647
      %v2649 = vpop.xlane.xlu0 %2648
      %v2650 = vsel %vm800, %v2608, 0.0
      %2651 = vadd.xlane.f32.xlu0 %v2650
      %v2652 = vpop.xlane.xlu0 %2651
      %v2653 = vsel %vm800, %v2609, 0.0
      %2654 = vadd.xlane.f32.xlu0 %v2653
      %v2655 = vpop.xlane.xlu0 %2654
      %v2656 = vsel %vm800, %v2610, 0.0
      %2657 = vadd.xlane.f32.xlu0 %v2656
      %v2658 = vpop.xlane.xlu0 %2657
      %v2659 = vsel %vm800, %v2611, 0.0
      %2660 = vadd.xlane.f32.xlu0 %v2659
      %v2661 = vpop.xlane.xlu0 %2660
      %v2662 = vsel %vm800, %v2612, 0.0
      %2663 = vadd.xlane.f32.xlu0 %v2662
      %v2664 = vpop.xlane.xlu0 %2663
      %v2665 = vsel %vm800, %v2613, 0.0
      %2666 = vadd.xlane.f32.xlu0 %v2665
      %v2667 = vpop.xlane.xlu0 %2666
      %v2668 = vsel %vm800, %v2614, 0.0
      %2669 = vadd.xlane.f32.xlu0 %v2668
      %v2670 = vpop.xlane.xlu0 %2669
      %v2671 = vsel %vm800, %v2615, 0.0
      %2672 = vadd.xlane.f32.xlu0 %v2671
      %v2673 = vpop.xlane.xlu0 %2672
      %v2674 = vsel %vm800, %v2616, 0.0
      %2675 = vadd.xlane.f32.xlu0 %v2674
      %v2676 = vpop.xlane.xlu0 %2675
      %v2677 = vsel %vm800, %v2617, 0.0
      %2678 = vadd.xlane.f32.xlu0 %v2677
      %v2679 = vpop.xlane.xlu0 %2678
      %v2680 = vsel %vm800, %v2618, 0.0
      %2681 = vadd.xlane.f32.xlu0 %v2680
      %v2682 = vpop.xlane.xlu0 %2681
      %v2683 = vsel %vm800, %v2619, 0.0
      %2684 = vadd.xlane.f32.xlu0 %v2683
      %v2685 = vpop.xlane.xlu0 %2684
      %v2686 = vsel %vm800, %v2620, 0.0
      %2687 = vadd.xlane.f32.xlu0 %v2686
      %v2688 = vpop.xlane.xlu0 %2687
      %v2689 = vsel %vm800, %v2621, 0.0
      %2690 = vadd.xlane.f32.xlu0 %v2689
      %v2691 = vpop.xlane.xlu0 %2690
      %v2692 = vsel %vm800, %v2622, 0.0
      %2693 = vadd.xlane.f32.xlu0 %v2692
      %v2694 = vpop.xlane.xlu0 %2693
      %v2695 = vsel %vm800, %v2623, 0.0
      %2696 = vadd.xlane.f32.xlu0 %v2695
      %v2697 = vpop.xlane.xlu0 %2696
      %v2698 = vsel %vm800, %v2624, 0.0
      %2699 = vadd.xlane.f32.xlu0 %v2698
      %v2700 = vpop.xlane.xlu0 %2699
      %v2701 = vsel %vm800, %v2625, 0.0
      %2702 = vadd.xlane.f32.xlu0 %v2701
      %v2703 = vpop.xlane.xlu0 %2702
      %v2704 = vsel %vm800, %v2626, 0.0
      %2705 = vadd.xlane.f32.xlu0 %v2704
      %v2706 = vpop.xlane.xlu0 %2705
      %v2707 = vsel %vm800, %v2627, 0.0
      %2708 = vadd.xlane.f32.xlu0 %v2707
      %v2709 = vpop.xlane.xlu0 %2708
      %v2710 = vsel %vm800, %v2628, 0.0
      %2711 = vadd.xlane.f32.xlu0 %v2710
      %v2712 = vpop.xlane.xlu0 %2711
      %v2713 = vsel %vm800, %v2629, 0.0
      %2714 = vadd.xlane.f32.xlu0 %v2713
      %v2715 = vpop.xlane.xlu0 %2714
      %v2716 = vsel %vm800, %v2630, 0.0
      %2717 = vadd.xlane.f32.xlu0 %v2716
      %v2718 = vpop.xlane.xlu0 %2717
      %v2719 = vsel %vm800, %v2631, 0.0
      %2720 = vadd.xlane.f32.xlu0 %v2719
      %v2721 = vpop.xlane.xlu0 %2720
      %v2722 = vsel %vm800, %v2632, 0.0
      %2723 = vadd.xlane.f32.xlu0 %v2722
      %v2724 = vpop.xlane.xlu0 %2723
      %v2725 = vsel %vm800, %v2633, 0.0
      %2726 = vadd.xlane.f32.xlu0 %v2725
      %v2727 = vpop.xlane.xlu0 %2726
      %v2728 = vsel %vm800, %v2634, 0.0
      %2729 = vadd.xlane.f32.xlu0 %v2728
      %v2730 = vpop.xlane.xlu0 %2729
      %2731 = vrot.lane.b32.xlu0 %v587, 48
      %v2732 = vpop.permute.xlu0 %2731
      %v2766 = vlaneseq
      %v2767 = vshrl.u32 %v2766, 7
      %v2768 = vsub.s32 %v933, %v2767
      %v2769 = vrot.slane %v2637, %v2768
      %v2770 = vlaneseq
      %v2771 = vshrl.u32 %v2770, 7
      %v2772 = vsub.s32 %v938, %v2771
      %v2773 = vrot.slane %v2640, %v2772
      %v2774 = vsel %vm943, %v2773, %v2769
      %v2775 = vlaneseq
      %v2776 = vshrl.u32 %v2775, 7
      %v2777 = vsub.s32 %v933, %v2776
      %v2778 = vrot.slane %v2643, %v2777
      %v2779 = vlaneseq
      %v2780 = vshrl.u32 %v2779, 7
      %v2781 = vsub.s32 %v938, %v2780
      %v2782 = vrot.slane %v2646, %v2781
      %v2783 = vsel %vm943, %v2782, %v2778
      %v2784 = vlaneseq
      %v2785 = vshrl.u32 %v2784, 7
      %v2786 = vsub.s32 %v933, %v2785
      %v2787 = vrot.slane %v2649, %v2786
      %v2788 = vlaneseq
      %v2789 = vshrl.u32 %v2788, 7
      %v2790 = vsub.s32 %v938, %v2789
      %v2791 = vrot.slane %v2652, %v2790
      %v2792 = vsel %vm943, %v2791, %v2787
      %v2793 = vlaneseq
      %v2794 = vshrl.u32 %v2793, 7
      %v2795 = vsub.s32 %v933, %v2794
      %v2796 = vrot.slane %v2655, %v2795
      %v2797 = vlaneseq
      %v2798 = vshrl.u32 %v2797, 7
      %v2799 = vsub.s32 %v938, %v2798
      %v2800 = vrot.slane %v2658, %v2799
      %v2801 = vsel %vm943, %v2800, %v2796
      %v2802 = vlaneseq
      %v2803 = vshrl.u32 %v2802, 7
      %v2804 = vsub.s32 %v933, %v2803
      %v2805 = vrot.slane %v2661, %v2804
      %v2806 = vlaneseq
      %v2807 = vshrl.u32 %v2806, 7
      %v2808 = vsub.s32 %v938, %v2807
      %v2809 = vrot.slane %v2664, %v2808
      %v2810 = vsel %vm943, %v2809, %v2805
      %v2811 = vlaneseq
      %v2812 = vshrl.u32 %v2811, 7
      %v2813 = vsub.s32 %v933, %v2812
      %v2814 = vrot.slane %v2667, %v2813
      %v2815 = vlaneseq
      %v2816 = vshrl.u32 %v2815, 7
      %v2817 = vsub.s32 %v938, %v2816
      %v2818 = vrot.slane %v2670, %v2817
      %v2819 = vsel %vm943, %v2818, %v2814
      %v2820 = vlaneseq
      %v2821 = vshrl.u32 %v2820, 7
      %v2822 = vsub.s32 %v933, %v2821
      %v2823 = vrot.slane %v2673, %v2822
      %v2824 = vlaneseq
      %v2825 = vshrl.u32 %v2824, 7
      %v2826 = vsub.s32 %v938, %v2825
      %v2827 = vrot.slane %v2676, %v2826
      %v2828 = vsel %vm943, %v2827, %v2823
      %v2829 = vlaneseq
      %v2830 = vshrl.u32 %v2829, 7
      %v2831 = vsub.s32 %v933, %v2830
      %v2832 = vrot.slane %v2679, %v2831
      %v2833 = vlaneseq
      %v2834 = vshrl.u32 %v2833, 7
      %v2835 = vsub.s32 %v938, %v2834
      %v2836 = vrot.slane %v2682, %v2835
      %v2837 = vsel %vm943, %v2836, %v2832
      %v2838 = vlaneseq
      %v2839 = vshrl.u32 %v2838, 7
      %v2840 = vsub.s32 %v933, %v2839
      %v2841 = vrot.slane %v2685, %v2840
      %v2842 = vlaneseq
      %v2843 = vshrl.u32 %v2842, 7
      %v2844 = vsub.s32 %v938, %v2843
      %v2845 = vrot.slane %v2688, %v2844
      %v2846 = vsel %vm943, %v2845, %v2841
      %v2847 = vlaneseq
      %v2848 = vshrl.u32 %v2847, 7
      %v2849 = vsub.s32 %v933, %v2848
      %v2850 = vrot.slane %v2691, %v2849
      %v2851 = vlaneseq
      %v2852 = vshrl.u32 %v2851, 7
      %v2853 = vsub.s32 %v938, %v2852
      %v2854 = vrot.slane %v2694, %v2853
      %v2855 = vsel %vm943, %v2854, %v2850
      %v2856 = vlaneseq
      %v2857 = vshrl.u32 %v2856, 7
      %v2858 = vsub.s32 %v933, %v2857
      %v2859 = vrot.slane %v2697, %v2858
      %v2860 = vlaneseq
      %v2861 = vshrl.u32 %v2860, 7
      %v2862 = vsub.s32 %v938, %v2861
      %v2863 = vrot.slane %v2700, %v2862
      %v2864 = vsel %vm943, %v2863, %v2859
      %v2865 = vlaneseq
      %v2866 = vshrl.u32 %v2865, 7
      %v2867 = vsub.s32 %v933, %v2866
      %v2868 = vrot.slane %v2703, %v2867
      %v2869 = vlaneseq
      %v2870 = vshrl.u32 %v2869, 7
      %v2871 = vsub.s32 %v938, %v2870
      %v2872 = vrot.slane %v2706, %v2871
      %v2873 = vsel %vm943, %v2872, %v2868
      %v2874 = vlaneseq
      %v2875 = vshrl.u32 %v2874, 7
      %v2876 = vsub.s32 %v933, %v2875
      %v2877 = vrot.slane %v2709, %v2876
      %v2878 = vlaneseq
      %v2879 = vshrl.u32 %v2878, 7
      %v2880 = vsub.s32 %v938, %v2879
      %v2881 = vrot.slane %v2712, %v2880
      %v2882 = vsel %vm943, %v2881, %v2877
      %v2883 = vlaneseq
      %v2884 = vshrl.u32 %v2883, 7
      %v2885 = vsub.s32 %v933, %v2884
      %v2886 = vrot.slane %v2715, %v2885
      %v2887 = vlaneseq
      %v2888 = vshrl.u32 %v2887, 7
      %v2889 = vsub.s32 %v938, %v2888
      %v2890 = vrot.slane %v2718, %v2889
      %v2891 = vsel %vm943, %v2890, %v2886
      %v2892 = vlaneseq
      %v2893 = vshrl.u32 %v2892, 7
      %v2894 = vsub.s32 %v933, %v2893
      %v2895 = vrot.slane %v2721, %v2894
      %v2896 = vlaneseq
      %v2897 = vshrl.u32 %v2896, 7
      %v2898 = vsub.s32 %v938, %v2897
      %v2899 = vrot.slane %v2724, %v2898
      %v2900 = vsel %vm943, %v2899, %v2895
      %v2901 = vlaneseq
      %v2902 = vshrl.u32 %v2901, 7
      %v2903 = vsub.s32 %v933, %v2902
      %v2904 = vrot.slane %v2727, %v2903
      %v2905 = vlaneseq
      %v2906 = vshrl.u32 %v2905, 7
      %v2907 = vsub.s32 %v938, %v2906
      %v2908 = vrot.slane %v2730, %v2907
      %v2909 = vsel %vm943, %v2908, %v2904
      %v2910 = vsel %vm1080, %v2783, %v2774
      %v2911 = vsel %vm1082, %v2792, %v2910
      %v2912 = vsel %vm1084, %v2801, %v2911
      %v2913 = vsel %vm1086, %v2810, %v2912
      %v2914 = vsel %vm1088, %v2819, %v2913
      %v2915 = vsel %vm1090, %v2828, %v2914
      %v2916 = vsel %vm1092, %v2837, %v2915
      %v2917 = vsel %vm1080, %v2855, %v2846
      %v2918 = vsel %vm1082, %v2864, %v2917
      %v2919 = vsel %vm1084, %v2873, %v2918
      %v2920 = vsel %vm1086, %v2882, %v2919
      %v2921 = vsel %vm1088, %v2891, %v2920
      %v2922 = vsel %vm1090, %v2900, %v2921
      %v2923 = vsel %vm1092, %v2909, %v2922
      %v2927 = vsel %vm800, %v2422, 0
      %2929 = vmatprep.subr.bf16.mxu0 0
      %2930 = vmatpush1.bf16.msra.mxu0 0
      %2931 = vmatprep.subr.bf16.mxu0 0
      %2932 = vmatpush1.bf16.msra.mxu0 0
      %2933 = vmatprep.subr.bf16.mxu0 0
      %2934 = vmatpush1.bf16.msra.mxu0 0
      %2935 = vmatprep.subr.bf16.mxu0 0
      %2936 = vmatpush1.bf16.msra.mxu0 0
      %2937 = vmatprep.subr.bf16.mxu0 0
      %2938 = vmatpush1.bf16.msra.mxu0 0
      %2939 = vmatprep.subr.bf16.mxu0 0
      %2940 = vmatpush1.bf16.msra.mxu0 0
      %2941 = vmatprep.subr.bf16.mxu0 0
      %2942 = vmatpush1.bf16.msra.mxu0 0
      %2943 = vmatprep.subr.bf16.mxu0 0
      %2944 = vmatpush1.bf16.msra.mxu0 %v2732
      %2945 = vmatprep.subr.bf16.mxu0 0
      %2946 = vmatpush2.bf16.msra.mxu0 0
      %2947 = vmatprep.subr.bf16.mxu0 0
      %2948 = vmatpush2.bf16.msra.mxu0 0
      %2949 = vmatprep.subr.bf16.mxu0 0
      %2950 = vmatpush2.bf16.msra.mxu0 0
      %2951 = vmatprep.subr.bf16.mxu0 0
      %2952 = vmatpush2.bf16.msra.mxu0 0
      %2953 = vmatprep.subr.bf16.mxu0 0
      %2954 = vmatpush2.bf16.msra.mxu0 0
      %2955 = vmatprep.subr.bf16.mxu0 0
      %2956 = vmatpush2.bf16.msra.mxu0 0
      %2957 = vmatprep.subr.bf16.mxu0 0
      %2958 = vmatpush2.bf16.msra.mxu0 0
      %2959 = vmatprep.subr.bf16.mxu0 0
      %2960 = vmatpush2.bf16.msra.mxu0 0
      %2961 = vmatprep.mubr.bf16.mxu0 0
      %2962 = vmatmul.mubr.bf16.gmra.mxu0 %v2927
      %v2963 = vpop.f32.mrf.mxu0
      %v2964 = vadd.f32 %v2916, %v2963
      %v2965 = vpop.f32.mrf.mxu0
      %v2966 = vpop.f32.mrf.mxu0
      %v2967 = vadd.f32 %v2923, %v2966
      %v2968 = vpop.f32.mrf.mxu0
      %2969 = vdwg.mxu0
      %v2970 = vpack.c.bf16 %v2967, %v2964
      %v2971 = vpack.c.bf16 %v574, %v573
      %v2973 = vsel %vm800, %v2970, 0
      %2975 = vmatprep.subr.bf16.mxu0 0
      %2976 = vmatpush1.bf16.msra.mxu0 0
      %2977 = vmatprep.subr.bf16.mxu0 0
      %2978 = vmatpush1.bf16.msra.mxu0 0
      %2979 = vmatprep.subr.bf16.mxu0 0
      %2980 = vmatpush1.bf16.msra.mxu0 0
      %2981 = vmatprep.subr.bf16.mxu0 0
      %2982 = vmatpush1.bf16.msra.mxu0 0
      %2983 = vmatprep.subr.bf16.mxu0 0
      %2984 = vmatpush1.bf16.msra.mxu0 0
      %2985 = vmatprep.subr.bf16.mxu0 0
      %2986 = vmatpush1.bf16.msra.mxu0 0
      %2987 = vmatprep.subr.bf16.mxu0 0
      %2988 = vmatpush1.bf16.msra.mxu0 0
      %2989 = vmatprep.subr.bf16.mxu0 0
      %2990 = vmatpush1.bf16.msra.mxu0 %v2971
      %2991 = vmatprep.subr.bf16.mxu0 0
      %2992 = vmatpush2.bf16.msra.mxu0 0
      %2993 = vmatprep.subr.bf16.mxu0 0
      %2994 = vmatpush2.bf16.msra.mxu0 0
      %2995 = vmatprep.subr.bf16.mxu0 0
      %2996 = vmatpush2.bf16.msra.mxu0 0
      %2997 = vmatprep.subr.bf16.mxu0 0
      %2998 = vmatpush2.bf16.msra.mxu0 0
      %2999 = vmatprep.subr.bf16.mxu0 0
      %3000 = vmatpush2.bf16.msra.mxu0 0
      %3001 = vmatprep.subr.bf16.mxu0 0
      %3002 = vmatpush2.bf16.msra.mxu0 0
      %3003 = vmatprep.subr.bf16.mxu0 0
      %3004 = vmatpush2.bf16.msra.mxu0 0
      %3005 = vmatprep.subr.bf16.mxu0 0
      %3006 = vmatpush2.bf16.msra.mxu0 0
      %3007 = vmatprep.mubr.bf16.mxu0 0
      %3008 = vmatmul.mubr.bf16.gmra.mxu0 %v2973
      %v3009 = vpop.f32.mrf.mxu0
      %v3010 = vadd.f32 0.0, %v3009
      %v3011 = vpop.f32.mrf.mxu0
      %v3012 = vpop.f32.mrf.mxu0
      %v3013 = vadd.f32 0.0, %v3012
      %v3014 = vpop.f32.mrf.mxu0
      %3015 = vdwg.mxu0
      %v3016 = vadd.f32 %v1768, %v3010
      %v3017 = vadd.f32 %v1769, %v3013
      %v3018 = vld [vmem:[%s9] sm:$0x1]
      %v3019 = vld [vmem:[%s10] sm:$0x1]
      %v3020 = vsel %vm438, %v3016, 0.0
      %3021 = vadd.xlane.f32.xlu0 %v3020
      %v3022 = vpop.xlane.xlu0 %3021
      %v3023 = vsel %vm438, %v3017, 0.0
      %3024 = vadd.xlane.f32.xlu0 %v3023
      %v3025 = vpop.xlane.xlu0 %3024
      %v3026 = vrcp.pop 32.0
      %v3027 = vmul.f32 %v3022, %v3026
      %v3028 = vmul.f32 %v3025, %v3026
      %v3029 = vsub.f32 %v3016, %v3027
      %v3030 = vsub.f32 %v3017, %v3028
      %v3031 = vmul.f32 %v3029, %v3029
      %v3032 = vmul.f32 %v3030, %v3030
      %v3033 = vsel %vm438, %v3031, 0.0
      %3034 = vadd.xlane.f32.xlu0 %v3033
      %v3035 = vpop.xlane.xlu0 %3034
      %v3036 = vsel %vm438, %v3032, 0.0
      %3037 = vadd.xlane.f32.xlu0 %v3036
      %v3038 = vpop.xlane.xlu0 %3037
      %v3039 = vmul.f32 %v3035, %v3026
      %v3040 = vmul.f32 %v3038, %v3026
      %v3041 = vadd.f32 %v3039, 1e-05
      %v3042 = vadd.f32 %v3040, 1e-05
      %v3043 = vrsqrt.pop %v3041
      %v3044 = vrsqrt.pop %v3042
      %v3045 = vmul.f32 %v3029, %v3043
      %v3046 = vmul.f32 %v3030, %v3044
      %v3048 = vlaneseq
      %v3049 = vshrl.u32 %v3048, 7
      %v3050 = vsub.s32 0, %v3049
      %v3051 = vrot.slane %v3018, %v3050
      %v3053 = vmul.f32 %v3045, %v3051
      %v3054 = vmul.f32 %v3046, %v3051
      %v3056 = vlaneseq
      %v3057 = vshrl.u32 %v3056, 7
      %v3058 = vsub.s32 0, %v3057
      %v3059 = vrot.slane %v3019, %v3058
      %v3061 = vadd.f32 %v3053, %v3059
      %v3062 = vadd.f32 %v3054, %v3059
      %3063 = vst.msk [vmem:[%s420] sm:$0xff] %vm438, %v3061
      %3064 = vst.msk [vmem:[%s420 + $0x8] sm:$0xff] %vm438, %v3062
      %p3065 = scmp.lt.s32.totalorder %s22, 1
      %s3066 = scalar_select %p3065, %s22, 1
      %s3067 = smul.addr %s3066, 2
      %s3068 = smul.addr %s3067, 8
      %s3069 = scalar_lea.vmem %s11, %s3068
      // Predicated region
      $region65: #{code_predictor_forward.16} parent=63 // pred_check
        %p3070 = pneg %p286
      $region66: #{code_predictor_forward.16} parent=63 // pred_check_branch
        %3072 = sbr.rel (%p3070) target = $region68
      $region67: #{code_predictor_forward.16} parent=63 // pred_region
        _
      $region68: #{code_predictor_forward.16} parent=63 // pred_fallthru
        _
    $region64: #{code_predictor_forward.16} parent=5 // pred_fallthru
      _
    %p3073 = scmp.le.s32.totalorder 2, %s17
    // Predicated region
    $region69: #{code_predictor_forward.16} parent=5 // pred_check
      %p3074 = pneg %p3073
    $region70: #{code_predictor_forward.16} parent=5 // pred_check_branch
      %3076 = sbr.rel (%p3074) target = $region72
    $region71: #{code_predictor_forward.16} parent=5 // pred_region
      %s3077 = ssub.s32 %s17, 2
      // Predicated region
      $region73: #{code_predictor_forward.16} parent=71 // pred_check
        %p3078 = pneg %p292
      $region74: #{code_predictor_forward.16} parent=71 // pred_check_branch
        %3080 = sbr.rel (%p3078) target = $region76
      $region75: #{code_predictor_forward.16} parent=71 // pred_region
        %p3081 = scmp.lt.s32.totalorder %s23, 1
        %s3082 = scalar_select %p3081, %s23, 1
        %s3083 = smul.addr %s3082, 2
        %s3084 = smul.addr %s3083, 8
        %s3085 = scalar_lea.vmem %s11, %s3084
      $region76: #{code_predictor_forward.16} parent=71 // pred_fallthru
        _
    $region72: #{code_predictor_forward.16} parent=5 // pred_fallthru
      _
  $region6: #{code_predictor_forward.16} parent=0 // loop_footer
    %s21 = sadd.s32 1, %s17
  $region7: #{code_predictor_forward.16} parent=0 // loop_footer_branch
    %16 = sbr.rel target = $region3
  $region8: #{code_predictor_forward.16} parent=0 // loop_exit
    _

</llo_original>
